<compile_context>
chip_gen: v6e
topology: v6e:2x2x1
jax: 0.10.0
libtpu: 0.0.40
codegen_flags: <defaults>
</compile_context>

<pallas_src>
import jax
import jax.numpy as jnp
from jax import lax
from jax.experimental import pallas as pl
from jax.experimental.pallas import tpu as pltpu


# ----------------------------------------------------------------------------
# Pallas kernel: full bidirectional BRITS-I recurrence (batch in lanes)
# ----------------------------------------------------------------------------
def brits_i_kernel(data_ref, vecs_ref, wbd_ref, fcw_ref, fcb_ref,
                   hout_ref, impf_ref, impb_ref,
                   dec_ref, prer_ref, prez_ref, pren_ref):
    f32 = jnp.float32
    T, H2, B = dec_ref.shape           # H2 = 2*H (fwd rows on top, bwd rows below)
    H = H2 // 2
    static_loops = T <= 32             # fully unroll short recurrences

    # ---- packed per-direction weight columns, read once ---------------------
    V = vecs_ref[...]                                   # (2H, 16)
    gw, gb = V[:, 0:1], V[:, 1:2]                       # decay-gate linear
    wx_r, wx_z, wx_n = V[:, 2:3], V[:, 3:4], V[:, 4:5]  # W_ih[:, x_c] per gate
    wm_r, wm_z, wm_n = V[:, 5:6], V[:, 6:7], V[:, 7:8]  # W_ih[:, mask] per gate
    b_r, b_z, b_n = V[:, 8:9], V[:, 9:10], V[:, 10:11]  # folded biases
    bhh_n = V[:, 11:12]                                 # stays inside r*(...)
    rb2 = V[0:2, 12:13]                                 # regression biases [fwd; bwd]

    def both(row_f, row_b):            # two (1,B) rows -> (2H,B) stacked [fwd ; bwd]
        return jnp.concatenate([jnp.broadcast_to(row_f, (H, B)),
                                jnp.broadcast_to(row_b, (H, B))], axis=0)

    # ---- phase 1: hoist all h-independent per-step terms into VMEM slabs ----
    def pre_body(t):
        dat = data_ref[t]                               # (6, B): xf mf df  xb mb db
        x_f = jnp.where(jnp.isnan(dat[0:1]), f32(-1.0), dat[0:1])
        x_b = jnp.where(jnp.isnan(dat[3:4]), f32(-1.0), dat[3:4])
        m_f, d_f = dat[1:2], dat[2:3]
        m_b, d_b = dat[4:5], dat[5:6]
        dd = both(d_f, d_b)
        mm = both(m_f, m_b)
        mx = both(m_f * x_f, m_b * x_b)
        dec_ref[t] = jax.nn.sigmoid(dd * gw + gb)       # decay gate, both dirs
        prer_ref[t] = mx * wx_r + mm * wm_r + b_r       # gi_r minus the h part
        prez_ref[t] = mx * wx_z + mm * wm_z + b_z
        pren_ref[t] = mx * wx_n + mm * wm_n + b_n       # (b_hh_n kept separate)

    if static_loops:
        for t in range(T):
            pre_body(t)
    else:
        pl.loop(0, T)(pre_body)

    # ---- phase 2: serial bidirectional recurrence ----------------------------
    W = wbd_ref[...]                    # (6H+8, 2H) block-diag hidden + regression

    def step(s, h):                     # h: (2H, B) = [h_f ; h_b]
        h_dec = h * dec_ref[s]
        res = jnp.dot(W, h_dec, preferred_element_type=f32)      # one MXU dot/step
        gh_r = res[0:H2]
        gh_z = res[H2:2 * H2]
        gh_n = res[2 * H2:3 * H2]
        x_h2 = res[3 * H2:3 * H2 + 2] + rb2             # (2, B) fwd/bwd regression
        dat = data_ref[s]
        u_f = (1.0 - dat[1:2]) * x_h2[0:1]              # (1 - m) * x_h
        u_b = (1.0 - dat[4:5]) * x_h2[1:2]
        u = jnp.concatenate([jnp.broadcast_to(u_f, (H, B)),
                             jnp.broadcast_to(u_b, (H, B))], axis=0)
        r = jax.nn.sigmoid(prer_ref[s] + wx_r * u + gh_r)
        z = jax.nn.sigmoid(prez_ref[s] + wx_z * u + gh_z)
        n = jnp.tanh(pren_ref[s] + wx_n * u + r * (gh_n + bhh_n))
        h_new = (1.0 - z) * n + z * h_dec
        impf_ref[pl.ds(s, 1), :] = x_h2[0:1]            # direct per-step row stores
        impb_ref[pl.ds(s, 1), :] = x_h2[1:2]            # (reversed time order, as in module)
        return h_new

    h0 = jnp.zeros((H2, B), f32)
    if static_loops:
        h = h0
        for s in range(T):
            h = step(s, h)
    else:
        h = lax.fori_loop(0, T, step, h0, unroll=4)

    # ---- final fused fc: 0.5*(fc_f(h_f) + fc_b(h_b)) in one dot --------------
    hout_ref[...] = (jnp.dot(fcw_ref[...], h, preferred_element_type=f32)
                     + fcb_ref[...])


# ----------------------------------------------------------------------------
# Wrapper: channel extraction + weight packing/re-layout + pallas_call
# ----------------------------------------------------------------------------
def brits_i_forward(x, p, batch_block=None):
    f32 = jnp.float32
    B, C, T, _ = x.shape
    H = p['gamma_h_f_w'].shape[0]
    O = p['fc_f_w'].shape[0]
    H2 = 2 * H
    RP = 6 * H + 8                      # block-diag rows, padded to a sublane multiple

    # --- time-major data planes; dir-1 planes are pre-reversed in time --------
    xs = x[:, 0, :, 0].T                # (T, B)
    ms = x[:, 2, :, 0].T
    df = x[:, 3, :, 0].T                # module feeds forward deltas to BOTH chains
    fwd = jnp.stack([xs, ms, df], axis=1)                          # (T, 3, B)
    data = jnp.concatenate([fwd, fwd[::-1]], axis=1).astype(f32)   # (T, 6, B)

    # --- packed per-direction parameter columns: rows = [fwd(H) ; bwd(H)] -----
    def col(a_f, a_b):
        return jnp.concatenate([a_f, a_b], axis=0)

    def gsl(a, g):
        return a[g * H:(g + 1) * H]

    wihf, wihb = p['gru_f_wih'], p['gru_b_wih']
    bihf, bihb = p['gru_f_bih'], p['gru_b_bih']
    bhhf, bhhb = p['gru_f_bhh'], p['gru_b_bhh']
    cols = [
        col(p['gamma_h_f_w'][:, 0], p['gamma_h_b_w'][:, 0]),                 # 0  gamma_w
        col(p['gamma_h_f_b'], p['gamma_h_b_b']),                             # 1  gamma_b
        col(gsl(wihf, 0)[:, 0], gsl(wihb, 0)[:, 0]),                         # 2  wx_r
        col(gsl(wihf, 1)[:, 0], gsl(wihb, 1)[:, 0]),                         # 3  wx_z
        col(gsl(wihf, 2)[:, 0], gsl(wihb, 2)[:, 0]),                         # 4  wx_n
        col(gsl(wihf, 0)[:, 1], gsl(wihb, 0)[:, 1]),                         # 5  wm_r
        col(gsl(wihf, 1)[:, 1], gsl(wihb, 1)[:, 1]),                         # 6  wm_z
        col(gsl(wihf, 2)[:, 1], gsl(wihb, 2)[:, 1]),                         # 7  wm_n
        col(gsl(bihf, 0) + gsl(bhhf, 0), gsl(bihb, 0) + gsl(bhhb, 0)),       # 8  b_r
        col(gsl(bihf, 1) + gsl(bhhf, 1), gsl(bihb, 1) + gsl(bhhb, 1)),       # 9  b_z
        col(gsl(bihf, 2), gsl(bihb, 2)),                                     # 10 b_n (b_ih only)
        col(gsl(bhhf, 2), gsl(bhhb, 2)),                                     # 11 bhh_n
        jnp.zeros((H2,), f32).at[0].set(p['regression_f_b'][0])
                             .at[1].set(p['regression_b_b'][0]),             # 12 rb (rows 0,1)
    ]
    vecs = jnp.stack(cols, axis=1).astype(f32)
    vecs = jnp.pad(vecs, ((0, 0), (0, 16 - vecs.shape[1])))                  # (2H, 16)

    # --- block-diagonal hidden + regression matrix: one MXU dot per step ------
    whhf, whhb = p['gru_f_whh'], p['gru_b_whh']
    W = jnp.zeros((RP, H2), f32)
    for g in range(3):
        W = W.at[2 * g * H:(2 * g + 1) * H, 0:H].set(gsl(whhf, g))
        W = W.at[(2 * g + 1) * H:(2 * g + 2) * H, H:H2].set(gsl(whhb, g))
    W = W.at[6 * H:6 * H + 1, 0:H].set(p['regression_f_w'])
    W = W.at[6 * H + 1:6 * H + 2, H:H2].set(p['regression_b_w'])
    W = W.astype(f32)

    fcw = (0.5 * jnp.concatenate([p['fc_f_w'], p['fc_b_w']], axis=1)).astype(f32)  # (O, 2H)
    fcb = (0.5 * (p['fc_f_b'] + p['fc_b_b']))[:, None].astype(f32)                 # (O, 1)

    # --- batch tiling: bb must be the full batch or a multiple of 128 (lanes) --
    bb = B
    if batch_block is not None and B % batch_block == 0 and batch_block % 128 == 0:
        bb = batch_block
    n_blk = B // bb

    # --- VMEM budget + scheduler cost hints ------------------------------------
    lane = -(-bb // 128) * 128
    sub8 = lambda n: -(-n // 8) * 8
    slab_bytes = 4 * T * sub8(H2) * lane * 4
    io_bytes = 2 * (T * 8 + sub8(O) + 2 * sub8(T)) * lane * 4
    w_bytes = (sub8(RP) + sub8(H2) + 2 * sub8(O)) * 128 * 4
    vmem_limit = int(min(max(slab_bytes + io_bytes + w_bytes + (2 << 20), 16 << 20),
                         64 << 20))
    flops = int(n_blk * (2 * T * RP * H2 * bb + 2 * O * H2 * bb + 30 * T * H2 * bb))
    trans = int(n_blk * 4 * T * H2 * bb)
    byts = int(data.size * 4 + (W.size + vecs.size + fcw.size + fcb.size) * 4
               + (B * O + 2 * B * T) * 4 + 2 * n_blk * slab_bytes)

    vmem_ws = pl.BlockSpec(memory_space=pltpu.MemorySpace.VMEM)   # whole-array weights

    hout, impf, impb = pl.pallas_call(
        brits_i_kernel,
        out_shape=(
            jax.ShapeDtypeStruct((O, B), f32),    # (h_f + h_b) / 2   (batch in lanes)
            jax.ShapeDtypeStruct((T, B), f32),    # xs_imputation_f
            jax.ShapeDtypeStruct((T, B), f32),    # xs_imputation_b (reversed time order)
        ),
        grid=(n_blk,),
        in_specs=[
            pl.BlockSpec((T, 6, bb), lambda i: (0, 0, i)),   # data planes, time-major
            vmem_ws,                                         # packed parameter columns
            vmem_ws,                                         # block-diag hidden matrix
            vmem_ws,                                         # fused fc weights
            vmem_ws,                                         # fused fc bias
        ],
        out_specs=(
            pl.BlockSpec((O, bb), lambda i: (0, i)),
            pl.BlockSpec((T, bb), lambda i: (0, i)),
            pl.BlockSpec((T, bb), lambda i: (0, i)),
        ),
        scratch_shapes=[pltpu.VMEM((T, H2, bb), f32) for _ in range(4)],
        compiler_params=pltpu.CompilerParams(
            dimension_semantics=("parallel",),
            vmem_limit_bytes=vmem_limit,
        ),
        cost_estimate=pl.CostEstimate(
            flops=flops, transcendentals=trans, bytes_accessed=byts),
    )(data, vecs, W, fcw, fcb)

    # layout plumbing back to the module's (B, .) convention
    return hout.T, impf.T, impb.T


# ----------------------------------------------------------------------------
# Deterministic parameter init (PyTorch-style U(-1/sqrt(fan_in), 1/sqrt(fan_in)))
# ----------------------------------------------------------------------------
def init_params(key, input_size, H, O):
    keys = iter(jax.random.split(key, 32))

    def lin(out_f, in_f):
        s = 1.0 / float(in_f) ** 0.5
        w = jax.random.uniform(next(keys), (out_f, in_f), jnp.float32, -s, s)
        b = jax.random.uniform(next(keys), (out_f,), jnp.float32, -s, s)
        return w, b

    def gru(in_f, hid):
        s = 1.0 / float(hid) ** 0.5
        wih = jax.random.uniform(next(keys), (3 * hid, in_f), jnp.float32, -s, s)
        whh = jax.random.uniform(next(keys), (3 * hid, hid), jnp.float32, -s, s)
        bih = jax.random.uniform(next(keys), (3 * hid,), jnp.float32, -s, s)
        bhh = jax.random.uniform(next(keys), (3 * hid,), jnp.float32, -s, s)
        return wih, whh, bih, bhh

    p = {}
    p['gamma_h_f_w'], p['gamma_h_f_b'] = lin(H, input_size)
    p['gamma_h_b_w'], p['gamma_h_b_b'] = lin(H, input_size)
    p['fc_f_w'], p['fc_f_b'] = lin(O, H)
    p['fc_b_w'], p['fc_b_b'] = lin(O, H)
    p['gru_f_wih'], p['gru_f_whh'], p['gru_f_bih'], p['gru_f_bhh'] = gru(2 * input_size, H)
    p['regression_f_w'], p['regression_f_b'] = lin(input_size, H)
    p['gru_b_wih'], p['gru_b_whh'], p['gru_b_bih'], p['gru_b_bhh'] = gru(2 * input_size, H)
    p['regression_b_w'], p['regression_b_b'] = lin(input_size, H)
    return p


# ----------------------------------------------------------------------------
# Pure-JAX reference (mirrors the PyTorch forward exactly) for validation
# ----------------------------------------------------------------------------
def reference_forward(x, p):
    B, C, T, _ = x.shape
    xs = jnp.where(jnp.isnan(x[:, 0, :, 0]), -1.0, x[:, 0, :, 0])
    masks = x[:, 2, :, 0]
    d_f = x[:, 3, :, 0]
    H = p['gamma_h_f_w'].shape[0]

    def lin(v, w, b):
        return v @ w.T + b

    def gru(inp, h, wih, whh, bih, bhh):
        gi = inp @ wih.T + bih
        gh = h @ whh.T + bhh
        r = jax.nn.sigmoid(gi[:, :H] + gh[:, :H])
        z = jax.nn.sigmoid(gi[:, H:2 * H] + gh[:, H:2 * H])
        n = jnp.tanh(gi[:, 2 * H:] + r * gh[:, 2 * H:])
        return (1 - z) * n + z * h

    def step(x_t, m_t, d_t, h, s):
        h = h * jax.nn.sigmoid(lin(d_t, p[f'gamma_h_{s}_w'], p[f'gamma_h_{s}_b']))
        x_h = lin(h, p[f'regression_{s}_w'], p[f'regression_{s}_b'])
        x_c = m_t * x_t + (1 - m_t) * x_h
        inp = jnp.concatenate([x_c, m_t], axis=1)
        h = gru(inp, h, p[f'gru_{s}_wih'], p[f'gru_{s}_whh'],
                p[f'gru_{s}_bih'], p[f'gru_{s}_bhh'])
        return h, x_h

    h_f = jnp.zeros((B, H), jnp.float32)
    imp_f = []
    for t in range(T):
        h_f, xh = step(xs[:, t:t + 1], masks[:, t:t + 1], d_f[:, t:t + 1], h_f, 'f')
        imp_f.append(xh)
    h_b = jnp.zeros((B, H), jnp.float32)
    imp_b = []
    for t in reversed(range(T)):
        h_b, xh = step(xs[:, t:t + 1], masks[:, t:t + 1], d_f[:, t:t + 1], h_b, 'b')
        imp_b.append(xh)
    hf = lin(h_f, p['fc_f_w'], p['fc_f_b'])
    hb = lin(h_b, p['fc_b_w'], p['fc_b_b'])
    return (hf + hb) / 2, jnp.concatenate(imp_f, 1), jnp.concatenate(imp_b, 1)


if __name__ == "__main__":
    B, C, T, H, O = 2, 6, 8, 32, 4   # input_size = 1 (implied by the module's slicing)
    key = jax.random.PRNGKey(0)
    kx, kp = jax.random.split(key)

    x = jax.random.normal(kx, (B, C, T, 1), jnp.float32)
    x = x.at[:, 2].set((x[:, 2] > 0).astype(jnp.float32))   # binary observation mask
    x = x.at[:, 3].set(jnp.abs(x[:, 3]))                    # forward deltas >= 0
    x = x.at[:, 5].set(jnp.abs(x[:, 5]))                    # backward deltas >= 0
    x = x.at[0, 0, 1, 0].set(jnp.nan)                       # missing values -> NaN
    x = x.at[1, 0, 5, 0].set(jnp.nan)

    params = init_params(kp, 1, H, O)

    out = jax.block_until_ready(brits_i_forward(x, params))
    ref = reference_forward(x, params)
    for o, r in zip(out, ref):
        assert o.shape == r.shape, (o.shape, r.shape)
        assert jnp.allclose(o, r, atol=1e-3, rtol=1e-3)
    print("KERNEL_OK")
</pallas_src>

<mosaic_0001>
module attributes {stable_mosaic.version = 11 : i64} {
  func.func @brits_i_kernel(%arg0: i32, %arg1: memref<8x6x2xf32, #tpu.memory_space<vmem>>, %arg2: memref<64x16xf32, #tpu.memory_space<vmem>>, %arg3: memref<200x64xf32, #tpu.memory_space<vmem>>, %arg4: memref<4x64xf32, #tpu.memory_space<vmem>>, %arg5: memref<4x1xf32, #tpu.memory_space<vmem>>, %arg6: memref<4x2xf32, #tpu.memory_space<vmem>>, %arg7: memref<8x2xf32, #tpu.memory_space<vmem>>, %arg8: memref<8x2xf32, #tpu.memory_space<vmem>>, %arg9: memref<8x64x2xf32, #tpu.memory_space<vmem>>, %arg10: memref<8x64x2xf32, #tpu.memory_space<vmem>>, %arg11: memref<8x64x2xf32, #tpu.memory_space<vmem>>, %arg12: memref<8x64x2xf32, #tpu.memory_space<vmem>>) attributes {dimension_semantics = [#tpu.dimension_semantics<parallel>], iteration_bounds = array<i64: 1>, scalar_prefetch = 0 : i64, scratch_operands = 4 : i64, tpu.core_type = #tpu.core_type<tc>, window_params = [{transform_indices = @transform_0, window_bounds = array<i64: 8, 6, 2>}, {pipeline_mode = #tpu.pipeline_mode<synchronous>, transform_indices = @transform_1, window_bounds = array<i64: 64, 16>}, {pipeline_mode = #tpu.pipeline_mode<synchronous>, transform_indices = @transform_2, window_bounds = array<i64: 200, 64>}, {pipeline_mode = #tpu.pipeline_mode<synchronous>, transform_indices = @transform_3, window_bounds = array<i64: 4, 64>}, {pipeline_mode = #tpu.pipeline_mode<synchronous>, transform_indices = @transform_4, window_bounds = array<i64: 4, 1>}, {transform_indices = @transform_5, window_bounds = array<i64: 4, 2>}, {transform_indices = @transform_6, window_bounds = array<i64: 8, 2>}, {transform_indices = @transform_7, window_bounds = array<i64: 8, 2>}]} {
    %c0 = arith.constant 0 : index
    %c0_0 = arith.constant 0 : index
    %0 = vector.load %arg2[%c0, %c0_0] : memref<64x16xf32, #tpu.memory_space<vmem>>, vector<64x16xf32>
    %1 = vector.extract_strided_slice %0 {offsets = [0, 0], sizes = [64, 1], strides = [1, 1]} : vector<64x16xf32> to vector<64x1xf32>
    %2 = vector.extract_strided_slice %0 {offsets = [0, 1], sizes = [64, 1], strides = [1, 1]} : vector<64x16xf32> to vector<64x1xf32>
    %3 = vector.extract_strided_slice %0 {offsets = [0, 2], sizes = [64, 1], strides = [1, 1]} : vector<64x16xf32> to vector<64x1xf32>
    %4 = vector.extract_strided_slice %0 {offsets = [0, 3], sizes = [64, 1], strides = [1, 1]} : vector<64x16xf32> to vector<64x1xf32>
    %5 = vector.extract_strided_slice %0 {offsets = [0, 4], sizes = [64, 1], strides = [1, 1]} : vector<64x16xf32> to vector<64x1xf32>
    %6 = vector.extract_strided_slice %0 {offsets = [0, 5], sizes = [64, 1], strides = [1, 1]} : vector<64x16xf32> to vector<64x1xf32>
    %7 = vector.extract_strided_slice %0 {offsets = [0, 6], sizes = [64, 1], strides = [1, 1]} : vector<64x16xf32> to vector<64x1xf32>
    %8 = vector.extract_strided_slice %0 {offsets = [0, 7], sizes = [64, 1], strides = [1, 1]} : vector<64x16xf32> to vector<64x1xf32>
    %9 = vector.extract_strided_slice %0 {offsets = [0, 8], sizes = [64, 1], strides = [1, 1]} : vector<64x16xf32> to vector<64x1xf32>
    %10 = vector.extract_strided_slice %0 {offsets = [0, 9], sizes = [64, 1], strides = [1, 1]} : vector<64x16xf32> to vector<64x1xf32>
    %11 = vector.extract_strided_slice %0 {offsets = [0, 10], sizes = [64, 1], strides = [1, 1]} : vector<64x16xf32> to vector<64x1xf32>
    %12 = vector.extract_strided_slice %0 {offsets = [0, 11], sizes = [64, 1], strides = [1, 1]} : vector<64x16xf32> to vector<64x1xf32>
    %13 = vector.extract_strided_slice %0 {offsets = [0, 12], sizes = [2, 1], strides = [1, 1]} : vector<64x16xf32> to vector<2x1xf32>
    %c0_1 = arith.constant 0 : index
    %c0_2 = arith.constant 0 : index
    %c0_3 = arith.constant 0 : index
    %14 = vector.load %arg1[%c0_1, %c0_2, %c0_3] : memref<8x6x2xf32, #tpu.memory_space<vmem>>, vector<1x6x2xf32>
    %15 = vector.shape_cast %14 : vector<1x6x2xf32> to vector<6x2xf32>
    %16 = vector.extract_strided_slice %15 {offsets = [0, 0], sizes = [1, 2], strides = [1, 1]} : vector<6x2xf32> to vector<1x2xf32>
    %17 = arith.cmpf one, %16, %16 : vector<1x2xf32>
    %18 = vector.extract_strided_slice %15 {offsets = [0, 0], sizes = [1, 2], strides = [1, 1]} : vector<6x2xf32> to vector<1x2xf32>
    %cst = arith.constant -1.000000e+00 : f32
    %19 = vector.broadcast %cst : f32 to vector<1x2xf32>
    %20 = arith.select %17, %19, %18 : vector<1x2xi1>, vector<1x2xf32>
    %21 = vector.extract_strided_slice %15 {offsets = [3, 0], sizes = [1, 2], strides = [1, 1]} : vector<6x2xf32> to vector<1x2xf32>
    %22 = arith.cmpf one, %21, %21 : vector<1x2xf32>
    %23 = vector.extract_strided_slice %15 {offsets = [3, 0], sizes = [1, 2], strides = [1, 1]} : vector<6x2xf32> to vector<1x2xf32>
    %cst_4 = arith.constant -1.000000e+00 : f32
    %24 = vector.broadcast %cst_4 : f32 to vector<1x2xf32>
    %25 = arith.select %22, %24, %23 : vector<1x2xi1>, vector<1x2xf32>
    %26 = vector.extract_strided_slice %15 {offsets = [1, 0], sizes = [1, 2], strides = [1, 1]} : vector<6x2xf32> to vector<1x2xf32>
    %27 = vector.extract_strided_slice %15 {offsets = [2, 0], sizes = [1, 2], strides = [1, 1]} : vector<6x2xf32> to vector<1x2xf32>
    %28 = vector.extract_strided_slice %15 {offsets = [4, 0], sizes = [1, 2], strides = [1, 1]} : vector<6x2xf32> to vector<1x2xf32>
    %29 = vector.extract_strided_slice %15 {offsets = [5, 0], sizes = [1, 2], strides = [1, 1]} : vector<6x2xf32> to vector<1x2xf32>
    %30 = vector.shape_cast %27 : vector<1x2xf32> to vector<1x2xf32>
    %31 = vector.broadcast %30 : vector<1x2xf32> to vector<32x2xf32>
    %32 = vector.shape_cast %29 : vector<1x2xf32> to vector<1x2xf32>
    %33 = vector.broadcast %32 : vector<1x2xf32> to vector<32x2xf32>
    %34 = tpu.concatenate %31, %33 in 0 : vector<32x2xf32>, vector<32x2xf32> -> vector<64x2xf32>
    %35 = vector.shape_cast %26 : vector<1x2xf32> to vector<1x2xf32>
    %36 = vector.broadcast %35 : vector<1x2xf32> to vector<32x2xf32>
    %37 = vector.shape_cast %28 : vector<1x2xf32> to vector<1x2xf32>
    %38 = vector.broadcast %37 : vector<1x2xf32> to vector<32x2xf32>
    %39 = tpu.concatenate %36, %38 in 0 : vector<32x2xf32>, vector<32x2xf32> -> vector<64x2xf32>
    %40 = arith.mulf %26, %20 : vector<1x2xf32>
    %41 = arith.mulf %28, %25 : vector<1x2xf32>
    %42 = vector.shape_cast %40 : vector<1x2xf32> to vector<1x2xf32>
    %43 = vector.broadcast %42 : vector<1x2xf32> to vector<32x2xf32>
    %44 = vector.shape_cast %41 : vector<1x2xf32> to vector<1x2xf32>
    %45 = vector.broadcast %44 : vector<1x2xf32> to vector<32x2xf32>
    %46 = tpu.concatenate %43, %45 in 0 : vector<32x2xf32>, vector<32x2xf32> -> vector<64x2xf32>
    %47 = vector.broadcast %1 : vector<64x1xf32> to vector<64x2xf32>
    %48 = arith.mulf %34, %47 : vector<64x2xf32>
    %49 = vector.broadcast %2 : vector<64x1xf32> to vector<64x2xf32>
    %50 = arith.addf %48, %49 : vector<64x2xf32>
    %51 = arith.negf %50 : vector<64x2xf32>
    %52 = math.exp %51 : vector<64x2xf32>
    %cst_5 = arith.constant 1.000000e+00 : f32
    %53 = vector.broadcast %cst_5 : f32 to vector<64x2xf32>
    %54 = arith.addf %53, %52 : vector<64x2xf32>
    %55 = arith.divf %53, %54 : vector<64x2xf32>
    %c0_6 = arith.constant 0 : index
    %c0_7 = arith.constant 0 : index
    %c0_8 = arith.constant 0 : index
    %56 = vector.load %arg9[%c0_6, %c0_7, %c0_8] : memref<8x64x2xf32, #tpu.memory_space<vmem>>, vector<1x64x2xf32>
    %57 = vector.shape_cast %56 : vector<1x64x2xf32> to vector<64x2xf32>
    %58 = vector.shape_cast %55 : vector<64x2xf32> to vector<1x64x2xf32>
    tpu.vector_store %arg9[%c0_6, %c0_7, %c0_8], %58 {strides = array<i32>} : memref<8x64x2xf32, #tpu.memory_space<vmem>>, vector<1x64x2xf32>,
    %59 = vector.broadcast %3 : vector<64x1xf32> to vector<64x2xf32>
    %60 = arith.mulf %46, %59 : vector<64x2xf32>
    %61 = vector.broadcast %6 : vector<64x1xf32> to vector<64x2xf32>
    %62 = arith.mulf %39, %61 : vector<64x2xf32>
    %63 = arith.addf %60, %62 : vector<64x2xf32>
    %64 = vector.broadcast %9 : vector<64x1xf32> to vector<64x2xf32>
    %65 = arith.addf %63, %64 : vector<64x2xf32>
    %c0_9 = arith.constant 0 : index
    %c0_10 = arith.constant 0 : index
    %c0_11 = arith.constant 0 : index
    %66 = vector.load %arg10[%c0_9, %c0_10, %c0_11] : memref<8x64x2xf32, #tpu.memory_space<vmem>>, vector<1x64x2xf32>
    %67 = vector.shape_cast %66 : vector<1x64x2xf32> to vector<64x2xf32>
    %68 = vector.shape_cast %65 : vector<64x2xf32> to vector<1x64x2xf32>
    tpu.vector_store %arg10[%c0_9, %c0_10, %c0_11], %68 {strides = array<i32>} : memref<8x64x2xf32, #tpu.memory_space<vmem>>, vector<1x64x2xf32>,
    %69 = vector.broadcast %4 : vector<64x1xf32> to vector<64x2xf32>
    %70 = arith.mulf %46, %69 : vector<64x2xf32>
    %71 = vector.broadcast %7 : vector<64x1xf32> to vector<64x2xf32>
    %72 = arith.mulf %39, %71 : vector<64x2xf32>
    %73 = arith.addf %70, %72 : vector<64x2xf32>
    %74 = vector.broadcast %10 : vector<64x1xf32> to vector<64x2xf32>
    %75 = arith.addf %73, %74 : vector<64x2xf32>
    %c0_12 = arith.constant 0 : index
    %c0_13 = arith.constant 0 : index
    %c0_14 = arith.constant 0 : index
    %76 = vector.load %arg11[%c0_12, %c0_13, %c0_14] : memref<8x64x2xf32, #tpu.memory_space<vmem>>, vector<1x64x2xf32>
    %77 = vector.shape_cast %76 : vector<1x64x2xf32> to vector<64x2xf32>
    %78 = vector.shape_cast %75 : vector<64x2xf32> to vector<1x64x2xf32>
    tpu.vector_store %arg11[%c0_12, %c0_13, %c0_14], %78 {strides = array<i32>} : memref<8x64x2xf32, #tpu.memory_space<vmem>>, vector<1x64x2xf32>,
    %79 = vector.broadcast %5 : vector<64x1xf32> to vector<64x2xf32>
    %80 = arith.mulf %46, %79 : vector<64x2xf32>
    %81 = vector.broadcast %8 : vector<64x1xf32> to vector<64x2xf32>
    %82 = arith.mulf %39, %81 : vector<64x2xf32>
    %83 = arith.addf %80, %82 : vector<64x2xf32>
    %84 = vector.broadcast %11 : vector<64x1xf32> to vector<64x2xf32>
    %85 = arith.addf %83, %84 : vector<64x2xf32>
    %c0_15 = arith.constant 0 : index
    %c0_16 = arith.constant 0 : index
    %c0_17 = arith.constant 0 : index
    %86 = vector.load %arg12[%c0_15, %c0_16, %c0_17] : memref<8x64x2xf32, #tpu.memory_space<vmem>>, vector<1x64x2xf32>
    %87 = vector.shape_cast %86 : vector<1x64x2xf32> to vector<64x2xf32>
    %88 = vector.shape_cast %85 : vector<64x2xf32> to vector<1x64x2xf32>
    tpu.vector_store %arg12[%c0_15, %c0_16, %c0_17], %88 {strides = array<i32>} : memref<8x64x2xf32, #tpu.memory_space<vmem>>, vector<1x64x2xf32>,
    %c1 = arith.constant 1 : index
    %c0_18 = arith.constant 0 : index
    %c0_19 = arith.constant 0 : index
    %89 = vector.load %arg1[%c1, %c0_18, %c0_19] : memref<8x6x2xf32, #tpu.memory_space<vmem>>, vector<1x6x2xf32>
    %90 = vector.shape_cast %89 : vector<1x6x2xf32> to vector<6x2xf32>
    %91 = vector.extract_strided_slice %90 {offsets = [0, 0], sizes = [1, 2], strides = [1, 1]} : vector<6x2xf32> to vector<1x2xf32>
    %92 = arith.cmpf one, %91, %91 : vector<1x2xf32>
    %93 = vector.extract_strided_slice %90 {offsets = [0, 0], sizes = [1, 2], strides = [1, 1]} : vector<6x2xf32> to vector<1x2xf32>
    %cst_20 = arith.constant -1.000000e+00 : f32
    %94 = vector.broadcast %cst_20 : f32 to vector<1x2xf32>
    %95 = arith.select %92, %94, %93 : vector<1x2xi1>, vector<1x2xf32>
    %96 = vector.extract_strided_slice %90 {offsets = [3, 0], sizes = [1, 2], strides = [1, 1]} : vector<6x2xf32> to vector<1x2xf32>
    %97 = arith.cmpf one, %96, %96 : vector<1x2xf32>
    %98 = vector.extract_strided_slice %90 {offsets = [3, 0], sizes = [1, 2], strides = [1, 1]} : vector<6x2xf32> to vector<1x2xf32>
    %cst_21 = arith.constant -1.000000e+00 : f32
    %99 = vector.broadcast %cst_21 : f32 to vector<1x2xf32>
    %100 = arith.select %97, %99, %98 : vector<1x2xi1>, vector<1x2xf32>
    %101 = vector.extract_strided_slice %90 {offsets = [1, 0], sizes = [1, 2], strides = [1, 1]} : vector<6x2xf32> to vector<1x2xf32>
    %102 = vector.extract_strided_slice %90 {offsets = [2, 0], sizes = [1, 2], strides = [1, 1]} : vector<6x2xf32> to vector<1x2xf32>
    %103 = vector.extract_strided_slice %90 {offsets = [4, 0], sizes = [1, 2], strides = [1, 1]} : vector<6x2xf32> to vector<1x2xf32>
    %104 = vector.extract_strided_slice %90 {offsets = [5, 0], sizes = [1, 2], strides = [1, 1]} : vector<6x2xf32> to vector<1x2xf32>
    %105 = vector.shape_cast %102 : vector<1x2xf32> to vector<1x2xf32>
    %106 = vector.broadcast %105 : vector<1x2xf32> to vector<32x2xf32>
    %107 = vector.shape_cast %104 : vector<1x2xf32> to vector<1x2xf32>
    %108 = vector.broadcast %107 : vector<1x2xf32> to vector<32x2xf32>
    %109 = tpu.concatenate %106, %108 in 0 : vector<32x2xf32>, vector<32x2xf32> -> vector<64x2xf32>
    %110 = vector.shape_cast %101 : vector<1x2xf32> to vector<1x2xf32>
    %111 = vector.broadcast %110 : vector<1x2xf32> to vector<32x2xf32>
    %112 = vector.shape_cast %103 : vector<1x2xf32> to vector<1x2xf32>
    %113 = vector.broadcast %112 : vector<1x2xf32> to vector<32x2xf32>
    %114 = tpu.concatenate %111, %113 in 0 : vector<32x2xf32>, vector<32x2xf32> -> vector<64x2xf32>
    %115 = arith.mulf %101, %95 : vector<1x2xf32>
    %116 = arith.mulf %103, %100 : vector<1x2xf32>
    %117 = vector.shape_cast %115 : vector<1x2xf32> to vector<1x2xf32>
    %118 = vector.broadcast %117 : vector<1x2xf32> to vector<32x2xf32>
    %119 = vector.shape_cast %116 : vector<1x2xf32> to vector<1x2xf32>
    %120 = vector.broadcast %119 : vector<1x2xf32> to vector<32x2xf32>
    %121 = tpu.concatenate %118, %120 in 0 : vector<32x2xf32>, vector<32x2xf32> -> vector<64x2xf32>
    %122 = vector.broadcast %1 : vector<64x1xf32> to vector<64x2xf32>
    %123 = arith.mulf %109, %122 : vector<64x2xf32>
    %124 = vector.broadcast %2 : vector<64x1xf32> to vector<64x2xf32>
    %125 = arith.addf %123, %124 : vector<64x2xf32>
    %126 = arith.negf %125 : vector<64x2xf32>
    %127 = math.exp %126 : vector<64x2xf32>
    %cst_22 = arith.constant 1.000000e+00 : f32
    %128 = vector.broadcast %cst_22 : f32 to vector<64x2xf32>
    %129 = arith.addf %128, %127 : vector<64x2xf32>
    %130 = arith.divf %128, %129 : vector<64x2xf32>
    %c1_23 = arith.constant 1 : index
    %c0_24 = arith.constant 0 : index
    %c0_25 = arith.constant 0 : index
    %131 = vector.load %arg9[%c1_23, %c0_24, %c0_25] : memref<8x64x2xf32, #tpu.memory_space<vmem>>, vector<1x64x2xf32>
    %132 = vector.shape_cast %131 : vector<1x64x2xf32> to vector<64x2xf32>
    %133 = vector.shape_cast %130 : vector<64x2xf32> to vector<1x64x2xf32>
    tpu.vector_store %arg9[%c1_23, %c0_24, %c0_25], %133 {strides = array<i32>} : memref<8x64x2xf32, #tpu.memory_space<vmem>>, vector<1x64x2xf32>,
    %134 = vector.broadcast %3 : vector<64x1xf32> to vector<64x2xf32>
    %135 = arith.mulf %121, %134 : vector<64x2xf32>
    %136 = vector.broadcast %6 : vector<64x1xf32> to vector<64x2xf32>
    %137 = arith.mulf %114, %136 : vector<64x2xf32>
    %138 = arith.addf %135, %137 : vector<64x2xf32>
    %139 = vector.broadcast %9 : vector<64x1xf32> to vector<64x2xf32>
    %140 = arith.addf %138, %139 : vector<64x2xf32>
    %c1_26 = arith.constant 1 : index
    %c0_27 = arith.constant 0 : index
    %c0_28 = arith.constant 0 : index
    %141 = vector.load %arg10[%c1_26, %c0_27, %c0_28] : memref<8x64x2xf32, #tpu.memory_space<vmem>>, vector<1x64x2xf32>
    %142 = vector.shape_cast %141 : vector<1x64x2xf32> to vector<64x2xf32>
    %143 = vector.shape_cast %140 : vector<64x2xf32> to vector<1x64x2xf32>
    tpu.vector_store %arg10[%c1_26, %c0_27, %c0_28], %143 {strides = array<i32>} : memref<8x64x2xf32, #tpu.memory_space<vmem>>, vector<1x64x2xf32>,
    %144 = vector.broadcast %4 : vector<64x1xf32> to vector<64x2xf32>
    %145 = arith.mulf %121, %144 : vector<64x2xf32>
    %146 = vector.broadcast %7 : vector<64x1xf32> to vector<64x2xf32>
    %147 = arith.mulf %114, %146 : vector<64x2xf32>
    %148 = arith.addf %145, %147 : vector<64x2xf32>
    %149 = vector.broadcast %10 : vector<64x1xf32> to vector<64x2xf32>
    %150 = arith.addf %148, %149 : vector<64x2xf32>
    %c1_29 = arith.constant 1 : index
    %c0_30 = arith.constant 0 : index
    %c0_31 = arith.constant 0 : index
    %151 = vector.load %arg11[%c1_29, %c0_30, %c0_31] : memref<8x64x2xf32, #tpu.memory_space<vmem>>, vector<1x64x2xf32>
    %152 = vector.shape_cast %151 : vector<1x64x2xf32> to vector<64x2xf32>
    %153 = vector.shape_cast %150 : vector<64x2xf32> to vector<1x64x2xf32>
    tpu.vector_store %arg11[%c1_29, %c0_30, %c0_31], %153 {strides = array<i32>} : memref<8x64x2xf32, #tpu.memory_space<vmem>>, vector<1x64x2xf32>,
    %154 = vector.broadcast %5 : vector<64x1xf32> to vector<64x2xf32>
    %155 = arith.mulf %121, %154 : vector<64x2xf32>
    %156 = vector.broadcast %8 : vector<64x1xf32> to vector<64x2xf32>
    %157 = arith.mulf %114, %156 : vector<64x2xf32>
    %158 = arith.addf %155, %157 : vector<64x2xf32>
    %159 = vector.broadcast %11 : vector<64x1xf32> to vector<64x2xf32>
    %160 = arith.addf %158, %159 : vector<64x2xf32>
    %c1_32 = arith.constant 1 : index
    %c0_33 = arith.constant 0 : index
    %c0_34 = arith.constant 0 : index
    %161 = vector.load %arg12[%c1_32, %c0_33, %c0_34] : memref<8x64x2xf32, #tpu.memory_space<vmem>>, vector<1x64x2xf32>
    %162 = vector.shape_cast %161 : vector<1x64x2xf32> to vector<64x2xf32>
    %163 = vector.shape_cast %160 : vector<64x2xf32> to vector<1x64x2xf32>
    tpu.vector_store %arg12[%c1_32, %c0_33, %c0_34], %163 {strides = array<i32>} : memref<8x64x2xf32, #tpu.memory_space<vmem>>, vector<1x64x2xf32>,
    %c2 = arith.constant 2 : index
    %c0_35 = arith.constant 0 : index
    %c0_36 = arith.constant 0 : index
    %164 = vector.load %arg1[%c2, %c0_35, %c0_36] : memref<8x6x2xf32, #tpu.memory_space<vmem>>, vector<1x6x2xf32>
    %165 = vector.shape_cast %164 : vector<1x6x2xf32> to vector<6x2xf32>
    %166 = vector.extract_strided_slice %165 {offsets = [0, 0], sizes = [1, 2], strides = [1, 1]} : vector<6x2xf32> to vector<1x2xf32>
    %167 = arith.cmpf one, %166, %166 : vector<1x2xf32>
    %168 = vector.extract_strided_slice %165 {offsets = [0, 0], sizes = [1, 2], strides = [1, 1]} : vector<6x2xf32> to vector<1x2xf32>
    %cst_37 = arith.constant -1.000000e+00 : f32
    %169 = vector.broadcast %cst_37 : f32 to vector<1x2xf32>
    %170 = arith.select %167, %169, %168 : vector<1x2xi1>, vector<1x2xf32>
    %171 = vector.extract_strided_slice %165 {offsets = [3, 0], sizes = [1, 2], strides = [1, 1]} : vector<6x2xf32> to vector<1x2xf32>
    %172 = arith.cmpf one, %171, %171 : vector<1x2xf32>
    %173 = vector.extract_strided_slice %165 {offsets = [3, 0], sizes = [1, 2], strides = [1, 1]} : vector<6x2xf32> to vector<1x2xf32>
    %cst_38 = arith.constant -1.000000e+00 : f32
    %174 = vector.broadcast %cst_38 : f32 to vector<1x2xf32>
    %175 = arith.select %172, %174, %173 : vector<1x2xi1>, vector<1x2xf32>
    %176 = vector.extract_strided_slice %165 {offsets = [1, 0], sizes = [1, 2], strides = [1, 1]} : vector<6x2xf32> to vector<1x2xf32>
    %177 = vector.extract_strided_slice %165 {offsets = [2, 0], sizes = [1, 2], strides = [1, 1]} : vector<6x2xf32> to vector<1x2xf32>
    %178 = vector.extract_strided_slice %165 {offsets = [4, 0], sizes = [1, 2], strides = [1, 1]} : vector<6x2xf32> to vector<1x2xf32>
    %179 = vector.extract_strided_slice %165 {offsets = [5, 0], sizes = [1, 2], strides = [1, 1]} : vector<6x2xf32> to vector<1x2xf32>
    %180 = vector.shape_cast %177 : vector<1x2xf32> to vector<1x2xf32>
    %181 = vector.broadcast %180 : vector<1x2xf32> to vector<32x2xf32>
    %182 = vector.shape_cast %179 : vector<1x2xf32> to vector<1x2xf32>
    %183 = vector.broadcast %182 : vector<1x2xf32> to vector<32x2xf32>
    %184 = tpu.concatenate %181, %183 in 0 : vector<32x2xf32>, vector<32x2xf32> -> vector<64x2xf32>
    %185 = vector.shape_cast %176 : vector<1x2xf32> to vector<1x2xf32>
    %186 = vector.broadcast %185 : vector<1x2xf32> to vector<32x2xf32>
    %187 = vector.shape_cast %178 : vector<1x2xf32> to vector<1x2xf32>
    %188 = vector.broadcast %187 : vector<1x2xf32> to vector<32x2xf32>
    %189 = tpu.concatenate %186, %188 in 0 : vector<32x2xf32>, vector<32x2xf32> -> vector<64x2xf32>
    %190 = arith.mulf %176, %170 : vector<1x2xf32>
    %191 = arith.mulf %178, %175 : vector<1x2xf32>
    %192 = vector.shape_cast %190 : vector<1x2xf32> to vector<1x2xf32>
    %193 = vector.broadcast %192 : vector<1x2xf32> to vector<32x2xf32>
    %194 = vector.shape_cast %191 : vector<1x2xf32> to vector<1x2xf32>
    %195 = vector.broadcast %194 : vector<1x2xf32> to vector<32x2xf32>
    %196 = tpu.concatenate %193, %195 in 0 : vector<32x2xf32>, vector<32x2xf32> -> vector<64x2xf32>
    %197 = vector.broadcast %1 : vector<64x1xf32> to vector<64x2xf32>
    %198 = arith.mulf %184, %197 : vector<64x2xf32>
    %199 = vector.broadcast %2 : vector<64x1xf32> to vector<64x2xf32>
    %200 = arith.addf %198, %199 : vector<64x2xf32>
    %201 = arith.negf %200 : vector<64x2xf32>
    %202 = math.exp %201 : vector<64x2xf32>
    %cst_39 = arith.constant 1.000000e+00 : f32
    %203 = vector.broadcast %cst_39 : f32 to vector<64x2xf32>
    %204 = arith.addf %203, %202 : vector<64x2xf32>
    %205 = arith.divf %203, %204 : vector<64x2xf32>
    %c2_40 = arith.constant 2 : index
    %c0_41 = arith.constant 0 : index
    %c0_42 = arith.constant 0 : index
    %206 = vector.load %arg9[%c2_40, %c0_41, %c0_42] : memref<8x64x2xf32, #tpu.memory_space<vmem>>, vector<1x64x2xf32>
    %207 = vector.shape_cast %206 : vector<1x64x2xf32> to vector<64x2xf32>
    %208 = vector.shape_cast %205 : vector<64x2xf32> to vector<1x64x2xf32>
    tpu.vector_store %arg9[%c2_40, %c0_41, %c0_42], %208 {strides = array<i32>} : memref<8x64x2xf32, #tpu.memory_space<vmem>>, vector<1x64x2xf32>,
    %209 = vector.broadcast %3 : vector<64x1xf32> to vector<64x2xf32>
    %210 = arith.mulf %196, %209 : vector<64x2xf32>
    %211 = vector.broadcast %6 : vector<64x1xf32> to vector<64x2xf32>
    %212 = arith.mulf %189, %211 : vector<64x2xf32>
    %213 = arith.addf %210, %212 : vector<64x2xf32>
    %214 = vector.broadcast %9 : vector<64x1xf32> to vector<64x2xf32>
    %215 = arith.addf %213, %214 : vector<64x2xf32>
    %c2_43 = arith.constant 2 : index
    %c0_44 = arith.constant 0 : index
    %c0_45 = arith.constant 0 : index
    %216 = vector.load %arg10[%c2_43, %c0_44, %c0_45] : memref<8x64x2xf32, #tpu.memory_space<vmem>>, vector<1x64x2xf32>
    %217 = vector.shape_cast %216 : vector<1x64x2xf32> to vector<64x2xf32>
    %218 = vector.shape_cast %215 : vector<64x2xf32> to vector<1x64x2xf32>
    tpu.vector_store %arg10[%c2_43, %c0_44, %c0_45], %218 {strides = array<i32>} : memref<8x64x2xf32, #tpu.memory_space<vmem>>, vector<1x64x2xf32>,
    %219 = vector.broadcast %4 : vector<64x1xf32> to vector<64x2xf32>
    %220 = arith.mulf %196, %219 : vector<64x2xf32>
    %221 = vector.broadcast %7 : vector<64x1xf32> to vector<64x2xf32>
    %222 = arith.mulf %189, %221 : vector<64x2xf32>
    %223 = arith.addf %220, %222 : vector<64x2xf32>
    %224 = vector.broadcast %10 : vector<64x1xf32> to vector<64x2xf32>
    %225 = arith.addf %223, %224 : vector<64x2xf32>
    %c2_46 = arith.constant 2 : index
    %c0_47 = arith.constant 0 : index
    %c0_48 = arith.constant 0 : index
    %226 = vector.load %arg11[%c2_46, %c0_47, %c0_48] : memref<8x64x2xf32, #tpu.memory_space<vmem>>, vector<1x64x2xf32>
    %227 = vector.shape_cast %226 : vector<1x64x2xf32> to vector<64x2xf32>
    %228 = vector.shape_cast %225 : vector<64x2xf32> to vector<1x64x2xf32>
    tpu.vector_store %arg11[%c2_46, %c0_47, %c0_48], %228 {strides = array<i32>} : memref<8x64x2xf32, #tpu.memory_space<vmem>>, vector<1x64x2xf32>,
    %229 = vector.broadcast %5 : vector<64x1xf32> to vector<64x2xf32>
    %230 = arith.mulf %196, %229 : vector<64x2xf32>
    %231 = vector.broadcast %8 : vector<64x1xf32> to vector<64x2xf32>
    %232 = arith.mulf %189, %231 : vector<64x2xf32>
    %233 = arith.addf %230, %232 : vector<64x2xf32>
    %234 = vector.broadcast %11 : vector<64x1xf32> to vector<64x2xf32>
    %235 = arith.addf %233, %234 : vector<64x2xf32>
    %c2_49 = arith.constant 2 : index
    %c0_50 = arith.constant 0 : index
    %c0_51 = arith.constant 0 : index
    %236 = vector.load %arg12[%c2_49, %c0_50, %c0_51] : memref<8x64x2xf32, #tpu.memory_space<vmem>>, vector<1x64x2xf32>
    %237 = vector.shape_cast %236 : vector<1x64x2xf32> to vector<64x2xf32>
    %238 = vector.shape_cast %235 : vector<64x2xf32> to vector<1x64x2xf32>
    tpu.vector_store %arg12[%c2_49, %c0_50, %c0_51], %238 {strides = array<i32>} : memref<8x64x2xf32, #tpu.memory_space<vmem>>, vector<1x64x2xf32>,
    %c3 = arith.constant 3 : index
    %c0_52 = arith.constant 0 : index
    %c0_53 = arith.constant 0 : index
    %239 = vector.load %arg1[%c3, %c0_52, %c0_53] : memref<8x6x2xf32, #tpu.memory_space<vmem>>, vector<1x6x2xf32>
    %240 = vector.shape_cast %239 : vector<1x6x2xf32> to vector<6x2xf32>
    %241 = vector.extract_strided_slice %240 {offsets = [0, 0], sizes = [1, 2], strides = [1, 1]} : vector<6x2xf32> to vector<1x2xf32>
    %242 = arith.cmpf one, %241, %241 : vector<1x2xf32>
    %243 = vector.extract_strided_slice %240 {offsets = [0, 0], sizes = [1, 2], strides = [1, 1]} : vector<6x2xf32> to vector<1x2xf32>
    %cst_54 = arith.constant -1.000000e+00 : f32
    %244 = vector.broadcast %cst_54 : f32 to vector<1x2xf32>
    %245 = arith.select %242, %244, %243 : vector<1x2xi1>, vector<1x2xf32>
    %246 = vector.extract_strided_slice %240 {offsets = [3, 0], sizes = [1, 2], strides = [1, 1]} : vector<6x2xf32> to vector<1x2xf32>
    %247 = arith.cmpf one, %246, %246 : vector<1x2xf32>
    %248 = vector.extract_strided_slice %240 {offsets = [3, 0], sizes = [1, 2], strides = [1, 1]} : vector<6x2xf32> to vector<1x2xf32>
    %cst_55 = arith.constant -1.000000e+00 : f32
    %249 = vector.broadcast %cst_55 : f32 to vector<1x2xf32>
    %250 = arith.select %247, %249, %248 : vector<1x2xi1>, vector<1x2xf32>
    %251 = vector.extract_strided_slice %240 {offsets = [1, 0], sizes = [1, 2], strides = [1, 1]} : vector<6x2xf32> to vector<1x2xf32>
    %252 = vector.extract_strided_slice %240 {offsets = [2, 0], sizes = [1, 2], strides = [1, 1]} : vector<6x2xf32> to vector<1x2xf32>
    %253 = vector.extract_strided_slice %240 {offsets = [4, 0], sizes = [1, 2], strides = [1, 1]} : vector<6x2xf32> to vector<1x2xf32>
    %254 = vector.extract_strided_slice %240 {offsets = [5, 0], sizes = [1, 2], strides = [1, 1]} : vector<6x2xf32> to vector<1x2xf32>
    %255 = vector.shape_cast %252 : vector<1x2xf32> to vector<1x2xf32>
    %256 = vector.broadcast %255 : vector<1x2xf32> to vector<32x2xf32>
    %257 = vector.shape_cast %254 : vector<1x2xf32> to vector<1x2xf32>
    %258 = vector.broadcast %257 : vector<1x2xf32> to vector<32x2xf32>
    %259 = tpu.concatenate %256, %258 in 0 : vector<32x2xf32>, vector<32x2xf32> -> vector<64x2xf32>
    %260 = vector.shape_cast %251 : vector<1x2xf32> to vector<1x2xf32>
    %261 = vector.broadcast %260 : vector<1x2xf32> to vector<32x2xf32>
    %262 = vector.shape_cast %253 : vector<1x2xf32> to vector<1x2xf32>
    %263 = vector.broadcast %262 : vector<1x2xf32> to vector<32x2xf32>
    %264 = tpu.concatenate %261, %263 in 0 : vector<32x2xf32>, vector<32x2xf32> -> vector<64x2xf32>
    %265 = arith.mulf %251, %245 : vector<1x2xf32>
    %266 = arith.mulf %253, %250 : vector<1x2xf32>
    %267 = vector.shape_cast %265 : vector<1x2xf32> to vector<1x2xf32>
    %268 = vector.broadcast %267 : vector<1x2xf32> to vector<32x2xf32>
    %269 = vector.shape_cast %266 : vector<1x2xf32> to vector<1x2xf32>
    %270 = vector.broadcast %269 : vector<1x2xf32> to vector<32x2xf32>
    %271 = tpu.concatenate %268, %270 in 0 : vector<32x2xf32>, vector<32x2xf32> -> vector<64x2xf32>
    %272 = vector.broadcast %1 : vector<64x1xf32> to vector<64x2xf32>
    %273 = arith.mulf %259, %272 : vector<64x2xf32>
    %274 = vector.broadcast %2 : vector<64x1xf32> to vector<64x2xf32>
    %275 = arith.addf %273, %274 : vector<64x2xf32>
    %276 = arith.negf %275 : vector<64x2xf32>
    %277 = math.exp %276 : vector<64x2xf32>
    %cst_56 = arith.constant 1.000000e+00 : f32
    %278 = vector.broadcast %cst_56 : f32 to vector<64x2xf32>
    %279 = arith.addf %278, %277 : vector<64x2xf32>
    %280 = arith.divf %278, %279 : vector<64x2xf32>
    %c3_57 = arith.constant 3 : index
    %c0_58 = arith.constant 0 : index
    %c0_59 = arith.constant 0 : index
    %281 = vector.load %arg9[%c3_57, %c0_58, %c0_59] : memref<8x64x2xf32, #tpu.memory_space<vmem>>, vector<1x64x2xf32>
    %282 = vector.shape_cast %281 : vector<1x64x2xf32> to vector<64x2xf32>
    %283 = vector.shape_cast %280 : vector<64x2xf32> to vector<1x64x2xf32>
    tpu.vector_store %arg9[%c3_57, %c0_58, %c0_59], %283 {strides = array<i32>} : memref<8x64x2xf32, #tpu.memory_space<vmem>>, vector<1x64x2xf32>,
    %284 = vector.broadcast %3 : vector<64x1xf32> to vector<64x2xf32>
    %285 = arith.mulf %271, %284 : vector<64x2xf32>
    %286 = vector.broadcast %6 : vector<64x1xf32> to vector<64x2xf32>
    %287 = arith.mulf %264, %286 : vector<64x2xf32>
    %288 = arith.addf %285, %287 : vector<64x2xf32>
    %289 = vector.broadcast %9 : vector<64x1xf32> to vector<64x2xf32>
    %290 = arith.addf %288, %289 : vector<64x2xf32>
    %c3_60 = arith.constant 3 : index
    %c0_61 = arith.constant 0 : index
    %c0_62 = arith.constant 0 : index
    %291 = vector.load %arg10[%c3_60, %c0_61, %c0_62] : memref<8x64x2xf32, #tpu.memory_space<vmem>>, vector<1x64x2xf32>
    %292 = vector.shape_cast %291 : vector<1x64x2xf32> to vector<64x2xf32>
    %293 = vector.shape_cast %290 : vector<64x2xf32> to vector<1x64x2xf32>
    tpu.vector_store %arg10[%c3_60, %c0_61, %c0_62], %293 {strides = array<i32>} : memref<8x64x2xf32, #tpu.memory_space<vmem>>, vector<1x64x2xf32>,
    %294 = vector.broadcast %4 : vector<64x1xf32> to vector<64x2xf32>
    %295 = arith.mulf %271, %294 : vector<64x2xf32>
    %296 = vector.broadcast %7 : vector<64x1xf32> to vector<64x2xf32>
    %297 = arith.mulf %264, %296 : vector<64x2xf32>
    %298 = arith.addf %295, %297 : vector<64x2xf32>
    %299 = vector.broadcast %10 : vector<64x1xf32> to vector<64x2xf32>
    %300 = arith.addf %298, %299 : vector<64x2xf32>
    %c3_63 = arith.constant 3 : index
    %c0_64 = arith.constant 0 : index
    %c0_65 = arith.constant 0 : index
    %301 = vector.load %arg11[%c3_63, %c0_64, %c0_65] : memref<8x64x2xf32, #tpu.memory_space<vmem>>, vector<1x64x2xf32>
    %302 = vector.shape_cast %301 : vector<1x64x2xf32> to vector<64x2xf32>
    %303 = vector.shape_cast %300 : vector<64x2xf32> to vector<1x64x2xf32>
    tpu.vector_store %arg11[%c3_63, %c0_64, %c0_65], %303 {strides = array<i32>} : memref<8x64x2xf32, #tpu.memory_space<vmem>>, vector<1x64x2xf32>,
    %304 = vector.broadcast %5 : vector<64x1xf32> to vector<64x2xf32>
    %305 = arith.mulf %271, %304 : vector<64x2xf32>
    %306 = vector.broadcast %8 : vector<64x1xf32> to vector<64x2xf32>
    %307 = arith.mulf %264, %306 : vector<64x2xf32>
    %308 = arith.addf %305, %307 : vector<64x2xf32>
    %309 = vector.broadcast %11 : vector<64x1xf32> to vector<64x2xf32>
    %310 = arith.addf %308, %309 : vector<64x2xf32>
    %c3_66 = arith.constant 3 : index
    %c0_67 = arith.constant 0 : index
    %c0_68 = arith.constant 0 : index
    %311 = vector.load %arg12[%c3_66, %c0_67, %c0_68] : memref<8x64x2xf32, #tpu.memory_space<vmem>>, vector<1x64x2xf32>
    %312 = vector.shape_cast %311 : vector<1x64x2xf32> to vector<64x2xf32>
    %313 = vector.shape_cast %310 : vector<64x2xf32> to vector<1x64x2xf32>
    tpu.vector_store %arg12[%c3_66, %c0_67, %c0_68], %313 {strides = array<i32>} : memref<8x64x2xf32, #tpu.memory_space<vmem>>, vector<1x64x2xf32>,
    %c4 = arith.constant 4 : index
    %c0_69 = arith.constant 0 : index
    %c0_70 = arith.constant 0 : index
    %314 = vector.load %arg1[%c4, %c0_69, %c0_70] : memref<8x6x2xf32, #tpu.memory_space<vmem>>, vector<1x6x2xf32>
    %315 = vector.shape_cast %314 : vector<1x6x2xf32> to vector<6x2xf32>
    %316 = vector.extract_strided_slice %315 {offsets = [0, 0], sizes = [1, 2], strides = [1, 1]} : vector<6x2xf32> to vector<1x2xf32>
    %317 = arith.cmpf one, %316, %316 : vector<1x2xf32>
    %318 = vector.extract_strided_slice %315 {offsets = [0, 0], sizes = [1, 2], strides = [1, 1]} : vector<6x2xf32> to vector<1x2xf32>
    %cst_71 = arith.constant -1.000000e+00 : f32
    %319 = vector.broadcast %cst_71 : f32 to vector<1x2xf32>
    %320 = arith.select %317, %319, %318 : vector<1x2xi1>, vector<1x2xf32>
    %321 = vector.extract_strided_slice %315 {offsets = [3, 0], sizes = [1, 2], strides = [1, 1]} : vector<6x2xf32> to vector<1x2xf32>
    %322 = arith.cmpf one, %321, %321 : vector<1x2xf32>
    %323 = vector.extract_strided_slice %315 {offsets = [3, 0], sizes = [1, 2], strides = [1, 1]} : vector<6x2xf32> to vector<1x2xf32>
    %cst_72 = arith.constant -1.000000e+00 : f32
    %324 = vector.broadcast %cst_72 : f32 to vector<1x2xf32>
    %325 = arith.select %322, %324, %323 : vector<1x2xi1>, vector<1x2xf32>
    %326 = vector.extract_strided_slice %315 {offsets = [1, 0], sizes = [1, 2], strides = [1, 1]} : vector<6x2xf32> to vector<1x2xf32>
    %327 = vector.extract_strided_slice %315 {offsets = [2, 0], sizes = [1, 2], strides = [1, 1]} : vector<6x2xf32> to vector<1x2xf32>
    %328 = vector.extract_strided_slice %315 {offsets = [4, 0], sizes = [1, 2], strides = [1, 1]} : vector<6x2xf32> to vector<1x2xf32>
    %329 = vector.extract_strided_slice %315 {offsets = [5, 0], sizes = [1, 2], strides = [1, 1]} : vector<6x2xf32> to vector<1x2xf32>
    %330 = vector.shape_cast %327 : vector<1x2xf32> to vector<1x2xf32>
    %331 = vector.broadcast %330 : vector<1x2xf32> to vector<32x2xf32>
    %332 = vector.shape_cast %329 : vector<1x2xf32> to vector<1x2xf32>
    %333 = vector.broadcast %332 : vector<1x2xf32> to vector<32x2xf32>
    %334 = tpu.concatenate %331, %333 in 0 : vector<32x2xf32>, vector<32x2xf32> -> vector<64x2xf32>
    %335 = vector.shape_cast %326 : vector<1x2xf32> to vector<1x2xf32>
    %336 = vector.broadcast %335 : vector<1x2xf32> to vector<32x2xf32>
    %337 = vector.shape_cast %328 : vector<1x2xf32> to vector<1x2xf32>
    %338 = vector.broadcast %337 : vector<1x2xf32> to vector<32x2xf32>
    %339 = tpu.concatenate %336, %338 in 0 : vector<32x2xf32>, vector<32x2xf32> -> vector<64x2xf32>
    %340 = arith.mulf %326, %320 : vector<1x2xf32>
    %341 = arith.mulf %328, %325 : vector<1x2xf32>
    %342 = vector.shape_cast %340 : vector<1x2xf32> to vector<1x2xf32>
    %343 = vector.broadcast %342 : vector<1x2xf32> to vector<32x2xf32>
    %344 = vector.shape_cast %341 : vector<1x2xf32> to vector<1x2xf32>
    %345 = vector.broadcast %344 : vector<1x2xf32> to vector<32x2xf32>
    %346 = tpu.concatenate %343, %345 in 0 : vector<32x2xf32>, vector<32x2xf32> -> vector<64x2xf32>
    %347 = vector.broadcast %1 : vector<64x1xf32> to vector<64x2xf32>
    %348 = arith.mulf %334, %347 : vector<64x2xf32>
    %349 = vector.broadcast %2 : vector<64x1xf32> to vector<64x2xf32>
    %350 = arith.addf %348, %349 : vector<64x2xf32>
    %351 = arith.negf %350 : vector<64x2xf32>
    %352 = math.exp %351 : vector<64x2xf32>
    %cst_73 = arith.constant 1.000000e+00 : f32
    %353 = vector.broadcast %cst_73 : f32 to vector<64x2xf32>
    %354 = arith.addf %353, %352 : vector<64x2xf32>
    %355 = arith.divf %353, %354 : vector<64x2xf32>
    %c4_74 = arith.constant 4 : index
    %c0_75 = arith.constant 0 : index
    %c0_76 = arith.constant 0 : index
    %356 = vector.load %arg9[%c4_74, %c0_75, %c0_76] : memref<8x64x2xf32, #tpu.memory_space<vmem>>, vector<1x64x2xf32>
    %357 = vector.shape_cast %356 : vector<1x64x2xf32> to vector<64x2xf32>
    %358 = vector.shape_cast %355 : vector<64x2xf32> to vector<1x64x2xf32>
    tpu.vector_store %arg9[%c4_74, %c0_75, %c0_76], %358 {strides = array<i32>} : memref<8x64x2xf32, #tpu.memory_space<vmem>>, vector<1x64x2xf32>,
    %359 = vector.broadcast %3 : vector<64x1xf32> to vector<64x2xf32>
    %360 = arith.mulf %346, %359 : vector<64x2xf32>
    %361 = vector.broadcast %6 : vector<64x1xf32> to vector<64x2xf32>
    %362 = arith.mulf %339, %361 : vector<64x2xf32>
    %363 = arith.addf %360, %362 : vector<64x2xf32>
    %364 = vector.broadcast %9 : vector<64x1xf32> to vector<64x2xf32>
    %365 = arith.addf %363, %364 : vector<64x2xf32>
    %c4_77 = arith.constant 4 : index
    %c0_78 = arith.constant 0 : index
    %c0_79 = arith.constant 0 : index
    %366 = vector.load %arg10[%c4_77, %c0_78, %c0_79] : memref<8x64x2xf32, #tpu.memory_space<vmem>>, vector<1x64x2xf32>
    %367 = vector.shape_cast %366 : vector<1x64x2xf32> to vector<64x2xf32>
    %368 = vector.shape_cast %365 : vector<64x2xf32> to vector<1x64x2xf32>
    tpu.vector_store %arg10[%c4_77, %c0_78, %c0_79], %368 {strides = array<i32>} : memref<8x64x2xf32, #tpu.memory_space<vmem>>, vector<1x64x2xf32>,
    %369 = vector.broadcast %4 : vector<64x1xf32> to vector<64x2xf32>
    %370 = arith.mulf %346, %369 : vector<64x2xf32>
    %371 = vector.broadcast %7 : vector<64x1xf32> to vector<64x2xf32>
    %372 = arith.mulf %339, %371 : vector<64x2xf32>
    %373 = arith.addf %370, %372 : vector<64x2xf32>
    %374 = vector.broadcast %10 : vector<64x1xf32> to vector<64x2xf32>
    %375 = arith.addf %373, %374 : vector<64x2xf32>
    %c4_80 = arith.constant 4 : index
    %c0_81 = arith.constant 0 : index
    %c0_82 = arith.constant 0 : index
    %376 = vector.load %arg11[%c4_80, %c0_81, %c0_82] : memref<8x64x2xf32, #tpu.memory_space<vmem>>, vector<1x64x2xf32>
    %377 = vector.shape_cast %376 : vector<1x64x2xf32> to vector<64x2xf32>
    %378 = vector.shape_cast %375 : vector<64x2xf32> to vector<1x64x2xf32>
    tpu.vector_store %arg11[%c4_80, %c0_81, %c0_82], %378 {strides = array<i32>} : memref<8x64x2xf32, #tpu.memory_space<vmem>>, vector<1x64x2xf32>,
    %379 = vector.broadcast %5 : vector<64x1xf32> to vector<64x2xf32>
    %380 = arith.mulf %346, %379 : vector<64x2xf32>
    %381 = vector.broadcast %8 : vector<64x1xf32> to vector<64x2xf32>
    %382 = arith.mulf %339, %381 : vector<64x2xf32>
    %383 = arith.addf %380, %382 : vector<64x2xf32>
    %384 = vector.broadcast %11 : vector<64x1xf32> to vector<64x2xf32>
    %385 = arith.addf %383, %384 : vector<64x2xf32>
    %c4_83 = arith.constant 4 : index
    %c0_84 = arith.constant 0 : index
    %c0_85 = arith.constant 0 : index
    %386 = vector.load %arg12[%c4_83, %c0_84, %c0_85] : memref<8x64x2xf32, #tpu.memory_space<vmem>>, vector<1x64x2xf32>
    %387 = vector.shape_cast %386 : vector<1x64x2xf32> to vector<64x2xf32>
    %388 = vector.shape_cast %385 : vector<64x2xf32> to vector<1x64x2xf32>
    tpu.vector_store %arg12[%c4_83, %c0_84, %c0_85], %388 {strides = array<i32>} : memref<8x64x2xf32, #tpu.memory_space<vmem>>, vector<1x64x2xf32>,
    %c5 = arith.constant 5 : index
    %c0_86 = arith.constant 0 : index
    %c0_87 = arith.constant 0 : index
    %389 = vector.load %arg1[%c5, %c0_86, %c0_87] : memref<8x6x2xf32, #tpu.memory_space<vmem>>, vector<1x6x2xf32>
    %390 = vector.shape_cast %389 : vector<1x6x2xf32> to vector<6x2xf32>
    %391 = vector.extract_strided_slice %390 {offsets = [0, 0], sizes = [1, 2], strides = [1, 1]} : vector<6x2xf32> to vector<1x2xf32>
    %392 = arith.cmpf one, %391, %391 : vector<1x2xf32>
    %393 = vector.extract_strided_slice %390 {offsets = [0, 0], sizes = [1, 2], strides = [1, 1]} : vector<6x2xf32> to vector<1x2xf32>
    %cst_88 = arith.constant -1.000000e+00 : f32
    %394 = vector.broadcast %cst_88 : f32 to vector<1x2xf32>
    %395 = arith.select %392, %394, %393 : vector<1x2xi1>, vector<1x2xf32>
    %396 = vector.extract_strided_slice %390 {offsets = [3, 0], sizes = [1, 2], strides = [1, 1]} : vector<6x2xf32> to vector<1x2xf32>
    %397 = arith.cmpf one, %396, %396 : vector<1x2xf32>
    %398 = vector.extract_strided_slice %390 {offsets = [3, 0], sizes = [1, 2], strides = [1, 1]} : vector<6x2xf32> to vector<1x2xf32>
    %cst_89 = arith.constant -1.000000e+00 : f32
    %399 = vector.broadcast %cst_89 : f32 to vector<1x2xf32>
    %400 = arith.select %397, %399, %398 : vector<1x2xi1>, vector<1x2xf32>
    %401 = vector.extract_strided_slice %390 {offsets = [1, 0], sizes = [1, 2], strides = [1, 1]} : vector<6x2xf32> to vector<1x2xf32>
    %402 = vector.extract_strided_slice %390 {offsets = [2, 0], sizes = [1, 2], strides = [1, 1]} : vector<6x2xf32> to vector<1x2xf32>
    %403 = vector.extract_strided_slice %390 {offsets = [4, 0], sizes = [1, 2], strides = [1, 1]} : vector<6x2xf32> to vector<1x2xf32>
    %404 = vector.extract_strided_slice %390 {offsets = [5, 0], sizes = [1, 2], strides = [1, 1]} : vector<6x2xf32> to vector<1x2xf32>
    %405 = vector.shape_cast %402 : vector<1x2xf32> to vector<1x2xf32>
    %406 = vector.broadcast %405 : vector<1x2xf32> to vector<32x2xf32>
    %407 = vector.shape_cast %404 : vector<1x2xf32> to vector<1x2xf32>
    %408 = vector.broadcast %407 : vector<1x2xf32> to vector<32x2xf32>
    %409 = tpu.concatenate %406, %408 in 0 : vector<32x2xf32>, vector<32x2xf32> -> vector<64x2xf32>
    %410 = vector.shape_cast %401 : vector<1x2xf32> to vector<1x2xf32>
    %411 = vector.broadcast %410 : vector<1x2xf32> to vector<32x2xf32>
    %412 = vector.shape_cast %403 : vector<1x2xf32> to vector<1x2xf32>
    %413 = vector.broadcast %412 : vector<1x2xf32> to vector<32x2xf32>
    %414 = tpu.concatenate %411, %413 in 0 : vector<32x2xf32>, vector<32x2xf32> -> vector<64x2xf32>
    %415 = arith.mulf %401, %395 : vector<1x2xf32>
    %416 = arith.mulf %403, %400 : vector<1x2xf32>
    %417 = vector.shape_cast %415 : vector<1x2xf32> to vector<1x2xf32>
    %418 = vector.broadcast %417 : vector<1x2xf32> to vector<32x2xf32>
    %419 = vector.shape_cast %416 : vector<1x2xf32> to vector<1x2xf32>
    %420 = vector.broadcast %419 : vector<1x2xf32> to vector<32x2xf32>
    %421 = tpu.concatenate %418, %420 in 0 : vector<32x2xf32>, vector<32x2xf32> -> vector<64x2xf32>
    %422 = vector.broadcast %1 : vector<64x1xf32> to vector<64x2xf32>
    %423 = arith.mulf %409, %422 : vector<64x2xf32>
    %424 = vector.broadcast %2 : vector<64x1xf32> to vector<64x2xf32>
    %425 = arith.addf %423, %424 : vector<64x2xf32>
    %426 = arith.negf %425 : vector<64x2xf32>
    %427 = math.exp %426 : vector<64x2xf32>
    %cst_90 = arith.constant 1.000000e+00 : f32
    %428 = vector.broadcast %cst_90 : f32 to vector<64x2xf32>
    %429 = arith.addf %428, %427 : vector<64x2xf32>
    %430 = arith.divf %428, %429 : vector<64x2xf32>
    %c5_91 = arith.constant 5 : index
    %c0_92 = arith.constant 0 : index
    %c0_93 = arith.constant 0 : index
    %431 = vector.load %arg9[%c5_91, %c0_92, %c0_93] : memref<8x64x2xf32, #tpu.memory_space<vmem>>, vector<1x64x2xf32>
    %432 = vector.shape_cast %431 : vector<1x64x2xf32> to vector<64x2xf32>
    %433 = vector.shape_cast %430 : vector<64x2xf32> to vector<1x64x2xf32>
    tpu.vector_store %arg9[%c5_91, %c0_92, %c0_93], %433 {strides = array<i32>} : memref<8x64x2xf32, #tpu.memory_space<vmem>>, vector<1x64x2xf32>,
    %434 = vector.broadcast %3 : vector<64x1xf32> to vector<64x2xf32>
    %435 = arith.mulf %421, %434 : vector<64x2xf32>
    %436 = vector.broadcast %6 : vector<64x1xf32> to vector<64x2xf32>
    %437 = arith.mulf %414, %436 : vector<64x2xf32>
    %438 = arith.addf %435, %437 : vector<64x2xf32>
    %439 = vector.broadcast %9 : vector<64x1xf32> to vector<64x2xf32>
    %440 = arith.addf %438, %439 : vector<64x2xf32>
    %c5_94 = arith.constant 5 : index
    %c0_95 = arith.constant 0 : index
    %c0_96 = arith.constant 0 : index
    %441 = vector.load %arg10[%c5_94, %c0_95, %c0_96] : memref<8x64x2xf32, #tpu.memory_space<vmem>>, vector<1x64x2xf32>
    %442 = vector.shape_cast %441 : vector<1x64x2xf32> to vector<64x2xf32>
    %443 = vector.shape_cast %440 : vector<64x2xf32> to vector<1x64x2xf32>
    tpu.vector_store %arg10[%c5_94, %c0_95, %c0_96], %443 {strides = array<i32>} : memref<8x64x2xf32, #tpu.memory_space<vmem>>, vector<1x64x2xf32>,
    %444 = vector.broadcast %4 : vector<64x1xf32> to vector<64x2xf32>
    %445 = arith.mulf %421, %444 : vector<64x2xf32>
    %446 = vector.broadcast %7 : vector<64x1xf32> to vector<64x2xf32>
    %447 = arith.mulf %414, %446 : vector<64x2xf32>
    %448 = arith.addf %445, %447 : vector<64x2xf32>
    %449 = vector.broadcast %10 : vector<64x1xf32> to vector<64x2xf32>
    %450 = arith.addf %448, %449 : vector<64x2xf32>
    %c5_97 = arith.constant 5 : index
    %c0_98 = arith.constant 0 : index
    %c0_99 = arith.constant 0 : index
    %451 = vector.load %arg11[%c5_97, %c0_98, %c0_99] : memref<8x64x2xf32, #tpu.memory_space<vmem>>, vector<1x64x2xf32>
    %452 = vector.shape_cast %451 : vector<1x64x2xf32> to vector<64x2xf32>
    %453 = vector.shape_cast %450 : vector<64x2xf32> to vector<1x64x2xf32>
    tpu.vector_store %arg11[%c5_97, %c0_98, %c0_99], %453 {strides = array<i32>} : memref<8x64x2xf32, #tpu.memory_space<vmem>>, vector<1x64x2xf32>,
    %454 = vector.broadcast %5 : vector<64x1xf32> to vector<64x2xf32>
    %455 = arith.mulf %421, %454 : vector<64x2xf32>
    %456 = vector.broadcast %8 : vector<64x1xf32> to vector<64x2xf32>
    %457 = arith.mulf %414, %456 : vector<64x2xf32>
    %458 = arith.addf %455, %457 : vector<64x2xf32>
    %459 = vector.broadcast %11 : vector<64x1xf32> to vector<64x2xf32>
    %460 = arith.addf %458, %459 : vector<64x2xf32>
    %c5_100 = arith.constant 5 : index
    %c0_101 = arith.constant 0 : index
    %c0_102 = arith.constant 0 : index
    %461 = vector.load %arg12[%c5_100, %c0_101, %c0_102] : memref<8x64x2xf32, #tpu.memory_space<vmem>>, vector<1x64x2xf32>
    %462 = vector.shape_cast %461 : vector<1x64x2xf32> to vector<64x2xf32>
    %463 = vector.shape_cast %460 : vector<64x2xf32> to vector<1x64x2xf32>
    tpu.vector_store %arg12[%c5_100, %c0_101, %c0_102], %463 {strides = array<i32>} : memref<8x64x2xf32, #tpu.memory_space<vmem>>, vector<1x64x2xf32>,
    %c6 = arith.constant 6 : index
    %c0_103 = arith.constant 0 : index
    %c0_104 = arith.constant 0 : index
    %464 = vector.load %arg1[%c6, %c0_103, %c0_104] : memref<8x6x2xf32, #tpu.memory_space<vmem>>, vector<1x6x2xf32>
    %465 = vector.shape_cast %464 : vector<1x6x2xf32> to vector<6x2xf32>
    %466 = vector.extract_strided_slice %465 {offsets = [0, 0], sizes = [1, 2], strides = [1, 1]} : vector<6x2xf32> to vector<1x2xf32>
    %467 = arith.cmpf one, %466, %466 : vector<1x2xf32>
    %468 = vector.extract_strided_slice %465 {offsets = [0, 0], sizes = [1, 2], strides = [1, 1]} : vector<6x2xf32> to vector<1x2xf32>
    %cst_105 = arith.constant -1.000000e+00 : f32
    %469 = vector.broadcast %cst_105 : f32 to vector<1x2xf32>
    %470 = arith.select %467, %469, %468 : vector<1x2xi1>, vector<1x2xf32>
    %471 = vector.extract_strided_slice %465 {offsets = [3, 0], sizes = [1, 2], strides = [1, 1]} : vector<6x2xf32> to vector<1x2xf32>
    %472 = arith.cmpf one, %471, %471 : vector<1x2xf32>
    %473 = vector.extract_strided_slice %465 {offsets = [3, 0], sizes = [1, 2], strides = [1, 1]} : vector<6x2xf32> to vector<1x2xf32>
    %cst_106 = arith.constant -1.000000e+00 : f32
    %474 = vector.broadcast %cst_106 : f32 to vector<1x2xf32>
    %475 = arith.select %472, %474, %473 : vector<1x2xi1>, vector<1x2xf32>
    %476 = vector.extract_strided_slice %465 {offsets = [1, 0], sizes = [1, 2], strides = [1, 1]} : vector<6x2xf32> to vector<1x2xf32>
    %477 = vector.extract_strided_slice %465 {offsets = [2, 0], sizes = [1, 2], strides = [1, 1]} : vector<6x2xf32> to vector<1x2xf32>
    %478 = vector.extract_strided_slice %465 {offsets = [4, 0], sizes = [1, 2], strides = [1, 1]} : vector<6x2xf32> to vector<1x2xf32>
    %479 = vector.extract_strided_slice %465 {offsets = [5, 0], sizes = [1, 2], strides = [1, 1]} : vector<6x2xf32> to vector<1x2xf32>
    %480 = vector.shape_cast %477 : vector<1x2xf32> to vector<1x2xf32>
    %481 = vector.broadcast %480 : vector<1x2xf32> to vector<32x2xf32>
    %482 = vector.shape_cast %479 : vector<1x2xf32> to vector<1x2xf32>
    %483 = vector.broadcast %482 : vector<1x2xf32> to vector<32x2xf32>
    %484 = tpu.concatenate %481, %483 in 0 : vector<32x2xf32>, vector<32x2xf32> -> vector<64x2xf32>
    %485 = vector.shape_cast %476 : vector<1x2xf32> to vector<1x2xf32>
    %486 = vector.broadcast %485 : vector<1x2xf32> to vector<32x2xf32>
    %487 = vector.shape_cast %478 : vector<1x2xf32> to vector<1x2xf32>
    %488 = vector.broadcast %487 : vector<1x2xf32> to vector<32x2xf32>
    %489 = tpu.concatenate %486, %488 in 0 : vector<32x2xf32>, vector<32x2xf32> -> vector<64x2xf32>
    %490 = arith.mulf %476, %470 : vector<1x2xf32>
    %491 = arith.mulf %478, %475 : vector<1x2xf32>
    %492 = vector.shape_cast %490 : vector<1x2xf32> to vector<1x2xf32>
    %493 = vector.broadcast %492 : vector<1x2xf32> to vector<32x2xf32>
    %494 = vector.shape_cast %491 : vector<1x2xf32> to vector<1x2xf32>
    %495 = vector.broadcast %494 : vector<1x2xf32> to vector<32x2xf32>
    %496 = tpu.concatenate %493, %495 in 0 : vector<32x2xf32>, vector<32x2xf32> -> vector<64x2xf32>
    %497 = vector.broadcast %1 : vector<64x1xf32> to vector<64x2xf32>
    %498 = arith.mulf %484, %497 : vector<64x2xf32>
    %499 = vector.broadcast %2 : vector<64x1xf32> to vector<64x2xf32>
    %500 = arith.addf %498, %499 : vector<64x2xf32>
    %501 = arith.negf %500 : vector<64x2xf32>
    %502 = math.exp %501 : vector<64x2xf32>
    %cst_107 = arith.constant 1.000000e+00 : f32
    %503 = vector.broadcast %cst_107 : f32 to vector<64x2xf32>
    %504 = arith.addf %503, %502 : vector<64x2xf32>
    %505 = arith.divf %503, %504 : vector<64x2xf32>
    %c6_108 = arith.constant 6 : index
    %c0_109 = arith.constant 0 : index
    %c0_110 = arith.constant 0 : index
    %506 = vector.load %arg9[%c6_108, %c0_109, %c0_110] : memref<8x64x2xf32, #tpu.memory_space<vmem>>, vector<1x64x2xf32>
    %507 = vector.shape_cast %506 : vector<1x64x2xf32> to vector<64x2xf32>
    %508 = vector.shape_cast %505 : vector<64x2xf32> to vector<1x64x2xf32>
    tpu.vector_store %arg9[%c6_108, %c0_109, %c0_110], %508 {strides = array<i32>} : memref<8x64x2xf32, #tpu.memory_space<vmem>>, vector<1x64x2xf32>,
    %509 = vector.broadcast %3 : vector<64x1xf32> to vector<64x2xf32>
    %510 = arith.mulf %496, %509 : vector<64x2xf32>
    %511 = vector.broadcast %6 : vector<64x1xf32> to vector<64x2xf32>
    %512 = arith.mulf %489, %511 : vector<64x2xf32>
    %513 = arith.addf %510, %512 : vector<64x2xf32>
    %514 = vector.broadcast %9 : vector<64x1xf32> to vector<64x2xf32>
    %515 = arith.addf %513, %514 : vector<64x2xf32>
    %c6_111 = arith.constant 6 : index
    %c0_112 = arith.constant 0 : index
    %c0_113 = arith.constant 0 : index
    %516 = vector.load %arg10[%c6_111, %c0_112, %c0_113] : memref<8x64x2xf32, #tpu.memory_space<vmem>>, vector<1x64x2xf32>
    %517 = vector.shape_cast %516 : vector<1x64x2xf32> to vector<64x2xf32>
    %518 = vector.shape_cast %515 : vector<64x2xf32> to vector<1x64x2xf32>
    tpu.vector_store %arg10[%c6_111, %c0_112, %c0_113], %518 {strides = array<i32>} : memref<8x64x2xf32, #tpu.memory_space<vmem>>, vector<1x64x2xf32>,
    %519 = vector.broadcast %4 : vector<64x1xf32> to vector<64x2xf32>
    %520 = arith.mulf %496, %519 : vector<64x2xf32>
    %521 = vector.broadcast %7 : vector<64x1xf32> to vector<64x2xf32>
    %522 = arith.mulf %489, %521 : vector<64x2xf32>
    %523 = arith.addf %520, %522 : vector<64x2xf32>
    %524 = vector.broadcast %10 : vector<64x1xf32> to vector<64x2xf32>
    %525 = arith.addf %523, %524 : vector<64x2xf32>
    %c6_114 = arith.constant 6 : index
    %c0_115 = arith.constant 0 : index
    %c0_116 = arith.constant 0 : index
    %526 = vector.load %arg11[%c6_114, %c0_115, %c0_116] : memref<8x64x2xf32, #tpu.memory_space<vmem>>, vector<1x64x2xf32>
    %527 = vector.shape_cast %526 : vector<1x64x2xf32> to vector<64x2xf32>
    %528 = vector.shape_cast %525 : vector<64x2xf32> to vector<1x64x2xf32>
    tpu.vector_store %arg11[%c6_114, %c0_115, %c0_116], %528 {strides = array<i32>} : memref<8x64x2xf32, #tpu.memory_space<vmem>>, vector<1x64x2xf32>,
    %529 = vector.broadcast %5 : vector<64x1xf32> to vector<64x2xf32>
    %530 = arith.mulf %496, %529 : vector<64x2xf32>
    %531 = vector.broadcast %8 : vector<64x1xf32> to vector<64x2xf32>
    %532 = arith.mulf %489, %531 : vector<64x2xf32>
    %533 = arith.addf %530, %532 : vector<64x2xf32>
    %534 = vector.broadcast %11 : vector<64x1xf32> to vector<64x2xf32>
    %535 = arith.addf %533, %534 : vector<64x2xf32>
    %c6_117 = arith.constant 6 : index
    %c0_118 = arith.constant 0 : index
    %c0_119 = arith.constant 0 : index
    %536 = vector.load %arg12[%c6_117, %c0_118, %c0_119] : memref<8x64x2xf32, #tpu.memory_space<vmem>>, vector<1x64x2xf32>
    %537 = vector.shape_cast %536 : vector<1x64x2xf32> to vector<64x2xf32>
    %538 = vector.shape_cast %535 : vector<64x2xf32> to vector<1x64x2xf32>
    tpu.vector_store %arg12[%c6_117, %c0_118, %c0_119], %538 {strides = array<i32>} : memref<8x64x2xf32, #tpu.memory_space<vmem>>, vector<1x64x2xf32>,
    %c7 = arith.constant 7 : index
    %c0_120 = arith.constant 0 : index
    %c0_121 = arith.constant 0 : index
    %539 = vector.load %arg1[%c7, %c0_120, %c0_121] : memref<8x6x2xf32, #tpu.memory_space<vmem>>, vector<1x6x2xf32>
    %540 = vector.shape_cast %539 : vector<1x6x2xf32> to vector<6x2xf32>
    %541 = vector.extract_strided_slice %540 {offsets = [0, 0], sizes = [1, 2], strides = [1, 1]} : vector<6x2xf32> to vector<1x2xf32>
    %542 = arith.cmpf one, %541, %541 : vector<1x2xf32>
    %543 = vector.extract_strided_slice %540 {offsets = [0, 0], sizes = [1, 2], strides = [1, 1]} : vector<6x2xf32> to vector<1x2xf32>
    %cst_122 = arith.constant -1.000000e+00 : f32
    %544 = vector.broadcast %cst_122 : f32 to vector<1x2xf32>
    %545 = arith.select %542, %544, %543 : vector<1x2xi1>, vector<1x2xf32>
    %546 = vector.extract_strided_slice %540 {offsets = [3, 0], sizes = [1, 2], strides = [1, 1]} : vector<6x2xf32> to vector<1x2xf32>
    %547 = arith.cmpf one, %546, %546 : vector<1x2xf32>
    %548 = vector.extract_strided_slice %540 {offsets = [3, 0], sizes = [1, 2], strides = [1, 1]} : vector<6x2xf32> to vector<1x2xf32>
    %cst_123 = arith.constant -1.000000e+00 : f32
    %549 = vector.broadcast %cst_123 : f32 to vector<1x2xf32>
    %550 = arith.select %547, %549, %548 : vector<1x2xi1>, vector<1x2xf32>
    %551 = vector.extract_strided_slice %540 {offsets = [1, 0], sizes = [1, 2], strides = [1, 1]} : vector<6x2xf32> to vector<1x2xf32>
    %552 = vector.extract_strided_slice %540 {offsets = [2, 0], sizes = [1, 2], strides = [1, 1]} : vector<6x2xf32> to vector<1x2xf32>
    %553 = vector.extract_strided_slice %540 {offsets = [4, 0], sizes = [1, 2], strides = [1, 1]} : vector<6x2xf32> to vector<1x2xf32>
    %554 = vector.extract_strided_slice %540 {offsets = [5, 0], sizes = [1, 2], strides = [1, 1]} : vector<6x2xf32> to vector<1x2xf32>
    %555 = vector.shape_cast %552 : vector<1x2xf32> to vector<1x2xf32>
    %556 = vector.broadcast %555 : vector<1x2xf32> to vector<32x2xf32>
    %557 = vector.shape_cast %554 : vector<1x2xf32> to vector<1x2xf32>
    %558 = vector.broadcast %557 : vector<1x2xf32> to vector<32x2xf32>
    %559 = tpu.concatenate %556, %558 in 0 : vector<32x2xf32>, vector<32x2xf32> -> vector<64x2xf32>
    %560 = vector.shape_cast %551 : vector<1x2xf32> to vector<1x2xf32>
    %561 = vector.broadcast %560 : vector<1x2xf32> to vector<32x2xf32>
    %562 = vector.shape_cast %553 : vector<1x2xf32> to vector<1x2xf32>
    %563 = vector.broadcast %562 : vector<1x2xf32> to vector<32x2xf32>
    %564 = tpu.concatenate %561, %563 in 0 : vector<32x2xf32>, vector<32x2xf32> -> vector<64x2xf32>
    %565 = arith.mulf %551, %545 : vector<1x2xf32>
    %566 = arith.mulf %553, %550 : vector<1x2xf32>
    %567 = vector.shape_cast %565 : vector<1x2xf32> to vector<1x2xf32>
    %568 = vector.broadcast %567 : vector<1x2xf32> to vector<32x2xf32>
    %569 = vector.shape_cast %566 : vector<1x2xf32> to vector<1x2xf32>
    %570 = vector.broadcast %569 : vector<1x2xf32> to vector<32x2xf32>
    %571 = tpu.concatenate %568, %570 in 0 : vector<32x2xf32>, vector<32x2xf32> -> vector<64x2xf32>
    %572 = vector.broadcast %1 : vector<64x1xf32> to vector<64x2xf32>
    %573 = arith.mulf %559, %572 : vector<64x2xf32>
    %574 = vector.broadcast %2 : vector<64x1xf32> to vector<64x2xf32>
    %575 = arith.addf %573, %574 : vector<64x2xf32>
    %576 = arith.negf %575 : vector<64x2xf32>
    %577 = math.exp %576 : vector<64x2xf32>
    %cst_124 = arith.constant 1.000000e+00 : f32
    %578 = vector.broadcast %cst_124 : f32 to vector<64x2xf32>
    %579 = arith.addf %578, %577 : vector<64x2xf32>
    %580 = arith.divf %578, %579 : vector<64x2xf32>
    %c7_125 = arith.constant 7 : index
    %c0_126 = arith.constant 0 : index
    %c0_127 = arith.constant 0 : index
    %581 = vector.load %arg9[%c7_125, %c0_126, %c0_127] : memref<8x64x2xf32, #tpu.memory_space<vmem>>, vector<1x64x2xf32>
    %582 = vector.shape_cast %581 : vector<1x64x2xf32> to vector<64x2xf32>
    %583 = vector.shape_cast %580 : vector<64x2xf32> to vector<1x64x2xf32>
    tpu.vector_store %arg9[%c7_125, %c0_126, %c0_127], %583 {strides = array<i32>} : memref<8x64x2xf32, #tpu.memory_space<vmem>>, vector<1x64x2xf32>,
    %584 = vector.broadcast %3 : vector<64x1xf32> to vector<64x2xf32>
    %585 = arith.mulf %571, %584 : vector<64x2xf32>
    %586 = vector.broadcast %6 : vector<64x1xf32> to vector<64x2xf32>
    %587 = arith.mulf %564, %586 : vector<64x2xf32>
    %588 = arith.addf %585, %587 : vector<64x2xf32>
    %589 = vector.broadcast %9 : vector<64x1xf32> to vector<64x2xf32>
    %590 = arith.addf %588, %589 : vector<64x2xf32>
    %c7_128 = arith.constant 7 : index
    %c0_129 = arith.constant 0 : index
    %c0_130 = arith.constant 0 : index
    %591 = vector.load %arg10[%c7_128, %c0_129, %c0_130] : memref<8x64x2xf32, #tpu.memory_space<vmem>>, vector<1x64x2xf32>
    %592 = vector.shape_cast %591 : vector<1x64x2xf32> to vector<64x2xf32>
    %593 = vector.shape_cast %590 : vector<64x2xf32> to vector<1x64x2xf32>
    tpu.vector_store %arg10[%c7_128, %c0_129, %c0_130], %593 {strides = array<i32>} : memref<8x64x2xf32, #tpu.memory_space<vmem>>, vector<1x64x2xf32>,
    %594 = vector.broadcast %4 : vector<64x1xf32> to vector<64x2xf32>
    %595 = arith.mulf %571, %594 : vector<64x2xf32>
    %596 = vector.broadcast %7 : vector<64x1xf32> to vector<64x2xf32>
    %597 = arith.mulf %564, %596 : vector<64x2xf32>
    %598 = arith.addf %595, %597 : vector<64x2xf32>
    %599 = vector.broadcast %10 : vector<64x1xf32> to vector<64x2xf32>
    %600 = arith.addf %598, %599 : vector<64x2xf32>
    %c7_131 = arith.constant 7 : index
    %c0_132 = arith.constant 0 : index
    %c0_133 = arith.constant 0 : index
    %601 = vector.load %arg11[%c7_131, %c0_132, %c0_133] : memref<8x64x2xf32, #tpu.memory_space<vmem>>, vector<1x64x2xf32>
    %602 = vector.shape_cast %601 : vector<1x64x2xf32> to vector<64x2xf32>
    %603 = vector.shape_cast %600 : vector<64x2xf32> to vector<1x64x2xf32>
    tpu.vector_store %arg11[%c7_131, %c0_132, %c0_133], %603 {strides = array<i32>} : memref<8x64x2xf32, #tpu.memory_space<vmem>>, vector<1x64x2xf32>,
    %604 = vector.broadcast %5 : vector<64x1xf32> to vector<64x2xf32>
    %605 = arith.mulf %571, %604 : vector<64x2xf32>
    %606 = vector.broadcast %8 : vector<64x1xf32> to vector<64x2xf32>
    %607 = arith.mulf %564, %606 : vector<64x2xf32>
    %608 = arith.addf %605, %607 : vector<64x2xf32>
    %609 = vector.broadcast %11 : vector<64x1xf32> to vector<64x2xf32>
    %610 = arith.addf %608, %609 : vector<64x2xf32>
    %c7_134 = arith.constant 7 : index
    %c0_135 = arith.constant 0 : index
    %c0_136 = arith.constant 0 : index
    %611 = vector.load %arg12[%c7_134, %c0_135, %c0_136] : memref<8x64x2xf32, #tpu.memory_space<vmem>>, vector<1x64x2xf32>
    %612 = vector.shape_cast %611 : vector<1x64x2xf32> to vector<64x2xf32>
    %613 = vector.shape_cast %610 : vector<64x2xf32> to vector<1x64x2xf32>
    tpu.vector_store %arg12[%c7_134, %c0_135, %c0_136], %613 {strides = array<i32>} : memref<8x64x2xf32, #tpu.memory_space<vmem>>, vector<1x64x2xf32>,
    %c0_137 = arith.constant 0 : index
    %c0_138 = arith.constant 0 : index
    %614 = vector.load %arg3[%c0_137, %c0_138] : memref<200x64xf32, #tpu.memory_space<vmem>>, vector<200x64xf32>
    %cst_139 = arith.constant 0.000000e+00 : f32
    %615 = vector.broadcast %cst_139 : f32 to vector<64x2xf32>
    %c0_140 = arith.constant 0 : index
    %c0_141 = arith.constant 0 : index
    %c0_142 = arith.constant 0 : index
    %616 = vector.load %arg9[%c0_140, %c0_141, %c0_142] : memref<8x64x2xf32, #tpu.memory_space<vmem>>, vector<1x64x2xf32>
    %617 = vector.shape_cast %616 : vector<1x64x2xf32> to vector<64x2xf32>
    %618 = arith.mulf %615, %617 : vector<64x2xf32>
    %cst_143 = arith.constant dense<0.000000e+00> : vector<200x2xf32>
    %619 = tpu.matmul %614, %618, %cst_143 {dimension_numbers = #tpu.dot_dimension_numbers<[1], [0], [0], [1], [0, 0, 1, 1], [], []>} : vector<200x64xf32>, vector<64x2xf32>, vector<200x2xf32> -> vector<200x2xf32>
    %620 = vector.extract_strided_slice %619 {offsets = [0, 0], sizes = [64, 2], strides = [1, 1]} : vector<200x2xf32> to vector<64x2xf32>
    %621 = vector.extract_strided_slice %619 {offsets = [64, 0], sizes = [64, 2], strides = [1, 1]} : vector<200x2xf32> to vector<64x2xf32>
    %622 = vector.extract_strided_slice %619 {offsets = [128, 0], sizes = [64, 2], strides = [1, 1]} : vector<200x2xf32> to vector<64x2xf32>
    %623 = vector.extract_strided_slice %619 {offsets = [192, 0], sizes = [2, 2], strides = [1, 1]} : vector<200x2xf32> to vector<2x2xf32>
    %624 = vector.broadcast %13 : vector<2x1xf32> to vector<2x2xf32>
    %625 = arith.addf %623, %624 : vector<2x2xf32>
    %c0_144 = arith.constant 0 : index
    %c0_145 = arith.constant 0 : index
    %c0_146 = arith.constant 0 : index
    %626 = vector.load %arg1[%c0_144, %c0_145, %c0_146] : memref<8x6x2xf32, #tpu.memory_space<vmem>>, vector<1x6x2xf32>
    %627 = vector.shape_cast %626 : vector<1x6x2xf32> to vector<6x2xf32>
    %628 = vector.extract_strided_slice %627 {offsets = [1, 0], sizes = [1, 2], strides = [1, 1]} : vector<6x2xf32> to vector<1x2xf32>
    %cst_147 = arith.constant 1.000000e+00 : f32
    %629 = vector.broadcast %cst_147 : f32 to vector<1x2xf32>
    %630 = arith.subf %629, %628 : vector<1x2xf32>
    %631 = vector.extract_strided_slice %625 {offsets = [0, 0], sizes = [1, 2], strides = [1, 1]} : vector<2x2xf32> to vector<1x2xf32>
    %632 = arith.mulf %630, %631 : vector<1x2xf32>
    %633 = vector.extract_strided_slice %627 {offsets = [4, 0], sizes = [1, 2], strides = [1, 1]} : vector<6x2xf32> to vector<1x2xf32>
    %cst_148 = arith.constant 1.000000e+00 : f32
    %634 = vector.broadcast %cst_148 : f32 to vector<1x2xf32>
    %635 = arith.subf %634, %633 : vector<1x2xf32>
    %636 = vector.extract_strided_slice %625 {offsets = [1, 0], sizes = [1, 2], strides = [1, 1]} : vector<2x2xf32> to vector<1x2xf32>
    %637 = arith.mulf %635, %636 : vector<1x2xf32>
    %638 = vector.shape_cast %632 : vector<1x2xf32> to vector<1x2xf32>
    %639 = vector.broadcast %638 : vector<1x2xf32> to vector<32x2xf32>
    %640 = vector.shape_cast %637 : vector<1x2xf32> to vector<1x2xf32>
    %641 = vector.broadcast %640 : vector<1x2xf32> to vector<32x2xf32>
    %642 = tpu.concatenate %639, %641 in 0 : vector<32x2xf32>, vector<32x2xf32> -> vector<64x2xf32>
    %c0_149 = arith.constant 0 : index
    %c0_150 = arith.constant 0 : index
    %c0_151 = arith.constant 0 : index
    %643 = vector.load %arg10[%c0_149, %c0_150, %c0_151] : memref<8x64x2xf32, #tpu.memory_space<vmem>>, vector<1x64x2xf32>
    %644 = vector.shape_cast %643 : vector<1x64x2xf32> to vector<64x2xf32>
    %645 = vector.broadcast %3 : vector<64x1xf32> to vector<64x2xf32>
    %646 = arith.mulf %645, %642 : vector<64x2xf32>
    %647 = arith.addf %644, %646 : vector<64x2xf32>
    %648 = arith.addf %647, %620 : vector<64x2xf32>
    %649 = arith.negf %648 : vector<64x2xf32>
    %650 = math.exp %649 : vector<64x2xf32>
    %cst_152 = arith.constant 1.000000e+00 : f32
    %651 = vector.broadcast %cst_152 : f32 to vector<64x2xf32>
    %652 = arith.addf %651, %650 : vector<64x2xf32>
    %653 = arith.divf %651, %652 : vector<64x2xf32>
    %c0_153 = arith.constant 0 : index
    %c0_154 = arith.constant 0 : index
    %c0_155 = arith.constant 0 : index
    %654 = vector.load %arg11[%c0_153, %c0_154, %c0_155] : memref<8x64x2xf32, #tpu.memory_space<vmem>>, vector<1x64x2xf32>
    %655 = vector.shape_cast %654 : vector<1x64x2xf32> to vector<64x2xf32>
    %656 = vector.broadcast %4 : vector<64x1xf32> to vector<64x2xf32>
    %657 = arith.mulf %656, %642 : vector<64x2xf32>
    %658 = arith.addf %655, %657 : vector<64x2xf32>
    %659 = arith.addf %658, %621 : vector<64x2xf32>
    %660 = arith.negf %659 : vector<64x2xf32>
    %661 = math.exp %660 : vector<64x2xf32>
    %cst_156 = arith.constant 1.000000e+00 : f32
    %662 = vector.broadcast %cst_156 : f32 to vector<64x2xf32>
    %663 = arith.addf %662, %661 : vector<64x2xf32>
    %664 = arith.divf %662, %663 : vector<64x2xf32>
    %c0_157 = arith.constant 0 : index
    %c0_158 = arith.constant 0 : index
    %c0_159 = arith.constant 0 : index
    %665 = vector.load %arg12[%c0_157, %c0_158, %c0_159] : memref<8x64x2xf32, #tpu.memory_space<vmem>>, vector<1x64x2xf32>
    %666 = vector.shape_cast %665 : vector<1x64x2xf32> to vector<64x2xf32>
    %667 = vector.broadcast %5 : vector<64x1xf32> to vector<64x2xf32>
    %668 = arith.mulf %667, %642 : vector<64x2xf32>
    %669 = arith.addf %666, %668 : vector<64x2xf32>
    %670 = vector.broadcast %12 : vector<64x1xf32> to vector<64x2xf32>
    %671 = arith.addf %622, %670 : vector<64x2xf32>
    %672 = arith.mulf %653, %671 : vector<64x2xf32>
    %673 = arith.addf %669, %672 : vector<64x2xf32>
    %674 = math.tanh %673 : vector<64x2xf32>
    %cst_160 = arith.constant 1.000000e+00 : f32
    %675 = vector.broadcast %cst_160 : f32 to vector<64x2xf32>
    %676 = arith.subf %675, %664 : vector<64x2xf32>
    %677 = arith.mulf %676, %674 : vector<64x2xf32>
    %678 = arith.mulf %664, %618 : vector<64x2xf32>
    %679 = arith.addf %677, %678 : vector<64x2xf32>
    %680 = vector.extract_strided_slice %625 {offsets = [0, 0], sizes = [1, 2], strides = [1, 1]} : vector<2x2xf32> to vector<1x2xf32>
    %c0_161 = arith.constant 0 : index
    %c0_162 = arith.constant 0 : index
    %681 = vector.load %arg7[%c0_161, %c0_162] : memref<8x2xf32, #tpu.memory_space<vmem>>, vector<1x2xf32>
    tpu.vector_store %arg7[%c0_161, %c0_162], %680 {strides = array<i32>} : memref<8x2xf32, #tpu.memory_space<vmem>>, vector<1x2xf32>,
    %682 = vector.extract_strided_slice %625 {offsets = [1, 0], sizes = [1, 2], strides = [1, 1]} : vector<2x2xf32> to vector<1x2xf32>
    %c0_163 = arith.constant 0 : index
    %c0_164 = arith.constant 0 : index
    %683 = vector.load %arg8[%c0_163, %c0_164] : memref<8x2xf32, #tpu.memory_space<vmem>>, vector<1x2xf32>
    tpu.vector_store %arg8[%c0_163, %c0_164], %682 {strides = array<i32>} : memref<8x2xf32, #tpu.memory_space<vmem>>, vector<1x2xf32>,
    %c1_165 = arith.constant 1 : index
    %c0_166 = arith.constant 0 : index
    %c0_167 = arith.constant 0 : index
    %684 = vector.load %arg9[%c1_165, %c0_166, %c0_167] : memref<8x64x2xf32, #tpu.memory_space<vmem>>, vector<1x64x2xf32>
    %685 = vector.shape_cast %684 : vector<1x64x2xf32> to vector<64x2xf32>
    %686 = arith.mulf %679, %685 : vector<64x2xf32>
    %cst_168 = arith.constant dense<0.000000e+00> : vector<200x2xf32>
    %687 = tpu.matmul %614, %686, %cst_168 {dimension_numbers = #tpu.dot_dimension_numbers<[1], [0], [0], [1], [0, 0, 1, 1], [], []>} : vector<200x64xf32>, vector<64x2xf32>, vector<200x2xf32> -> vector<200x2xf32>
    %688 = vector.extract_strided_slice %687 {offsets = [0, 0], sizes = [64, 2], strides = [1, 1]} : vector<200x2xf32> to vector<64x2xf32>
    %689 = vector.extract_strided_slice %687 {offsets = [64, 0], sizes = [64, 2], strides = [1, 1]} : vector<200x2xf32> to vector<64x2xf32>
    %690 = vector.extract_strided_slice %687 {offsets = [128, 0], sizes = [64, 2], strides = [1, 1]} : vector<200x2xf32> to vector<64x2xf32>
    %691 = vector.extract_strided_slice %687 {offsets = [192, 0], sizes = [2, 2], strides = [1, 1]} : vector<200x2xf32> to vector<2x2xf32>
    %692 = vector.broadcast %13 : vector<2x1xf32> to vector<2x2xf32>
    %693 = arith.addf %691, %692 : vector<2x2xf32>
    %c1_169 = arith.constant 1 : index
    %c0_170 = arith.constant 0 : index
    %c0_171 = arith.constant 0 : index
    %694 = vector.load %arg1[%c1_169, %c0_170, %c0_171] : memref<8x6x2xf32, #tpu.memory_space<vmem>>, vector<1x6x2xf32>
    %695 = vector.shape_cast %694 : vector<1x6x2xf32> to vector<6x2xf32>
    %696 = vector.extract_strided_slice %695 {offsets = [1, 0], sizes = [1, 2], strides = [1, 1]} : vector<6x2xf32> to vector<1x2xf32>
    %cst_172 = arith.constant 1.000000e+00 : f32
    %697 = vector.broadcast %cst_172 : f32 to vector<1x2xf32>
    %698 = arith.subf %697, %696 : vector<1x2xf32>
    %699 = vector.extract_strided_slice %693 {offsets = [0, 0], sizes = [1, 2], strides = [1, 1]} : vector<2x2xf32> to vector<1x2xf32>
    %700 = arith.mulf %698, %699 : vector<1x2xf32>
    %701 = vector.extract_strided_slice %695 {offsets = [4, 0], sizes = [1, 2], strides = [1, 1]} : vector<6x2xf32> to vector<1x2xf32>
    %cst_173 = arith.constant 1.000000e+00 : f32
    %702 = vector.broadcast %cst_173 : f32 to vector<1x2xf32>
    %703 = arith.subf %702, %701 : vector<1x2xf32>
    %704 = vector.extract_strided_slice %693 {offsets = [1, 0], sizes = [1, 2], strides = [1, 1]} : vector<2x2xf32> to vector<1x2xf32>
    %705 = arith.mulf %703, %704 : vector<1x2xf32>
    %706 = vector.shape_cast %700 : vector<1x2xf32> to vector<1x2xf32>
    %707 = vector.broadcast %706 : vector<1x2xf32> to vector<32x2xf32>
    %708 = vector.shape_cast %705 : vector<1x2xf32> to vector<1x2xf32>
    %709 = vector.broadcast %708 : vector<1x2xf32> to vector<32x2xf32>
    %710 = tpu.concatenate %707, %709 in 0 : vector<32x2xf32>, vector<32x2xf32> -> vector<64x2xf32>
    %c1_174 = arith.constant 1 : index
    %c0_175 = arith.constant 0 : index
    %c0_176 = arith.constant 0 : index
    %711 = vector.load %arg10[%c1_174, %c0_175, %c0_176] : memref<8x64x2xf32, #tpu.memory_space<vmem>>, vector<1x64x2xf32>
    %712 = vector.shape_cast %711 : vector<1x64x2xf32> to vector<64x2xf32>
    %713 = vector.broadcast %3 : vector<64x1xf32> to vector<64x2xf32>
    %714 = arith.mulf %713, %710 : vector<64x2xf32>
    %715 = arith.addf %712, %714 : vector<64x2xf32>
    %716 = arith.addf %715, %688 : vector<64x2xf32>
    %717 = arith.negf %716 : vector<64x2xf32>
    %718 = math.exp %717 : vector<64x2xf32>
    %cst_177 = arith.constant 1.000000e+00 : f32
    %719 = vector.broadcast %cst_177 : f32 to vector<64x2xf32>
    %720 = arith.addf %719, %718 : vector<64x2xf32>
    %721 = arith.divf %719, %720 : vector<64x2xf32>
    %c1_178 = arith.constant 1 : index
    %c0_179 = arith.constant 0 : index
    %c0_180 = arith.constant 0 : index
    %722 = vector.load %arg11[%c1_178, %c0_179, %c0_180] : memref<8x64x2xf32, #tpu.memory_space<vmem>>, vector<1x64x2xf32>
    %723 = vector.shape_cast %722 : vector<1x64x2xf32> to vector<64x2xf32>
    %724 = vector.broadcast %4 : vector<64x1xf32> to vector<64x2xf32>
    %725 = arith.mulf %724, %710 : vector<64x2xf32>
    %726 = arith.addf %723, %725 : vector<64x2xf32>
    %727 = arith.addf %726, %689 : vector<64x2xf32>
    %728 = arith.negf %727 : vector<64x2xf32>
    %729 = math.exp %728 : vector<64x2xf32>
    %cst_181 = arith.constant 1.000000e+00 : f32
    %730 = vector.broadcast %cst_181 : f32 to vector<64x2xf32>
    %731 = arith.addf %730, %729 : vector<64x2xf32>
    %732 = arith.divf %730, %731 : vector<64x2xf32>
    %c1_182 = arith.constant 1 : index
    %c0_183 = arith.constant 0 : index
    %c0_184 = arith.constant 0 : index
    %733 = vector.load %arg12[%c1_182, %c0_183, %c0_184] : memref<8x64x2xf32, #tpu.memory_space<vmem>>, vector<1x64x2xf32>
    %734 = vector.shape_cast %733 : vector<1x64x2xf32> to vector<64x2xf32>
    %735 = vector.broadcast %5 : vector<64x1xf32> to vector<64x2xf32>
    %736 = arith.mulf %735, %710 : vector<64x2xf32>
    %737 = arith.addf %734, %736 : vector<64x2xf32>
    %738 = vector.broadcast %12 : vector<64x1xf32> to vector<64x2xf32>
    %739 = arith.addf %690, %738 : vector<64x2xf32>
    %740 = arith.mulf %721, %739 : vector<64x2xf32>
    %741 = arith.addf %737, %740 : vector<64x2xf32>
    %742 = math.tanh %741 : vector<64x2xf32>
    %cst_185 = arith.constant 1.000000e+00 : f32
    %743 = vector.broadcast %cst_185 : f32 to vector<64x2xf32>
    %744 = arith.subf %743, %732 : vector<64x2xf32>
    %745 = arith.mulf %744, %742 : vector<64x2xf32>
    %746 = arith.mulf %732, %686 : vector<64x2xf32>
    %747 = arith.addf %745, %746 : vector<64x2xf32>
    %748 = vector.extract_strided_slice %693 {offsets = [0, 0], sizes = [1, 2], strides = [1, 1]} : vector<2x2xf32> to vector<1x2xf32>
    %c1_186 = arith.constant 1 : index
    %c0_187 = arith.constant 0 : index
    %749 = vector.load %arg7[%c1_186, %c0_187] : memref<8x2xf32, #tpu.memory_space<vmem>>, vector<1x2xf32>
    tpu.vector_store %arg7[%c1_186, %c0_187], %748 {strides = array<i32>} : memref<8x2xf32, #tpu.memory_space<vmem>>, vector<1x2xf32>,
    %750 = vector.extract_strided_slice %693 {offsets = [1, 0], sizes = [1, 2], strides = [1, 1]} : vector<2x2xf32> to vector<1x2xf32>
    %c1_188 = arith.constant 1 : index
    %c0_189 = arith.constant 0 : index
    %751 = vector.load %arg8[%c1_188, %c0_189] : memref<8x2xf32, #tpu.memory_space<vmem>>, vector<1x2xf32>
    tpu.vector_store %arg8[%c1_188, %c0_189], %750 {strides = array<i32>} : memref<8x2xf32, #tpu.memory_space<vmem>>, vector<1x2xf32>,
    %c2_190 = arith.constant 2 : index
    %c0_191 = arith.constant 0 : index
    %c0_192 = arith.constant 0 : index
    %752 = vector.load %arg9[%c2_190, %c0_191, %c0_192] : memref<8x64x2xf32, #tpu.memory_space<vmem>>, vector<1x64x2xf32>
    %753 = vector.shape_cast %752 : vector<1x64x2xf32> to vector<64x2xf32>
    %754 = arith.mulf %747, %753 : vector<64x2xf32>
    %cst_193 = arith.constant dense<0.000000e+00> : vector<200x2xf32>
    %755 = tpu.matmul %614, %754, %cst_193 {dimension_numbers = #tpu.dot_dimension_numbers<[1], [0], [0], [1], [0, 0, 1, 1], [], []>} : vector<200x64xf32>, vector<64x2xf32>, vector<200x2xf32> -> vector<200x2xf32>
    %756 = vector.extract_strided_slice %755 {offsets = [0, 0], sizes = [64, 2], strides = [1, 1]} : vector<200x2xf32> to vector<64x2xf32>
    %757 = vector.extract_strided_slice %755 {offsets = [64, 0], sizes = [64, 2], strides = [1, 1]} : vector<200x2xf32> to vector<64x2xf32>
    %758 = vector.extract_strided_slice %755 {offsets = [128, 0], sizes = [64, 2], strides = [1, 1]} : vector<200x2xf32> to vector<64x2xf32>
    %759 = vector.extract_strided_slice %755 {offsets = [192, 0], sizes = [2, 2], strides = [1, 1]} : vector<200x2xf32> to vector<2x2xf32>
    %760 = vector.broadcast %13 : vector<2x1xf32> to vector<2x2xf32>
    %761 = arith.addf %759, %760 : vector<2x2xf32>
    %c2_194 = arith.constant 2 : index
    %c0_195 = arith.constant 0 : index
    %c0_196 = arith.constant 0 : index
    %762 = vector.load %arg1[%c2_194, %c0_195, %c0_196] : memref<8x6x2xf32, #tpu.memory_space<vmem>>, vector<1x6x2xf32>
    %763 = vector.shape_cast %762 : vector<1x6x2xf32> to vector<6x2xf32>
    %764 = vector.extract_strided_slice %763 {offsets = [1, 0], sizes = [1, 2], strides = [1, 1]} : vector<6x2xf32> to vector<1x2xf32>
    %cst_197 = arith.constant 1.000000e+00 : f32
    %765 = vector.broadcast %cst_197 : f32 to vector<1x2xf32>
    %766 = arith.subf %765, %764 : vector<1x2xf32>
    %767 = vector.extract_strided_slice %761 {offsets = [0, 0], sizes = [1, 2], strides = [1, 1]} : vector<2x2xf32> to vector<1x2xf32>
    %768 = arith.mulf %766, %767 : vector<1x2xf32>
    %769 = vector.extract_strided_slice %763 {offsets = [4, 0], sizes = [1, 2], strides = [1, 1]} : vector<6x2xf32> to vector<1x2xf32>
    %cst_198 = arith.constant 1.000000e+00 : f32
    %770 = vector.broadcast %cst_198 : f32 to vector<1x2xf32>
    %771 = arith.subf %770, %769 : vector<1x2xf32>
    %772 = vector.extract_strided_slice %761 {offsets = [1, 0], sizes = [1, 2], strides = [1, 1]} : vector<2x2xf32> to vector<1x2xf32>
    %773 = arith.mulf %771, %772 : vector<1x2xf32>
    %774 = vector.shape_cast %768 : vector<1x2xf32> to vector<1x2xf32>
    %775 = vector.broadcast %774 : vector<1x2xf32> to vector<32x2xf32>
    %776 = vector.shape_cast %773 : vector<1x2xf32> to vector<1x2xf32>
    %777 = vector.broadcast %776 : vector<1x2xf32> to vector<32x2xf32>
    %778 = tpu.concatenate %775, %777 in 0 : vector<32x2xf32>, vector<32x2xf32> -> vector<64x2xf32>
    %c2_199 = arith.constant 2 : index
    %c0_200 = arith.constant 0 : index
    %c0_201 = arith.constant 0 : index
    %779 = vector.load %arg10[%c2_199, %c0_200, %c0_201] : memref<8x64x2xf32, #tpu.memory_space<vmem>>, vector<1x64x2xf32>
    %780 = vector.shape_cast %779 : vector<1x64x2xf32> to vector<64x2xf32>
    %781 = vector.broadcast %3 : vector<64x1xf32> to vector<64x2xf32>
    %782 = arith.mulf %781, %778 : vector<64x2xf32>
    %783 = arith.addf %780, %782 : vector<64x2xf32>
    %784 = arith.addf %783, %756 : vector<64x2xf32>
    %785 = arith.negf %784 : vector<64x2xf32>
    %786 = math.exp %785 : vector<64x2xf32>
    %cst_202 = arith.constant 1.000000e+00 : f32
    %787 = vector.broadcast %cst_202 : f32 to vector<64x2xf32>
    %788 = arith.addf %787, %786 : vector<64x2xf32>
    %789 = arith.divf %787, %788 : vector<64x2xf32>
    %c2_203 = arith.constant 2 : index
    %c0_204 = arith.constant 0 : index
    %c0_205 = arith.constant 0 : index
    %790 = vector.load %arg11[%c2_203, %c0_204, %c0_205] : memref<8x64x2xf32, #tpu.memory_space<vmem>>, vector<1x64x2xf32>
    %791 = vector.shape_cast %790 : vector<1x64x2xf32> to vector<64x2xf32>
    %792 = vector.broadcast %4 : vector<64x1xf32> to vector<64x2xf32>
    %793 = arith.mulf %792, %778 : vector<64x2xf32>
    %794 = arith.addf %791, %793 : vector<64x2xf32>
    %795 = arith.addf %794, %757 : vector<64x2xf32>
    %796 = arith.negf %795 : vector<64x2xf32>
    %797 = math.exp %796 : vector<64x2xf32>
    %cst_206 = arith.constant 1.000000e+00 : f32
    %798 = vector.broadcast %cst_206 : f32 to vector<64x2xf32>
    %799 = arith.addf %798, %797 : vector<64x2xf32>
    %800 = arith.divf %798, %799 : vector<64x2xf32>
    %c2_207 = arith.constant 2 : index
    %c0_208 = arith.constant 0 : index
    %c0_209 = arith.constant 0 : index
    %801 = vector.load %arg12[%c2_207, %c0_208, %c0_209] : memref<8x64x2xf32, #tpu.memory_space<vmem>>, vector<1x64x2xf32>
    %802 = vector.shape_cast %801 : vector<1x64x2xf32> to vector<64x2xf32>
    %803 = vector.broadcast %5 : vector<64x1xf32> to vector<64x2xf32>
    %804 = arith.mulf %803, %778 : vector<64x2xf32>
    %805 = arith.addf %802, %804 : vector<64x2xf32>
    %806 = vector.broadcast %12 : vector<64x1xf32> to vector<64x2xf32>
    %807 = arith.addf %758, %806 : vector<64x2xf32>
    %808 = arith.mulf %789, %807 : vector<64x2xf32>
    %809 = arith.addf %805, %808 : vector<64x2xf32>
    %810 = math.tanh %809 : vector<64x2xf32>
    %cst_210 = arith.constant 1.000000e+00 : f32
    %811 = vector.broadcast %cst_210 : f32 to vector<64x2xf32>
    %812 = arith.subf %811, %800 : vector<64x2xf32>
    %813 = arith.mulf %812, %810 : vector<64x2xf32>
    %814 = arith.mulf %800, %754 : vector<64x2xf32>
    %815 = arith.addf %813, %814 : vector<64x2xf32>
    %816 = vector.extract_strided_slice %761 {offsets = [0, 0], sizes = [1, 2], strides = [1, 1]} : vector<2x2xf32> to vector<1x2xf32>
    %c2_211 = arith.constant 2 : index
    %c0_212 = arith.constant 0 : index
    %817 = vector.load %arg7[%c2_211, %c0_212] : memref<8x2xf32, #tpu.memory_space<vmem>>, vector<1x2xf32>
    tpu.vector_store %arg7[%c2_211, %c0_212], %816 {strides = array<i32>} : memref<8x2xf32, #tpu.memory_space<vmem>>, vector<1x2xf32>,
    %818 = vector.extract_strided_slice %761 {offsets = [1, 0], sizes = [1, 2], strides = [1, 1]} : vector<2x2xf32> to vector<1x2xf32>
    %c2_213 = arith.constant 2 : index
    %c0_214 = arith.constant 0 : index
    %819 = vector.load %arg8[%c2_213, %c0_214] : memref<8x2xf32, #tpu.memory_space<vmem>>, vector<1x2xf32>
    tpu.vector_store %arg8[%c2_213, %c0_214], %818 {strides = array<i32>} : memref<8x2xf32, #tpu.memory_space<vmem>>, vector<1x2xf32>,
    %c3_215 = arith.constant 3 : index
    %c0_216 = arith.constant 0 : index
    %c0_217 = arith.constant 0 : index
    %820 = vector.load %arg9[%c3_215, %c0_216, %c0_217] : memref<8x64x2xf32, #tpu.memory_space<vmem>>, vector<1x64x2xf32>
    %821 = vector.shape_cast %820 : vector<1x64x2xf32> to vector<64x2xf32>
    %822 = arith.mulf %815, %821 : vector<64x2xf32>
    %cst_218 = arith.constant dense<0.000000e+00> : vector<200x2xf32>
    %823 = tpu.matmul %614, %822, %cst_218 {dimension_numbers = #tpu.dot_dimension_numbers<[1], [0], [0], [1], [0, 0, 1, 1], [], []>} : vector<200x64xf32>, vector<64x2xf32>, vector<200x2xf32> -> vector<200x2xf32>
    %824 = vector.extract_strided_slice %823 {offsets = [0, 0], sizes = [64, 2], strides = [1, 1]} : vector<200x2xf32> to vector<64x2xf32>
    %825 = vector.extract_strided_slice %823 {offsets = [64, 0], sizes = [64, 2], strides = [1, 1]} : vector<200x2xf32> to vector<64x2xf32>
    %826 = vector.extract_strided_slice %823 {offsets = [128, 0], sizes = [64, 2], strides = [1, 1]} : vector<200x2xf32> to vector<64x2xf32>
    %827 = vector.extract_strided_slice %823 {offsets = [192, 0], sizes = [2, 2], strides = [1, 1]} : vector<200x2xf32> to vector<2x2xf32>
    %828 = vector.broadcast %13 : vector<2x1xf32> to vector<2x2xf32>
    %829 = arith.addf %827, %828 : vector<2x2xf32>
    %c3_219 = arith.constant 3 : index
    %c0_220 = arith.constant 0 : index
    %c0_221 = arith.constant 0 : index
    %830 = vector.load %arg1[%c3_219, %c0_220, %c0_221] : memref<8x6x2xf32, #tpu.memory_space<vmem>>, vector<1x6x2xf32>
    %831 = vector.shape_cast %830 : vector<1x6x2xf32> to vector<6x2xf32>
    %832 = vector.extract_strided_slice %831 {offsets = [1, 0], sizes = [1, 2], strides = [1, 1]} : vector<6x2xf32> to vector<1x2xf32>
    %cst_222 = arith.constant 1.000000e+00 : f32
    %833 = vector.broadcast %cst_222 : f32 to vector<1x2xf32>
    %834 = arith.subf %833, %832 : vector<1x2xf32>
    %835 = vector.extract_strided_slice %829 {offsets = [0, 0], sizes = [1, 2], strides = [1, 1]} : vector<2x2xf32> to vector<1x2xf32>
    %836 = arith.mulf %834, %835 : vector<1x2xf32>
    %837 = vector.extract_strided_slice %831 {offsets = [4, 0], sizes = [1, 2], strides = [1, 1]} : vector<6x2xf32> to vector<1x2xf32>
    %cst_223 = arith.constant 1.000000e+00 : f32
    %838 = vector.broadcast %cst_223 : f32 to vector<1x2xf32>
    %839 = arith.subf %838, %837 : vector<1x2xf32>
    %840 = vector.extract_strided_slice %829 {offsets = [1, 0], sizes = [1, 2], strides = [1, 1]} : vector<2x2xf32> to vector<1x2xf32>
    %841 = arith.mulf %839, %840 : vector<1x2xf32>
    %842 = vector.shape_cast %836 : vector<1x2xf32> to vector<1x2xf32>
    %843 = vector.broadcast %842 : vector<1x2xf32> to vector<32x2xf32>
    %844 = vector.shape_cast %841 : vector<1x2xf32> to vector<1x2xf32>
    %845 = vector.broadcast %844 : vector<1x2xf32> to vector<32x2xf32>
    %846 = tpu.concatenate %843, %845 in 0 : vector<32x2xf32>, vector<32x2xf32> -> vector<64x2xf32>
    %c3_224 = arith.constant 3 : index
    %c0_225 = arith.constant 0 : index
    %c0_226 = arith.constant 0 : index
    %847 = vector.load %arg10[%c3_224, %c0_225, %c0_226] : memref<8x64x2xf32, #tpu.memory_space<vmem>>, vector<1x64x2xf32>
    %848 = vector.shape_cast %847 : vector<1x64x2xf32> to vector<64x2xf32>
    %849 = vector.broadcast %3 : vector<64x1xf32> to vector<64x2xf32>
    %850 = arith.mulf %849, %846 : vector<64x2xf32>
    %851 = arith.addf %848, %850 : vector<64x2xf32>
    %852 = arith.addf %851, %824 : vector<64x2xf32>
    %853 = arith.negf %852 : vector<64x2xf32>
    %854 = math.exp %853 : vector<64x2xf32>
    %cst_227 = arith.constant 1.000000e+00 : f32
    %855 = vector.broadcast %cst_227 : f32 to vector<64x2xf32>
    %856 = arith.addf %855, %854 : vector<64x2xf32>
    %857 = arith.divf %855, %856 : vector<64x2xf32>
    %c3_228 = arith.constant 3 : index
    %c0_229 = arith.constant 0 : index
    %c0_230 = arith.constant 0 : index
    %858 = vector.load %arg11[%c3_228, %c0_229, %c0_230] : memref<8x64x2xf32, #tpu.memory_space<vmem>>, vector<1x64x2xf32>
    %859 = vector.shape_cast %858 : vector<1x64x2xf32> to vector<64x2xf32>
    %860 = vector.broadcast %4 : vector<64x1xf32> to vector<64x2xf32>
    %861 = arith.mulf %860, %846 : vector<64x2xf32>
    %862 = arith.addf %859, %861 : vector<64x2xf32>
    %863 = arith.addf %862, %825 : vector<64x2xf32>
    %864 = arith.negf %863 : vector<64x2xf32>
    %865 = math.exp %864 : vector<64x2xf32>
    %cst_231 = arith.constant 1.000000e+00 : f32
    %866 = vector.broadcast %cst_231 : f32 to vector<64x2xf32>
    %867 = arith.addf %866, %865 : vector<64x2xf32>
    %868 = arith.divf %866, %867 : vector<64x2xf32>
    %c3_232 = arith.constant 3 : index
    %c0_233 = arith.constant 0 : index
    %c0_234 = arith.constant 0 : index
    %869 = vector.load %arg12[%c3_232, %c0_233, %c0_234] : memref<8x64x2xf32, #tpu.memory_space<vmem>>, vector<1x64x2xf32>
    %870 = vector.shape_cast %869 : vector<1x64x2xf32> to vector<64x2xf32>
    %871 = vector.broadcast %5 : vector<64x1xf32> to vector<64x2xf32>
    %872 = arith.mulf %871, %846 : vector<64x2xf32>
    %873 = arith.addf %870, %872 : vector<64x2xf32>
    %874 = vector.broadcast %12 : vector<64x1xf32> to vector<64x2xf32>
    %875 = arith.addf %826, %874 : vector<64x2xf32>
    %876 = arith.mulf %857, %875 : vector<64x2xf32>
    %877 = arith.addf %873, %876 : vector<64x2xf32>
    %878 = math.tanh %877 : vector<64x2xf32>
    %cst_235 = arith.constant 1.000000e+00 : f32
    %879 = vector.broadcast %cst_235 : f32 to vector<64x2xf32>
    %880 = arith.subf %879, %868 : vector<64x2xf32>
    %881 = arith.mulf %880, %878 : vector<64x2xf32>
    %882 = arith.mulf %868, %822 : vector<64x2xf32>
    %883 = arith.addf %881, %882 : vector<64x2xf32>
    %884 = vector.extract_strided_slice %829 {offsets = [0, 0], sizes = [1, 2], strides = [1, 1]} : vector<2x2xf32> to vector<1x2xf32>
    %c3_236 = arith.constant 3 : index
    %c0_237 = arith.constant 0 : index
    %885 = vector.load %arg7[%c3_236, %c0_237] : memref<8x2xf32, #tpu.memory_space<vmem>>, vector<1x2xf32>
    tpu.vector_store %arg7[%c3_236, %c0_237], %884 {strides = array<i32>} : memref<8x2xf32, #tpu.memory_space<vmem>>, vector<1x2xf32>,
    %886 = vector.extract_strided_slice %829 {offsets = [1, 0], sizes = [1, 2], strides = [1, 1]} : vector<2x2xf32> to vector<1x2xf32>
    %c3_238 = arith.constant 3 : index
    %c0_239 = arith.constant 0 : index
    %887 = vector.load %arg8[%c3_238, %c0_239] : memref<8x2xf32, #tpu.memory_space<vmem>>, vector<1x2xf32>
    tpu.vector_store %arg8[%c3_238, %c0_239], %886 {strides = array<i32>} : memref<8x2xf32, #tpu.memory_space<vmem>>, vector<1x2xf32>,
    %c4_240 = arith.constant 4 : index
    %c0_241 = arith.constant 0 : index
    %c0_242 = arith.constant 0 : index
    %888 = vector.load %arg9[%c4_240, %c0_241, %c0_242] : memref<8x64x2xf32, #tpu.memory_space<vmem>>, vector<1x64x2xf32>
    %889 = vector.shape_cast %888 : vector<1x64x2xf32> to vector<64x2xf32>
    %890 = arith.mulf %883, %889 : vector<64x2xf32>
    %cst_243 = arith.constant dense<0.000000e+00> : vector<200x2xf32>
    %891 = tpu.matmul %614, %890, %cst_243 {dimension_numbers = #tpu.dot_dimension_numbers<[1], [0], [0], [1], [0, 0, 1, 1], [], []>} : vector<200x64xf32>, vector<64x2xf32>, vector<200x2xf32> -> vector<200x2xf32>
    %892 = vector.extract_strided_slice %891 {offsets = [0, 0], sizes = [64, 2], strides = [1, 1]} : vector<200x2xf32> to vector<64x2xf32>
    %893 = vector.extract_strided_slice %891 {offsets = [64, 0], sizes = [64, 2], strides = [1, 1]} : vector<200x2xf32> to vector<64x2xf32>
    %894 = vector.extract_strided_slice %891 {offsets = [128, 0], sizes = [64, 2], strides = [1, 1]} : vector<200x2xf32> to vector<64x2xf32>
    %895 = vector.extract_strided_slice %891 {offsets = [192, 0], sizes = [2, 2], strides = [1, 1]} : vector<200x2xf32> to vector<2x2xf32>
    %896 = vector.broadcast %13 : vector<2x1xf32> to vector<2x2xf32>
    %897 = arith.addf %895, %896 : vector<2x2xf32>
    %c4_244 = arith.constant 4 : index
    %c0_245 = arith.constant 0 : index
    %c0_246 = arith.constant 0 : index
    %898 = vector.load %arg1[%c4_244, %c0_245, %c0_246] : memref<8x6x2xf32, #tpu.memory_space<vmem>>, vector<1x6x2xf32>
    %899 = vector.shape_cast %898 : vector<1x6x2xf32> to vector<6x2xf32>
    %900 = vector.extract_strided_slice %899 {offsets = [1, 0], sizes = [1, 2], strides = [1, 1]} : vector<6x2xf32> to vector<1x2xf32>
    %cst_247 = arith.constant 1.000000e+00 : f32
    %901 = vector.broadcast %cst_247 : f32 to vector<1x2xf32>
    %902 = arith.subf %901, %900 : vector<1x2xf32>
    %903 = vector.extract_strided_slice %897 {offsets = [0, 0], sizes = [1, 2], strides = [1, 1]} : vector<2x2xf32> to vector<1x2xf32>
    %904 = arith.mulf %902, %903 : vector<1x2xf32>
    %905 = vector.extract_strided_slice %899 {offsets = [4, 0], sizes = [1, 2], strides = [1, 1]} : vector<6x2xf32> to vector<1x2xf32>
    %cst_248 = arith.constant 1.000000e+00 : f32
    %906 = vector.broadcast %cst_248 : f32 to vector<1x2xf32>
    %907 = arith.subf %906, %905 : vector<1x2xf32>
    %908 = vector.extract_strided_slice %897 {offsets = [1, 0], sizes = [1, 2], strides = [1, 1]} : vector<2x2xf32> to vector<1x2xf32>
    %909 = arith.mulf %907, %908 : vector<1x2xf32>
    %910 = vector.shape_cast %904 : vector<1x2xf32> to vector<1x2xf32>
    %911 = vector.broadcast %910 : vector<1x2xf32> to vector<32x2xf32>
    %912 = vector.shape_cast %909 : vector<1x2xf32> to vector<1x2xf32>
    %913 = vector.broadcast %912 : vector<1x2xf32> to vector<32x2xf32>
    %914 = tpu.concatenate %911, %913 in 0 : vector<32x2xf32>, vector<32x2xf32> -> vector<64x2xf32>
    %c4_249 = arith.constant 4 : index
    %c0_250 = arith.constant 0 : index
    %c0_251 = arith.constant 0 : index
    %915 = vector.load %arg10[%c4_249, %c0_250, %c0_251] : memref<8x64x2xf32, #tpu.memory_space<vmem>>, vector<1x64x2xf32>
    %916 = vector.shape_cast %915 : vector<1x64x2xf32> to vector<64x2xf32>
    %917 = vector.broadcast %3 : vector<64x1xf32> to vector<64x2xf32>
    %918 = arith.mulf %917, %914 : vector<64x2xf32>
    %919 = arith.addf %916, %918 : vector<64x2xf32>
    %920 = arith.addf %919, %892 : vector<64x2xf32>
    %921 = arith.negf %920 : vector<64x2xf32>
    %922 = math.exp %921 : vector<64x2xf32>
    %cst_252 = arith.constant 1.000000e+00 : f32
    %923 = vector.broadcast %cst_252 : f32 to vector<64x2xf32>
    %924 = arith.addf %923, %922 : vector<64x2xf32>
    %925 = arith.divf %923, %924 : vector<64x2xf32>
    %c4_253 = arith.constant 4 : index
    %c0_254 = arith.constant 0 : index
    %c0_255 = arith.constant 0 : index
    %926 = vector.load %arg11[%c4_253, %c0_254, %c0_255] : memref<8x64x2xf32, #tpu.memory_space<vmem>>, vector<1x64x2xf32>
    %927 = vector.shape_cast %926 : vector<1x64x2xf32> to vector<64x2xf32>
    %928 = vector.broadcast %4 : vector<64x1xf32> to vector<64x2xf32>
    %929 = arith.mulf %928, %914 : vector<64x2xf32>
    %930 = arith.addf %927, %929 : vector<64x2xf32>
    %931 = arith.addf %930, %893 : vector<64x2xf32>
    %932 = arith.negf %931 : vector<64x2xf32>
    %933 = math.exp %932 : vector<64x2xf32>
    %cst_256 = arith.constant 1.000000e+00 : f32
    %934 = vector.broadcast %cst_256 : f32 to vector<64x2xf32>
    %935 = arith.addf %934, %933 : vector<64x2xf32>
    %936 = arith.divf %934, %935 : vector<64x2xf32>
    %c4_257 = arith.constant 4 : index
    %c0_258 = arith.constant 0 : index
    %c0_259 = arith.constant 0 : index
    %937 = vector.load %arg12[%c4_257, %c0_258, %c0_259] : memref<8x64x2xf32, #tpu.memory_space<vmem>>, vector<1x64x2xf32>
    %938 = vector.shape_cast %937 : vector<1x64x2xf32> to vector<64x2xf32>
    %939 = vector.broadcast %5 : vector<64x1xf32> to vector<64x2xf32>
    %940 = arith.mulf %939, %914 : vector<64x2xf32>
    %941 = arith.addf %938, %940 : vector<64x2xf32>
    %942 = vector.broadcast %12 : vector<64x1xf32> to vector<64x2xf32>
    %943 = arith.addf %894, %942 : vector<64x2xf32>
    %944 = arith.mulf %925, %943 : vector<64x2xf32>
    %945 = arith.addf %941, %944 : vector<64x2xf32>
    %946 = math.tanh %945 : vector<64x2xf32>
    %cst_260 = arith.constant 1.000000e+00 : f32
    %947 = vector.broadcast %cst_260 : f32 to vector<64x2xf32>
    %948 = arith.subf %947, %936 : vector<64x2xf32>
    %949 = arith.mulf %948, %946 : vector<64x2xf32>
    %950 = arith.mulf %936, %890 : vector<64x2xf32>
    %951 = arith.addf %949, %950 : vector<64x2xf32>
    %952 = vector.extract_strided_slice %897 {offsets = [0, 0], sizes = [1, 2], strides = [1, 1]} : vector<2x2xf32> to vector<1x2xf32>
    %c4_261 = arith.constant 4 : index
    %c0_262 = arith.constant 0 : index
    %953 = vector.load %arg7[%c4_261, %c0_262] : memref<8x2xf32, #tpu.memory_space<vmem>>, vector<1x2xf32>
    tpu.vector_store %arg7[%c4_261, %c0_262], %952 {strides = array<i32>} : memref<8x2xf32, #tpu.memory_space<vmem>>, vector<1x2xf32>,
    %954 = vector.extract_strided_slice %897 {offsets = [1, 0], sizes = [1, 2], strides = [1, 1]} : vector<2x2xf32> to vector<1x2xf32>
    %c4_263 = arith.constant 4 : index
    %c0_264 = arith.constant 0 : index
    %955 = vector.load %arg8[%c4_263, %c0_264] : memref<8x2xf32, #tpu.memory_space<vmem>>, vector<1x2xf32>
    tpu.vector_store %arg8[%c4_263, %c0_264], %954 {strides = array<i32>} : memref<8x2xf32, #tpu.memory_space<vmem>>, vector<1x2xf32>,
    %c5_265 = arith.constant 5 : index
    %c0_266 = arith.constant 0 : index
    %c0_267 = arith.constant 0 : index
    %956 = vector.load %arg9[%c5_265, %c0_266, %c0_267] : memref<8x64x2xf32, #tpu.memory_space<vmem>>, vector<1x64x2xf32>
    %957 = vector.shape_cast %956 : vector<1x64x2xf32> to vector<64x2xf32>
    %958 = arith.mulf %951, %957 : vector<64x2xf32>
    %cst_268 = arith.constant dense<0.000000e+00> : vector<200x2xf32>
    %959 = tpu.matmul %614, %958, %cst_268 {dimension_numbers = #tpu.dot_dimension_numbers<[1], [0], [0], [1], [0, 0, 1, 1], [], []>} : vector<200x64xf32>, vector<64x2xf32>, vector<200x2xf32> -> vector<200x2xf32>
    %960 = vector.extract_strided_slice %959 {offsets = [0, 0], sizes = [64, 2], strides = [1, 1]} : vector<200x2xf32> to vector<64x2xf32>
    %961 = vector.extract_strided_slice %959 {offsets = [64, 0], sizes = [64, 2], strides = [1, 1]} : vector<200x2xf32> to vector<64x2xf32>
    %962 = vector.extract_strided_slice %959 {offsets = [128, 0], sizes = [64, 2], strides = [1, 1]} : vector<200x2xf32> to vector<64x2xf32>
    %963 = vector.extract_strided_slice %959 {offsets = [192, 0], sizes = [2, 2], strides = [1, 1]} : vector<200x2xf32> to vector<2x2xf32>
    %964 = vector.broadcast %13 : vector<2x1xf32> to vector<2x2xf32>
    %965 = arith.addf %963, %964 : vector<2x2xf32>
    %c5_269 = arith.constant 5 : index
    %c0_270 = arith.constant 0 : index
    %c0_271 = arith.constant 0 : index
    %966 = vector.load %arg1[%c5_269, %c0_270, %c0_271] : memref<8x6x2xf32, #tpu.memory_space<vmem>>, vector<1x6x2xf32>
    %967 = vector.shape_cast %966 : vector<1x6x2xf32> to vector<6x2xf32>
    %968 = vector.extract_strided_slice %967 {offsets = [1, 0], sizes = [1, 2], strides = [1, 1]} : vector<6x2xf32> to vector<1x2xf32>
    %cst_272 = arith.constant 1.000000e+00 : f32
    %969 = vector.broadcast %cst_272 : f32 to vector<1x2xf32>
    %970 = arith.subf %969, %968 : vector<1x2xf32>
    %971 = vector.extract_strided_slice %965 {offsets = [0, 0], sizes = [1, 2], strides = [1, 1]} : vector<2x2xf32> to vector<1x2xf32>
    %972 = arith.mulf %970, %971 : vector<1x2xf32>
    %973 = vector.extract_strided_slice %967 {offsets = [4, 0], sizes = [1, 2], strides = [1, 1]} : vector<6x2xf32> to vector<1x2xf32>
    %cst_273 = arith.constant 1.000000e+00 : f32
    %974 = vector.broadcast %cst_273 : f32 to vector<1x2xf32>
    %975 = arith.subf %974, %973 : vector<1x2xf32>
    %976 = vector.extract_strided_slice %965 {offsets = [1, 0], sizes = [1, 2], strides = [1, 1]} : vector<2x2xf32> to vector<1x2xf32>
    %977 = arith.mulf %975, %976 : vector<1x2xf32>
    %978 = vector.shape_cast %972 : vector<1x2xf32> to vector<1x2xf32>
    %979 = vector.broadcast %978 : vector<1x2xf32> to vector<32x2xf32>
    %980 = vector.shape_cast %977 : vector<1x2xf32> to vector<1x2xf32>
    %981 = vector.broadcast %980 : vector<1x2xf32> to vector<32x2xf32>
    %982 = tpu.concatenate %979, %981 in 0 : vector<32x2xf32>, vector<32x2xf32> -> vector<64x2xf32>
    %c5_274 = arith.constant 5 : index
    %c0_275 = arith.constant 0 : index
    %c0_276 = arith.constant 0 : index
    %983 = vector.load %arg10[%c5_274, %c0_275, %c0_276] : memref<8x64x2xf32, #tpu.memory_space<vmem>>, vector<1x64x2xf32>
    %984 = vector.shape_cast %983 : vector<1x64x2xf32> to vector<64x2xf32>
    %985 = vector.broadcast %3 : vector<64x1xf32> to vector<64x2xf32>
    %986 = arith.mulf %985, %982 : vector<64x2xf32>
    %987 = arith.addf %984, %986 : vector<64x2xf32>
    %988 = arith.addf %987, %960 : vector<64x2xf32>
    %989 = arith.negf %988 : vector<64x2xf32>
    %990 = math.exp %989 : vector<64x2xf32>
    %cst_277 = arith.constant 1.000000e+00 : f32
    %991 = vector.broadcast %cst_277 : f32 to vector<64x2xf32>
    %992 = arith.addf %991, %990 : vector<64x2xf32>
    %993 = arith.divf %991, %992 : vector<64x2xf32>
    %c5_278 = arith.constant 5 : index
    %c0_279 = arith.constant 0 : index
    %c0_280 = arith.constant 0 : index
    %994 = vector.load %arg11[%c5_278, %c0_279, %c0_280] : memref<8x64x2xf32, #tpu.memory_space<vmem>>, vector<1x64x2xf32>
    %995 = vector.shape_cast %994 : vector<1x64x2xf32> to vector<64x2xf32>
    %996 = vector.broadcast %4 : vector<64x1xf32> to vector<64x2xf32>
    %997 = arith.mulf %996, %982 : vector<64x2xf32>
    %998 = arith.addf %995, %997 : vector<64x2xf32>
    %999 = arith.addf %998, %961 : vector<64x2xf32>
    %1000 = arith.negf %999 : vector<64x2xf32>
    %1001 = math.exp %1000 : vector<64x2xf32>
    %cst_281 = arith.constant 1.000000e+00 : f32
    %1002 = vector.broadcast %cst_281 : f32 to vector<64x2xf32>
    %1003 = arith.addf %1002, %1001 : vector<64x2xf32>
    %1004 = arith.divf %1002, %1003 : vector<64x2xf32>
    %c5_282 = arith.constant 5 : index
    %c0_283 = arith.constant 0 : index
    %c0_284 = arith.constant 0 : index
    %1005 = vector.load %arg12[%c5_282, %c0_283, %c0_284] : memref<8x64x2xf32, #tpu.memory_space<vmem>>, vector<1x64x2xf32>
    %1006 = vector.shape_cast %1005 : vector<1x64x2xf32> to vector<64x2xf32>
    %1007 = vector.broadcast %5 : vector<64x1xf32> to vector<64x2xf32>
    %1008 = arith.mulf %1007, %982 : vector<64x2xf32>
    %1009 = arith.addf %1006, %1008 : vector<64x2xf32>
    %1010 = vector.broadcast %12 : vector<64x1xf32> to vector<64x2xf32>
    %1011 = arith.addf %962, %1010 : vector<64x2xf32>
    %1012 = arith.mulf %993, %1011 : vector<64x2xf32>
    %1013 = arith.addf %1009, %1012 : vector<64x2xf32>
    %1014 = math.tanh %1013 : vector<64x2xf32>
    %cst_285 = arith.constant 1.000000e+00 : f32
    %1015 = vector.broadcast %cst_285 : f32 to vector<64x2xf32>
    %1016 = arith.subf %1015, %1004 : vector<64x2xf32>
    %1017 = arith.mulf %1016, %1014 : vector<64x2xf32>
    %1018 = arith.mulf %1004, %958 : vector<64x2xf32>
    %1019 = arith.addf %1017, %1018 : vector<64x2xf32>
    %1020 = vector.extract_strided_slice %965 {offsets = [0, 0], sizes = [1, 2], strides = [1, 1]} : vector<2x2xf32> to vector<1x2xf32>
    %c5_286 = arith.constant 5 : index
    %c0_287 = arith.constant 0 : index
    %1021 = vector.load %arg7[%c5_286, %c0_287] : memref<8x2xf32, #tpu.memory_space<vmem>>, vector<1x2xf32>
    tpu.vector_store %arg7[%c5_286, %c0_287], %1020 {strides = array<i32>} : memref<8x2xf32, #tpu.memory_space<vmem>>, vector<1x2xf32>,
    %1022 = vector.extract_strided_slice %965 {offsets = [1, 0], sizes = [1, 2], strides = [1, 1]} : vector<2x2xf32> to vector<1x2xf32>
    %c5_288 = arith.constant 5 : index
    %c0_289 = arith.constant 0 : index
    %1023 = vector.load %arg8[%c5_288, %c0_289] : memref<8x2xf32, #tpu.memory_space<vmem>>, vector<1x2xf32>
    tpu.vector_store %arg8[%c5_288, %c0_289], %1022 {strides = array<i32>} : memref<8x2xf32, #tpu.memory_space<vmem>>, vector<1x2xf32>,
    %c6_290 = arith.constant 6 : index
    %c0_291 = arith.constant 0 : index
    %c0_292 = arith.constant 0 : index
    %1024 = vector.load %arg9[%c6_290, %c0_291, %c0_292] : memref<8x64x2xf32, #tpu.memory_space<vmem>>, vector<1x64x2xf32>
    %1025 = vector.shape_cast %1024 : vector<1x64x2xf32> to vector<64x2xf32>
    %1026 = arith.mulf %1019, %1025 : vector<64x2xf32>
    %cst_293 = arith.constant dense<0.000000e+00> : vector<200x2xf32>
    %1027 = tpu.matmul %614, %1026, %cst_293 {dimension_numbers = #tpu.dot_dimension_numbers<[1], [0], [0], [1], [0, 0, 1, 1], [], []>} : vector<200x64xf32>, vector<64x2xf32>, vector<200x2xf32> -> vector<200x2xf32>
    %1028 = vector.extract_strided_slice %1027 {offsets = [0, 0], sizes = [64, 2], strides = [1, 1]} : vector<200x2xf32> to vector<64x2xf32>
    %1029 = vector.extract_strided_slice %1027 {offsets = [64, 0], sizes = [64, 2], strides = [1, 1]} : vector<200x2xf32> to vector<64x2xf32>
    %1030 = vector.extract_strided_slice %1027 {offsets = [128, 0], sizes = [64, 2], strides = [1, 1]} : vector<200x2xf32> to vector<64x2xf32>
    %1031 = vector.extract_strided_slice %1027 {offsets = [192, 0], sizes = [2, 2], strides = [1, 1]} : vector<200x2xf32> to vector<2x2xf32>
    %1032 = vector.broadcast %13 : vector<2x1xf32> to vector<2x2xf32>
    %1033 = arith.addf %1031, %1032 : vector<2x2xf32>
    %c6_294 = arith.constant 6 : index
    %c0_295 = arith.constant 0 : index
    %c0_296 = arith.constant 0 : index
    %1034 = vector.load %arg1[%c6_294, %c0_295, %c0_296] : memref<8x6x2xf32, #tpu.memory_space<vmem>>, vector<1x6x2xf32>
    %1035 = vector.shape_cast %1034 : vector<1x6x2xf32> to vector<6x2xf32>
    %1036 = vector.extract_strided_slice %1035 {offsets = [1, 0], sizes = [1, 2], strides = [1, 1]} : vector<6x2xf32> to vector<1x2xf32>
    %cst_297 = arith.constant 1.000000e+00 : f32
    %1037 = vector.broadcast %cst_297 : f32 to vector<1x2xf32>
    %1038 = arith.subf %1037, %1036 : vector<1x2xf32>
    %1039 = vector.extract_strided_slice %1033 {offsets = [0, 0], sizes = [1, 2], strides = [1, 1]} : vector<2x2xf32> to vector<1x2xf32>
    %1040 = arith.mulf %1038, %1039 : vector<1x2xf32>
    %1041 = vector.extract_strided_slice %1035 {offsets = [4, 0], sizes = [1, 2], strides = [1, 1]} : vector<6x2xf32> to vector<1x2xf32>
    %cst_298 = arith.constant 1.000000e+00 : f32
    %1042 = vector.broadcast %cst_298 : f32 to vector<1x2xf32>
    %1043 = arith.subf %1042, %1041 : vector<1x2xf32>
    %1044 = vector.extract_strided_slice %1033 {offsets = [1, 0], sizes = [1, 2], strides = [1, 1]} : vector<2x2xf32> to vector<1x2xf32>
    %1045 = arith.mulf %1043, %1044 : vector<1x2xf32>
    %1046 = vector.shape_cast %1040 : vector<1x2xf32> to vector<1x2xf32>
    %1047 = vector.broadcast %1046 : vector<1x2xf32> to vector<32x2xf32>
    %1048 = vector.shape_cast %1045 : vector<1x2xf32> to vector<1x2xf32>
    %1049 = vector.broadcast %1048 : vector<1x2xf32> to vector<32x2xf32>
    %1050 = tpu.concatenate %1047, %1049 in 0 : vector<32x2xf32>, vector<32x2xf32> -> vector<64x2xf32>
    %c6_299 = arith.constant 6 : index
    %c0_300 = arith.constant 0 : index
    %c0_301 = arith.constant 0 : index
    %1051 = vector.load %arg10[%c6_299, %c0_300, %c0_301] : memref<8x64x2xf32, #tpu.memory_space<vmem>>, vector<1x64x2xf32>
    %1052 = vector.shape_cast %1051 : vector<1x64x2xf32> to vector<64x2xf32>
    %1053 = vector.broadcast %3 : vector<64x1xf32> to vector<64x2xf32>
    %1054 = arith.mulf %1053, %1050 : vector<64x2xf32>
    %1055 = arith.addf %1052, %1054 : vector<64x2xf32>
    %1056 = arith.addf %1055, %1028 : vector<64x2xf32>
    %1057 = arith.negf %1056 : vector<64x2xf32>
    %1058 = math.exp %1057 : vector<64x2xf32>
    %cst_302 = arith.constant 1.000000e+00 : f32
    %1059 = vector.broadcast %cst_302 : f32 to vector<64x2xf32>
    %1060 = arith.addf %1059, %1058 : vector<64x2xf32>
    %1061 = arith.divf %1059, %1060 : vector<64x2xf32>
    %c6_303 = arith.constant 6 : index
    %c0_304 = arith.constant 0 : index
    %c0_305 = arith.constant 0 : index
    %1062 = vector.load %arg11[%c6_303, %c0_304, %c0_305] : memref<8x64x2xf32, #tpu.memory_space<vmem>>, vector<1x64x2xf32>
    %1063 = vector.shape_cast %1062 : vector<1x64x2xf32> to vector<64x2xf32>
    %1064 = vector.broadcast %4 : vector<64x1xf32> to vector<64x2xf32>
    %1065 = arith.mulf %1064, %1050 : vector<64x2xf32>
    %1066 = arith.addf %1063, %1065 : vector<64x2xf32>
    %1067 = arith.addf %1066, %1029 : vector<64x2xf32>
    %1068 = arith.negf %1067 : vector<64x2xf32>
    %1069 = math.exp %1068 : vector<64x2xf32>
    %cst_306 = arith.constant 1.000000e+00 : f32
    %1070 = vector.broadcast %cst_306 : f32 to vector<64x2xf32>
    %1071 = arith.addf %1070, %1069 : vector<64x2xf32>
    %1072 = arith.divf %1070, %1071 : vector<64x2xf32>
    %c6_307 = arith.constant 6 : index
    %c0_308 = arith.constant 0 : index
    %c0_309 = arith.constant 0 : index
    %1073 = vector.load %arg12[%c6_307, %c0_308, %c0_309] : memref<8x64x2xf32, #tpu.memory_space<vmem>>, vector<1x64x2xf32>
    %1074 = vector.shape_cast %1073 : vector<1x64x2xf32> to vector<64x2xf32>
    %1075 = vector.broadcast %5 : vector<64x1xf32> to vector<64x2xf32>
    %1076 = arith.mulf %1075, %1050 : vector<64x2xf32>
    %1077 = arith.addf %1074, %1076 : vector<64x2xf32>
    %1078 = vector.broadcast %12 : vector<64x1xf32> to vector<64x2xf32>
    %1079 = arith.addf %1030, %1078 : vector<64x2xf32>
    %1080 = arith.mulf %1061, %1079 : vector<64x2xf32>
    %1081 = arith.addf %1077, %1080 : vector<64x2xf32>
    %1082 = math.tanh %1081 : vector<64x2xf32>
    %cst_310 = arith.constant 1.000000e+00 : f32
    %1083 = vector.broadcast %cst_310 : f32 to vector<64x2xf32>
    %1084 = arith.subf %1083, %1072 : vector<64x2xf32>
    %1085 = arith.mulf %1084, %1082 : vector<64x2xf32>
    %1086 = arith.mulf %1072, %1026 : vector<64x2xf32>
    %1087 = arith.addf %1085, %1086 : vector<64x2xf32>
    %1088 = vector.extract_strided_slice %1033 {offsets = [0, 0], sizes = [1, 2], strides = [1, 1]} : vector<2x2xf32> to vector<1x2xf32>
    %c6_311 = arith.constant 6 : index
    %c0_312 = arith.constant 0 : index
    %1089 = vector.load %arg7[%c6_311, %c0_312] : memref<8x2xf32, #tpu.memory_space<vmem>>, vector<1x2xf32>
    tpu.vector_store %arg7[%c6_311, %c0_312], %1088 {strides = array<i32>} : memref<8x2xf32, #tpu.memory_space<vmem>>, vector<1x2xf32>,
    %1090 = vector.extract_strided_slice %1033 {offsets = [1, 0], sizes = [1, 2], strides = [1, 1]} : vector<2x2xf32> to vector<1x2xf32>
    %c6_313 = arith.constant 6 : index
    %c0_314 = arith.constant 0 : index
    %1091 = vector.load %arg8[%c6_313, %c0_314] : memref<8x2xf32, #tpu.memory_space<vmem>>, vector<1x2xf32>
    tpu.vector_store %arg8[%c6_313, %c0_314], %1090 {strides = array<i32>} : memref<8x2xf32, #tpu.memory_space<vmem>>, vector<1x2xf32>,
    %c7_315 = arith.constant 7 : index
    %c0_316 = arith.constant 0 : index
    %c0_317 = arith.constant 0 : index
    %1092 = vector.load %arg9[%c7_315, %c0_316, %c0_317] : memref<8x64x2xf32, #tpu.memory_space<vmem>>, vector<1x64x2xf32>
    %1093 = vector.shape_cast %1092 : vector<1x64x2xf32> to vector<64x2xf32>
    %1094 = arith.mulf %1087, %1093 : vector<64x2xf32>
    %cst_318 = arith.constant dense<0.000000e+00> : vector<200x2xf32>
    %1095 = tpu.matmul %614, %1094, %cst_318 {dimension_numbers = #tpu.dot_dimension_numbers<[1], [0], [0], [1], [0, 0, 1, 1], [], []>} : vector<200x64xf32>, vector<64x2xf32>, vector<200x2xf32> -> vector<200x2xf32>
    %1096 = vector.extract_strided_slice %1095 {offsets = [0, 0], sizes = [64, 2], strides = [1, 1]} : vector<200x2xf32> to vector<64x2xf32>
    %1097 = vector.extract_strided_slice %1095 {offsets = [64, 0], sizes = [64, 2], strides = [1, 1]} : vector<200x2xf32> to vector<64x2xf32>
    %1098 = vector.extract_strided_slice %1095 {offsets = [128, 0], sizes = [64, 2], strides = [1, 1]} : vector<200x2xf32> to vector<64x2xf32>
    %1099 = vector.extract_strided_slice %1095 {offsets = [192, 0], sizes = [2, 2], strides = [1, 1]} : vector<200x2xf32> to vector<2x2xf32>
    %1100 = vector.broadcast %13 : vector<2x1xf32> to vector<2x2xf32>
    %1101 = arith.addf %1099, %1100 : vector<2x2xf32>
    %c7_319 = arith.constant 7 : index
    %c0_320 = arith.constant 0 : index
    %c0_321 = arith.constant 0 : index
    %1102 = vector.load %arg1[%c7_319, %c0_320, %c0_321] : memref<8x6x2xf32, #tpu.memory_space<vmem>>, vector<1x6x2xf32>
    %1103 = vector.shape_cast %1102 : vector<1x6x2xf32> to vector<6x2xf32>
    %1104 = vector.extract_strided_slice %1103 {offsets = [1, 0], sizes = [1, 2], strides = [1, 1]} : vector<6x2xf32> to vector<1x2xf32>
    %cst_322 = arith.constant 1.000000e+00 : f32
    %1105 = vector.broadcast %cst_322 : f32 to vector<1x2xf32>
    %1106 = arith.subf %1105, %1104 : vector<1x2xf32>
    %1107 = vector.extract_strided_slice %1101 {offsets = [0, 0], sizes = [1, 2], strides = [1, 1]} : vector<2x2xf32> to vector<1x2xf32>
    %1108 = arith.mulf %1106, %1107 : vector<1x2xf32>
    %1109 = vector.extract_strided_slice %1103 {offsets = [4, 0], sizes = [1, 2], strides = [1, 1]} : vector<6x2xf32> to vector<1x2xf32>
    %cst_323 = arith.constant 1.000000e+00 : f32
    %1110 = vector.broadcast %cst_323 : f32 to vector<1x2xf32>
    %1111 = arith.subf %1110, %1109 : vector<1x2xf32>
    %1112 = vector.extract_strided_slice %1101 {offsets = [1, 0], sizes = [1, 2], strides = [1, 1]} : vector<2x2xf32> to vector<1x2xf32>
    %1113 = arith.mulf %1111, %1112 : vector<1x2xf32>
    %1114 = vector.shape_cast %1108 : vector<1x2xf32> to vector<1x2xf32>
    %1115 = vector.broadcast %1114 : vector<1x2xf32> to vector<32x2xf32>
    %1116 = vector.shape_cast %1113 : vector<1x2xf32> to vector<1x2xf32>
    %1117 = vector.broadcast %1116 : vector<1x2xf32> to vector<32x2xf32>
    %1118 = tpu.concatenate %1115, %1117 in 0 : vector<32x2xf32>, vector<32x2xf32> -> vector<64x2xf32>
    %c7_324 = arith.constant 7 : index
    %c0_325 = arith.constant 0 : index
    %c0_326 = arith.constant 0 : index
    %1119 = vector.load %arg10[%c7_324, %c0_325, %c0_326] : memref<8x64x2xf32, #tpu.memory_space<vmem>>, vector<1x64x2xf32>
    %1120 = vector.shape_cast %1119 : vector<1x64x2xf32> to vector<64x2xf32>
    %1121 = vector.broadcast %3 : vector<64x1xf32> to vector<64x2xf32>
    %1122 = arith.mulf %1121, %1118 : vector<64x2xf32>
    %1123 = arith.addf %1120, %1122 : vector<64x2xf32>
    %1124 = arith.addf %1123, %1096 : vector<64x2xf32>
    %1125 = arith.negf %1124 : vector<64x2xf32>
    %1126 = math.exp %1125 : vector<64x2xf32>
    %cst_327 = arith.constant 1.000000e+00 : f32
    %1127 = vector.broadcast %cst_327 : f32 to vector<64x2xf32>
    %1128 = arith.addf %1127, %1126 : vector<64x2xf32>
    %1129 = arith.divf %1127, %1128 : vector<64x2xf32>
    %c7_328 = arith.constant 7 : index
    %c0_329 = arith.constant 0 : index
    %c0_330 = arith.constant 0 : index
    %1130 = vector.load %arg11[%c7_328, %c0_329, %c0_330] : memref<8x64x2xf32, #tpu.memory_space<vmem>>, vector<1x64x2xf32>
    %1131 = vector.shape_cast %1130 : vector<1x64x2xf32> to vector<64x2xf32>
    %1132 = vector.broadcast %4 : vector<64x1xf32> to vector<64x2xf32>
    %1133 = arith.mulf %1132, %1118 : vector<64x2xf32>
    %1134 = arith.addf %1131, %1133 : vector<64x2xf32>
    %1135 = arith.addf %1134, %1097 : vector<64x2xf32>
    %1136 = arith.negf %1135 : vector<64x2xf32>
    %1137 = math.exp %1136 : vector<64x2xf32>
    %cst_331 = arith.constant 1.000000e+00 : f32
    %1138 = vector.broadcast %cst_331 : f32 to vector<64x2xf32>
    %1139 = arith.addf %1138, %1137 : vector<64x2xf32>
    %1140 = arith.divf %1138, %1139 : vector<64x2xf32>
    %c7_332 = arith.constant 7 : index
    %c0_333 = arith.constant 0 : index
    %c0_334 = arith.constant 0 : index
    %1141 = vector.load %arg12[%c7_332, %c0_333, %c0_334] : memref<8x64x2xf32, #tpu.memory_space<vmem>>, vector<1x64x2xf32>
    %1142 = vector.shape_cast %1141 : vector<1x64x2xf32> to vector<64x2xf32>
    %1143 = vector.broadcast %5 : vector<64x1xf32> to vector<64x2xf32>
    %1144 = arith.mulf %1143, %1118 : vector<64x2xf32>
    %1145 = arith.addf %1142, %1144 : vector<64x2xf32>
    %1146 = vector.broadcast %12 : vector<64x1xf32> to vector<64x2xf32>
    %1147 = arith.addf %1098, %1146 : vector<64x2xf32>
    %1148 = arith.mulf %1129, %1147 : vector<64x2xf32>
    %1149 = arith.addf %1145, %1148 : vector<64x2xf32>
    %1150 = math.tanh %1149 : vector<64x2xf32>
    %cst_335 = arith.constant 1.000000e+00 : f32
    %1151 = vector.broadcast %cst_335 : f32 to vector<64x2xf32>
    %1152 = arith.subf %1151, %1140 : vector<64x2xf32>
    %1153 = arith.mulf %1152, %1150 : vector<64x2xf32>
    %1154 = arith.mulf %1140, %1094 : vector<64x2xf32>
    %1155 = arith.addf %1153, %1154 : vector<64x2xf32>
    %1156 = vector.extract_strided_slice %1101 {offsets = [0, 0], sizes = [1, 2], strides = [1, 1]} : vector<2x2xf32> to vector<1x2xf32>
    %c7_336 = arith.constant 7 : index
    %c0_337 = arith.constant 0 : index
    %1157 = vector.load %arg7[%c7_336, %c0_337] : memref<8x2xf32, #tpu.memory_space<vmem>>, vector<1x2xf32>
    tpu.vector_store %arg7[%c7_336, %c0_337], %1156 {strides = array<i32>} : memref<8x2xf32, #tpu.memory_space<vmem>>, vector<1x2xf32>,
    %1158 = vector.extract_strided_slice %1101 {offsets = [1, 0], sizes = [1, 2], strides = [1, 1]} : vector<2x2xf32> to vector<1x2xf32>
    %c7_338 = arith.constant 7 : index
    %c0_339 = arith.constant 0 : index
    %1159 = vector.load %arg8[%c7_338, %c0_339] : memref<8x2xf32, #tpu.memory_space<vmem>>, vector<1x2xf32>
    tpu.vector_store %arg8[%c7_338, %c0_339], %1158 {strides = array<i32>} : memref<8x2xf32, #tpu.memory_space<vmem>>, vector<1x2xf32>,
    %c0_340 = arith.constant 0 : index
    %c0_341 = arith.constant 0 : index
    %1160 = vector.load %arg4[%c0_340, %c0_341] : memref<4x64xf32, #tpu.memory_space<vmem>>, vector<4x64xf32>
    %cst_342 = arith.constant dense<0.000000e+00> : vector<4x2xf32>
    %1161 = tpu.matmul %1160, %1155, %cst_342 {dimension_numbers = #tpu.dot_dimension_numbers<[1], [0], [0], [1], [0, 0, 1, 1], [], []>} : vector<4x64xf32>, vector<64x2xf32>, vector<4x2xf32> -> vector<4x2xf32>
    %c0_343 = arith.constant 0 : index
    %c0_344 = arith.constant 0 : index
    %1162 = vector.load %arg5[%c0_343, %c0_344] : memref<4x1xf32, #tpu.memory_space<vmem>>, vector<4x1xf32>
    %1163 = vector.broadcast %1162 : vector<4x1xf32> to vector<4x2xf32>
    %1164 = arith.addf %1161, %1163 : vector<4x2xf32>
    %c0_345 = arith.constant 0 : index
    %c0_346 = arith.constant 0 : index
    %1165 = vector.load %arg6[%c0_345, %c0_346] : memref<4x2xf32, #tpu.memory_space<vmem>>, vector<4x2xf32>
    tpu.vector_store %arg6[%c0_345, %c0_346], %1164 {strides = array<i32>} : memref<4x2xf32, #tpu.memory_space<vmem>>, vector<4x2xf32>,
    return
  }
  func.func @transform_0(%arg0: i32) -> (i32, i32, i32) {
    %c0_i32 = arith.constant 0 : i32
    %c0_i32_0 = arith.constant 0 : i32
    %c0_i32_1 = arith.constant 0 : i32
    return %c0_i32, %c0_i32_0, %arg0 : i32, i32, i32
  }
  func.func @transform_1(%arg0: i32) -> (i32, i32) {
    %c0_i32 = arith.constant 0 : i32
    %c0_i32_0 = arith.constant 0 : i32
    %c0_i32_1 = arith.constant 0 : i32
    return %c0_i32, %c0_i32_0 : i32, i32
  }
  func.func @transform_2(%arg0: i32) -> (i32, i32) {
    %c0_i32 = arith.constant 0 : i32
    %c0_i32_0 = arith.constant 0 : i32
    %c0_i32_1 = arith.constant 0 : i32
    return %c0_i32, %c0_i32_0 : i32, i32
  }
  func.func @transform_3(%arg0: i32) -> (i32, i32) {
    %c0_i32 = arith.constant 0 : i32
    %c0_i32_0 = arith.constant 0 : i32
    %c0_i32_1 = arith.constant 0 : i32
    return %c0_i32, %c0_i32_0 : i32, i32
  }
  func.func @transform_4(%arg0: i32) -> (i32, i32) {
    %c0_i32 = arith.constant 0 : i32
    %c0_i32_0 = arith.constant 0 : i32
    %c0_i32_1 = arith.constant 0 : i32
    return %c0_i32, %c0_i32_0 : i32, i32
  }
  func.func @transform_5(%arg0: i32) -> (i32, i32) {
    %c0_i32 = arith.constant 0 : i32
    %c0_i32_0 = arith.constant 0 : i32
    return %c0_i32, %arg0 : i32, i32
  }
  func.func @transform_6(%arg0: i32) -> (i32, i32) {
    %c0_i32 = arith.constant 0 : i32
    %c0_i32_0 = arith.constant 0 : i32
    return %c0_i32, %arg0 : i32, i32
  }
  func.func @transform_7(%arg0: i32) -> (i32, i32) {
    %c0_i32 = arith.constant 0 : i32
    %c0_i32_0 = arith.constant 0 : i32
    return %c0_i32, %arg0 : i32, i32
  }
}

</mosaic_0001>

<llo_original>
// kernel: tpu_custom_call.1
$region0: #{tpu_custom_call.1}
  #allocation0 [shape = 'u32[]', space=smem, size = 0x4, offset = 0x4, fixed_abs, tag = 'smem constant byte address 0x4 - core index']
  #allocation1 [shape = 'u32[144,128]{1,0:T(1,128)}', space=vmem, size = 0x12000, scoped, tag = 'internal scratch']
  #allocation2 [shape = 'f32[8,64,2]{2,1,0:T(8,128)}', space=vmem, size = 0x40000, scoped, tag = 'scratch operand']
  #allocation3 [shape = 'f32[8,64,2]{2,1,0:T(8,128)}', space=vmem, size = 0x40000, scoped, tag = 'scratch operand']
  #allocation4 [shape = 'f32[8,64,2]{2,1,0:T(8,128)}', space=vmem, size = 0x40000, scoped, tag = 'scratch operand']
  #allocation5 [shape = 'f32[8,64,2]{2,1,0:T(8,128)}', space=vmem, size = 0x40000, scoped, tag = 'scratch operand']
  %s0 = inlined_call_operand.vmem [shape: f32[8,6,2], index: 0, kind: input, shape index: {}]
  %s1 = inlined_call_operand.vmem [shape: f32[64,16], index: 1, kind: input, shape index: {}]
  %s2 = inlined_call_operand.vmem [shape: f32[200,64], index: 2, kind: input, shape index: {}]
  %s3 = inlined_call_operand.vmem [shape: f32[4,64], index: 3, kind: input, shape index: {}]
  %s4 = inlined_call_operand.vmem [shape: f32[4,1], index: 4, kind: input, shape index: {}]
  %s5 = inlined_call_operand.vmem [shape: f32[4,2], index: 5, kind: output, shape index: {0}]
  %s6 = inlined_call_operand.vmem [shape: f32[8,2], index: 6, kind: output, shape index: {1}]
  %s7 = inlined_call_operand.vmem [shape: f32[8,2], index: 7, kind: output, shape index: {2}]
  %8 = xla_tuple %s5, %s6, %s7
  %s9 = sld [smem:[#allocation0]]
  $region46: #{tpu_custom_call.1} parent=0
    _
  %s11 = ssub.s32 1, %s9
  %s12 = scalar_select 0, %s11, %s9
  // Predicated region
  $region2: #{tpu_custom_call.1} parent=0 // pred_check
    _
  $region3: #{tpu_custom_call.1} parent=0 // pred_check_branch
    %14 = sbr.rel (0) target = $region5
  $region4: #{tpu_custom_call.1} parent=0 // pred_region
    _
  $region5: #{tpu_custom_call.1} parent=0 // pred_fallthru
    _
  // Predicated region
  $region6: #{tpu_custom_call.1} parent=0 // pred_check
    _
  $region7: #{tpu_custom_call.1} parent=0 // pred_check_branch
    %16 = sbr.rel (0) target = $region9
  $region8: #{tpu_custom_call.1} parent=0 // pred_region
    _
  $region9: #{tpu_custom_call.1} parent=0 // pred_fallthru
    _
  // Predicated region
  $region10: #{tpu_custom_call.1} parent=0 // pred_check
    _
  $region11: #{tpu_custom_call.1} parent=0 // pred_check_branch
    %18 = sbr.rel (0) target = $region13
  $region12: #{tpu_custom_call.1} parent=0 // pred_region
    _
  $region13: #{tpu_custom_call.1} parent=0 // pred_fallthru
    _
  // Predicated region
  $region14: #{tpu_custom_call.1} parent=0 // pred_check
    _
  $region15: #{tpu_custom_call.1} parent=0 // pred_check_branch
    %20 = sbr.rel (0) target = $region17
  $region16: #{tpu_custom_call.1} parent=0 // pred_region
    _
  $region17: #{tpu_custom_call.1} parent=0 // pred_fallthru
    _
  // Predicated region
  $region18: #{tpu_custom_call.1} parent=0 // pred_check
    _
  $region19: #{tpu_custom_call.1} parent=0 // pred_check_branch
    %22 = sbr.rel (0) target = $region21
  $region20: #{tpu_custom_call.1} parent=0 // pred_region
    _
  $region21: #{tpu_custom_call.1} parent=0 // pred_fallthru
    _
  %v23 = vld [vmem:[%s1] sm:$0xff]
  %v24 = vld [vmem:[%s1 + $0x8] sm:$0xff]
  %v25 = vld [vmem:[%s1 + $0x10] sm:$0xff]
  %v26 = vld [vmem:[%s1 + $0x18] sm:$0xff]
  %v27 = vld [vmem:[%s1 + $0x20] sm:$0xff]
  %v28 = vld [vmem:[%s1 + $0x28] sm:$0xff]
  %v29 = vld [vmem:[%s1 + $0x30] sm:$0xff]
  %v30 = vld [vmem:[%s1 + $0x38] sm:$0xff]
  %v31 = vld [vmem:[%s0] sm:$0x3f]
  %vm32 = vcmp.ne.f32.partialorder %v31, %v31
  %v33 = vsel %vm32, -1.0, %v31
  %v34 = vlaneseq
  %v35 = vshrl.u32 %v34, 7
  %v36 = vsub.s32 2, %v35
  %v37 = vrot.slane %v31, %v36
  %v38 = vlaneseq
  %v39 = vshrl.u32 %v38, 7
  %v40 = vsub.s32 5, %v39
  %v41 = vrot.slane %v31, %v40
  %v42 = vlaneseq
  %v43 = vshrl.u32 %v42, 7
  %v44 = vsub.s32 1, %v43
  %v45 = vrot.slane %v31, %v44
  %v46 = vlaneseq
  %v47 = vshrl.u32 %v46, 7
  %v48 = vsub.s32 4, %v47
  %v49 = vrot.slane %v31, %v48
  %v51 = vrot.slane %v33, 7
  %v53 = vmul.f32 %v31, %v51
  %v54 = vlaneseq
  %v55 = vshrl.u32 %v54, 7
  %v56 = vsub.s32 1, %v55
  %v57 = vrot.slane %v53, %v56
  %v58 = vlaneseq
  %v59 = vshrl.u32 %v58, 7
  %v60 = vsub.s32 4, %v59
  %v61 = vrot.slane %v53, %v60
  %63 = vset.pattern.permute.xlu0 0
  %64 = vperm.xlu0 %63, %v23
  %v65 = vpop.permute.xlu0 %64
  %68 = vset.pattern.permute.xlu0 0
  %69 = vperm.xlu0 %68, %v24
  %v70 = vpop.permute.xlu0 %69
  %73 = vset.pattern.permute.xlu0 0
  %74 = vperm.xlu0 %73, %v25
  %v75 = vpop.permute.xlu0 %74
  %78 = vset.pattern.permute.xlu0 0
  %79 = vperm.xlu0 %78, %v26
  %v80 = vpop.permute.xlu0 %79
  %83 = vset.pattern.permute.xlu0 0
  %84 = vperm.xlu0 %83, %v27
  %v85 = vpop.permute.xlu0 %84
  %88 = vset.pattern.permute.xlu0 0
  %89 = vperm.xlu0 %88, %v28
  %v90 = vpop.permute.xlu0 %89
  %93 = vset.pattern.permute.xlu0 0
  %94 = vperm.xlu0 %93, %v29
  %v95 = vpop.permute.xlu0 %94
  %98 = vset.pattern.permute.xlu0 0
  %99 = vperm.xlu0 %98, %v30
  %v100 = vpop.permute.xlu0 %99
  %v102 = vmul.f32 %v37, %v65
  %v103 = vmul.f32 %v37, %v70
  %v104 = vmul.f32 %v37, %v75
  %v105 = vmul.f32 %v37, %v80
  %v106 = vmul.f32 %v41, %v85
  %v107 = vmul.f32 %v41, %v90
  %v108 = vmul.f32 %v41, %v95
  %v109 = vmul.f32 %v41, %v100
  %110 = vset.pattern.permute.xlu0 1
  %111 = vperm.xlu0 %110, %v23
  %v112 = vpop.permute.xlu0 %111
  %114 = vset.pattern.permute.xlu0 1
  %115 = vperm.xlu0 %114, %v24
  %v116 = vpop.permute.xlu0 %115
  %118 = vset.pattern.permute.xlu0 1
  %119 = vperm.xlu0 %118, %v25
  %v120 = vpop.permute.xlu0 %119
  %122 = vset.pattern.permute.xlu0 1
  %123 = vperm.xlu0 %122, %v26
  %v124 = vpop.permute.xlu0 %123
  %126 = vset.pattern.permute.xlu0 1
  %127 = vperm.xlu0 %126, %v27
  %v128 = vpop.permute.xlu0 %127
  %130 = vset.pattern.permute.xlu0 1
  %131 = vperm.xlu0 %130, %v28
  %v132 = vpop.permute.xlu0 %131
  %134 = vset.pattern.permute.xlu0 1
  %135 = vperm.xlu0 %134, %v29
  %v136 = vpop.permute.xlu0 %135
  %138 = vset.pattern.permute.xlu0 1
  %139 = vperm.xlu0 %138, %v30
  %v140 = vpop.permute.xlu0 %139
  %v142 = vadd.f32 %v102, %v112
  %v143 = vadd.f32 %v103, %v116
  %v144 = vadd.f32 %v104, %v120
  %v145 = vadd.f32 %v105, %v124
  %v146 = vadd.f32 %v106, %v128
  %v147 = vadd.f32 %v107, %v132
  %v148 = vadd.f32 %v108, %v136
  %v149 = vadd.f32 %v109, %v140
  %v150 = vxor.u32 %v142, 2147483648
  %v151 = vxor.u32 %v143, 2147483648
  %v152 = vxor.u32 %v144, 2147483648
  %v153 = vxor.u32 %v145, 2147483648
  %v154 = vxor.u32 %v146, 2147483648
  %v155 = vxor.u32 %v147, 2147483648
  %v156 = vxor.u32 %v148, 2147483648
  %v157 = vxor.u32 %v149, 2147483648
  %v158 = vmul.f32 %v150, 1.442695
  %v159 = vpow.pop %v158
  %v160 = vmul.f32 %v151, 1.442695
  %v161 = vpow.pop %v160
  %v162 = vmul.f32 %v152, 1.442695
  %v163 = vpow.pop %v162
  %v164 = vmul.f32 %v153, 1.442695
  %v165 = vpow.pop %v164
  %v166 = vmul.f32 %v154, 1.442695
  %v167 = vpow.pop %v166
  %v168 = vmul.f32 %v155, 1.442695
  %v169 = vpow.pop %v168
  %v170 = vmul.f32 %v156, 1.442695
  %v171 = vpow.pop %v170
  %v172 = vmul.f32 %v157, 1.442695
  %v173 = vpow.pop %v172
  %v174 = vadd.f32 %v159, 1.0
  %v175 = vadd.f32 %v161, 1.0
  %v176 = vadd.f32 %v163, 1.0
  %v177 = vadd.f32 %v165, 1.0
  %v178 = vadd.f32 %v167, 1.0
  %v179 = vadd.f32 %v169, 1.0
  %v180 = vadd.f32 %v171, 1.0
  %v181 = vadd.f32 %v173, 1.0
  %v182 = vrcp.pop %v174
  %v183 = vmul.f32 1.0, %v182
  %v184 = vrcp.pop %v175
  %v185 = vmul.f32 1.0, %v184
  %v186 = vrcp.pop %v176
  %v187 = vmul.f32 1.0, %v186
  %v188 = vrcp.pop %v177
  %v189 = vmul.f32 1.0, %v188
  %v190 = vrcp.pop %v178
  %v191 = vmul.f32 1.0, %v190
  %v192 = vrcp.pop %v179
  %v193 = vmul.f32 1.0, %v192
  %v194 = vrcp.pop %v180
  %v195 = vmul.f32 1.0, %v194
  %v196 = vrcp.pop %v181
  %v197 = vmul.f32 1.0, %v196
  %vm198 = vcmask 15360
  %199 = vst.msk [vmem:[#allocation2] sm:$0xff] %vm198, %v183
  %200 = vst.msk [vmem:[#allocation2 + $0x8] sm:$0xff] %vm198, %v185
  %201 = vst.msk [vmem:[#allocation2 + $0x10] sm:$0xff] %vm198, %v187
  %202 = vst.msk [vmem:[#allocation2 + $0x18] sm:$0xff] %vm198, %v189
  %203 = vst.msk [vmem:[#allocation2 + $0x20] sm:$0xff] %vm198, %v191
  %204 = vst.msk [vmem:[#allocation2 + $0x28] sm:$0xff] %vm198, %v193
  %205 = vst.msk [vmem:[#allocation2 + $0x30] sm:$0xff] %vm198, %v195
  %206 = vst.msk [vmem:[#allocation2 + $0x38] sm:$0xff] %vm198, %v197
  %207 = vset.pattern.permute.xlu0 2
  %208 = vperm.xlu0 %207, %v23
  %v209 = vpop.permute.xlu0 %208
  %211 = vset.pattern.permute.xlu0 2
  %212 = vperm.xlu0 %211, %v24
  %v213 = vpop.permute.xlu0 %212
  %215 = vset.pattern.permute.xlu0 2
  %216 = vperm.xlu0 %215, %v25
  %v217 = vpop.permute.xlu0 %216
  %219 = vset.pattern.permute.xlu0 2
  %220 = vperm.xlu0 %219, %v26
  %v221 = vpop.permute.xlu0 %220
  %223 = vset.pattern.permute.xlu0 2
  %224 = vperm.xlu0 %223, %v27
  %v225 = vpop.permute.xlu0 %224
  %227 = vset.pattern.permute.xlu0 2
  %228 = vperm.xlu0 %227, %v28
  %v229 = vpop.permute.xlu0 %228
  %231 = vset.pattern.permute.xlu0 2
  %232 = vperm.xlu0 %231, %v29
  %v233 = vpop.permute.xlu0 %232
  %235 = vset.pattern.permute.xlu0 2
  %236 = vperm.xlu0 %235, %v30
  %v237 = vpop.permute.xlu0 %236
  %v239 = vmul.f32 %v57, %v209
  %v240 = vmul.f32 %v57, %v213
  %v241 = vmul.f32 %v57, %v217
  %v242 = vmul.f32 %v57, %v221
  %v243 = vmul.f32 %v61, %v225
  %v244 = vmul.f32 %v61, %v229
  %v245 = vmul.f32 %v61, %v233
  %v246 = vmul.f32 %v61, %v237
  %247 = vset.pattern.permute.xlu0 5
  %248 = vperm.xlu0 %247, %v23
  %v249 = vpop.permute.xlu0 %248
  %251 = vset.pattern.permute.xlu0 5
  %252 = vperm.xlu0 %251, %v24
  %v253 = vpop.permute.xlu0 %252
  %255 = vset.pattern.permute.xlu0 5
  %256 = vperm.xlu0 %255, %v25
  %v257 = vpop.permute.xlu0 %256
  %259 = vset.pattern.permute.xlu0 5
  %260 = vperm.xlu0 %259, %v26
  %v261 = vpop.permute.xlu0 %260
  %263 = vset.pattern.permute.xlu0 5
  %264 = vperm.xlu0 %263, %v27
  %v265 = vpop.permute.xlu0 %264
  %267 = vset.pattern.permute.xlu0 5
  %268 = vperm.xlu0 %267, %v28
  %v269 = vpop.permute.xlu0 %268
  %271 = vset.pattern.permute.xlu0 5
  %272 = vperm.xlu0 %271, %v29
  %v273 = vpop.permute.xlu0 %272
  %275 = vset.pattern.permute.xlu0 5
  %276 = vperm.xlu0 %275, %v30
  %v277 = vpop.permute.xlu0 %276
  %v279 = vmul.f32 %v45, %v249
  %v280 = vmul.f32 %v45, %v253
  %v281 = vmul.f32 %v45, %v257
  %v282 = vmul.f32 %v45, %v261
  %v283 = vmul.f32 %v49, %v265
  %v284 = vmul.f32 %v49, %v269
  %v285 = vmul.f32 %v49, %v273
  %v286 = vmul.f32 %v49, %v277
  %v287 = vadd.f32 %v239, %v279
  %v288 = vadd.f32 %v240, %v280
  %v289 = vadd.f32 %v241, %v281
  %v290 = vadd.f32 %v242, %v282
  %v291 = vadd.f32 %v243, %v283
  %v292 = vadd.f32 %v244, %v284
  %v293 = vadd.f32 %v245, %v285
  %v294 = vadd.f32 %v246, %v286
  %295 = vset.pattern.permute.xlu0 8
  %296 = vperm.xlu0 %295, %v23
  %v297 = vpop.permute.xlu0 %296
  %299 = vset.pattern.permute.xlu0 8
  %300 = vperm.xlu0 %299, %v24
  %v301 = vpop.permute.xlu0 %300
  %303 = vset.pattern.permute.xlu0 8
  %304 = vperm.xlu0 %303, %v25
  %v305 = vpop.permute.xlu0 %304
  %307 = vset.pattern.permute.xlu0 8
  %308 = vperm.xlu0 %307, %v26
  %v309 = vpop.permute.xlu0 %308
  %311 = vset.pattern.permute.xlu0 8
  %312 = vperm.xlu0 %311, %v27
  %v313 = vpop.permute.xlu0 %312
  %315 = vset.pattern.permute.xlu0 8
  %316 = vperm.xlu0 %315, %v28
  %v317 = vpop.permute.xlu0 %316
  %319 = vset.pattern.permute.xlu0 8
  %320 = vperm.xlu0 %319, %v29
  %v321 = vpop.permute.xlu0 %320
  %323 = vset.pattern.permute.xlu0 8
  %324 = vperm.xlu0 %323, %v30
  %v325 = vpop.permute.xlu0 %324
  %v327 = vadd.f32 %v287, %v297
  %v328 = vadd.f32 %v288, %v301
  %v329 = vadd.f32 %v289, %v305
  %v330 = vadd.f32 %v290, %v309
  %v331 = vadd.f32 %v291, %v313
  %v332 = vadd.f32 %v292, %v317
  %v333 = vadd.f32 %v293, %v321
  %v334 = vadd.f32 %v294, %v325
  %335 = vst.msk [vmem:[#allocation3] sm:$0xff] %vm198, %v327
  %336 = vst.msk [vmem:[#allocation3 + $0x8] sm:$0xff] %vm198, %v328
  %337 = vst.msk [vmem:[#allocation3 + $0x10] sm:$0xff] %vm198, %v329
  %338 = vst.msk [vmem:[#allocation3 + $0x18] sm:$0xff] %vm198, %v330
  %339 = vst.msk [vmem:[#allocation3 + $0x20] sm:$0xff] %vm198, %v331
  %340 = vst.msk [vmem:[#allocation3 + $0x28] sm:$0xff] %vm198, %v332
  %341 = vst.msk [vmem:[#allocation3 + $0x30] sm:$0xff] %vm198, %v333
  %342 = vst.msk [vmem:[#allocation3 + $0x38] sm:$0xff] %vm198, %v334
  %343 = vset.pattern.permute.xlu0 3
  %344 = vperm.xlu0 %343, %v23
  %v345 = vpop.permute.xlu0 %344
  %347 = vset.pattern.permute.xlu0 3
  %348 = vperm.xlu0 %347, %v24
  %v349 = vpop.permute.xlu0 %348
  %351 = vset.pattern.permute.xlu0 3
  %352 = vperm.xlu0 %351, %v25
  %v353 = vpop.permute.xlu0 %352
  %355 = vset.pattern.permute.xlu0 3
  %356 = vperm.xlu0 %355, %v26
  %v357 = vpop.permute.xlu0 %356
  %359 = vset.pattern.permute.xlu0 3
  %360 = vperm.xlu0 %359, %v27
  %v361 = vpop.permute.xlu0 %360
  %363 = vset.pattern.permute.xlu0 3
  %364 = vperm.xlu0 %363, %v28
  %v365 = vpop.permute.xlu0 %364
  %367 = vset.pattern.permute.xlu0 3
  %368 = vperm.xlu0 %367, %v29
  %v369 = vpop.permute.xlu0 %368
  %371 = vset.pattern.permute.xlu0 3
  %372 = vperm.xlu0 %371, %v30
  %v373 = vpop.permute.xlu0 %372
  %v375 = vmul.f32 %v57, %v345
  %v376 = vmul.f32 %v57, %v349
  %v377 = vmul.f32 %v57, %v353
  %v378 = vmul.f32 %v57, %v357
  %v379 = vmul.f32 %v61, %v361
  %v380 = vmul.f32 %v61, %v365
  %v381 = vmul.f32 %v61, %v369
  %v382 = vmul.f32 %v61, %v373
  %383 = vset.pattern.permute.xlu0 6
  %384 = vperm.xlu0 %383, %v23
  %v385 = vpop.permute.xlu0 %384
  %387 = vset.pattern.permute.xlu0 6
  %388 = vperm.xlu0 %387, %v24
  %v389 = vpop.permute.xlu0 %388
  %391 = vset.pattern.permute.xlu0 6
  %392 = vperm.xlu0 %391, %v25
  %v393 = vpop.permute.xlu0 %392
  %395 = vset.pattern.permute.xlu0 6
  %396 = vperm.xlu0 %395, %v26
  %v397 = vpop.permute.xlu0 %396
  %399 = vset.pattern.permute.xlu0 6
  %400 = vperm.xlu0 %399, %v27
  %v401 = vpop.permute.xlu0 %400
  %403 = vset.pattern.permute.xlu0 6
  %404 = vperm.xlu0 %403, %v28
  %v405 = vpop.permute.xlu0 %404
  %407 = vset.pattern.permute.xlu0 6
  %408 = vperm.xlu0 %407, %v29
  %v409 = vpop.permute.xlu0 %408
  %411 = vset.pattern.permute.xlu0 6
  %412 = vperm.xlu0 %411, %v30
  %v413 = vpop.permute.xlu0 %412
  %v415 = vmul.f32 %v45, %v385
  %v416 = vmul.f32 %v45, %v389
  %v417 = vmul.f32 %v45, %v393
  %v418 = vmul.f32 %v45, %v397
  %v419 = vmul.f32 %v49, %v401
  %v420 = vmul.f32 %v49, %v405
  %v421 = vmul.f32 %v49, %v409
  %v422 = vmul.f32 %v49, %v413
  %v423 = vadd.f32 %v375, %v415
  %v424 = vadd.f32 %v376, %v416
  %v425 = vadd.f32 %v377, %v417
  %v426 = vadd.f32 %v378, %v418
  %v427 = vadd.f32 %v379, %v419
  %v428 = vadd.f32 %v380, %v420
  %v429 = vadd.f32 %v381, %v421
  %v430 = vadd.f32 %v382, %v422
  %431 = vset.pattern.permute.xlu0 9
  %432 = vperm.xlu0 %431, %v23
  %v433 = vpop.permute.xlu0 %432
  %435 = vset.pattern.permute.xlu0 9
  %436 = vperm.xlu0 %435, %v24
  %v437 = vpop.permute.xlu0 %436
  %439 = vset.pattern.permute.xlu0 9
  %440 = vperm.xlu0 %439, %v25
  %v441 = vpop.permute.xlu0 %440
  %443 = vset.pattern.permute.xlu0 9
  %444 = vperm.xlu0 %443, %v26
  %v445 = vpop.permute.xlu0 %444
  %447 = vset.pattern.permute.xlu0 9
  %448 = vperm.xlu0 %447, %v27
  %v449 = vpop.permute.xlu0 %448
  %451 = vset.pattern.permute.xlu0 9
  %452 = vperm.xlu0 %451, %v28
  %v453 = vpop.permute.xlu0 %452
  %455 = vset.pattern.permute.xlu0 9
  %456 = vperm.xlu0 %455, %v29
  %v457 = vpop.permute.xlu0 %456
  %459 = vset.pattern.permute.xlu0 9
  %460 = vperm.xlu0 %459, %v30
  %v461 = vpop.permute.xlu0 %460
  %v463 = vadd.f32 %v423, %v433
  %v464 = vadd.f32 %v424, %v437
  %v465 = vadd.f32 %v425, %v441
  %v466 = vadd.f32 %v426, %v445
  %v467 = vadd.f32 %v427, %v449
  %v468 = vadd.f32 %v428, %v453
  %v469 = vadd.f32 %v429, %v457
  %v470 = vadd.f32 %v430, %v461
  %471 = vst.msk [vmem:[#allocation4] sm:$0xff] %vm198, %v463
  %472 = vst.msk [vmem:[#allocation4 + $0x8] sm:$0xff] %vm198, %v464
  %473 = vst.msk [vmem:[#allocation4 + $0x10] sm:$0xff] %vm198, %v465
  %474 = vst.msk [vmem:[#allocation4 + $0x18] sm:$0xff] %vm198, %v466
  %475 = vst.msk [vmem:[#allocation4 + $0x20] sm:$0xff] %vm198, %v467
  %476 = vst.msk [vmem:[#allocation4 + $0x28] sm:$0xff] %vm198, %v468
  %477 = vst.msk [vmem:[#allocation4 + $0x30] sm:$0xff] %vm198, %v469
  %478 = vst.msk [vmem:[#allocation4 + $0x38] sm:$0xff] %vm198, %v470
  %479 = vset.pattern.permute.xlu0 4
  %480 = vperm.xlu0 %479, %v23
  %v481 = vpop.permute.xlu0 %480
  %483 = vset.pattern.permute.xlu0 4
  %484 = vperm.xlu0 %483, %v24
  %v485 = vpop.permute.xlu0 %484
  %487 = vset.pattern.permute.xlu0 4
  %488 = vperm.xlu0 %487, %v25
  %v489 = vpop.permute.xlu0 %488
  %491 = vset.pattern.permute.xlu0 4
  %492 = vperm.xlu0 %491, %v26
  %v493 = vpop.permute.xlu0 %492
  %495 = vset.pattern.permute.xlu0 4
  %496 = vperm.xlu0 %495, %v27
  %v497 = vpop.permute.xlu0 %496
  %499 = vset.pattern.permute.xlu0 4
  %500 = vperm.xlu0 %499, %v28
  %v501 = vpop.permute.xlu0 %500
  %503 = vset.pattern.permute.xlu0 4
  %504 = vperm.xlu0 %503, %v29
  %v505 = vpop.permute.xlu0 %504
  %507 = vset.pattern.permute.xlu0 4
  %508 = vperm.xlu0 %507, %v30
  %v509 = vpop.permute.xlu0 %508
  %v511 = vmul.f32 %v57, %v481
  %v512 = vmul.f32 %v57, %v485
  %v513 = vmul.f32 %v57, %v489
  %v514 = vmul.f32 %v57, %v493
  %v515 = vmul.f32 %v61, %v497
  %v516 = vmul.f32 %v61, %v501
  %v517 = vmul.f32 %v61, %v505
  %v518 = vmul.f32 %v61, %v509
  %519 = vset.pattern.permute.xlu0 7
  %520 = vperm.xlu0 %519, %v23
  %v521 = vpop.permute.xlu0 %520
  %523 = vset.pattern.permute.xlu0 7
  %524 = vperm.xlu0 %523, %v24
  %v525 = vpop.permute.xlu0 %524
  %527 = vset.pattern.permute.xlu0 7
  %528 = vperm.xlu0 %527, %v25
  %v529 = vpop.permute.xlu0 %528
  %531 = vset.pattern.permute.xlu0 7
  %532 = vperm.xlu0 %531, %v26
  %v533 = vpop.permute.xlu0 %532
  %535 = vset.pattern.permute.xlu0 7
  %536 = vperm.xlu0 %535, %v27
  %v537 = vpop.permute.xlu0 %536
  %539 = vset.pattern.permute.xlu0 7
  %540 = vperm.xlu0 %539, %v28
  %v541 = vpop.permute.xlu0 %540
  %543 = vset.pattern.permute.xlu0 7
  %544 = vperm.xlu0 %543, %v29
  %v545 = vpop.permute.xlu0 %544
  %547 = vset.pattern.permute.xlu0 7
  %548 = vperm.xlu0 %547, %v30
  %v549 = vpop.permute.xlu0 %548
  %v551 = vmul.f32 %v45, %v521
  %v552 = vmul.f32 %v45, %v525
  %v553 = vmul.f32 %v45, %v529
  %v554 = vmul.f32 %v45, %v533
  %v555 = vmul.f32 %v49, %v537
  %v556 = vmul.f32 %v49, %v541
  %v557 = vmul.f32 %v49, %v545
  %v558 = vmul.f32 %v49, %v549
  %v559 = vadd.f32 %v511, %v551
  %v560 = vadd.f32 %v512, %v552
  %v561 = vadd.f32 %v513, %v553
  %v562 = vadd.f32 %v514, %v554
  %v563 = vadd.f32 %v515, %v555
  %v564 = vadd.f32 %v516, %v556
  %v565 = vadd.f32 %v517, %v557
  %v566 = vadd.f32 %v518, %v558
  %567 = vset.pattern.permute.xlu0 10
  %568 = vperm.xlu0 %567, %v23
  %v569 = vpop.permute.xlu0 %568
  %571 = vset.pattern.permute.xlu0 10
  %572 = vperm.xlu0 %571, %v24
  %v573 = vpop.permute.xlu0 %572
  %575 = vset.pattern.permute.xlu0 10
  %576 = vperm.xlu0 %575, %v25
  %v577 = vpop.permute.xlu0 %576
  %579 = vset.pattern.permute.xlu0 10
  %580 = vperm.xlu0 %579, %v26
  %v581 = vpop.permute.xlu0 %580
  %583 = vset.pattern.permute.xlu0 10
  %584 = vperm.xlu0 %583, %v27
  %v585 = vpop.permute.xlu0 %584
  %587 = vset.pattern.permute.xlu0 10
  %588 = vperm.xlu0 %587, %v28
  %v589 = vpop.permute.xlu0 %588
  %591 = vset.pattern.permute.xlu0 10
  %592 = vperm.xlu0 %591, %v29
  %v593 = vpop.permute.xlu0 %592
  %595 = vset.pattern.permute.xlu0 10
  %596 = vperm.xlu0 %595, %v30
  %v597 = vpop.permute.xlu0 %596
  %v599 = vadd.f32 %v559, %v569
  %v600 = vadd.f32 %v560, %v573
  %v601 = vadd.f32 %v561, %v577
  %v602 = vadd.f32 %v562, %v581
  %v603 = vadd.f32 %v563, %v585
  %v604 = vadd.f32 %v564, %v589
  %v605 = vadd.f32 %v565, %v593
  %v606 = vadd.f32 %v566, %v597
  %607 = vst.msk [vmem:[#allocation5] sm:$0xff] %vm198, %v599
  %608 = vst.msk [vmem:[#allocation5 + $0x8] sm:$0xff] %vm198, %v600
  %609 = vst.msk [vmem:[#allocation5 + $0x10] sm:$0xff] %vm198, %v601
  %610 = vst.msk [vmem:[#allocation5 + $0x18] sm:$0xff] %vm198, %v602
  %611 = vst.msk [vmem:[#allocation5 + $0x20] sm:$0xff] %vm198, %v603
  %612 = vst.msk [vmem:[#allocation5 + $0x28] sm:$0xff] %vm198, %v604
  %613 = vst.msk [vmem:[#allocation5 + $0x30] sm:$0xff] %vm198, %v605
  %614 = vst.msk [vmem:[#allocation5 + $0x38] sm:$0xff] %vm198, %v606
  %s615 = scalar_lea.vmem %s0, 8
  %v616 = vld [vmem:[%s615] sm:$0x3f]
  %vm617 = vcmp.ne.f32.partialorder %v616, %v616
  %v618 = vsel %vm617, -1.0, %v616
  %v619 = vlaneseq
  %v620 = vshrl.u32 %v619, 7
  %v621 = vsub.s32 2, %v620
  %v622 = vrot.slane %v616, %v621
  %v623 = vlaneseq
  %v624 = vshrl.u32 %v623, 7
  %v625 = vsub.s32 5, %v624
  %v626 = vrot.slane %v616, %v625
  %v627 = vlaneseq
  %v628 = vshrl.u32 %v627, 7
  %v629 = vsub.s32 1, %v628
  %v630 = vrot.slane %v616, %v629
  %v631 = vlaneseq
  %v632 = vshrl.u32 %v631, 7
  %v633 = vsub.s32 4, %v632
  %v634 = vrot.slane %v616, %v633
  %v636 = vrot.slane %v618, 7
  %v638 = vmul.f32 %v616, %v636
  %v639 = vlaneseq
  %v640 = vshrl.u32 %v639, 7
  %v641 = vsub.s32 1, %v640
  %v642 = vrot.slane %v638, %v641
  %v643 = vlaneseq
  %v644 = vshrl.u32 %v643, 7
  %v645 = vsub.s32 4, %v644
  %v646 = vrot.slane %v638, %v645
  %v647 = vmul.f32 %v622, %v65
  %v648 = vmul.f32 %v622, %v70
  %v649 = vmul.f32 %v622, %v75
  %v650 = vmul.f32 %v622, %v80
  %v651 = vmul.f32 %v626, %v85
  %v652 = vmul.f32 %v626, %v90
  %v653 = vmul.f32 %v626, %v95
  %v654 = vmul.f32 %v626, %v100
  %v655 = vadd.f32 %v647, %v112
  %v656 = vadd.f32 %v648, %v116
  %v657 = vadd.f32 %v649, %v120
  %v658 = vadd.f32 %v650, %v124
  %v659 = vadd.f32 %v651, %v128
  %v660 = vadd.f32 %v652, %v132
  %v661 = vadd.f32 %v653, %v136
  %v662 = vadd.f32 %v654, %v140
  %v663 = vxor.u32 %v655, 2147483648
  %v664 = vxor.u32 %v656, 2147483648
  %v665 = vxor.u32 %v657, 2147483648
  %v666 = vxor.u32 %v658, 2147483648
  %v667 = vxor.u32 %v659, 2147483648
  %v668 = vxor.u32 %v660, 2147483648
  %v669 = vxor.u32 %v661, 2147483648
  %v670 = vxor.u32 %v662, 2147483648
  %v671 = vmul.f32 %v663, 1.442695
  %v672 = vpow.pop %v671
  %v673 = vmul.f32 %v664, 1.442695
  %v674 = vpow.pop %v673
  %v675 = vmul.f32 %v665, 1.442695
  %v676 = vpow.pop %v675
  %v677 = vmul.f32 %v666, 1.442695
  %v678 = vpow.pop %v677
  %v679 = vmul.f32 %v667, 1.442695
  %v680 = vpow.pop %v679
  %v681 = vmul.f32 %v668, 1.442695
  %v682 = vpow.pop %v681
  %v683 = vmul.f32 %v669, 1.442695
  %v684 = vpow.pop %v683
  %v685 = vmul.f32 %v670, 1.442695
  %v686 = vpow.pop %v685
  %v687 = vadd.f32 %v672, 1.0
  %v688 = vadd.f32 %v674, 1.0
  %v689 = vadd.f32 %v676, 1.0
  %v690 = vadd.f32 %v678, 1.0
  %v691 = vadd.f32 %v680, 1.0
  %v692 = vadd.f32 %v682, 1.0
  %v693 = vadd.f32 %v684, 1.0
  %v694 = vadd.f32 %v686, 1.0
  %v695 = vrcp.pop %v687
  %v696 = vmul.f32 1.0, %v695
  %v697 = vrcp.pop %v688
  %v698 = vmul.f32 1.0, %v697
  %v699 = vrcp.pop %v689
  %v700 = vmul.f32 1.0, %v699
  %v701 = vrcp.pop %v690
  %v702 = vmul.f32 1.0, %v701
  %v703 = vrcp.pop %v691
  %v704 = vmul.f32 1.0, %v703
  %v705 = vrcp.pop %v692
  %v706 = vmul.f32 1.0, %v705
  %v707 = vrcp.pop %v693
  %v708 = vmul.f32 1.0, %v707
  %v709 = vrcp.pop %v694
  %v710 = vmul.f32 1.0, %v709
  %s711 = scalar_lea.vmem [#allocation2], 64
  %712 = vst.msk [vmem:[%s711] sm:$0xff] %vm198, %v696
  %713 = vst.msk [vmem:[%s711 + $0x8] sm:$0xff] %vm198, %v698
  %714 = vst.msk [vmem:[%s711 + $0x10] sm:$0xff] %vm198, %v700
  %715 = vst.msk [vmem:[%s711 + $0x18] sm:$0xff] %vm198, %v702
  %716 = vst.msk [vmem:[%s711 + $0x20] sm:$0xff] %vm198, %v704
  %717 = vst.msk [vmem:[%s711 + $0x28] sm:$0xff] %vm198, %v706
  %718 = vst.msk [vmem:[%s711 + $0x30] sm:$0xff] %vm198, %v708
  %719 = vst.msk [vmem:[%s711 + $0x38] sm:$0xff] %vm198, %v710
  %v720 = vmul.f32 %v642, %v209
  %v721 = vmul.f32 %v642, %v213
  %v722 = vmul.f32 %v642, %v217
  %v723 = vmul.f32 %v642, %v221
  %v724 = vmul.f32 %v646, %v225
  %v725 = vmul.f32 %v646, %v229
  %v726 = vmul.f32 %v646, %v233
  %v727 = vmul.f32 %v646, %v237
  %v728 = vmul.f32 %v630, %v249
  %v729 = vmul.f32 %v630, %v253
  %v730 = vmul.f32 %v630, %v257
  %v731 = vmul.f32 %v630, %v261
  %v732 = vmul.f32 %v634, %v265
  %v733 = vmul.f32 %v634, %v269
  %v734 = vmul.f32 %v634, %v273
  %v735 = vmul.f32 %v634, %v277
  %v736 = vadd.f32 %v720, %v728
  %v737 = vadd.f32 %v721, %v729
  %v738 = vadd.f32 %v722, %v730
  %v739 = vadd.f32 %v723, %v731
  %v740 = vadd.f32 %v724, %v732
  %v741 = vadd.f32 %v725, %v733
  %v742 = vadd.f32 %v726, %v734
  %v743 = vadd.f32 %v727, %v735
  %v744 = vadd.f32 %v736, %v297
  %v745 = vadd.f32 %v737, %v301
  %v746 = vadd.f32 %v738, %v305
  %v747 = vadd.f32 %v739, %v309
  %v748 = vadd.f32 %v740, %v313
  %v749 = vadd.f32 %v741, %v317
  %v750 = vadd.f32 %v742, %v321
  %v751 = vadd.f32 %v743, %v325
  %s752 = scalar_lea.vmem [#allocation3], 64
  %753 = vst.msk [vmem:[%s752] sm:$0xff] %vm198, %v744
  %754 = vst.msk [vmem:[%s752 + $0x8] sm:$0xff] %vm198, %v745
  %755 = vst.msk [vmem:[%s752 + $0x10] sm:$0xff] %vm198, %v746
  %756 = vst.msk [vmem:[%s752 + $0x18] sm:$0xff] %vm198, %v747
  %757 = vst.msk [vmem:[%s752 + $0x20] sm:$0xff] %vm198, %v748
  %758 = vst.msk [vmem:[%s752 + $0x28] sm:$0xff] %vm198, %v749
  %759 = vst.msk [vmem:[%s752 + $0x30] sm:$0xff] %vm198, %v750
  %760 = vst.msk [vmem:[%s752 + $0x38] sm:$0xff] %vm198, %v751
  %v761 = vmul.f32 %v642, %v345
  %v762 = vmul.f32 %v642, %v349
  %v763 = vmul.f32 %v642, %v353
  %v764 = vmul.f32 %v642, %v357
  %v765 = vmul.f32 %v646, %v361
  %v766 = vmul.f32 %v646, %v365
  %v767 = vmul.f32 %v646, %v369
  %v768 = vmul.f32 %v646, %v373
  %v769 = vmul.f32 %v630, %v385
  %v770 = vmul.f32 %v630, %v389
  %v771 = vmul.f32 %v630, %v393
  %v772 = vmul.f32 %v630, %v397
  %v773 = vmul.f32 %v634, %v401
  %v774 = vmul.f32 %v634, %v405
  %v775 = vmul.f32 %v634, %v409
  %v776 = vmul.f32 %v634, %v413
  %v777 = vadd.f32 %v761, %v769
  %v778 = vadd.f32 %v762, %v770
  %v779 = vadd.f32 %v763, %v771
  %v780 = vadd.f32 %v764, %v772
  %v781 = vadd.f32 %v765, %v773
  %v782 = vadd.f32 %v766, %v774
  %v783 = vadd.f32 %v767, %v775
  %v784 = vadd.f32 %v768, %v776
  %v785 = vadd.f32 %v777, %v433
  %v786 = vadd.f32 %v778, %v437
  %v787 = vadd.f32 %v779, %v441
  %v788 = vadd.f32 %v780, %v445
  %v789 = vadd.f32 %v781, %v449
  %v790 = vadd.f32 %v782, %v453
  %v791 = vadd.f32 %v783, %v457
  %v792 = vadd.f32 %v784, %v461
  %s793 = scalar_lea.vmem [#allocation4], 64
  %794 = vst.msk [vmem:[%s793] sm:$0xff] %vm198, %v785
  %795 = vst.msk [vmem:[%s793 + $0x8] sm:$0xff] %vm198, %v786
  %796 = vst.msk [vmem:[%s793 + $0x10] sm:$0xff] %vm198, %v787
  %797 = vst.msk [vmem:[%s793 + $0x18] sm:$0xff] %vm198, %v788
  %798 = vst.msk [vmem:[%s793 + $0x20] sm:$0xff] %vm198, %v789
  %799 = vst.msk [vmem:[%s793 + $0x28] sm:$0xff] %vm198, %v790
  %800 = vst.msk [vmem:[%s793 + $0x30] sm:$0xff] %vm198, %v791
  %801 = vst.msk [vmem:[%s793 + $0x38] sm:$0xff] %vm198, %v792
  %v802 = vmul.f32 %v642, %v481
  %v803 = vmul.f32 %v642, %v485
  %v804 = vmul.f32 %v642, %v489
  %v805 = vmul.f32 %v642, %v493
  %v806 = vmul.f32 %v646, %v497
  %v807 = vmul.f32 %v646, %v501
  %v808 = vmul.f32 %v646, %v505
  %v809 = vmul.f32 %v646, %v509
  %v810 = vmul.f32 %v630, %v521
  %v811 = vmul.f32 %v630, %v525
  %v812 = vmul.f32 %v630, %v529
  %v813 = vmul.f32 %v630, %v533
  %v814 = vmul.f32 %v634, %v537
  %v815 = vmul.f32 %v634, %v541
  %v816 = vmul.f32 %v634, %v545
  %v817 = vmul.f32 %v634, %v549
  %v818 = vadd.f32 %v802, %v810
  %v819 = vadd.f32 %v803, %v811
  %v820 = vadd.f32 %v804, %v812
  %v821 = vadd.f32 %v805, %v813
  %v822 = vadd.f32 %v806, %v814
  %v823 = vadd.f32 %v807, %v815
  %v824 = vadd.f32 %v808, %v816
  %v825 = vadd.f32 %v809, %v817
  %v826 = vadd.f32 %v818, %v569
  %v827 = vadd.f32 %v819, %v573
  %v828 = vadd.f32 %v820, %v577
  %v829 = vadd.f32 %v821, %v581
  %v830 = vadd.f32 %v822, %v585
  %v831 = vadd.f32 %v823, %v589
  %v832 = vadd.f32 %v824, %v593
  %v833 = vadd.f32 %v825, %v597
  %s834 = scalar_lea.vmem [#allocation5], 64
  %835 = vst.msk [vmem:[%s834] sm:$0xff] %vm198, %v826
  %836 = vst.msk [vmem:[%s834 + $0x8] sm:$0xff] %vm198, %v827
  %837 = vst.msk [vmem:[%s834 + $0x10] sm:$0xff] %vm198, %v828
  %838 = vst.msk [vmem:[%s834 + $0x18] sm:$0xff] %vm198, %v829
  %839 = vst.msk [vmem:[%s834 + $0x20] sm:$0xff] %vm198, %v830
  %840 = vst.msk [vmem:[%s834 + $0x28] sm:$0xff] %vm198, %v831
  %841 = vst.msk [vmem:[%s834 + $0x30] sm:$0xff] %vm198, %v832
  %842 = vst.msk [vmem:[%s834 + $0x38] sm:$0xff] %vm198, %v833
  %s843 = scalar_lea.vmem %s0, 16
  %v844 = vld [vmem:[%s843] sm:$0x3f]
  %vm845 = vcmp.ne.f32.partialorder %v844, %v844
  %v846 = vsel %vm845, -1.0, %v844
  %v847 = vlaneseq
  %v848 = vshrl.u32 %v847, 7
  %v849 = vsub.s32 2, %v848
  %v850 = vrot.slane %v844, %v849
  %v851 = vlaneseq
  %v852 = vshrl.u32 %v851, 7
  %v853 = vsub.s32 5, %v852
  %v854 = vrot.slane %v844, %v853
  %v855 = vlaneseq
  %v856 = vshrl.u32 %v855, 7
  %v857 = vsub.s32 1, %v856
  %v858 = vrot.slane %v844, %v857
  %v859 = vlaneseq
  %v860 = vshrl.u32 %v859, 7
  %v861 = vsub.s32 4, %v860
  %v862 = vrot.slane %v844, %v861
  %v864 = vrot.slane %v846, 7
  %v866 = vmul.f32 %v844, %v864
  %v867 = vlaneseq
  %v868 = vshrl.u32 %v867, 7
  %v869 = vsub.s32 1, %v868
  %v870 = vrot.slane %v866, %v869
  %v871 = vlaneseq
  %v872 = vshrl.u32 %v871, 7
  %v873 = vsub.s32 4, %v872
  %v874 = vrot.slane %v866, %v873
  %v875 = vmul.f32 %v850, %v65
  %v876 = vmul.f32 %v850, %v70
  %v877 = vmul.f32 %v850, %v75
  %v878 = vmul.f32 %v850, %v80
  %v879 = vmul.f32 %v854, %v85
  %v880 = vmul.f32 %v854, %v90
  %v881 = vmul.f32 %v854, %v95
  %v882 = vmul.f32 %v854, %v100
  %v883 = vadd.f32 %v875, %v112
  %v884 = vadd.f32 %v876, %v116
  %v885 = vadd.f32 %v877, %v120
  %v886 = vadd.f32 %v878, %v124
  %v887 = vadd.f32 %v879, %v128
  %v888 = vadd.f32 %v880, %v132
  %v889 = vadd.f32 %v881, %v136
  %v890 = vadd.f32 %v882, %v140
  %v891 = vxor.u32 %v883, 2147483648
  %v892 = vxor.u32 %v884, 2147483648
  %v893 = vxor.u32 %v885, 2147483648
  %v894 = vxor.u32 %v886, 2147483648
  %v895 = vxor.u32 %v887, 2147483648
  %v896 = vxor.u32 %v888, 2147483648
  %v897 = vxor.u32 %v889, 2147483648
  %v898 = vxor.u32 %v890, 2147483648
  %v899 = vmul.f32 %v891, 1.442695
  %v900 = vpow.pop %v899
  %v901 = vmul.f32 %v892, 1.442695
  %v902 = vpow.pop %v901
  %v903 = vmul.f32 %v893, 1.442695
  %v904 = vpow.pop %v903
  %v905 = vmul.f32 %v894, 1.442695
  %v906 = vpow.pop %v905
  %v907 = vmul.f32 %v895, 1.442695
  %v908 = vpow.pop %v907
  %v909 = vmul.f32 %v896, 1.442695
  %v910 = vpow.pop %v909
  %v911 = vmul.f32 %v897, 1.442695
  %v912 = vpow.pop %v911
  %v913 = vmul.f32 %v898, 1.442695
  %v914 = vpow.pop %v913
  %v915 = vadd.f32 %v900, 1.0
  %v916 = vadd.f32 %v902, 1.0
  %v917 = vadd.f32 %v904, 1.0
  %v918 = vadd.f32 %v906, 1.0
  %v919 = vadd.f32 %v908, 1.0
  %v920 = vadd.f32 %v910, 1.0
  %v921 = vadd.f32 %v912, 1.0
  %v922 = vadd.f32 %v914, 1.0
  %v923 = vrcp.pop %v915
  %v924 = vmul.f32 1.0, %v923
  %v925 = vrcp.pop %v916
  %v926 = vmul.f32 1.0, %v925
  %v927 = vrcp.pop %v917
  %v928 = vmul.f32 1.0, %v927
  %v929 = vrcp.pop %v918
  %v930 = vmul.f32 1.0, %v929
  %v931 = vrcp.pop %v919
  %v932 = vmul.f32 1.0, %v931
  %v933 = vrcp.pop %v920
  %v934 = vmul.f32 1.0, %v933
  %v935 = vrcp.pop %v921
  %v936 = vmul.f32 1.0, %v935
  %v937 = vrcp.pop %v922
  %v938 = vmul.f32 1.0, %v937
  %s939 = scalar_lea.vmem [#allocation2], 128
  %940 = vst.msk [vmem:[%s939] sm:$0xff] %vm198, %v924
  %941 = vst.msk [vmem:[%s939 + $0x8] sm:$0xff] %vm198, %v926
  %942 = vst.msk [vmem:[%s939 + $0x10] sm:$0xff] %vm198, %v928
  %943 = vst.msk [vmem:[%s939 + $0x18] sm:$0xff] %vm198, %v930
  %944 = vst.msk [vmem:[%s939 + $0x20] sm:$0xff] %vm198, %v932
  %945 = vst.msk [vmem:[%s939 + $0x28] sm:$0xff] %vm198, %v934
  %946 = vst.msk [vmem:[%s939 + $0x30] sm:$0xff] %vm198, %v936
  %947 = vst.msk [vmem:[%s939 + $0x38] sm:$0xff] %vm198, %v938
  %v948 = vmul.f32 %v870, %v209
  %v949 = vmul.f32 %v870, %v213
  %v950 = vmul.f32 %v870, %v217
  %v951 = vmul.f32 %v870, %v221
  %v952 = vmul.f32 %v874, %v225
  %v953 = vmul.f32 %v874, %v229
  %v954 = vmul.f32 %v874, %v233
  %v955 = vmul.f32 %v874, %v237
  %v956 = vmul.f32 %v858, %v249
  %v957 = vmul.f32 %v858, %v253
  %v958 = vmul.f32 %v858, %v257
  %v959 = vmul.f32 %v858, %v261
  %v960 = vmul.f32 %v862, %v265
  %v961 = vmul.f32 %v862, %v269
  %v962 = vmul.f32 %v862, %v273
  %v963 = vmul.f32 %v862, %v277
  %v964 = vadd.f32 %v948, %v956
  %v965 = vadd.f32 %v949, %v957
  %v966 = vadd.f32 %v950, %v958
  %v967 = vadd.f32 %v951, %v959
  %v968 = vadd.f32 %v952, %v960
  %v969 = vadd.f32 %v953, %v961
  %v970 = vadd.f32 %v954, %v962
  %v971 = vadd.f32 %v955, %v963
  %v972 = vadd.f32 %v964, %v297
  %v973 = vadd.f32 %v965, %v301
  %v974 = vadd.f32 %v966, %v305
  %v975 = vadd.f32 %v967, %v309
  %v976 = vadd.f32 %v968, %v313
  %v977 = vadd.f32 %v969, %v317
  %v978 = vadd.f32 %v970, %v321
  %v979 = vadd.f32 %v971, %v325
  %s980 = scalar_lea.vmem [#allocation3], 128
  %981 = vst.msk [vmem:[%s980] sm:$0xff] %vm198, %v972
  %982 = vst.msk [vmem:[%s980 + $0x8] sm:$0xff] %vm198, %v973
  %983 = vst.msk [vmem:[%s980 + $0x10] sm:$0xff] %vm198, %v974
  %984 = vst.msk [vmem:[%s980 + $0x18] sm:$0xff] %vm198, %v975
  %985 = vst.msk [vmem:[%s980 + $0x20] sm:$0xff] %vm198, %v976
  %986 = vst.msk [vmem:[%s980 + $0x28] sm:$0xff] %vm198, %v977
  %987 = vst.msk [vmem:[%s980 + $0x30] sm:$0xff] %vm198, %v978
  %988 = vst.msk [vmem:[%s980 + $0x38] sm:$0xff] %vm198, %v979
  %v989 = vmul.f32 %v870, %v345
  %v990 = vmul.f32 %v870, %v349
  %v991 = vmul.f32 %v870, %v353
  %v992 = vmul.f32 %v870, %v357
  %v993 = vmul.f32 %v874, %v361
  %v994 = vmul.f32 %v874, %v365
  %v995 = vmul.f32 %v874, %v369
  %v996 = vmul.f32 %v874, %v373
  %v997 = vmul.f32 %v858, %v385
  %v998 = vmul.f32 %v858, %v389
  %v999 = vmul.f32 %v858, %v393
  %v1000 = vmul.f32 %v858, %v397
  %v1001 = vmul.f32 %v862, %v401
  %v1002 = vmul.f32 %v862, %v405
  %v1003 = vmul.f32 %v862, %v409
  %v1004 = vmul.f32 %v862, %v413
  %v1005 = vadd.f32 %v989, %v997
  %v1006 = vadd.f32 %v990, %v998
  %v1007 = vadd.f32 %v991, %v999
  %v1008 = vadd.f32 %v992, %v1000
  %v1009 = vadd.f32 %v993, %v1001
  %v1010 = vadd.f32 %v994, %v1002
  %v1011 = vadd.f32 %v995, %v1003
  %v1012 = vadd.f32 %v996, %v1004
  %v1013 = vadd.f32 %v1005, %v433
  %v1014 = vadd.f32 %v1006, %v437
  %v1015 = vadd.f32 %v1007, %v441
  %v1016 = vadd.f32 %v1008, %v445
  %v1017 = vadd.f32 %v1009, %v449
  %v1018 = vadd.f32 %v1010, %v453
  %v1019 = vadd.f32 %v1011, %v457
  %v1020 = vadd.f32 %v1012, %v461
  %s1021 = scalar_lea.vmem [#allocation4], 128
  %1022 = vst.msk [vmem:[%s1021] sm:$0xff] %vm198, %v1013
  %1023 = vst.msk [vmem:[%s1021 + $0x8] sm:$0xff] %vm198, %v1014
  %1024 = vst.msk [vmem:[%s1021 + $0x10] sm:$0xff] %vm198, %v1015
  %1025 = vst.msk [vmem:[%s1021 + $0x18] sm:$0xff] %vm198, %v1016
  %1026 = vst.msk [vmem:[%s1021 + $0x20] sm:$0xff] %vm198, %v1017
  %1027 = vst.msk [vmem:[%s1021 + $0x28] sm:$0xff] %vm198, %v1018
  %1028 = vst.msk [vmem:[%s1021 + $0x30] sm:$0xff] %vm198, %v1019
  %1029 = vst.msk [vmem:[%s1021 + $0x38] sm:$0xff] %vm198, %v1020
  %v1030 = vmul.f32 %v870, %v481
  %v1031 = vmul.f32 %v870, %v485
  %v1032 = vmul.f32 %v870, %v489
  %v1033 = vmul.f32 %v870, %v493
  %v1034 = vmul.f32 %v874, %v497
  %v1035 = vmul.f32 %v874, %v501
  %v1036 = vmul.f32 %v874, %v505
  %v1037 = vmul.f32 %v874, %v509
  %v1038 = vmul.f32 %v858, %v521
  %v1039 = vmul.f32 %v858, %v525
  %v1040 = vmul.f32 %v858, %v529
  %v1041 = vmul.f32 %v858, %v533
  %v1042 = vmul.f32 %v862, %v537
  %v1043 = vmul.f32 %v862, %v541
  %v1044 = vmul.f32 %v862, %v545
  %v1045 = vmul.f32 %v862, %v549
  %v1046 = vadd.f32 %v1030, %v1038
  %v1047 = vadd.f32 %v1031, %v1039
  %v1048 = vadd.f32 %v1032, %v1040
  %v1049 = vadd.f32 %v1033, %v1041
  %v1050 = vadd.f32 %v1034, %v1042
  %v1051 = vadd.f32 %v1035, %v1043
  %v1052 = vadd.f32 %v1036, %v1044
  %v1053 = vadd.f32 %v1037, %v1045
  %v1054 = vadd.f32 %v1046, %v569
  %v1055 = vadd.f32 %v1047, %v573
  %v1056 = vadd.f32 %v1048, %v577
  %v1057 = vadd.f32 %v1049, %v581
  %v1058 = vadd.f32 %v1050, %v585
  %v1059 = vadd.f32 %v1051, %v589
  %v1060 = vadd.f32 %v1052, %v593
  %v1061 = vadd.f32 %v1053, %v597
  %s1062 = scalar_lea.vmem [#allocation5], 128
  %1063 = vst.msk [vmem:[%s1062] sm:$0xff] %vm198, %v1054
  %1064 = vst.msk [vmem:[%s1062 + $0x8] sm:$0xff] %vm198, %v1055
  %1065 = vst.msk [vmem:[%s1062 + $0x10] sm:$0xff] %vm198, %v1056
  %1066 = vst.msk [vmem:[%s1062 + $0x18] sm:$0xff] %vm198, %v1057
  %1067 = vst.msk [vmem:[%s1062 + $0x20] sm:$0xff] %vm198, %v1058
  %1068 = vst.msk [vmem:[%s1062 + $0x28] sm:$0xff] %vm198, %v1059
  %1069 = vst.msk [vmem:[%s1062 + $0x30] sm:$0xff] %vm198, %v1060
  %1070 = vst.msk [vmem:[%s1062 + $0x38] sm:$0xff] %vm198, %v1061
  %s1071 = scalar_lea.vmem %s0, 24
  %v1072 = vld [vmem:[%s1071] sm:$0x3f]
  %vm1073 = vcmp.ne.f32.partialorder %v1072, %v1072
  %v1074 = vsel %vm1073, -1.0, %v1072
  %v1075 = vlaneseq
  %v1076 = vshrl.u32 %v1075, 7
  %v1077 = vsub.s32 2, %v1076
  %v1078 = vrot.slane %v1072, %v1077
  %v1079 = vlaneseq
  %v1080 = vshrl.u32 %v1079, 7
  %v1081 = vsub.s32 5, %v1080
  %v1082 = vrot.slane %v1072, %v1081
  %v1083 = vlaneseq
  %v1084 = vshrl.u32 %v1083, 7
  %v1085 = vsub.s32 1, %v1084
  %v1086 = vrot.slane %v1072, %v1085
  %v1087 = vlaneseq
  %v1088 = vshrl.u32 %v1087, 7
  %v1089 = vsub.s32 4, %v1088
  %v1090 = vrot.slane %v1072, %v1089
  %v1092 = vrot.slane %v1074, 7
  %v1094 = vmul.f32 %v1072, %v1092
  %v1095 = vlaneseq
  %v1096 = vshrl.u32 %v1095, 7
  %v1097 = vsub.s32 1, %v1096
  %v1098 = vrot.slane %v1094, %v1097
  %v1099 = vlaneseq
  %v1100 = vshrl.u32 %v1099, 7
  %v1101 = vsub.s32 4, %v1100
  %v1102 = vrot.slane %v1094, %v1101
  %v1103 = vmul.f32 %v1078, %v65
  %v1104 = vmul.f32 %v1078, %v70
  %v1105 = vmul.f32 %v1078, %v75
  %v1106 = vmul.f32 %v1078, %v80
  %v1107 = vmul.f32 %v1082, %v85
  %v1108 = vmul.f32 %v1082, %v90
  %v1109 = vmul.f32 %v1082, %v95
  %v1110 = vmul.f32 %v1082, %v100
  %v1111 = vadd.f32 %v1103, %v112
  %v1112 = vadd.f32 %v1104, %v116
  %v1113 = vadd.f32 %v1105, %v120
  %v1114 = vadd.f32 %v1106, %v124
  %v1115 = vadd.f32 %v1107, %v128
  %v1116 = vadd.f32 %v1108, %v132
  %v1117 = vadd.f32 %v1109, %v136
  %v1118 = vadd.f32 %v1110, %v140
  %v1119 = vxor.u32 %v1111, 2147483648
  %v1120 = vxor.u32 %v1112, 2147483648
  %v1121 = vxor.u32 %v1113, 2147483648
  %v1122 = vxor.u32 %v1114, 2147483648
  %v1123 = vxor.u32 %v1115, 2147483648
  %v1124 = vxor.u32 %v1116, 2147483648
  %v1125 = vxor.u32 %v1117, 2147483648
  %v1126 = vxor.u32 %v1118, 2147483648
  %v1127 = vmul.f32 %v1119, 1.442695
  %v1128 = vpow.pop %v1127
  %v1129 = vmul.f32 %v1120, 1.442695
  %v1130 = vpow.pop %v1129
  %v1131 = vmul.f32 %v1121, 1.442695
  %v1132 = vpow.pop %v1131
  %v1133 = vmul.f32 %v1122, 1.442695
  %v1134 = vpow.pop %v1133
  %v1135 = vmul.f32 %v1123, 1.442695
  %v1136 = vpow.pop %v1135
  %v1137 = vmul.f32 %v1124, 1.442695
  %v1138 = vpow.pop %v1137
  %v1139 = vmul.f32 %v1125, 1.442695
  %v1140 = vpow.pop %v1139
  %v1141 = vmul.f32 %v1126, 1.442695
  %v1142 = vpow.pop %v1141
  %v1143 = vadd.f32 %v1128, 1.0
  %v1144 = vadd.f32 %v1130, 1.0
  %v1145 = vadd.f32 %v1132, 1.0
  %v1146 = vadd.f32 %v1134, 1.0
  %v1147 = vadd.f32 %v1136, 1.0
  %v1148 = vadd.f32 %v1138, 1.0
  %v1149 = vadd.f32 %v1140, 1.0
  %v1150 = vadd.f32 %v1142, 1.0
  %v1151 = vrcp.pop %v1143
  %v1152 = vmul.f32 1.0, %v1151
  %v1153 = vrcp.pop %v1144
  %v1154 = vmul.f32 1.0, %v1153
  %v1155 = vrcp.pop %v1145
  %v1156 = vmul.f32 1.0, %v1155
  %v1157 = vrcp.pop %v1146
  %v1158 = vmul.f32 1.0, %v1157
  %v1159 = vrcp.pop %v1147
  %v1160 = vmul.f32 1.0, %v1159
  %v1161 = vrcp.pop %v1148
  %v1162 = vmul.f32 1.0, %v1161
  %v1163 = vrcp.pop %v1149
  %v1164 = vmul.f32 1.0, %v1163
  %v1165 = vrcp.pop %v1150
  %v1166 = vmul.f32 1.0, %v1165
  %s1167 = scalar_lea.vmem [#allocation2], 192
  %1168 = vst.msk [vmem:[%s1167] sm:$0xff] %vm198, %v1152
  %1169 = vst.msk [vmem:[%s1167 + $0x8] sm:$0xff] %vm198, %v1154
  %1170 = vst.msk [vmem:[%s1167 + $0x10] sm:$0xff] %vm198, %v1156
  %1171 = vst.msk [vmem:[%s1167 + $0x18] sm:$0xff] %vm198, %v1158
  %1172 = vst.msk [vmem:[%s1167 + $0x20] sm:$0xff] %vm198, %v1160
  %1173 = vst.msk [vmem:[%s1167 + $0x28] sm:$0xff] %vm198, %v1162
  %1174 = vst.msk [vmem:[%s1167 + $0x30] sm:$0xff] %vm198, %v1164
  %1175 = vst.msk [vmem:[%s1167 + $0x38] sm:$0xff] %vm198, %v1166
  %v1176 = vmul.f32 %v1098, %v209
  %v1177 = vmul.f32 %v1098, %v213
  %v1178 = vmul.f32 %v1098, %v217
  %v1179 = vmul.f32 %v1098, %v221
  %v1180 = vmul.f32 %v1102, %v225
  %v1181 = vmul.f32 %v1102, %v229
  %v1182 = vmul.f32 %v1102, %v233
  %v1183 = vmul.f32 %v1102, %v237
  %v1184 = vmul.f32 %v1086, %v249
  %v1185 = vmul.f32 %v1086, %v253
  %v1186 = vmul.f32 %v1086, %v257
  %v1187 = vmul.f32 %v1086, %v261
  %v1188 = vmul.f32 %v1090, %v265
  %v1189 = vmul.f32 %v1090, %v269
  %v1190 = vmul.f32 %v1090, %v273
  %v1191 = vmul.f32 %v1090, %v277
  %v1192 = vadd.f32 %v1176, %v1184
  %v1193 = vadd.f32 %v1177, %v1185
  %v1194 = vadd.f32 %v1178, %v1186
  %v1195 = vadd.f32 %v1179, %v1187
  %v1196 = vadd.f32 %v1180, %v1188
  %v1197 = vadd.f32 %v1181, %v1189
  %v1198 = vadd.f32 %v1182, %v1190
  %v1199 = vadd.f32 %v1183, %v1191
  %v1200 = vadd.f32 %v1192, %v297
  %v1201 = vadd.f32 %v1193, %v301
  %v1202 = vadd.f32 %v1194, %v305
  %v1203 = vadd.f32 %v1195, %v309
  %v1204 = vadd.f32 %v1196, %v313
  %v1205 = vadd.f32 %v1197, %v317
  %v1206 = vadd.f32 %v1198, %v321
  %v1207 = vadd.f32 %v1199, %v325
  %s1208 = scalar_lea.vmem [#allocation3], 192
  %1209 = vst.msk [vmem:[%s1208] sm:$0xff] %vm198, %v1200
  %1210 = vst.msk [vmem:[%s1208 + $0x8] sm:$0xff] %vm198, %v1201
  %1211 = vst.msk [vmem:[%s1208 + $0x10] sm:$0xff] %vm198, %v1202
  %1212 = vst.msk [vmem:[%s1208 + $0x18] sm:$0xff] %vm198, %v1203
  %1213 = vst.msk [vmem:[%s1208 + $0x20] sm:$0xff] %vm198, %v1204
  %1214 = vst.msk [vmem:[%s1208 + $0x28] sm:$0xff] %vm198, %v1205
  %1215 = vst.msk [vmem:[%s1208 + $0x30] sm:$0xff] %vm198, %v1206
  %1216 = vst.msk [vmem:[%s1208 + $0x38] sm:$0xff] %vm198, %v1207
  %v1217 = vmul.f32 %v1098, %v345
  %v1218 = vmul.f32 %v1098, %v349
  %v1219 = vmul.f32 %v1098, %v353
  %v1220 = vmul.f32 %v1098, %v357
  %v1221 = vmul.f32 %v1102, %v361
  %v1222 = vmul.f32 %v1102, %v365
  %v1223 = vmul.f32 %v1102, %v369
  %v1224 = vmul.f32 %v1102, %v373
  %v1225 = vmul.f32 %v1086, %v385
  %v1226 = vmul.f32 %v1086, %v389
  %v1227 = vmul.f32 %v1086, %v393
  %v1228 = vmul.f32 %v1086, %v397
  %v1229 = vmul.f32 %v1090, %v401
  %v1230 = vmul.f32 %v1090, %v405
  %v1231 = vmul.f32 %v1090, %v409
  %v1232 = vmul.f32 %v1090, %v413
  %v1233 = vadd.f32 %v1217, %v1225
  %v1234 = vadd.f32 %v1218, %v1226
  %v1235 = vadd.f32 %v1219, %v1227
  %v1236 = vadd.f32 %v1220, %v1228
  %v1237 = vadd.f32 %v1221, %v1229
  %v1238 = vadd.f32 %v1222, %v1230
  %v1239 = vadd.f32 %v1223, %v1231
  %v1240 = vadd.f32 %v1224, %v1232
  %v1241 = vadd.f32 %v1233, %v433
  %v1242 = vadd.f32 %v1234, %v437
  %v1243 = vadd.f32 %v1235, %v441
  %v1244 = vadd.f32 %v1236, %v445
  %v1245 = vadd.f32 %v1237, %v449
  %v1246 = vadd.f32 %v1238, %v453
  %v1247 = vadd.f32 %v1239, %v457
  %v1248 = vadd.f32 %v1240, %v461
  %s1249 = scalar_lea.vmem [#allocation4], 192
  %1250 = vst.msk [vmem:[%s1249] sm:$0xff] %vm198, %v1241
  %1251 = vst.msk [vmem:[%s1249 + $0x8] sm:$0xff] %vm198, %v1242
  %1252 = vst.msk [vmem:[%s1249 + $0x10] sm:$0xff] %vm198, %v1243
  %1253 = vst.msk [vmem:[%s1249 + $0x18] sm:$0xff] %vm198, %v1244
  %1254 = vst.msk [vmem:[%s1249 + $0x20] sm:$0xff] %vm198, %v1245
  %1255 = vst.msk [vmem:[%s1249 + $0x28] sm:$0xff] %vm198, %v1246
  %1256 = vst.msk [vmem:[%s1249 + $0x30] sm:$0xff] %vm198, %v1247
  %1257 = vst.msk [vmem:[%s1249 + $0x38] sm:$0xff] %vm198, %v1248
  %v1258 = vmul.f32 %v1098, %v481
  %v1259 = vmul.f32 %v1098, %v485
  %v1260 = vmul.f32 %v1098, %v489
  %v1261 = vmul.f32 %v1098, %v493
  %v1262 = vmul.f32 %v1102, %v497
  %v1263 = vmul.f32 %v1102, %v501
  %v1264 = vmul.f32 %v1102, %v505
  %v1265 = vmul.f32 %v1102, %v509
  %v1266 = vmul.f32 %v1086, %v521
  %v1267 = vmul.f32 %v1086, %v525
  %v1268 = vmul.f32 %v1086, %v529
  %v1269 = vmul.f32 %v1086, %v533
  %v1270 = vmul.f32 %v1090, %v537
  %v1271 = vmul.f32 %v1090, %v541
  %v1272 = vmul.f32 %v1090, %v545
  %v1273 = vmul.f32 %v1090, %v549
  %v1274 = vadd.f32 %v1258, %v1266
  %v1275 = vadd.f32 %v1259, %v1267
  %v1276 = vadd.f32 %v1260, %v1268
  %v1277 = vadd.f32 %v1261, %v1269
  %v1278 = vadd.f32 %v1262, %v1270
  %v1279 = vadd.f32 %v1263, %v1271
  %v1280 = vadd.f32 %v1264, %v1272
  %v1281 = vadd.f32 %v1265, %v1273
  %v1282 = vadd.f32 %v1274, %v569
  %v1283 = vadd.f32 %v1275, %v573
  %v1284 = vadd.f32 %v1276, %v577
  %v1285 = vadd.f32 %v1277, %v581
  %v1286 = vadd.f32 %v1278, %v585
  %v1287 = vadd.f32 %v1279, %v589
  %v1288 = vadd.f32 %v1280, %v593
  %v1289 = vadd.f32 %v1281, %v597
  %s1290 = scalar_lea.vmem [#allocation5], 192
  %1291 = vst.msk [vmem:[%s1290] sm:$0xff] %vm198, %v1282
  %1292 = vst.msk [vmem:[%s1290 + $0x8] sm:$0xff] %vm198, %v1283
  %1293 = vst.msk [vmem:[%s1290 + $0x10] sm:$0xff] %vm198, %v1284
  %1294 = vst.msk [vmem:[%s1290 + $0x18] sm:$0xff] %vm198, %v1285
  %1295 = vst.msk [vmem:[%s1290 + $0x20] sm:$0xff] %vm198, %v1286
  %1296 = vst.msk [vmem:[%s1290 + $0x28] sm:$0xff] %vm198, %v1287
  %1297 = vst.msk [vmem:[%s1290 + $0x30] sm:$0xff] %vm198, %v1288
  %1298 = vst.msk [vmem:[%s1290 + $0x38] sm:$0xff] %vm198, %v1289
  %s1299 = scalar_lea.vmem %s0, 32
  %v1300 = vld [vmem:[%s1299] sm:$0x3f]
  %vm1301 = vcmp.ne.f32.partialorder %v1300, %v1300
  %v1302 = vsel %vm1301, -1.0, %v1300
  %v1303 = vlaneseq
  %v1304 = vshrl.u32 %v1303, 7
  %v1305 = vsub.s32 2, %v1304
  %v1306 = vrot.slane %v1300, %v1305
  %v1307 = vlaneseq
  %v1308 = vshrl.u32 %v1307, 7
  %v1309 = vsub.s32 5, %v1308
  %v1310 = vrot.slane %v1300, %v1309
  %v1311 = vlaneseq
  %v1312 = vshrl.u32 %v1311, 7
  %v1313 = vsub.s32 1, %v1312
  %v1314 = vrot.slane %v1300, %v1313
  %v1315 = vlaneseq
  %v1316 = vshrl.u32 %v1315, 7
  %v1317 = vsub.s32 4, %v1316
  %v1318 = vrot.slane %v1300, %v1317
  %v1320 = vrot.slane %v1302, 7
  %v1322 = vmul.f32 %v1300, %v1320
  %v1323 = vlaneseq
  %v1324 = vshrl.u32 %v1323, 7
  %v1325 = vsub.s32 1, %v1324
  %v1326 = vrot.slane %v1322, %v1325
  %v1327 = vlaneseq
  %v1328 = vshrl.u32 %v1327, 7
  %v1329 = vsub.s32 4, %v1328
  %v1330 = vrot.slane %v1322, %v1329
  %v1331 = vmul.f32 %v1306, %v65
  %v1332 = vmul.f32 %v1306, %v70
  %v1333 = vmul.f32 %v1306, %v75
  %v1334 = vmul.f32 %v1306, %v80
  %v1335 = vmul.f32 %v1310, %v85
  %v1336 = vmul.f32 %v1310, %v90
  %v1337 = vmul.f32 %v1310, %v95
  %v1338 = vmul.f32 %v1310, %v100
  %v1339 = vadd.f32 %v1331, %v112
  %v1340 = vadd.f32 %v1332, %v116
  %v1341 = vadd.f32 %v1333, %v120
  %v1342 = vadd.f32 %v1334, %v124
  %v1343 = vadd.f32 %v1335, %v128
  %v1344 = vadd.f32 %v1336, %v132
  %v1345 = vadd.f32 %v1337, %v136
  %v1346 = vadd.f32 %v1338, %v140
  %v1347 = vxor.u32 %v1339, 2147483648
  %v1348 = vxor.u32 %v1340, 2147483648
  %v1349 = vxor.u32 %v1341, 2147483648
  %v1350 = vxor.u32 %v1342, 2147483648
  %v1351 = vxor.u32 %v1343, 2147483648
  %v1352 = vxor.u32 %v1344, 2147483648
  %v1353 = vxor.u32 %v1345, 2147483648
  %v1354 = vxor.u32 %v1346, 2147483648
  %v1355 = vmul.f32 %v1347, 1.442695
  %v1356 = vpow.pop %v1355
  %v1357 = vmul.f32 %v1348, 1.442695
  %v1358 = vpow.pop %v1357
  %v1359 = vmul.f32 %v1349, 1.442695
  %v1360 = vpow.pop %v1359
  %v1361 = vmul.f32 %v1350, 1.442695
  %v1362 = vpow.pop %v1361
  %v1363 = vmul.f32 %v1351, 1.442695
  %v1364 = vpow.pop %v1363
  %v1365 = vmul.f32 %v1352, 1.442695
  %v1366 = vpow.pop %v1365
  %v1367 = vmul.f32 %v1353, 1.442695
  %v1368 = vpow.pop %v1367
  %v1369 = vmul.f32 %v1354, 1.442695
  %v1370 = vpow.pop %v1369
  %v1371 = vadd.f32 %v1356, 1.0
  %v1372 = vadd.f32 %v1358, 1.0
  %v1373 = vadd.f32 %v1360, 1.0
  %v1374 = vadd.f32 %v1362, 1.0
  %v1375 = vadd.f32 %v1364, 1.0
  %v1376 = vadd.f32 %v1366, 1.0
  %v1377 = vadd.f32 %v1368, 1.0
  %v1378 = vadd.f32 %v1370, 1.0
  %v1379 = vrcp.pop %v1371
  %v1380 = vmul.f32 1.0, %v1379
  %v1381 = vrcp.pop %v1372
  %v1382 = vmul.f32 1.0, %v1381
  %v1383 = vrcp.pop %v1373
  %v1384 = vmul.f32 1.0, %v1383
  %v1385 = vrcp.pop %v1374
  %v1386 = vmul.f32 1.0, %v1385
  %v1387 = vrcp.pop %v1375
  %v1388 = vmul.f32 1.0, %v1387
  %v1389 = vrcp.pop %v1376
  %v1390 = vmul.f32 1.0, %v1389
  %v1391 = vrcp.pop %v1377
  %v1392 = vmul.f32 1.0, %v1391
  %v1393 = vrcp.pop %v1378
  %v1394 = vmul.f32 1.0, %v1393
  %s1395 = scalar_lea.vmem [#allocation2], 256
  %1396 = vst.msk [vmem:[%s1395] sm:$0xff] %vm198, %v1380
  %1397 = vst.msk [vmem:[%s1395 + $0x8] sm:$0xff] %vm198, %v1382
  %1398 = vst.msk [vmem:[%s1395 + $0x10] sm:$0xff] %vm198, %v1384
  %1399 = vst.msk [vmem:[%s1395 + $0x18] sm:$0xff] %vm198, %v1386
  %1400 = vst.msk [vmem:[%s1395 + $0x20] sm:$0xff] %vm198, %v1388
  %1401 = vst.msk [vmem:[%s1395 + $0x28] sm:$0xff] %vm198, %v1390
  %1402 = vst.msk [vmem:[%s1395 + $0x30] sm:$0xff] %vm198, %v1392
  %1403 = vst.msk [vmem:[%s1395 + $0x38] sm:$0xff] %vm198, %v1394
  %v1404 = vmul.f32 %v1326, %v209
  %v1405 = vmul.f32 %v1326, %v213
  %v1406 = vmul.f32 %v1326, %v217
  %v1407 = vmul.f32 %v1326, %v221
  %v1408 = vmul.f32 %v1330, %v225
  %v1409 = vmul.f32 %v1330, %v229
  %v1410 = vmul.f32 %v1330, %v233
  %v1411 = vmul.f32 %v1330, %v237
  %v1412 = vmul.f32 %v1314, %v249
  %v1413 = vmul.f32 %v1314, %v253
  %v1414 = vmul.f32 %v1314, %v257
  %v1415 = vmul.f32 %v1314, %v261
  %v1416 = vmul.f32 %v1318, %v265
  %v1417 = vmul.f32 %v1318, %v269
  %v1418 = vmul.f32 %v1318, %v273
  %v1419 = vmul.f32 %v1318, %v277
  %v1420 = vadd.f32 %v1404, %v1412
  %v1421 = vadd.f32 %v1405, %v1413
  %v1422 = vadd.f32 %v1406, %v1414
  %v1423 = vadd.f32 %v1407, %v1415
  %v1424 = vadd.f32 %v1408, %v1416
  %v1425 = vadd.f32 %v1409, %v1417
  %v1426 = vadd.f32 %v1410, %v1418
  %v1427 = vadd.f32 %v1411, %v1419
  %v1428 = vadd.f32 %v1420, %v297
  %v1429 = vadd.f32 %v1421, %v301
  %v1430 = vadd.f32 %v1422, %v305
  %v1431 = vadd.f32 %v1423, %v309
  %v1432 = vadd.f32 %v1424, %v313
  %v1433 = vadd.f32 %v1425, %v317
  %v1434 = vadd.f32 %v1426, %v321
  %v1435 = vadd.f32 %v1427, %v325
  %s1436 = scalar_lea.vmem [#allocation3], 256
  %1437 = vst.msk [vmem:[%s1436] sm:$0xff] %vm198, %v1428
  %1438 = vst.msk [vmem:[%s1436 + $0x8] sm:$0xff] %vm198, %v1429
  %1439 = vst.msk [vmem:[%s1436 + $0x10] sm:$0xff] %vm198, %v1430
  %1440 = vst.msk [vmem:[%s1436 + $0x18] sm:$0xff] %vm198, %v1431
  %1441 = vst.msk [vmem:[%s1436 + $0x20] sm:$0xff] %vm198, %v1432
  %1442 = vst.msk [vmem:[%s1436 + $0x28] sm:$0xff] %vm198, %v1433
  %1443 = vst.msk [vmem:[%s1436 + $0x30] sm:$0xff] %vm198, %v1434
  %1444 = vst.msk [vmem:[%s1436 + $0x38] sm:$0xff] %vm198, %v1435
  %v1445 = vmul.f32 %v1326, %v345
  %v1446 = vmul.f32 %v1326, %v349
  %v1447 = vmul.f32 %v1326, %v353
  %v1448 = vmul.f32 %v1326, %v357
  %v1449 = vmul.f32 %v1330, %v361
  %v1450 = vmul.f32 %v1330, %v365
  %v1451 = vmul.f32 %v1330, %v369
  %v1452 = vmul.f32 %v1330, %v373
  %v1453 = vmul.f32 %v1314, %v385
  %v1454 = vmul.f32 %v1314, %v389
  %v1455 = vmul.f32 %v1314, %v393
  %v1456 = vmul.f32 %v1314, %v397
  %v1457 = vmul.f32 %v1318, %v401
  %v1458 = vmul.f32 %v1318, %v405
  %v1459 = vmul.f32 %v1318, %v409
  %v1460 = vmul.f32 %v1318, %v413
  %v1461 = vadd.f32 %v1445, %v1453
  %v1462 = vadd.f32 %v1446, %v1454
  %v1463 = vadd.f32 %v1447, %v1455
  %v1464 = vadd.f32 %v1448, %v1456
  %v1465 = vadd.f32 %v1449, %v1457
  %v1466 = vadd.f32 %v1450, %v1458
  %v1467 = vadd.f32 %v1451, %v1459
  %v1468 = vadd.f32 %v1452, %v1460
  %v1469 = vadd.f32 %v1461, %v433
  %v1470 = vadd.f32 %v1462, %v437
  %v1471 = vadd.f32 %v1463, %v441
  %v1472 = vadd.f32 %v1464, %v445
  %v1473 = vadd.f32 %v1465, %v449
  %v1474 = vadd.f32 %v1466, %v453
  %v1475 = vadd.f32 %v1467, %v457
  %v1476 = vadd.f32 %v1468, %v461
  %s1477 = scalar_lea.vmem [#allocation4], 256
  %1478 = vst.msk [vmem:[%s1477] sm:$0xff] %vm198, %v1469
  %1479 = vst.msk [vmem:[%s1477 + $0x8] sm:$0xff] %vm198, %v1470
  %1480 = vst.msk [vmem:[%s1477 + $0x10] sm:$0xff] %vm198, %v1471
  %1481 = vst.msk [vmem:[%s1477 + $0x18] sm:$0xff] %vm198, %v1472
  %1482 = vst.msk [vmem:[%s1477 + $0x20] sm:$0xff] %vm198, %v1473
  %1483 = vst.msk [vmem:[%s1477 + $0x28] sm:$0xff] %vm198, %v1474
  %1484 = vst.msk [vmem:[%s1477 + $0x30] sm:$0xff] %vm198, %v1475
  %1485 = vst.msk [vmem:[%s1477 + $0x38] sm:$0xff] %vm198, %v1476
  %v1486 = vmul.f32 %v1326, %v481
  %v1487 = vmul.f32 %v1326, %v485
  %v1488 = vmul.f32 %v1326, %v489
  %v1489 = vmul.f32 %v1326, %v493
  %v1490 = vmul.f32 %v1330, %v497
  %v1491 = vmul.f32 %v1330, %v501
  %v1492 = vmul.f32 %v1330, %v505
  %v1493 = vmul.f32 %v1330, %v509
  %v1494 = vmul.f32 %v1314, %v521
  %v1495 = vmul.f32 %v1314, %v525
  %v1496 = vmul.f32 %v1314, %v529
  %v1497 = vmul.f32 %v1314, %v533
  %v1498 = vmul.f32 %v1318, %v537
  %v1499 = vmul.f32 %v1318, %v541
  %v1500 = vmul.f32 %v1318, %v545
  %v1501 = vmul.f32 %v1318, %v549
  %v1502 = vadd.f32 %v1486, %v1494
  %v1503 = vadd.f32 %v1487, %v1495
  %v1504 = vadd.f32 %v1488, %v1496
  %v1505 = vadd.f32 %v1489, %v1497
  %v1506 = vadd.f32 %v1490, %v1498
  %v1507 = vadd.f32 %v1491, %v1499
  %v1508 = vadd.f32 %v1492, %v1500
  %v1509 = vadd.f32 %v1493, %v1501
  %v1510 = vadd.f32 %v1502, %v569
  %v1511 = vadd.f32 %v1503, %v573
  %v1512 = vadd.f32 %v1504, %v577
  %v1513 = vadd.f32 %v1505, %v581
  %v1514 = vadd.f32 %v1506, %v585
  %v1515 = vadd.f32 %v1507, %v589
  %v1516 = vadd.f32 %v1508, %v593
  %v1517 = vadd.f32 %v1509, %v597
  %s1518 = scalar_lea.vmem [#allocation5], 256
  %1519 = vst.msk [vmem:[%s1518] sm:$0xff] %vm198, %v1510
  %1520 = vst.msk [vmem:[%s1518 + $0x8] sm:$0xff] %vm198, %v1511
  %1521 = vst.msk [vmem:[%s1518 + $0x10] sm:$0xff] %vm198, %v1512
  %1522 = vst.msk [vmem:[%s1518 + $0x18] sm:$0xff] %vm198, %v1513
  %1523 = vst.msk [vmem:[%s1518 + $0x20] sm:$0xff] %vm198, %v1514
  %1524 = vst.msk [vmem:[%s1518 + $0x28] sm:$0xff] %vm198, %v1515
  %1525 = vst.msk [vmem:[%s1518 + $0x30] sm:$0xff] %vm198, %v1516
  %1526 = vst.msk [vmem:[%s1518 + $0x38] sm:$0xff] %vm198, %v1517
  %s1527 = scalar_lea.vmem %s0, 40
  %v1528 = vld [vmem:[%s1527] sm:$0x3f]
  %vm1529 = vcmp.ne.f32.partialorder %v1528, %v1528
  %v1530 = vsel %vm1529, -1.0, %v1528
  %v1531 = vlaneseq
  %v1532 = vshrl.u32 %v1531, 7
  %v1533 = vsub.s32 2, %v1532
  %v1534 = vrot.slane %v1528, %v1533
  %v1535 = vlaneseq
  %v1536 = vshrl.u32 %v1535, 7
  %v1537 = vsub.s32 5, %v1536
  %v1538 = vrot.slane %v1528, %v1537
  %v1539 = vlaneseq
  %v1540 = vshrl.u32 %v1539, 7
  %v1541 = vsub.s32 1, %v1540
  %v1542 = vrot.slane %v1528, %v1541
  %v1543 = vlaneseq
  %v1544 = vshrl.u32 %v1543, 7
  %v1545 = vsub.s32 4, %v1544
  %v1546 = vrot.slane %v1528, %v1545
  %v1548 = vrot.slane %v1530, 7
  %v1550 = vmul.f32 %v1528, %v1548
  %v1551 = vlaneseq
  %v1552 = vshrl.u32 %v1551, 7
  %v1553 = vsub.s32 1, %v1552
  %v1554 = vrot.slane %v1550, %v1553
  %v1555 = vlaneseq
  %v1556 = vshrl.u32 %v1555, 7
  %v1557 = vsub.s32 4, %v1556
  %v1558 = vrot.slane %v1550, %v1557
  %v1559 = vmul.f32 %v1534, %v65
  %v1560 = vmul.f32 %v1534, %v70
  %v1561 = vmul.f32 %v1534, %v75
  %v1562 = vmul.f32 %v1534, %v80
  %v1563 = vmul.f32 %v1538, %v85
  %v1564 = vmul.f32 %v1538, %v90
  %v1565 = vmul.f32 %v1538, %v95
  %v1566 = vmul.f32 %v1538, %v100
  %v1567 = vadd.f32 %v1559, %v112
  %v1568 = vadd.f32 %v1560, %v116
  %v1569 = vadd.f32 %v1561, %v120
  %v1570 = vadd.f32 %v1562, %v124
  %v1571 = vadd.f32 %v1563, %v128
  %v1572 = vadd.f32 %v1564, %v132
  %v1573 = vadd.f32 %v1565, %v136
  %v1574 = vadd.f32 %v1566, %v140
  %v1575 = vxor.u32 %v1567, 2147483648
  %v1576 = vxor.u32 %v1568, 2147483648
  %v1577 = vxor.u32 %v1569, 2147483648
  %v1578 = vxor.u32 %v1570, 2147483648
  %v1579 = vxor.u32 %v1571, 2147483648
  %v1580 = vxor.u32 %v1572, 2147483648
  %v1581 = vxor.u32 %v1573, 2147483648
  %v1582 = vxor.u32 %v1574, 2147483648
  %v1583 = vmul.f32 %v1575, 1.442695
  %v1584 = vpow.pop %v1583
  %v1585 = vmul.f32 %v1576, 1.442695
  %v1586 = vpow.pop %v1585
  %v1587 = vmul.f32 %v1577, 1.442695
  %v1588 = vpow.pop %v1587
  %v1589 = vmul.f32 %v1578, 1.442695
  %v1590 = vpow.pop %v1589
  %v1591 = vmul.f32 %v1579, 1.442695
  %v1592 = vpow.pop %v1591
  %v1593 = vmul.f32 %v1580, 1.442695
  %v1594 = vpow.pop %v1593
  %v1595 = vmul.f32 %v1581, 1.442695
  %v1596 = vpow.pop %v1595
  %v1597 = vmul.f32 %v1582, 1.442695
  %v1598 = vpow.pop %v1597
  %v1599 = vadd.f32 %v1584, 1.0
  %v1600 = vadd.f32 %v1586, 1.0
  %v1601 = vadd.f32 %v1588, 1.0
  %v1602 = vadd.f32 %v1590, 1.0
  %v1603 = vadd.f32 %v1592, 1.0
  %v1604 = vadd.f32 %v1594, 1.0
  %v1605 = vadd.f32 %v1596, 1.0
  %v1606 = vadd.f32 %v1598, 1.0
  %v1607 = vrcp.pop %v1599
  %v1608 = vmul.f32 1.0, %v1607
  %v1609 = vrcp.pop %v1600
  %v1610 = vmul.f32 1.0, %v1609
  %v1611 = vrcp.pop %v1601
  %v1612 = vmul.f32 1.0, %v1611
  %v1613 = vrcp.pop %v1602
  %v1614 = vmul.f32 1.0, %v1613
  %v1615 = vrcp.pop %v1603
  %v1616 = vmul.f32 1.0, %v1615
  %v1617 = vrcp.pop %v1604
  %v1618 = vmul.f32 1.0, %v1617
  %v1619 = vrcp.pop %v1605
  %v1620 = vmul.f32 1.0, %v1619
  %v1621 = vrcp.pop %v1606
  %v1622 = vmul.f32 1.0, %v1621
  %s1623 = scalar_lea.vmem [#allocation2], 320
  %1624 = vst.msk [vmem:[%s1623] sm:$0xff] %vm198, %v1608
  %1625 = vst.msk [vmem:[%s1623 + $0x8] sm:$0xff] %vm198, %v1610
  %1626 = vst.msk [vmem:[%s1623 + $0x10] sm:$0xff] %vm198, %v1612
  %1627 = vst.msk [vmem:[%s1623 + $0x18] sm:$0xff] %vm198, %v1614
  %1628 = vst.msk [vmem:[%s1623 + $0x20] sm:$0xff] %vm198, %v1616
  %1629 = vst.msk [vmem:[%s1623 + $0x28] sm:$0xff] %vm198, %v1618
  %1630 = vst.msk [vmem:[%s1623 + $0x30] sm:$0xff] %vm198, %v1620
  %1631 = vst.msk [vmem:[%s1623 + $0x38] sm:$0xff] %vm198, %v1622
  %v1632 = vmul.f32 %v1554, %v209
  %v1633 = vmul.f32 %v1554, %v213
  %v1634 = vmul.f32 %v1554, %v217
  %v1635 = vmul.f32 %v1554, %v221
  %v1636 = vmul.f32 %v1558, %v225
  %v1637 = vmul.f32 %v1558, %v229
  %v1638 = vmul.f32 %v1558, %v233
  %v1639 = vmul.f32 %v1558, %v237
  %v1640 = vmul.f32 %v1542, %v249
  %v1641 = vmul.f32 %v1542, %v253
  %v1642 = vmul.f32 %v1542, %v257
  %v1643 = vmul.f32 %v1542, %v261
  %v1644 = vmul.f32 %v1546, %v265
  %v1645 = vmul.f32 %v1546, %v269
  %v1646 = vmul.f32 %v1546, %v273
  %v1647 = vmul.f32 %v1546, %v277
  %v1648 = vadd.f32 %v1632, %v1640
  %v1649 = vadd.f32 %v1633, %v1641
  %v1650 = vadd.f32 %v1634, %v1642
  %v1651 = vadd.f32 %v1635, %v1643
  %v1652 = vadd.f32 %v1636, %v1644
  %v1653 = vadd.f32 %v1637, %v1645
  %v1654 = vadd.f32 %v1638, %v1646
  %v1655 = vadd.f32 %v1639, %v1647
  %v1656 = vadd.f32 %v1648, %v297
  %v1657 = vadd.f32 %v1649, %v301
  %v1658 = vadd.f32 %v1650, %v305
  %v1659 = vadd.f32 %v1651, %v309
  %v1660 = vadd.f32 %v1652, %v313
  %v1661 = vadd.f32 %v1653, %v317
  %v1662 = vadd.f32 %v1654, %v321
  %v1663 = vadd.f32 %v1655, %v325
  %s1664 = scalar_lea.vmem [#allocation3], 320
  %1665 = vst.msk [vmem:[%s1664] sm:$0xff] %vm198, %v1656
  %1666 = vst.msk [vmem:[%s1664 + $0x8] sm:$0xff] %vm198, %v1657
  %1667 = vst.msk [vmem:[%s1664 + $0x10] sm:$0xff] %vm198, %v1658
  %1668 = vst.msk [vmem:[%s1664 + $0x18] sm:$0xff] %vm198, %v1659
  %1669 = vst.msk [vmem:[%s1664 + $0x20] sm:$0xff] %vm198, %v1660
  %1670 = vst.msk [vmem:[%s1664 + $0x28] sm:$0xff] %vm198, %v1661
  %1671 = vst.msk [vmem:[%s1664 + $0x30] sm:$0xff] %vm198, %v1662
  %1672 = vst.msk [vmem:[%s1664 + $0x38] sm:$0xff] %vm198, %v1663
  %v1673 = vmul.f32 %v1554, %v345
  %v1674 = vmul.f32 %v1554, %v349
  %v1675 = vmul.f32 %v1554, %v353
  %v1676 = vmul.f32 %v1554, %v357
  %v1677 = vmul.f32 %v1558, %v361
  %v1678 = vmul.f32 %v1558, %v365
  %v1679 = vmul.f32 %v1558, %v369
  %v1680 = vmul.f32 %v1558, %v373
  %v1681 = vmul.f32 %v1542, %v385
  %v1682 = vmul.f32 %v1542, %v389
  %v1683 = vmul.f32 %v1542, %v393
  %v1684 = vmul.f32 %v1542, %v397
  %v1685 = vmul.f32 %v1546, %v401
  %v1686 = vmul.f32 %v1546, %v405
  %v1687 = vmul.f32 %v1546, %v409
  %v1688 = vmul.f32 %v1546, %v413
  %v1689 = vadd.f32 %v1673, %v1681
  %v1690 = vadd.f32 %v1674, %v1682
  %v1691 = vadd.f32 %v1675, %v1683
  %v1692 = vadd.f32 %v1676, %v1684
  %v1693 = vadd.f32 %v1677, %v1685
  %v1694 = vadd.f32 %v1678, %v1686
  %v1695 = vadd.f32 %v1679, %v1687
  %v1696 = vadd.f32 %v1680, %v1688
  %v1697 = vadd.f32 %v1689, %v433
  %v1698 = vadd.f32 %v1690, %v437
  %v1699 = vadd.f32 %v1691, %v441
  %v1700 = vadd.f32 %v1692, %v445
  %v1701 = vadd.f32 %v1693, %v449
  %v1702 = vadd.f32 %v1694, %v453
  %v1703 = vadd.f32 %v1695, %v457
  %v1704 = vadd.f32 %v1696, %v461
  %s1705 = scalar_lea.vmem [#allocation4], 320
  %1706 = vst.msk [vmem:[%s1705] sm:$0xff] %vm198, %v1697
  %1707 = vst.msk [vmem:[%s1705 + $0x8] sm:$0xff] %vm198, %v1698
  %1708 = vst.msk [vmem:[%s1705 + $0x10] sm:$0xff] %vm198, %v1699
  %1709 = vst.msk [vmem:[%s1705 + $0x18] sm:$0xff] %vm198, %v1700
  %1710 = vst.msk [vmem:[%s1705 + $0x20] sm:$0xff] %vm198, %v1701
  %1711 = vst.msk [vmem:[%s1705 + $0x28] sm:$0xff] %vm198, %v1702
  %1712 = vst.msk [vmem:[%s1705 + $0x30] sm:$0xff] %vm198, %v1703
  %1713 = vst.msk [vmem:[%s1705 + $0x38] sm:$0xff] %vm198, %v1704
  %v1714 = vmul.f32 %v1554, %v481
  %v1715 = vmul.f32 %v1554, %v485
  %v1716 = vmul.f32 %v1554, %v489
  %v1717 = vmul.f32 %v1554, %v493
  %v1718 = vmul.f32 %v1558, %v497
  %v1719 = vmul.f32 %v1558, %v501
  %v1720 = vmul.f32 %v1558, %v505
  %v1721 = vmul.f32 %v1558, %v509
  %v1722 = vmul.f32 %v1542, %v521
  %v1723 = vmul.f32 %v1542, %v525
  %v1724 = vmul.f32 %v1542, %v529
  %v1725 = vmul.f32 %v1542, %v533
  %v1726 = vmul.f32 %v1546, %v537
  %v1727 = vmul.f32 %v1546, %v541
  %v1728 = vmul.f32 %v1546, %v545
  %v1729 = vmul.f32 %v1546, %v549
  %v1730 = vadd.f32 %v1714, %v1722
  %v1731 = vadd.f32 %v1715, %v1723
  %v1732 = vadd.f32 %v1716, %v1724
  %v1733 = vadd.f32 %v1717, %v1725
  %v1734 = vadd.f32 %v1718, %v1726
  %v1735 = vadd.f32 %v1719, %v1727
  %v1736 = vadd.f32 %v1720, %v1728
  %v1737 = vadd.f32 %v1721, %v1729
  %v1738 = vadd.f32 %v1730, %v569
  %v1739 = vadd.f32 %v1731, %v573
  %v1740 = vadd.f32 %v1732, %v577
  %v1741 = vadd.f32 %v1733, %v581
  %v1742 = vadd.f32 %v1734, %v585
  %v1743 = vadd.f32 %v1735, %v589
  %v1744 = vadd.f32 %v1736, %v593
  %v1745 = vadd.f32 %v1737, %v597
  %s1746 = scalar_lea.vmem [#allocation5], 320
  %1747 = vst.msk [vmem:[%s1746] sm:$0xff] %vm198, %v1738
  %1748 = vst.msk [vmem:[%s1746 + $0x8] sm:$0xff] %vm198, %v1739
  %1749 = vst.msk [vmem:[%s1746 + $0x10] sm:$0xff] %vm198, %v1740
  %1750 = vst.msk [vmem:[%s1746 + $0x18] sm:$0xff] %vm198, %v1741
  %1751 = vst.msk [vmem:[%s1746 + $0x20] sm:$0xff] %vm198, %v1742
  %1752 = vst.msk [vmem:[%s1746 + $0x28] sm:$0xff] %vm198, %v1743
  %1753 = vst.msk [vmem:[%s1746 + $0x30] sm:$0xff] %vm198, %v1744
  %1754 = vst.msk [vmem:[%s1746 + $0x38] sm:$0xff] %vm198, %v1745
  %s1755 = scalar_lea.vmem %s0, 48
  %v1756 = vld [vmem:[%s1755] sm:$0x3f]
  %vm1757 = vcmp.ne.f32.partialorder %v1756, %v1756
  %v1758 = vsel %vm1757, -1.0, %v1756
  %v1759 = vlaneseq
  %v1760 = vshrl.u32 %v1759, 7
  %v1761 = vsub.s32 2, %v1760
  %v1762 = vrot.slane %v1756, %v1761
  %v1763 = vlaneseq
  %v1764 = vshrl.u32 %v1763, 7
  %v1765 = vsub.s32 5, %v1764
  %v1766 = vrot.slane %v1756, %v1765
  %v1767 = vlaneseq
  %v1768 = vshrl.u32 %v1767, 7
  %v1769 = vsub.s32 1, %v1768
  %v1770 = vrot.slane %v1756, %v1769
  %v1771 = vlaneseq
  %v1772 = vshrl.u32 %v1771, 7
  %v1773 = vsub.s32 4, %v1772
  %v1774 = vrot.slane %v1756, %v1773
  %v1776 = vrot.slane %v1758, 7
  %v1778 = vmul.f32 %v1756, %v1776
  %v1779 = vlaneseq
  %v1780 = vshrl.u32 %v1779, 7
  %v1781 = vsub.s32 1, %v1780
  %v1782 = vrot.slane %v1778, %v1781
  %v1783 = vlaneseq
  %v1784 = vshrl.u32 %v1783, 7
  %v1785 = vsub.s32 4, %v1784
  %v1786 = vrot.slane %v1778, %v1785
  %v1787 = vmul.f32 %v1762, %v65
  %v1788 = vmul.f32 %v1762, %v70
  %v1789 = vmul.f32 %v1762, %v75
  %v1790 = vmul.f32 %v1762, %v80
  %v1791 = vmul.f32 %v1766, %v85
  %v1792 = vmul.f32 %v1766, %v90
  %v1793 = vmul.f32 %v1766, %v95
  %v1794 = vmul.f32 %v1766, %v100
  %v1795 = vadd.f32 %v1787, %v112
  %v1796 = vadd.f32 %v1788, %v116
  %v1797 = vadd.f32 %v1789, %v120
  %v1798 = vadd.f32 %v1790, %v124
  %v1799 = vadd.f32 %v1791, %v128
  %v1800 = vadd.f32 %v1792, %v132
  %v1801 = vadd.f32 %v1793, %v136
  %v1802 = vadd.f32 %v1794, %v140
  %v1803 = vxor.u32 %v1795, 2147483648
  %v1804 = vxor.u32 %v1796, 2147483648
  %v1805 = vxor.u32 %v1797, 2147483648
  %v1806 = vxor.u32 %v1798, 2147483648
  %v1807 = vxor.u32 %v1799, 2147483648
  %v1808 = vxor.u32 %v1800, 2147483648
  %v1809 = vxor.u32 %v1801, 2147483648
  %v1810 = vxor.u32 %v1802, 2147483648
  %v1811 = vmul.f32 %v1803, 1.442695
  %v1812 = vpow.pop %v1811
  %v1813 = vmul.f32 %v1804, 1.442695
  %v1814 = vpow.pop %v1813
  %v1815 = vmul.f32 %v1805, 1.442695
  %v1816 = vpow.pop %v1815
  %v1817 = vmul.f32 %v1806, 1.442695
  %v1818 = vpow.pop %v1817
  %v1819 = vmul.f32 %v1807, 1.442695
  %v1820 = vpow.pop %v1819
  %v1821 = vmul.f32 %v1808, 1.442695
  %v1822 = vpow.pop %v1821
  %v1823 = vmul.f32 %v1809, 1.442695
  %v1824 = vpow.pop %v1823
  %v1825 = vmul.f32 %v1810, 1.442695
  %v1826 = vpow.pop %v1825
  %v1827 = vadd.f32 %v1812, 1.0
  %v1828 = vadd.f32 %v1814, 1.0
  %v1829 = vadd.f32 %v1816, 1.0
  %v1830 = vadd.f32 %v1818, 1.0
  %v1831 = vadd.f32 %v1820, 1.0
  %v1832 = vadd.f32 %v1822, 1.0
  %v1833 = vadd.f32 %v1824, 1.0
  %v1834 = vadd.f32 %v1826, 1.0
  %v1835 = vrcp.pop %v1827
  %v1836 = vmul.f32 1.0, %v1835
  %v1837 = vrcp.pop %v1828
  %v1838 = vmul.f32 1.0, %v1837
  %v1839 = vrcp.pop %v1829
  %v1840 = vmul.f32 1.0, %v1839
  %v1841 = vrcp.pop %v1830
  %v1842 = vmul.f32 1.0, %v1841
  %v1843 = vrcp.pop %v1831
  %v1844 = vmul.f32 1.0, %v1843
  %v1845 = vrcp.pop %v1832
  %v1846 = vmul.f32 1.0, %v1845
  %v1847 = vrcp.pop %v1833
  %v1848 = vmul.f32 1.0, %v1847
  %v1849 = vrcp.pop %v1834
  %v1850 = vmul.f32 1.0, %v1849
  %s1851 = scalar_lea.vmem [#allocation2], 384
  %1852 = vst.msk [vmem:[%s1851] sm:$0xff] %vm198, %v1836
  %1853 = vst.msk [vmem:[%s1851 + $0x8] sm:$0xff] %vm198, %v1838
  %1854 = vst.msk [vmem:[%s1851 + $0x10] sm:$0xff] %vm198, %v1840
  %1855 = vst.msk [vmem:[%s1851 + $0x18] sm:$0xff] %vm198, %v1842
  %1856 = vst.msk [vmem:[%s1851 + $0x20] sm:$0xff] %vm198, %v1844
  %1857 = vst.msk [vmem:[%s1851 + $0x28] sm:$0xff] %vm198, %v1846
  %1858 = vst.msk [vmem:[%s1851 + $0x30] sm:$0xff] %vm198, %v1848
  %1859 = vst.msk [vmem:[%s1851 + $0x38] sm:$0xff] %vm198, %v1850
  %v1860 = vmul.f32 %v1782, %v209
  %v1861 = vmul.f32 %v1782, %v213
  %v1862 = vmul.f32 %v1782, %v217
  %v1863 = vmul.f32 %v1782, %v221
  %v1864 = vmul.f32 %v1786, %v225
  %v1865 = vmul.f32 %v1786, %v229
  %v1866 = vmul.f32 %v1786, %v233
  %v1867 = vmul.f32 %v1786, %v237
  %v1868 = vmul.f32 %v1770, %v249
  %v1869 = vmul.f32 %v1770, %v253
  %v1870 = vmul.f32 %v1770, %v257
  %v1871 = vmul.f32 %v1770, %v261
  %v1872 = vmul.f32 %v1774, %v265
  %v1873 = vmul.f32 %v1774, %v269
  %v1874 = vmul.f32 %v1774, %v273
  %v1875 = vmul.f32 %v1774, %v277
  %v1876 = vadd.f32 %v1860, %v1868
  %v1877 = vadd.f32 %v1861, %v1869
  %v1878 = vadd.f32 %v1862, %v1870
  %v1879 = vadd.f32 %v1863, %v1871
  %v1880 = vadd.f32 %v1864, %v1872
  %v1881 = vadd.f32 %v1865, %v1873
  %v1882 = vadd.f32 %v1866, %v1874
  %v1883 = vadd.f32 %v1867, %v1875
  %v1884 = vadd.f32 %v1876, %v297
  %v1885 = vadd.f32 %v1877, %v301
  %v1886 = vadd.f32 %v1878, %v305
  %v1887 = vadd.f32 %v1879, %v309
  %v1888 = vadd.f32 %v1880, %v313
  %v1889 = vadd.f32 %v1881, %v317
  %v1890 = vadd.f32 %v1882, %v321
  %v1891 = vadd.f32 %v1883, %v325
  %s1892 = scalar_lea.vmem [#allocation3], 384
  %1893 = vst.msk [vmem:[%s1892] sm:$0xff] %vm198, %v1884
  %1894 = vst.msk [vmem:[%s1892 + $0x8] sm:$0xff] %vm198, %v1885
  %1895 = vst.msk [vmem:[%s1892 + $0x10] sm:$0xff] %vm198, %v1886
  %1896 = vst.msk [vmem:[%s1892 + $0x18] sm:$0xff] %vm198, %v1887
  %1897 = vst.msk [vmem:[%s1892 + $0x20] sm:$0xff] %vm198, %v1888
  %1898 = vst.msk [vmem:[%s1892 + $0x28] sm:$0xff] %vm198, %v1889
  %1899 = vst.msk [vmem:[%s1892 + $0x30] sm:$0xff] %vm198, %v1890
  %1900 = vst.msk [vmem:[%s1892 + $0x38] sm:$0xff] %vm198, %v1891
  %v1901 = vmul.f32 %v1782, %v345
  %v1902 = vmul.f32 %v1782, %v349
  %v1903 = vmul.f32 %v1782, %v353
  %v1904 = vmul.f32 %v1782, %v357
  %v1905 = vmul.f32 %v1786, %v361
  %v1906 = vmul.f32 %v1786, %v365
  %v1907 = vmul.f32 %v1786, %v369
  %v1908 = vmul.f32 %v1786, %v373
  %v1909 = vmul.f32 %v1770, %v385
  %v1910 = vmul.f32 %v1770, %v389
  %v1911 = vmul.f32 %v1770, %v393
  %v1912 = vmul.f32 %v1770, %v397
  %v1913 = vmul.f32 %v1774, %v401
  %v1914 = vmul.f32 %v1774, %v405
  %v1915 = vmul.f32 %v1774, %v409
  %v1916 = vmul.f32 %v1774, %v413
  %v1917 = vadd.f32 %v1901, %v1909
  %v1918 = vadd.f32 %v1902, %v1910
  %v1919 = vadd.f32 %v1903, %v1911
  %v1920 = vadd.f32 %v1904, %v1912
  %v1921 = vadd.f32 %v1905, %v1913
  %v1922 = vadd.f32 %v1906, %v1914
  %v1923 = vadd.f32 %v1907, %v1915
  %v1924 = vadd.f32 %v1908, %v1916
  %v1925 = vadd.f32 %v1917, %v433
  %v1926 = vadd.f32 %v1918, %v437
  %v1927 = vadd.f32 %v1919, %v441
  %v1928 = vadd.f32 %v1920, %v445
  %v1929 = vadd.f32 %v1921, %v449
  %v1930 = vadd.f32 %v1922, %v453
  %v1931 = vadd.f32 %v1923, %v457
  %v1932 = vadd.f32 %v1924, %v461
  %s1933 = scalar_lea.vmem [#allocation4], 384
  %1934 = vst.msk [vmem:[%s1933] sm:$0xff] %vm198, %v1925
  %1935 = vst.msk [vmem:[%s1933 + $0x8] sm:$0xff] %vm198, %v1926
  %1936 = vst.msk [vmem:[%s1933 + $0x10] sm:$0xff] %vm198, %v1927
  %1937 = vst.msk [vmem:[%s1933 + $0x18] sm:$0xff] %vm198, %v1928
  %1938 = vst.msk [vmem:[%s1933 + $0x20] sm:$0xff] %vm198, %v1929
  %1939 = vst.msk [vmem:[%s1933 + $0x28] sm:$0xff] %vm198, %v1930
  %1940 = vst.msk [vmem:[%s1933 + $0x30] sm:$0xff] %vm198, %v1931
  %1941 = vst.msk [vmem:[%s1933 + $0x38] sm:$0xff] %vm198, %v1932
  %v1942 = vmul.f32 %v1782, %v481
  %v1943 = vmul.f32 %v1782, %v485
  %v1944 = vmul.f32 %v1782, %v489
  %v1945 = vmul.f32 %v1782, %v493
  %v1946 = vmul.f32 %v1786, %v497
  %v1947 = vmul.f32 %v1786, %v501
  %v1948 = vmul.f32 %v1786, %v505
  %v1949 = vmul.f32 %v1786, %v509
  %v1950 = vmul.f32 %v1770, %v521
  %v1951 = vmul.f32 %v1770, %v525
  %v1952 = vmul.f32 %v1770, %v529
  %v1953 = vmul.f32 %v1770, %v533
  %v1954 = vmul.f32 %v1774, %v537
  %v1955 = vmul.f32 %v1774, %v541
  %v1956 = vmul.f32 %v1774, %v545
  %v1957 = vmul.f32 %v1774, %v549
  %v1958 = vadd.f32 %v1942, %v1950
  %v1959 = vadd.f32 %v1943, %v1951
  %v1960 = vadd.f32 %v1944, %v1952
  %v1961 = vadd.f32 %v1945, %v1953
  %v1962 = vadd.f32 %v1946, %v1954
  %v1963 = vadd.f32 %v1947, %v1955
  %v1964 = vadd.f32 %v1948, %v1956
  %v1965 = vadd.f32 %v1949, %v1957
  %v1966 = vadd.f32 %v1958, %v569
  %v1967 = vadd.f32 %v1959, %v573
  %v1968 = vadd.f32 %v1960, %v577
  %v1969 = vadd.f32 %v1961, %v581
  %v1970 = vadd.f32 %v1962, %v585
  %v1971 = vadd.f32 %v1963, %v589
  %v1972 = vadd.f32 %v1964, %v593
  %v1973 = vadd.f32 %v1965, %v597
  %s1974 = scalar_lea.vmem [#allocation5], 384
  %1975 = vst.msk [vmem:[%s1974] sm:$0xff] %vm198, %v1966
  %1976 = vst.msk [vmem:[%s1974 + $0x8] sm:$0xff] %vm198, %v1967
  %1977 = vst.msk [vmem:[%s1974 + $0x10] sm:$0xff] %vm198, %v1968
  %1978 = vst.msk [vmem:[%s1974 + $0x18] sm:$0xff] %vm198, %v1969
  %1979 = vst.msk [vmem:[%s1974 + $0x20] sm:$0xff] %vm198, %v1970
  %1980 = vst.msk [vmem:[%s1974 + $0x28] sm:$0xff] %vm198, %v1971
  %1981 = vst.msk [vmem:[%s1974 + $0x30] sm:$0xff] %vm198, %v1972
  %1982 = vst.msk [vmem:[%s1974 + $0x38] sm:$0xff] %vm198, %v1973
  %s1983 = scalar_lea.vmem %s0, 56
  %v1984 = vld [vmem:[%s1983] sm:$0x3f]
  %vm1985 = vcmp.ne.f32.partialorder %v1984, %v1984
  %v1986 = vsel %vm1985, -1.0, %v1984
  %v1987 = vlaneseq
  %v1988 = vshrl.u32 %v1987, 7
  %v1989 = vsub.s32 2, %v1988
  %v1990 = vrot.slane %v1984, %v1989
  %v1991 = vlaneseq
  %v1992 = vshrl.u32 %v1991, 7
  %v1993 = vsub.s32 5, %v1992
  %v1994 = vrot.slane %v1984, %v1993
  %v1995 = vlaneseq
  %v1996 = vshrl.u32 %v1995, 7
  %v1997 = vsub.s32 1, %v1996
  %v1998 = vrot.slane %v1984, %v1997
  %v1999 = vlaneseq
  %v2000 = vshrl.u32 %v1999, 7
  %v2001 = vsub.s32 4, %v2000
  %v2002 = vrot.slane %v1984, %v2001
  %v2004 = vrot.slane %v1986, 7
  %v2006 = vmul.f32 %v1984, %v2004
  %v2007 = vlaneseq
  %v2008 = vshrl.u32 %v2007, 7
  %v2009 = vsub.s32 1, %v2008
  %v2010 = vrot.slane %v2006, %v2009
  %v2011 = vlaneseq
  %v2012 = vshrl.u32 %v2011, 7
  %v2013 = vsub.s32 4, %v2012
  %v2014 = vrot.slane %v2006, %v2013
  %v2015 = vmul.f32 %v1990, %v65
  %v2016 = vmul.f32 %v1990, %v70
  %v2017 = vmul.f32 %v1990, %v75
  %v2018 = vmul.f32 %v1990, %v80
  %v2019 = vmul.f32 %v1994, %v85
  %v2020 = vmul.f32 %v1994, %v90
  %v2021 = vmul.f32 %v1994, %v95
  %v2022 = vmul.f32 %v1994, %v100
  %v2023 = vadd.f32 %v2015, %v112
  %v2024 = vadd.f32 %v2016, %v116
  %v2025 = vadd.f32 %v2017, %v120
  %v2026 = vadd.f32 %v2018, %v124
  %v2027 = vadd.f32 %v2019, %v128
  %v2028 = vadd.f32 %v2020, %v132
  %v2029 = vadd.f32 %v2021, %v136
  %v2030 = vadd.f32 %v2022, %v140
  %v2031 = vxor.u32 %v2023, 2147483648
  %v2032 = vxor.u32 %v2024, 2147483648
  %v2033 = vxor.u32 %v2025, 2147483648
  %v2034 = vxor.u32 %v2026, 2147483648
  %v2035 = vxor.u32 %v2027, 2147483648
  %v2036 = vxor.u32 %v2028, 2147483648
  %v2037 = vxor.u32 %v2029, 2147483648
  %v2038 = vxor.u32 %v2030, 2147483648
  %v2039 = vmul.f32 %v2031, 1.442695
  %v2040 = vpow.pop %v2039
  %v2041 = vmul.f32 %v2032, 1.442695
  %v2042 = vpow.pop %v2041
  %v2043 = vmul.f32 %v2033, 1.442695
  %v2044 = vpow.pop %v2043
  %v2045 = vmul.f32 %v2034, 1.442695
  %v2046 = vpow.pop %v2045
  %v2047 = vmul.f32 %v2035, 1.442695
  %v2048 = vpow.pop %v2047
  %v2049 = vmul.f32 %v2036, 1.442695
  %v2050 = vpow.pop %v2049
  %v2051 = vmul.f32 %v2037, 1.442695
  %v2052 = vpow.pop %v2051
  %v2053 = vmul.f32 %v2038, 1.442695
  %v2054 = vpow.pop %v2053
  %v2055 = vadd.f32 %v2040, 1.0
  %v2056 = vadd.f32 %v2042, 1.0
  %v2057 = vadd.f32 %v2044, 1.0
  %v2058 = vadd.f32 %v2046, 1.0
  %v2059 = vadd.f32 %v2048, 1.0
  %v2060 = vadd.f32 %v2050, 1.0
  %v2061 = vadd.f32 %v2052, 1.0
  %v2062 = vadd.f32 %v2054, 1.0
  %v2063 = vrcp.pop %v2055
  %v2064 = vmul.f32 1.0, %v2063
  %v2065 = vrcp.pop %v2056
  %v2066 = vmul.f32 1.0, %v2065
  %v2067 = vrcp.pop %v2057
  %v2068 = vmul.f32 1.0, %v2067
  %v2069 = vrcp.pop %v2058
  %v2070 = vmul.f32 1.0, %v2069
  %v2071 = vrcp.pop %v2059
  %v2072 = vmul.f32 1.0, %v2071
  %v2073 = vrcp.pop %v2060
  %v2074 = vmul.f32 1.0, %v2073
  %v2075 = vrcp.pop %v2061
  %v2076 = vmul.f32 1.0, %v2075
  %v2077 = vrcp.pop %v2062
  %v2078 = vmul.f32 1.0, %v2077
  %s2079 = scalar_lea.vmem [#allocation2], 448
  %2080 = vst.msk [vmem:[%s2079] sm:$0xff] %vm198, %v2064
  %2081 = vst.msk [vmem:[%s2079 + $0x8] sm:$0xff] %vm198, %v2066
  %2082 = vst.msk [vmem:[%s2079 + $0x10] sm:$0xff] %vm198, %v2068
  %2083 = vst.msk [vmem:[%s2079 + $0x18] sm:$0xff] %vm198, %v2070
  %2084 = vst.msk [vmem:[%s2079 + $0x20] sm:$0xff] %vm198, %v2072
  %2085 = vst.msk [vmem:[%s2079 + $0x28] sm:$0xff] %vm198, %v2074
  %2086 = vst.msk [vmem:[%s2079 + $0x30] sm:$0xff] %vm198, %v2076
  %2087 = vst.msk [vmem:[%s2079 + $0x38] sm:$0xff] %vm198, %v2078
  %v2088 = vmul.f32 %v2010, %v209
  %v2089 = vmul.f32 %v2010, %v213
  %v2090 = vmul.f32 %v2010, %v217
  %v2091 = vmul.f32 %v2010, %v221
  %v2092 = vmul.f32 %v2014, %v225
  %v2093 = vmul.f32 %v2014, %v229
  %v2094 = vmul.f32 %v2014, %v233
  %v2095 = vmul.f32 %v2014, %v237
  %v2096 = vmul.f32 %v1998, %v249
  %v2097 = vmul.f32 %v1998, %v253
  %v2098 = vmul.f32 %v1998, %v257
  %v2099 = vmul.f32 %v1998, %v261
  %v2100 = vmul.f32 %v2002, %v265
  %v2101 = vmul.f32 %v2002, %v269
  %v2102 = vmul.f32 %v2002, %v273
  %v2103 = vmul.f32 %v2002, %v277
  %v2104 = vadd.f32 %v2088, %v2096
  %v2105 = vadd.f32 %v2089, %v2097
  %v2106 = vadd.f32 %v2090, %v2098
  %v2107 = vadd.f32 %v2091, %v2099
  %v2108 = vadd.f32 %v2092, %v2100
  %v2109 = vadd.f32 %v2093, %v2101
  %v2110 = vadd.f32 %v2094, %v2102
  %v2111 = vadd.f32 %v2095, %v2103
  %v2112 = vadd.f32 %v2104, %v297
  %v2113 = vadd.f32 %v2105, %v301
  %v2114 = vadd.f32 %v2106, %v305
  %v2115 = vadd.f32 %v2107, %v309
  %v2116 = vadd.f32 %v2108, %v313
  %v2117 = vadd.f32 %v2109, %v317
  %v2118 = vadd.f32 %v2110, %v321
  %v2119 = vadd.f32 %v2111, %v325
  %s2120 = scalar_lea.vmem [#allocation3], 448
  %2121 = vst.msk [vmem:[%s2120] sm:$0xff] %vm198, %v2112
  %2122 = vst.msk [vmem:[%s2120 + $0x8] sm:$0xff] %vm198, %v2113
  %2123 = vst.msk [vmem:[%s2120 + $0x10] sm:$0xff] %vm198, %v2114
  %2124 = vst.msk [vmem:[%s2120 + $0x18] sm:$0xff] %vm198, %v2115
  %2125 = vst.msk [vmem:[%s2120 + $0x20] sm:$0xff] %vm198, %v2116
  %2126 = vst.msk [vmem:[%s2120 + $0x28] sm:$0xff] %vm198, %v2117
  %2127 = vst.msk [vmem:[%s2120 + $0x30] sm:$0xff] %vm198, %v2118
  %2128 = vst.msk [vmem:[%s2120 + $0x38] sm:$0xff] %vm198, %v2119
  %v2129 = vmul.f32 %v2010, %v345
  %v2130 = vmul.f32 %v2010, %v349
  %v2131 = vmul.f32 %v2010, %v353
  %v2132 = vmul.f32 %v2010, %v357
  %v2133 = vmul.f32 %v2014, %v361
  %v2134 = vmul.f32 %v2014, %v365
  %v2135 = vmul.f32 %v2014, %v369
  %v2136 = vmul.f32 %v2014, %v373
  %v2137 = vmul.f32 %v1998, %v385
  %v2138 = vmul.f32 %v1998, %v389
  %v2139 = vmul.f32 %v1998, %v393
  %v2140 = vmul.f32 %v1998, %v397
  %v2141 = vmul.f32 %v2002, %v401
  %v2142 = vmul.f32 %v2002, %v405
  %v2143 = vmul.f32 %v2002, %v409
  %v2144 = vmul.f32 %v2002, %v413
  %v2145 = vadd.f32 %v2129, %v2137
  %v2146 = vadd.f32 %v2130, %v2138
  %v2147 = vadd.f32 %v2131, %v2139
  %v2148 = vadd.f32 %v2132, %v2140
  %v2149 = vadd.f32 %v2133, %v2141
  %v2150 = vadd.f32 %v2134, %v2142
  %v2151 = vadd.f32 %v2135, %v2143
  %v2152 = vadd.f32 %v2136, %v2144
  %v2153 = vadd.f32 %v2145, %v433
  %v2154 = vadd.f32 %v2146, %v437
  %v2155 = vadd.f32 %v2147, %v441
  %v2156 = vadd.f32 %v2148, %v445
  %v2157 = vadd.f32 %v2149, %v449
  %v2158 = vadd.f32 %v2150, %v453
  %v2159 = vadd.f32 %v2151, %v457
  %v2160 = vadd.f32 %v2152, %v461
  %s2161 = scalar_lea.vmem [#allocation4], 448
  %2162 = vst.msk [vmem:[%s2161] sm:$0xff] %vm198, %v2153
  %2163 = vst.msk [vmem:[%s2161 + $0x8] sm:$0xff] %vm198, %v2154
  %2164 = vst.msk [vmem:[%s2161 + $0x10] sm:$0xff] %vm198, %v2155
  %2165 = vst.msk [vmem:[%s2161 + $0x18] sm:$0xff] %vm198, %v2156
  %2166 = vst.msk [vmem:[%s2161 + $0x20] sm:$0xff] %vm198, %v2157
  %2167 = vst.msk [vmem:[%s2161 + $0x28] sm:$0xff] %vm198, %v2158
  %2168 = vst.msk [vmem:[%s2161 + $0x30] sm:$0xff] %vm198, %v2159
  %2169 = vst.msk [vmem:[%s2161 + $0x38] sm:$0xff] %vm198, %v2160
  %v2170 = vmul.f32 %v2010, %v481
  %v2171 = vmul.f32 %v2010, %v485
  %v2172 = vmul.f32 %v2010, %v489
  %v2173 = vmul.f32 %v2010, %v493
  %v2174 = vmul.f32 %v2014, %v497
  %v2175 = vmul.f32 %v2014, %v501
  %v2176 = vmul.f32 %v2014, %v505
  %v2177 = vmul.f32 %v2014, %v509
  %v2178 = vmul.f32 %v1998, %v521
  %v2179 = vmul.f32 %v1998, %v525
  %v2180 = vmul.f32 %v1998, %v529
  %v2181 = vmul.f32 %v1998, %v533
  %v2182 = vmul.f32 %v2002, %v537
  %v2183 = vmul.f32 %v2002, %v541
  %v2184 = vmul.f32 %v2002, %v545
  %v2185 = vmul.f32 %v2002, %v549
  %v2186 = vadd.f32 %v2170, %v2178
  %v2187 = vadd.f32 %v2171, %v2179
  %v2188 = vadd.f32 %v2172, %v2180
  %v2189 = vadd.f32 %v2173, %v2181
  %v2190 = vadd.f32 %v2174, %v2182
  %v2191 = vadd.f32 %v2175, %v2183
  %v2192 = vadd.f32 %v2176, %v2184
  %v2193 = vadd.f32 %v2177, %v2185
  %v2194 = vadd.f32 %v2186, %v569
  %v2195 = vadd.f32 %v2187, %v573
  %v2196 = vadd.f32 %v2188, %v577
  %v2197 = vadd.f32 %v2189, %v581
  %v2198 = vadd.f32 %v2190, %v585
  %v2199 = vadd.f32 %v2191, %v589
  %v2200 = vadd.f32 %v2192, %v593
  %v2201 = vadd.f32 %v2193, %v597
  %s2202 = scalar_lea.vmem [#allocation5], 448
  %2203 = vst.msk [vmem:[%s2202] sm:$0xff] %vm198, %v2194
  %2204 = vst.msk [vmem:[%s2202 + $0x8] sm:$0xff] %vm198, %v2195
  %2205 = vst.msk [vmem:[%s2202 + $0x10] sm:$0xff] %vm198, %v2196
  %2206 = vst.msk [vmem:[%s2202 + $0x18] sm:$0xff] %vm198, %v2197
  %2207 = vst.msk [vmem:[%s2202 + $0x20] sm:$0xff] %vm198, %v2198
  %2208 = vst.msk [vmem:[%s2202 + $0x28] sm:$0xff] %vm198, %v2199
  %2209 = vst.msk [vmem:[%s2202 + $0x30] sm:$0xff] %vm198, %v2200
  %2210 = vst.msk [vmem:[%s2202 + $0x38] sm:$0xff] %vm198, %v2201
  %v2211 = vld [vmem:[%s2] sm:$0xff]
  %v2212 = vld [vmem:[%s2 + $0x8] sm:$0xff]
  %v2213 = vld [vmem:[%s2 + $0x10] sm:$0xff]
  %v2214 = vld [vmem:[%s2 + $0x18] sm:$0xff]
  %v2215 = vld [vmem:[%s2 + $0x20] sm:$0xff]
  %v2216 = vld [vmem:[%s2 + $0x28] sm:$0xff]
  %v2217 = vld [vmem:[%s2 + $0x30] sm:$0xff]
  %v2218 = vld [vmem:[%s2 + $0x38] sm:$0xff]
  %v2219 = vld [vmem:[%s2 + $0x40] sm:$0xff]
  %v2220 = vld [vmem:[%s2 + $0x48] sm:$0xff]
  %v2221 = vld [vmem:[%s2 + $0x50] sm:$0xff]
  %v2222 = vld [vmem:[%s2 + $0x58] sm:$0xff]
  %v2223 = vld [vmem:[%s2 + $0x60] sm:$0xff]
  %v2224 = vld [vmem:[%s2 + $0x68] sm:$0xff]
  %v2225 = vld [vmem:[%s2 + $0x70] sm:$0xff]
  %v2226 = vld [vmem:[%s2 + $0x78] sm:$0xff]
  %v2227 = vld [vmem:[%s2 + $0x80] sm:$0xff]
  %v2228 = vld [vmem:[%s2 + $0x88] sm:$0xff]
  %v2229 = vld [vmem:[%s2 + $0x90] sm:$0xff]
  %v2230 = vld [vmem:[%s2 + $0x98] sm:$0xff]
  %v2231 = vld [vmem:[%s2 + $0xa0] sm:$0xff]
  %v2232 = vld [vmem:[%s2 + $0xa8] sm:$0xff]
  %v2233 = vld [vmem:[%s2 + $0xb0] sm:$0xff]
  %v2234 = vld [vmem:[%s2 + $0xb8] sm:$0xff]
  %v2235 = vld [vmem:[%s2 + $0xc0] sm:$0xff]
  %v2236 = vld [vmem:[#allocation2] sm:$0xff]
  %v2237 = vld [vmem:[#allocation2 + $0x8] sm:$0xff]
  %v2238 = vld [vmem:[#allocation2 + $0x10] sm:$0xff]
  %v2239 = vld [vmem:[#allocation2 + $0x18] sm:$0xff]
  %v2240 = vld [vmem:[#allocation2 + $0x20] sm:$0xff]
  %v2241 = vld [vmem:[#allocation2 + $0x28] sm:$0xff]
  %v2242 = vld [vmem:[#allocation2 + $0x30] sm:$0xff]
  %v2243 = vld [vmem:[#allocation2 + $0x38] sm:$0xff]
  %v2244 = vmul.f32 %v2236, 0.0
  %v2245 = vmul.f32 %v2237, 0.0
  %v2246 = vmul.f32 %v2238, 0.0
  %v2247 = vmul.f32 %v2239, 0.0
  %v2248 = vmul.f32 %v2240, 0.0
  %v2249 = vmul.f32 %v2241, 0.0
  %v2250 = vmul.f32 %v2242, 0.0
  %v2251 = vmul.f32 %v2243, 0.0
  %vm2252 = vcmask 523264
  %v2254 = vsel %vm2252, %v2211, 0
  %v2257 = vsel %vm2252, %v2212, 0
  %v2260 = vsel %vm2252, %v2213, 0
  %v2263 = vsel %vm2252, %v2214, 0
  %v2266 = vsel %vm2252, %v2215, 0
  %v2269 = vsel %vm2252, %v2216, 0
  %v2272 = vsel %vm2252, %v2217, 0
  %v2275 = vsel %vm2252, %v2218, 0
  %v2278 = vsel %vm2252, %v2219, 0
  %v2281 = vsel %vm2252, %v2220, 0
  %v2284 = vsel %vm2252, %v2221, 0
  %v2287 = vsel %vm2252, %v2222, 0
  %v2290 = vsel %vm2252, %v2223, 0
  %v2293 = vsel %vm2252, %v2224, 0
  %v2296 = vsel %vm2252, %v2225, 0
  %v2299 = vsel %vm2252, %v2226, 0
  %v2302 = vsel %vm2252, %v2227, 0
  %v2305 = vsel %vm2252, %v2228, 0
  %v2308 = vsel %vm2252, %v2229, 0
  %v2311 = vsel %vm2252, %v2230, 0
  %v2314 = vsel %vm2252, %v2231, 0
  %v2317 = vsel %vm2252, %v2232, 0
  %v2320 = vsel %vm2252, %v2233, 0
  %v2323 = vsel %vm2252, %v2234, 0
  %v2326 = vsel %vm2252, %v2235, 0
  %2328 = vmatprep.subr.mxu0 0.0
  %2329 = vmatpush1.msra.mxu0 0.0
  %2330 = vmatprep.subr.mxu0 0.0
  %2331 = vmatpush1.msra.mxu0 0.0
  %2332 = vmatprep.subr.mxu0 0.0
  %2333 = vmatpush1.msra.mxu0 0.0
  %2334 = vmatprep.subr.mxu0 0.0
  %2335 = vmatpush1.msra.mxu0 0.0
  %2336 = vmatprep.subr.mxu0 0.0
  %2337 = vmatpush1.msra.mxu0 0.0
  %2338 = vmatprep.subr.mxu0 0.0
  %2339 = vmatpush1.msra.mxu0 0.0
  %2340 = vmatprep.subr.mxu0 0.0
  %2341 = vmatpush1.msra.mxu0 0.0
  %2342 = vmatprep.subr.mxu0 0.0
  %2343 = vmatpush1.msra.mxu0 0.0
  %2344 = vmatprep.subr.mxu0 0.0
  %2345 = vmatpush1.msra.mxu0 %v2251
  %2346 = vmatprep.subr.mxu0 0.0
  %2347 = vmatpush1.msra.mxu0 %v2250
  %2348 = vmatprep.subr.mxu0 0.0
  %2349 = vmatpush1.msra.mxu0 %v2249
  %2350 = vmatprep.subr.mxu0 0.0
  %2351 = vmatpush1.msra.mxu0 %v2248
  %2352 = vmatprep.subr.mxu0 0.0
  %2353 = vmatpush1.msra.mxu0 %v2247
  %2354 = vmatprep.subr.mxu0 0.0
  %2355 = vmatpush1.msra.mxu0 %v2246
  %2356 = vmatprep.subr.mxu0 0.0
  %2357 = vmatpush1.msra.mxu0 %v2245
  %2358 = vmatprep.subr.mxu0 0.0
  %2359 = vmatpush1.msra.mxu0 %v2244
  %2360 = vmatprep.subr.mxu0 0.0
  %2361 = vmatpush2.msra.mxu0 0.0
  %2362 = vmatprep.subr.mxu0 0.0
  %2363 = vmatpush2.msra.mxu0 0.0
  %2364 = vmatprep.subr.mxu0 0.0
  %2365 = vmatpush2.msra.mxu0 0.0
  %2366 = vmatprep.subr.mxu0 0.0
  %2367 = vmatpush2.msra.mxu0 0.0
  %2368 = vmatprep.subr.mxu0 0.0
  %2369 = vmatpush2.msra.mxu0 0.0
  %2370 = vmatprep.subr.mxu0 0.0
  %2371 = vmatpush2.msra.mxu0 0.0
  %2372 = vmatprep.subr.mxu0 0.0
  %2373 = vmatpush2.msra.mxu0 0.0
  %2374 = vmatprep.subr.mxu0 0.0
  %2375 = vmatpush2.msra.mxu0 0.0
  %2376 = vmatprep.subr.mxu0 0.0
  %2377 = vmatpush2.msra.mxu0 0.0
  %2378 = vmatprep.subr.mxu0 0.0
  %2379 = vmatpush2.msra.mxu0 0.0
  %2380 = vmatprep.subr.mxu0 0.0
  %2381 = vmatpush2.msra.mxu0 0.0
  %2382 = vmatprep.subr.mxu0 0.0
  %2383 = vmatpush2.msra.mxu0 0.0
  %2384 = vmatprep.subr.mxu0 0.0
  %2385 = vmatpush2.msra.mxu0 0.0
  %2386 = vmatprep.subr.mxu0 0.0
  %2387 = vmatpush2.msra.mxu0 0.0
  %2388 = vmatprep.subr.mxu0 0.0
  %2389 = vmatpush2.msra.mxu0 0.0
  %2390 = vmatprep.subr.mxu0 0.0
  %2391 = vmatpush2.msra.mxu0 0.0
  %2392 = vmatprep.mubr.f32.mxu0 0.0
  %2393 = vmatmul.mubr.f32.gmra.mxu0 %v2254
  %v2394 = vpop.f32.mrf.mxu0
  %v2395 = vadd.f32 0.0, %v2394
  %v2396 = vpop.f32.mrf.mxu0
  %2397 = vmatprep.mubr.f32.mxu0 0.0
  %2398 = vmatmul.mubr.f32.gmra.mxu0 %v2257
  %v2399 = vpop.f32.mrf.mxu0
  %v2400 = vadd.f32 0.0, %v2399
  %v2401 = vpop.f32.mrf.mxu0
  %2402 = vmatprep.mubr.f32.mxu0 0.0
  %2403 = vmatmul.mubr.f32.gmra.mxu0 %v2260
  %v2404 = vpop.f32.mrf.mxu0
  %v2405 = vadd.f32 0.0, %v2404
  %v2406 = vpop.f32.mrf.mxu0
  %2407 = vmatprep.mubr.f32.mxu0 0.0
  %2408 = vmatmul.mubr.f32.gmra.mxu0 %v2263
  %v2409 = vpop.f32.mrf.mxu0
  %v2410 = vadd.f32 0.0, %v2409
  %v2411 = vpop.f32.mrf.mxu0
  %2412 = vmatprep.mubr.f32.mxu0 0.0
  %2413 = vmatmul.mubr.f32.gmra.mxu0 %v2266
  %v2414 = vpop.f32.mrf.mxu0
  %v2415 = vadd.f32 0.0, %v2414
  %v2416 = vpop.f32.mrf.mxu0
  %2417 = vmatprep.mubr.f32.mxu0 0.0
  %2418 = vmatmul.mubr.f32.gmra.mxu0 %v2269
  %v2419 = vpop.f32.mrf.mxu0
  %v2420 = vadd.f32 0.0, %v2419
  %v2421 = vpop.f32.mrf.mxu0
  %2422 = vmatprep.mubr.f32.mxu0 0.0
  %2423 = vmatmul.mubr.f32.gmra.mxu0 %v2272
  %v2424 = vpop.f32.mrf.mxu0
  %v2425 = vadd.f32 0.0, %v2424
  %v2426 = vpop.f32.mrf.mxu0
  %2427 = vmatprep.mubr.f32.mxu0 0.0
  %2428 = vmatmul.mubr.f32.gmra.mxu0 %v2275
  %v2429 = vpop.f32.mrf.mxu0
  %v2430 = vadd.f32 0.0, %v2429
  %v2431 = vpop.f32.mrf.mxu0
  %2432 = vmatprep.mubr.f32.mxu0 0.0
  %2433 = vmatmul.mubr.f32.gmra.mxu0 %v2278
  %v2434 = vpop.f32.mrf.mxu0
  %v2435 = vadd.f32 0.0, %v2434
  %v2436 = vpop.f32.mrf.mxu0
  %2437 = vmatprep.mubr.f32.mxu0 0.0
  %2438 = vmatmul.mubr.f32.gmra.mxu0 %v2281
  %v2439 = vpop.f32.mrf.mxu0
  %v2440 = vadd.f32 0.0, %v2439
  %v2441 = vpop.f32.mrf.mxu0
  %2442 = vmatprep.mubr.f32.mxu0 0.0
  %2443 = vmatmul.mubr.f32.gmra.mxu0 %v2284
  %v2444 = vpop.f32.mrf.mxu0
  %v2445 = vadd.f32 0.0, %v2444
  %v2446 = vpop.f32.mrf.mxu0
  %2447 = vmatprep.mubr.f32.mxu0 0.0
  %2448 = vmatmul.mubr.f32.gmra.mxu0 %v2287
  %v2449 = vpop.f32.mrf.mxu0
  %v2450 = vadd.f32 0.0, %v2449
  %v2451 = vpop.f32.mrf.mxu0
  %2452 = vmatprep.mubr.f32.mxu0 0.0
  %2453 = vmatmul.mubr.f32.gmra.mxu0 %v2290
  %v2454 = vpop.f32.mrf.mxu0
  %v2455 = vadd.f32 0.0, %v2454
  %v2456 = vpop.f32.mrf.mxu0
  %2457 = vmatprep.mubr.f32.mxu0 0.0
  %2458 = vmatmul.mubr.f32.gmra.mxu0 %v2293
  %v2459 = vpop.f32.mrf.mxu0
  %v2460 = vadd.f32 0.0, %v2459
  %v2461 = vpop.f32.mrf.mxu0
  %2462 = vmatprep.mubr.f32.mxu0 0.0
  %2463 = vmatmul.mubr.f32.gmra.mxu0 %v2296
  %v2464 = vpop.f32.mrf.mxu0
  %v2465 = vadd.f32 0.0, %v2464
  %v2466 = vpop.f32.mrf.mxu0
  %2467 = vmatprep.mubr.f32.mxu0 0.0
  %2468 = vmatmul.mubr.f32.gmra.mxu0 %v2299
  %v2469 = vpop.f32.mrf.mxu0
  %v2470 = vadd.f32 0.0, %v2469
  %v2471 = vpop.f32.mrf.mxu0
  %2472 = vmatprep.mubr.f32.mxu0 0.0
  %2473 = vmatmul.mubr.f32.gmra.mxu0 %v2302
  %v2474 = vpop.f32.mrf.mxu0
  %v2475 = vadd.f32 0.0, %v2474
  %v2476 = vpop.f32.mrf.mxu0
  %2477 = vmatprep.mubr.f32.mxu0 0.0
  %2478 = vmatmul.mubr.f32.gmra.mxu0 %v2305
  %v2479 = vpop.f32.mrf.mxu0
  %v2480 = vadd.f32 0.0, %v2479
  %v2481 = vpop.f32.mrf.mxu0
  %2482 = vmatprep.mubr.f32.mxu0 0.0
  %2483 = vmatmul.mubr.f32.gmra.mxu0 %v2308
  %v2484 = vpop.f32.mrf.mxu0
  %v2485 = vadd.f32 0.0, %v2484
  %v2486 = vpop.f32.mrf.mxu0
  %2487 = vmatprep.mubr.f32.mxu0 0.0
  %2488 = vmatmul.mubr.f32.gmra.mxu0 %v2311
  %v2489 = vpop.f32.mrf.mxu0
  %v2490 = vadd.f32 0.0, %v2489
  %v2491 = vpop.f32.mrf.mxu0
  %2492 = vmatprep.mubr.f32.mxu0 0.0
  %2493 = vmatmul.mubr.f32.gmra.mxu0 %v2314
  %v2494 = vpop.f32.mrf.mxu0
  %v2495 = vadd.f32 0.0, %v2494
  %v2496 = vpop.f32.mrf.mxu0
  %2497 = vmatprep.mubr.f32.mxu0 0.0
  %2498 = vmatmul.mubr.f32.gmra.mxu0 %v2317
  %v2499 = vpop.f32.mrf.mxu0
  %v2500 = vadd.f32 0.0, %v2499
  %v2501 = vpop.f32.mrf.mxu0
  %2502 = vmatprep.mubr.f32.mxu0 0.0
  %2503 = vmatmul.mubr.f32.gmra.mxu0 %v2320
  %v2504 = vpop.f32.mrf.mxu0
  %v2505 = vadd.f32 0.0, %v2504
  %v2506 = vpop.f32.mrf.mxu0
  %2507 = vmatprep.mubr.f32.mxu0 0.0
  %2508 = vmatmul.mubr.f32.gmra.mxu0 %v2323
  %v2509 = vpop.f32.mrf.mxu0
  %v2510 = vadd.f32 0.0, %v2509
  %v2511 = vpop.f32.mrf.mxu0
  %2512 = vmatprep.mubr.f32.mxu0 0.0
  %2513 = vmatmul.mubr.f32.gmra.mxu0 %v2326
  %v2514 = vpop.f32.mrf.mxu0
  %v2515 = vadd.f32 0.0, %v2514
  %v2516 = vpop.f32.mrf.mxu0
  %2517 = vdwg.mxu0
  %2518 = vset.pattern.permute.xlu0 12
  %2519 = vperm.xlu0 %2518, %v23
  %v2520 = vpop.permute.xlu0 %2519
  %v2522 = vadd.f32 %v2515, %v2520
  %v2523 = vld [vmem:[%s0] sm:$0x3f]
  %v2524 = vsub.f32 1.0, %v2523
  %v2526 = vrot.slane %v2522, 7
  %v2528 = vmul.f32 %v2524, %v2526
  %v2529 = vrot.slane %v2522, 5
  %v2531 = vmul.f32 %v2524, %v2529
  %v2532 = vlaneseq
  %v2533 = vshrl.u32 %v2532, 7
  %v2534 = vsub.s32 1, %v2533
  %v2535 = vrot.slane %v2528, %v2534
  %v2536 = vlaneseq
  %v2537 = vshrl.u32 %v2536, 7
  %v2538 = vsub.s32 4, %v2537
  %v2539 = vrot.slane %v2531, %v2538
  %v2540 = vld [vmem:[#allocation3] sm:$0xff]
  %v2541 = vld [vmem:[#allocation3 + $0x8] sm:$0xff]
  %v2542 = vld [vmem:[#allocation3 + $0x10] sm:$0xff]
  %v2543 = vld [vmem:[#allocation3 + $0x18] sm:$0xff]
  %v2544 = vld [vmem:[#allocation3 + $0x20] sm:$0xff]
  %v2545 = vld [vmem:[#allocation3 + $0x28] sm:$0xff]
  %v2546 = vld [vmem:[#allocation3 + $0x30] sm:$0xff]
  %v2547 = vld [vmem:[#allocation3 + $0x38] sm:$0xff]
  %v2548 = vmul.f32 %v209, %v2535
  %v2549 = vmul.f32 %v213, %v2535
  %v2550 = vmul.f32 %v217, %v2535
  %v2551 = vmul.f32 %v221, %v2535
  %v2552 = vmul.f32 %v225, %v2539
  %v2553 = vmul.f32 %v229, %v2539
  %v2554 = vmul.f32 %v233, %v2539
  %v2555 = vmul.f32 %v237, %v2539
  %v2556 = vadd.f32 %v2540, %v2548
  %v2557 = vadd.f32 %v2541, %v2549
  %v2558 = vadd.f32 %v2542, %v2550
  %v2559 = vadd.f32 %v2543, %v2551
  %v2560 = vadd.f32 %v2544, %v2552
  %v2561 = vadd.f32 %v2545, %v2553
  %v2562 = vadd.f32 %v2546, %v2554
  %v2563 = vadd.f32 %v2547, %v2555
  %v2564 = vadd.f32 %v2556, %v2395
  %v2565 = vadd.f32 %v2557, %v2400
  %v2566 = vadd.f32 %v2558, %v2405
  %v2567 = vadd.f32 %v2559, %v2410
  %v2568 = vadd.f32 %v2560, %v2415
  %v2569 = vadd.f32 %v2561, %v2420
  %v2570 = vadd.f32 %v2562, %v2425
  %v2571 = vadd.f32 %v2563, %v2430
  %v2572 = vxor.u32 %v2564, 2147483648
  %v2573 = vxor.u32 %v2565, 2147483648
  %v2574 = vxor.u32 %v2566, 2147483648
  %v2575 = vxor.u32 %v2567, 2147483648
  %v2576 = vxor.u32 %v2568, 2147483648
  %v2577 = vxor.u32 %v2569, 2147483648
  %v2578 = vxor.u32 %v2570, 2147483648
  %v2579 = vxor.u32 %v2571, 2147483648
  %v2580 = vmul.f32 %v2572, 1.442695
  %v2581 = vpow.pop %v2580
  %v2582 = vmul.f32 %v2573, 1.442695
  %v2583 = vpow.pop %v2582
  %v2584 = vmul.f32 %v2574, 1.442695
  %v2585 = vpow.pop %v2584
  %v2586 = vmul.f32 %v2575, 1.442695
  %v2587 = vpow.pop %v2586
  %v2588 = vmul.f32 %v2576, 1.442695
  %v2589 = vpow.pop %v2588
  %v2590 = vmul.f32 %v2577, 1.442695
  %v2591 = vpow.pop %v2590
  %v2592 = vmul.f32 %v2578, 1.442695
  %v2593 = vpow.pop %v2592
  %v2594 = vmul.f32 %v2579, 1.442695
  %v2595 = vpow.pop %v2594
  %v2596 = vadd.f32 %v2581, 1.0
  %v2597 = vadd.f32 %v2583, 1.0
  %v2598 = vadd.f32 %v2585, 1.0
  %v2599 = vadd.f32 %v2587, 1.0
  %v2600 = vadd.f32 %v2589, 1.0
  %v2601 = vadd.f32 %v2591, 1.0
  %v2602 = vadd.f32 %v2593, 1.0
  %v2603 = vadd.f32 %v2595, 1.0
  %v2604 = vrcp.pop %v2596
  %v2605 = vmul.f32 1.0, %v2604
  %v2606 = vrcp.pop %v2597
  %v2607 = vmul.f32 1.0, %v2606
  %v2608 = vrcp.pop %v2598
  %v2609 = vmul.f32 1.0, %v2608
  %v2610 = vrcp.pop %v2599
  %v2611 = vmul.f32 1.0, %v2610
  %v2612 = vrcp.pop %v2600
  %v2613 = vmul.f32 1.0, %v2612
  %v2614 = vrcp.pop %v2601
  %v2615 = vmul.f32 1.0, %v2614
  %v2616 = vrcp.pop %v2602
  %v2617 = vmul.f32 1.0, %v2616
  %v2618 = vrcp.pop %v2603
  %v2619 = vmul.f32 1.0, %v2618
  %v2620 = vld [vmem:[#allocation4] sm:$0xff]
  %v2621 = vld [vmem:[#allocation4 + $0x8] sm:$0xff]
  %v2622 = vld [vmem:[#allocation4 + $0x10] sm:$0xff]
  %v2623 = vld [vmem:[#allocation4 + $0x18] sm:$0xff]
  %v2624 = vld [vmem:[#allocation4 + $0x20] sm:$0xff]
  %v2625 = vld [vmem:[#allocation4 + $0x28] sm:$0xff]
  %v2626 = vld [vmem:[#allocation4 + $0x30] sm:$0xff]
  %v2627 = vld [vmem:[#allocation4 + $0x38] sm:$0xff]
  %v2628 = vmul.f32 %v345, %v2535
  %v2629 = vmul.f32 %v349, %v2535
  %v2630 = vmul.f32 %v353, %v2535
  %v2631 = vmul.f32 %v357, %v2535
  %v2632 = vmul.f32 %v361, %v2539
  %v2633 = vmul.f32 %v365, %v2539
  %v2634 = vmul.f32 %v369, %v2539
  %v2635 = vmul.f32 %v373, %v2539
  %v2636 = vadd.f32 %v2620, %v2628
  %v2637 = vadd.f32 %v2621, %v2629
  %v2638 = vadd.f32 %v2622, %v2630
  %v2639 = vadd.f32 %v2623, %v2631
  %v2640 = vadd.f32 %v2624, %v2632
  %v2641 = vadd.f32 %v2625, %v2633
  %v2642 = vadd.f32 %v2626, %v2634
  %v2643 = vadd.f32 %v2627, %v2635
  %v2644 = vadd.f32 %v2636, %v2435
  %v2645 = vadd.f32 %v2637, %v2440
  %v2646 = vadd.f32 %v2638, %v2445
  %v2647 = vadd.f32 %v2639, %v2450
  %v2648 = vadd.f32 %v2640, %v2455
  %v2649 = vadd.f32 %v2641, %v2460
  %v2650 = vadd.f32 %v2642, %v2465
  %v2651 = vadd.f32 %v2643, %v2470
  %v2652 = vxor.u32 %v2644, 2147483648
  %v2653 = vxor.u32 %v2645, 2147483648
  %v2654 = vxor.u32 %v2646, 2147483648
  %v2655 = vxor.u32 %v2647, 2147483648
  %v2656 = vxor.u32 %v2648, 2147483648
  %v2657 = vxor.u32 %v2649, 2147483648
  %v2658 = vxor.u32 %v2650, 2147483648
  %v2659 = vxor.u32 %v2651, 2147483648
  %v2660 = vmul.f32 %v2652, 1.442695
  %v2661 = vpow.pop %v2660
  %v2662 = vmul.f32 %v2653, 1.442695
  %v2663 = vpow.pop %v2662
  %v2664 = vmul.f32 %v2654, 1.442695
  %v2665 = vpow.pop %v2664
  %v2666 = vmul.f32 %v2655, 1.442695
  %v2667 = vpow.pop %v2666
  %v2668 = vmul.f32 %v2656, 1.442695
  %v2669 = vpow.pop %v2668
  %v2670 = vmul.f32 %v2657, 1.442695
  %v2671 = vpow.pop %v2670
  %v2672 = vmul.f32 %v2658, 1.442695
  %v2673 = vpow.pop %v2672
  %v2674 = vmul.f32 %v2659, 1.442695
  %v2675 = vpow.pop %v2674
  %v2676 = vadd.f32 %v2661, 1.0
  %v2677 = vadd.f32 %v2663, 1.0
  %v2678 = vadd.f32 %v2665, 1.0
  %v2679 = vadd.f32 %v2667, 1.0
  %v2680 = vadd.f32 %v2669, 1.0
  %v2681 = vadd.f32 %v2671, 1.0
  %v2682 = vadd.f32 %v2673, 1.0
  %v2683 = vadd.f32 %v2675, 1.0
  %v2684 = vrcp.pop %v2676
  %v2685 = vmul.f32 1.0, %v2684
  %v2686 = vrcp.pop %v2677
  %v2687 = vmul.f32 1.0, %v2686
  %v2688 = vrcp.pop %v2678
  %v2689 = vmul.f32 1.0, %v2688
  %v2690 = vrcp.pop %v2679
  %v2691 = vmul.f32 1.0, %v2690
  %v2692 = vrcp.pop %v2680
  %v2693 = vmul.f32 1.0, %v2692
  %v2694 = vrcp.pop %v2681
  %v2695 = vmul.f32 1.0, %v2694
  %v2696 = vrcp.pop %v2682
  %v2697 = vmul.f32 1.0, %v2696
  %v2698 = vrcp.pop %v2683
  %v2699 = vmul.f32 1.0, %v2698
  %v2700 = vld [vmem:[#allocation5] sm:$0xff]
  %v2701 = vld [vmem:[#allocation5 + $0x8] sm:$0xff]
  %v2702 = vld [vmem:[#allocation5 + $0x10] sm:$0xff]
  %v2703 = vld [vmem:[#allocation5 + $0x18] sm:$0xff]
  %v2704 = vld [vmem:[#allocation5 + $0x20] sm:$0xff]
  %v2705 = vld [vmem:[#allocation5 + $0x28] sm:$0xff]
  %v2706 = vld [vmem:[#allocation5 + $0x30] sm:$0xff]
  %v2707 = vld [vmem:[#allocation5 + $0x38] sm:$0xff]
  %v2708 = vmul.f32 %v481, %v2535
  %v2709 = vmul.f32 %v485, %v2535
  %v2710 = vmul.f32 %v489, %v2535
  %v2711 = vmul.f32 %v493, %v2535
  %v2712 = vmul.f32 %v497, %v2539
  %v2713 = vmul.f32 %v501, %v2539
  %v2714 = vmul.f32 %v505, %v2539
  %v2715 = vmul.f32 %v509, %v2539
  %v2716 = vadd.f32 %v2700, %v2708
  %v2717 = vadd.f32 %v2701, %v2709
  %v2718 = vadd.f32 %v2702, %v2710
  %v2719 = vadd.f32 %v2703, %v2711
  %v2720 = vadd.f32 %v2704, %v2712
  %v2721 = vadd.f32 %v2705, %v2713
  %v2722 = vadd.f32 %v2706, %v2714
  %v2723 = vadd.f32 %v2707, %v2715
  %2724 = vset.pattern.permute.xlu0 11
  %2725 = vperm.xlu0 %2724, %v23
  %v2726 = vpop.permute.xlu0 %2725
  %2728 = vset.pattern.permute.xlu0 11
  %2729 = vperm.xlu0 %2728, %v24
  %v2730 = vpop.permute.xlu0 %2729
  %2732 = vset.pattern.permute.xlu0 11
  %2733 = vperm.xlu0 %2732, %v25
  %v2734 = vpop.permute.xlu0 %2733
  %2736 = vset.pattern.permute.xlu0 11
  %2737 = vperm.xlu0 %2736, %v26
  %v2738 = vpop.permute.xlu0 %2737
  %2740 = vset.pattern.permute.xlu0 11
  %2741 = vperm.xlu0 %2740, %v27
  %v2742 = vpop.permute.xlu0 %2741
  %2744 = vset.pattern.permute.xlu0 11
  %2745 = vperm.xlu0 %2744, %v28
  %v2746 = vpop.permute.xlu0 %2745
  %2748 = vset.pattern.permute.xlu0 11
  %2749 = vperm.xlu0 %2748, %v29
  %v2750 = vpop.permute.xlu0 %2749
  %2752 = vset.pattern.permute.xlu0 11
  %2753 = vperm.xlu0 %2752, %v30
  %v2754 = vpop.permute.xlu0 %2753
  %v2756 = vadd.f32 %v2475, %v2726
  %v2757 = vadd.f32 %v2480, %v2730
  %v2758 = vadd.f32 %v2485, %v2734
  %v2759 = vadd.f32 %v2490, %v2738
  %v2760 = vadd.f32 %v2495, %v2742
  %v2761 = vadd.f32 %v2500, %v2746
  %v2762 = vadd.f32 %v2505, %v2750
  %v2763 = vadd.f32 %v2510, %v2754
  %v2764 = vmul.f32 %v2605, %v2756
  %v2765 = vmul.f32 %v2607, %v2757
  %v2766 = vmul.f32 %v2609, %v2758
  %v2767 = vmul.f32 %v2611, %v2759
  %v2768 = vmul.f32 %v2613, %v2760
  %v2769 = vmul.f32 %v2615, %v2761
  %v2770 = vmul.f32 %v2617, %v2762
  %v2771 = vmul.f32 %v2619, %v2763
  %v2772 = vadd.f32 %v2716, %v2764
  %v2773 = vadd.f32 %v2717, %v2765
  %v2774 = vadd.f32 %v2718, %v2766
  %v2775 = vadd.f32 %v2719, %v2767
  %v2776 = vadd.f32 %v2720, %v2768
  %v2777 = vadd.f32 %v2721, %v2769
  %v2778 = vadd.f32 %v2722, %v2770
  %v2779 = vadd.f32 %v2723, %v2771
  %v2780 = vtanh.pop %v2772
  %v2781 = vtanh.pop %v2773
  %v2782 = vtanh.pop %v2774
  %v2783 = vtanh.pop %v2775
  %v2784 = vtanh.pop %v2776
  %v2785 = vtanh.pop %v2777
  %v2786 = vtanh.pop %v2778
  %v2787 = vtanh.pop %v2779
  %v2788 = vsub.f32 1.0, %v2685
  %v2789 = vsub.f32 1.0, %v2687
  %v2790 = vsub.f32 1.0, %v2689
  %v2791 = vsub.f32 1.0, %v2691
  %v2792 = vsub.f32 1.0, %v2693
  %v2793 = vsub.f32 1.0, %v2695
  %v2794 = vsub.f32 1.0, %v2697
  %v2795 = vsub.f32 1.0, %v2699
  %v2796 = vmul.f32 %v2788, %v2780
  %v2797 = vmul.f32 %v2789, %v2781
  %v2798 = vmul.f32 %v2790, %v2782
  %v2799 = vmul.f32 %v2791, %v2783
  %v2800 = vmul.f32 %v2792, %v2784
  %v2801 = vmul.f32 %v2793, %v2785
  %v2802 = vmul.f32 %v2794, %v2786
  %v2803 = vmul.f32 %v2795, %v2787
  %v2804 = vmul.f32 %v2685, %v2244
  %v2805 = vmul.f32 %v2687, %v2245
  %v2806 = vmul.f32 %v2689, %v2246
  %v2807 = vmul.f32 %v2691, %v2247
  %v2808 = vmul.f32 %v2693, %v2248
  %v2809 = vmul.f32 %v2695, %v2249
  %v2810 = vmul.f32 %v2697, %v2250
  %v2811 = vmul.f32 %v2699, %v2251
  %v2812 = vadd.f32 %v2796, %v2804
  %v2813 = vadd.f32 %v2797, %v2805
  %v2814 = vadd.f32 %v2798, %v2806
  %v2815 = vadd.f32 %v2799, %v2807
  %v2816 = vadd.f32 %v2800, %v2808
  %v2817 = vadd.f32 %v2801, %v2809
  %v2818 = vadd.f32 %v2802, %v2810
  %v2819 = vadd.f32 %v2803, %v2811
  %vm2820 = vcmask 8192
  %2821 = vst.msk [vmem:[%s6] sm:$0x1] %vm2820, %v2522
  %vm2822 = vcmask 9217
  %2823 = vst.msk [vmem:[%s7 - $0x1] sm:$0x2] %vm2822, %v2522
  %v2824 = vld [vmem:[%s711] sm:$0xff]
  %v2825 = vld [vmem:[%s711 + $0x8] sm:$0xff]
  %v2826 = vld [vmem:[%s711 + $0x10] sm:$0xff]
  %v2827 = vld [vmem:[%s711 + $0x18] sm:$0xff]
  %v2828 = vld [vmem:[%s711 + $0x20] sm:$0xff]
  %v2829 = vld [vmem:[%s711 + $0x28] sm:$0xff]
  %v2830 = vld [vmem:[%s711 + $0x30] sm:$0xff]
  %v2831 = vld [vmem:[%s711 + $0x38] sm:$0xff]
  %v2832 = vmul.f32 %v2812, %v2824
  %v2833 = vmul.f32 %v2813, %v2825
  %v2834 = vmul.f32 %v2814, %v2826
  %v2835 = vmul.f32 %v2815, %v2827
  %v2836 = vmul.f32 %v2816, %v2828
  %v2837 = vmul.f32 %v2817, %v2829
  %v2838 = vmul.f32 %v2818, %v2830
  %v2839 = vmul.f32 %v2819, %v2831
  %2840 = vmatprep.subr.mxu0 0.0
  %2841 = vmatpush1.msra.mxu0 0.0
  %2842 = vmatprep.subr.mxu0 0.0
  %2843 = vmatpush1.msra.mxu0 0.0
  %2844 = vmatprep.subr.mxu0 0.0
  %2845 = vmatpush1.msra.mxu0 0.0
  %2846 = vmatprep.subr.mxu0 0.0
  %2847 = vmatpush1.msra.mxu0 0.0
  %2848 = vmatprep.subr.mxu0 0.0
  %2849 = vmatpush1.msra.mxu0 0.0
  %2850 = vmatprep.subr.mxu0 0.0
  %2851 = vmatpush1.msra.mxu0 0.0
  %2852 = vmatprep.subr.mxu0 0.0
  %2853 = vmatpush1.msra.mxu0 0.0
  %2854 = vmatprep.subr.mxu0 0.0
  %2855 = vmatpush1.msra.mxu0 0.0
  %2856 = vmatprep.subr.mxu0 0.0
  %2857 = vmatpush1.msra.mxu0 %v2839
  %2858 = vmatprep.subr.mxu0 0.0
  %2859 = vmatpush1.msra.mxu0 %v2838
  %2860 = vmatprep.subr.mxu0 0.0
  %2861 = vmatpush1.msra.mxu0 %v2837
  %2862 = vmatprep.subr.mxu0 0.0
  %2863 = vmatpush1.msra.mxu0 %v2836
  %2864 = vmatprep.subr.mxu0 0.0
  %2865 = vmatpush1.msra.mxu0 %v2835
  %2866 = vmatprep.subr.mxu0 0.0
  %2867 = vmatpush1.msra.mxu0 %v2834
  %2868 = vmatprep.subr.mxu0 0.0
  %2869 = vmatpush1.msra.mxu0 %v2833
  %2870 = vmatprep.subr.mxu0 0.0
  %2871 = vmatpush1.msra.mxu0 %v2832
  %2872 = vmatprep.subr.mxu0 0.0
  %2873 = vmatpush2.msra.mxu0 0.0
  %2874 = vmatprep.subr.mxu0 0.0
  %2875 = vmatpush2.msra.mxu0 0.0
  %2876 = vmatprep.subr.mxu0 0.0
  %2877 = vmatpush2.msra.mxu0 0.0
  %2878 = vmatprep.subr.mxu0 0.0
  %2879 = vmatpush2.msra.mxu0 0.0
  %2880 = vmatprep.subr.mxu0 0.0
  %2881 = vmatpush2.msra.mxu0 0.0
  %2882 = vmatprep.subr.mxu0 0.0
  %2883 = vmatpush2.msra.mxu0 0.0
  %2884 = vmatprep.subr.mxu0 0.0
  %2885 = vmatpush2.msra.mxu0 0.0
  %2886 = vmatprep.subr.mxu0 0.0
  %2887 = vmatpush2.msra.mxu0 0.0
  %2888 = vmatprep.subr.mxu0 0.0
  %2889 = vmatpush2.msra.mxu0 0.0
  %2890 = vmatprep.subr.mxu0 0.0
  %2891 = vmatpush2.msra.mxu0 0.0
  %2892 = vmatprep.subr.mxu0 0.0
  %2893 = vmatpush2.msra.mxu0 0.0
  %2894 = vmatprep.subr.mxu0 0.0
  %2895 = vmatpush2.msra.mxu0 0.0
  %2896 = vmatprep.subr.mxu0 0.0
  %2897 = vmatpush2.msra.mxu0 0.0
  %2898 = vmatprep.subr.mxu0 0.0
  %2899 = vmatpush2.msra.mxu0 0.0
  %2900 = vmatprep.subr.mxu0 0.0
  %2901 = vmatpush2.msra.mxu0 0.0
  %2902 = vmatprep.subr.mxu0 0.0
  %2903 = vmatpush2.msra.mxu0 0.0
  %2904 = vmatprep.mubr.f32.mxu0 0.0
  %2905 = vmatmul.mubr.f32.gmra.mxu0 %v2254
  %v2906 = vpop.f32.mrf.mxu0
  %v2907 = vadd.f32 0.0, %v2906
  %v2908 = vpop.f32.mrf.mxu0
  %2909 = vmatprep.mubr.f32.mxu0 0.0
  %2910 = vmatmul.mubr.f32.gmra.mxu0 %v2257
  %v2911 = vpop.f32.mrf.mxu0
  %v2912 = vadd.f32 0.0, %v2911
  %v2913 = vpop.f32.mrf.mxu0
  %2914 = vmatprep.mubr.f32.mxu0 0.0
  %2915 = vmatmul.mubr.f32.gmra.mxu0 %v2260
  %v2916 = vpop.f32.mrf.mxu0
  %v2917 = vadd.f32 0.0, %v2916
  %v2918 = vpop.f32.mrf.mxu0
  %2919 = vmatprep.mubr.f32.mxu0 0.0
  %2920 = vmatmul.mubr.f32.gmra.mxu0 %v2263
  %v2921 = vpop.f32.mrf.mxu0
  %v2922 = vadd.f32 0.0, %v2921
  %v2923 = vpop.f32.mrf.mxu0
  %2924 = vmatprep.mubr.f32.mxu0 0.0
  %2925 = vmatmul.mubr.f32.gmra.mxu0 %v2266
  %v2926 = vpop.f32.mrf.mxu0
  %v2927 = vadd.f32 0.0, %v2926
  %v2928 = vpop.f32.mrf.mxu0
  %2929 = vmatprep.mubr.f32.mxu0 0.0
  %2930 = vmatmul.mubr.f32.gmra.mxu0 %v2269
  %v2931 = vpop.f32.mrf.mxu0
  %v2932 = vadd.f32 0.0, %v2931
  %v2933 = vpop.f32.mrf.mxu0
  %2934 = vmatprep.mubr.f32.mxu0 0.0
  %2935 = vmatmul.mubr.f32.gmra.mxu0 %v2272
  %v2936 = vpop.f32.mrf.mxu0
  %v2937 = vadd.f32 0.0, %v2936
  %v2938 = vpop.f32.mrf.mxu0
  %2939 = vmatprep.mubr.f32.mxu0 0.0
  %2940 = vmatmul.mubr.f32.gmra.mxu0 %v2275
  %v2941 = vpop.f32.mrf.mxu0
  %v2942 = vadd.f32 0.0, %v2941
  %v2943 = vpop.f32.mrf.mxu0
  %2944 = vmatprep.mubr.f32.mxu0 0.0
  %2945 = vmatmul.mubr.f32.gmra.mxu0 %v2278
  %v2946 = vpop.f32.mrf.mxu0
  %v2947 = vadd.f32 0.0, %v2946
  %v2948 = vpop.f32.mrf.mxu0
  %2949 = vmatprep.mubr.f32.mxu0 0.0
  %2950 = vmatmul.mubr.f32.gmra.mxu0 %v2281
  %v2951 = vpop.f32.mrf.mxu0
  %v2952 = vadd.f32 0.0, %v2951
  %v2953 = vpop.f32.mrf.mxu0
  %2954 = vmatprep.mubr.f32.mxu0 0.0
  %2955 = vmatmul.mubr.f32.gmra.mxu0 %v2284
  %v2956 = vpop.f32.mrf.mxu0
  %v2957 = vadd.f32 0.0, %v2956
  %v2958 = vpop.f32.mrf.mxu0
  %2959 = vmatprep.mubr.f32.mxu0 0.0
  %2960 = vmatmul.mubr.f32.gmra.mxu0 %v2287
  %v2961 = vpop.f32.mrf.mxu0
  %v2962 = vadd.f32 0.0, %v2961
  %v2963 = vpop.f32.mrf.mxu0
  %2964 = vmatprep.mubr.f32.mxu0 0.0
  %2965 = vmatmul.mubr.f32.gmra.mxu0 %v2290
  %v2966 = vpop.f32.mrf.mxu0
  %v2967 = vadd.f32 0.0, %v2966
  %v2968 = vpop.f32.mrf.mxu0
  %2969 = vmatprep.mubr.f32.mxu0 0.0
  %2970 = vmatmul.mubr.f32.gmra.mxu0 %v2293
  %v2971 = vpop.f32.mrf.mxu0
  %v2972 = vadd.f32 0.0, %v2971
  %v2973 = vpop.f32.mrf.mxu0
  %2974 = vmatprep.mubr.f32.mxu0 0.0
  %2975 = vmatmul.mubr.f32.gmra.mxu0 %v2296
  %v2976 = vpop.f32.mrf.mxu0
  %v2977 = vadd.f32 0.0, %v2976
  %v2978 = vpop.f32.mrf.mxu0
  %2979 = vmatprep.mubr.f32.mxu0 0.0
  %2980 = vmatmul.mubr.f32.gmra.mxu0 %v2299
  %v2981 = vpop.f32.mrf.mxu0
  %v2982 = vadd.f32 0.0, %v2981
  %v2983 = vpop.f32.mrf.mxu0
  %2984 = vmatprep.mubr.f32.mxu0 0.0
  %2985 = vmatmul.mubr.f32.gmra.mxu0 %v2302
  %v2986 = vpop.f32.mrf.mxu0
  %v2987 = vadd.f32 0.0, %v2986
  %v2988 = vpop.f32.mrf.mxu0
  %2989 = vmatprep.mubr.f32.mxu0 0.0
  %2990 = vmatmul.mubr.f32.gmra.mxu0 %v2305
  %v2991 = vpop.f32.mrf.mxu0
  %v2992 = vadd.f32 0.0, %v2991
  %v2993 = vpop.f32.mrf.mxu0
  %2994 = vmatprep.mubr.f32.mxu0 0.0
  %2995 = vmatmul.mubr.f32.gmra.mxu0 %v2308
  %v2996 = vpop.f32.mrf.mxu0
  %v2997 = vadd.f32 0.0, %v2996
  %v2998 = vpop.f32.mrf.mxu0
  %2999 = vmatprep.mubr.f32.mxu0 0.0
  %3000 = vmatmul.mubr.f32.gmra.mxu0 %v2311
  %v3001 = vpop.f32.mrf.mxu0
  %v3002 = vadd.f32 0.0, %v3001
  %v3003 = vpop.f32.mrf.mxu0
  %3004 = vmatprep.mubr.f32.mxu0 0.0
  %3005 = vmatmul.mubr.f32.gmra.mxu0 %v2314
  %v3006 = vpop.f32.mrf.mxu0
  %v3007 = vadd.f32 0.0, %v3006
  %v3008 = vpop.f32.mrf.mxu0
  %3009 = vmatprep.mubr.f32.mxu0 0.0
  %3010 = vmatmul.mubr.f32.gmra.mxu0 %v2317
  %v3011 = vpop.f32.mrf.mxu0
  %v3012 = vadd.f32 0.0, %v3011
  %v3013 = vpop.f32.mrf.mxu0
  %3014 = vmatprep.mubr.f32.mxu0 0.0
  %3015 = vmatmul.mubr.f32.gmra.mxu0 %v2320
  %v3016 = vpop.f32.mrf.mxu0
  %v3017 = vadd.f32 0.0, %v3016
  %v3018 = vpop.f32.mrf.mxu0
  %3019 = vmatprep.mubr.f32.mxu0 0.0
  %3020 = vmatmul.mubr.f32.gmra.mxu0 %v2323
  %v3021 = vpop.f32.mrf.mxu0
  %v3022 = vadd.f32 0.0, %v3021
  %v3023 = vpop.f32.mrf.mxu0
  %3024 = vmatprep.mubr.f32.mxu0 0.0
  %3025 = vmatmul.mubr.f32.gmra.mxu0 %v2326
  %v3026 = vpop.f32.mrf.mxu0
  %v3027 = vadd.f32 0.0, %v3026
  %v3028 = vpop.f32.mrf.mxu0
  %3029 = vdwg.mxu0
  %v3030 = vadd.f32 %v3027, %v2520
  %v3031 = vld [vmem:[%s615] sm:$0x3f]
  %v3032 = vsub.f32 1.0, %v3031
  %v3034 = vrot.slane %v3030, 7
  %v3036 = vmul.f32 %v3032, %v3034
  %v3037 = vrot.slane %v3030, 5
  %v3039 = vmul.f32 %v3032, %v3037
  %v3040 = vlaneseq
  %v3041 = vshrl.u32 %v3040, 7
  %v3042 = vsub.s32 1, %v3041
  %v3043 = vrot.slane %v3036, %v3042
  %v3044 = vlaneseq
  %v3045 = vshrl.u32 %v3044, 7
  %v3046 = vsub.s32 4, %v3045
  %v3047 = vrot.slane %v3039, %v3046
  %v3048 = vld [vmem:[%s752] sm:$0xff]
  %v3049 = vld [vmem:[%s752 + $0x8] sm:$0xff]
  %v3050 = vld [vmem:[%s752 + $0x10] sm:$0xff]
  %v3051 = vld [vmem:[%s752 + $0x18] sm:$0xff]
  %v3052 = vld [vmem:[%s752 + $0x20] sm:$0xff]
  %v3053 = vld [vmem:[%s752 + $0x28] sm:$0xff]
  %v3054 = vld [vmem:[%s752 + $0x30] sm:$0xff]
  %v3055 = vld [vmem:[%s752 + $0x38] sm:$0xff]
  %v3056 = vmul.f32 %v209, %v3043
  %v3057 = vmul.f32 %v213, %v3043
  %v3058 = vmul.f32 %v217, %v3043
  %v3059 = vmul.f32 %v221, %v3043
  %v3060 = vmul.f32 %v225, %v3047
  %v3061 = vmul.f32 %v229, %v3047
  %v3062 = vmul.f32 %v233, %v3047
  %v3063 = vmul.f32 %v237, %v3047
  %v3064 = vadd.f32 %v3048, %v3056
  %v3065 = vadd.f32 %v3049, %v3057
  %v3066 = vadd.f32 %v3050, %v3058
  %v3067 = vadd.f32 %v3051, %v3059
  %v3068 = vadd.f32 %v3052, %v3060
  %v3069 = vadd.f32 %v3053, %v3061
  %v3070 = vadd.f32 %v3054, %v3062
  %v3071 = vadd.f32 %v3055, %v3063
  %v3072 = vadd.f32 %v3064, %v2907
  %v3073 = vadd.f32 %v3065, %v2912
  %v3074 = vadd.f32 %v3066, %v2917
  %v3075 = vadd.f32 %v3067, %v2922
  %v3076 = vadd.f32 %v3068, %v2927
  %v3077 = vadd.f32 %v3069, %v2932
  %v3078 = vadd.f32 %v3070, %v2937
  %v3079 = vadd.f32 %v3071, %v2942
  %v3080 = vxor.u32 %v3072, 2147483648
  %v3081 = vxor.u32 %v3073, 2147483648
  %v3082 = vxor.u32 %v3074, 2147483648
  %v3083 = vxor.u32 %v3075, 2147483648
  %v3084 = vxor.u32 %v3076, 2147483648
  %v3085 = vxor.u32 %v3077, 2147483648
  %v3086 = vxor.u32 %v3078, 2147483648
  %v3087 = vxor.u32 %v3079, 2147483648
  %v3088 = vmul.f32 %v3080, 1.442695
  %v3089 = vpow.pop %v3088
  %v3090 = vmul.f32 %v3081, 1.442695
  %v3091 = vpow.pop %v3090
  %v3092 = vmul.f32 %v3082, 1.442695
  %v3093 = vpow.pop %v3092
  %v3094 = vmul.f32 %v3083, 1.442695
  %v3095 = vpow.pop %v3094
  %v3096 = vmul.f32 %v3084, 1.442695
  %v3097 = vpow.pop %v3096
  %v3098 = vmul.f32 %v3085, 1.442695
  %v3099 = vpow.pop %v3098
  %v3100 = vmul.f32 %v3086, 1.442695
  %v3101 = vpow.pop %v3100
  %v3102 = vmul.f32 %v3087, 1.442695
  %v3103 = vpow.pop %v3102
  %v3104 = vadd.f32 %v3089, 1.0
  %v3105 = vadd.f32 %v3091, 1.0
  %v3106 = vadd.f32 %v3093, 1.0
  %v3107 = vadd.f32 %v3095, 1.0
  %v3108 = vadd.f32 %v3097, 1.0
  %v3109 = vadd.f32 %v3099, 1.0
  %v3110 = vadd.f32 %v3101, 1.0
  %v3111 = vadd.f32 %v3103, 1.0
  %v3112 = vrcp.pop %v3104
  %v3113 = vmul.f32 1.0, %v3112
  %v3114 = vrcp.pop %v3105
  %v3115 = vmul.f32 1.0, %v3114
  %v3116 = vrcp.pop %v3106
  %v3117 = vmul.f32 1.0, %v3116
  %v3118 = vrcp.pop %v3107
  %v3119 = vmul.f32 1.0, %v3118
  %v3120 = vrcp.pop %v3108
  %v3121 = vmul.f32 1.0, %v3120
  %v3122 = vrcp.pop %v3109
  %v3123 = vmul.f32 1.0, %v3122
  %v3124 = vrcp.pop %v3110
  %v3125 = vmul.f32 1.0, %v3124
  %v3126 = vrcp.pop %v3111
  %v3127 = vmul.f32 1.0, %v3126
  %v3128 = vld [vmem:[%s793] sm:$0xff]
  %v3129 = vld [vmem:[%s793 + $0x8] sm:$0xff]
  %v3130 = vld [vmem:[%s793 + $0x10] sm:$0xff]
  %v3131 = vld [vmem:[%s793 + $0x18] sm:$0xff]
  %v3132 = vld [vmem:[%s793 + $0x20] sm:$0xff]
  %v3133 = vld [vmem:[%s793 + $0x28] sm:$0xff]
  %v3134 = vld [vmem:[%s793 + $0x30] sm:$0xff]
  %v3135 = vld [vmem:[%s793 + $0x38] sm:$0xff]
  %v3136 = vmul.f32 %v345, %v3043
  %v3137 = vmul.f32 %v349, %v3043
  %v3138 = vmul.f32 %v353, %v3043
  %v3139 = vmul.f32 %v357, %v3043
  %v3140 = vmul.f32 %v361, %v3047
  %v3141 = vmul.f32 %v365, %v3047
  %v3142 = vmul.f32 %v369, %v3047
  %v3143 = vmul.f32 %v373, %v3047
  %v3144 = vadd.f32 %v3128, %v3136
  %v3145 = vadd.f32 %v3129, %v3137
  %v3146 = vadd.f32 %v3130, %v3138
  %v3147 = vadd.f32 %v3131, %v3139
  %v3148 = vadd.f32 %v3132, %v3140
  %v3149 = vadd.f32 %v3133, %v3141
  %v3150 = vadd.f32 %v3134, %v3142
  %v3151 = vadd.f32 %v3135, %v3143
  %v3152 = vadd.f32 %v3144, %v2947
  %v3153 = vadd.f32 %v3145, %v2952
  %v3154 = vadd.f32 %v3146, %v2957
  %v3155 = vadd.f32 %v3147, %v2962
  %v3156 = vadd.f32 %v3148, %v2967
  %v3157 = vadd.f32 %v3149, %v2972
  %v3158 = vadd.f32 %v3150, %v2977
  %v3159 = vadd.f32 %v3151, %v2982
  %v3160 = vxor.u32 %v3152, 2147483648
  %v3161 = vxor.u32 %v3153, 2147483648
  %v3162 = vxor.u32 %v3154, 2147483648
  %v3163 = vxor.u32 %v3155, 2147483648
  %v3164 = vxor.u32 %v3156, 2147483648
  %v3165 = vxor.u32 %v3157, 2147483648
  %v3166 = vxor.u32 %v3158, 2147483648
  %v3167 = vxor.u32 %v3159, 2147483648
  %v3168 = vmul.f32 %v3160, 1.442695
  %v3169 = vpow.pop %v3168
  %v3170 = vmul.f32 %v3161, 1.442695
  %v3171 = vpow.pop %v3170
  %v3172 = vmul.f32 %v3162, 1.442695
  %v3173 = vpow.pop %v3172
  %v3174 = vmul.f32 %v3163, 1.442695
  %v3175 = vpow.pop %v3174
  %v3176 = vmul.f32 %v3164, 1.442695
  %v3177 = vpow.pop %v3176
  %v3178 = vmul.f32 %v3165, 1.442695
  %v3179 = vpow.pop %v3178
  %v3180 = vmul.f32 %v3166, 1.442695
  %v3181 = vpow.pop %v3180
  %v3182 = vmul.f32 %v3167, 1.442695
  %v3183 = vpow.pop %v3182
  %v3184 = vadd.f32 %v3169, 1.0
  %v3185 = vadd.f32 %v3171, 1.0
  %v3186 = vadd.f32 %v3173, 1.0
  %v3187 = vadd.f32 %v3175, 1.0
  %v3188 = vadd.f32 %v3177, 1.0
  %v3189 = vadd.f32 %v3179, 1.0
  %v3190 = vadd.f32 %v3181, 1.0
  %v3191 = vadd.f32 %v3183, 1.0
  %v3192 = vrcp.pop %v3184
  %v3193 = vmul.f32 1.0, %v3192
  %v3194 = vrcp.pop %v3185
  %v3195 = vmul.f32 1.0, %v3194
  %v3196 = vrcp.pop %v3186
  %v3197 = vmul.f32 1.0, %v3196
  %v3198 = vrcp.pop %v3187
  %v3199 = vmul.f32 1.0, %v3198
  %v3200 = vrcp.pop %v3188
  %v3201 = vmul.f32 1.0, %v3200
  %v3202 = vrcp.pop %v3189
  %v3203 = vmul.f32 1.0, %v3202
  %v3204 = vrcp.pop %v3190
  %v3205 = vmul.f32 1.0, %v3204
  %v3206 = vrcp.pop %v3191
  %v3207 = vmul.f32 1.0, %v3206
  %v3208 = vld [vmem:[%s834] sm:$0xff]
  %v3209 = vld [vmem:[%s834 + $0x8] sm:$0xff]
  %v3210 = vld [vmem:[%s834 + $0x10] sm:$0xff]
  %v3211 = vld [vmem:[%s834 + $0x18] sm:$0xff]
  %v3212 = vld [vmem:[%s834 + $0x20] sm:$0xff]
  %v3213 = vld [vmem:[%s834 + $0x28] sm:$0xff]
  %v3214 = vld [vmem:[%s834 + $0x30] sm:$0xff]
  %v3215 = vld [vmem:[%s834 + $0x38] sm:$0xff]
  %v3216 = vmul.f32 %v481, %v3043
  %v3217 = vmul.f32 %v485, %v3043
  %v3218 = vmul.f32 %v489, %v3043
  %v3219 = vmul.f32 %v493, %v3043
  %v3220 = vmul.f32 %v497, %v3047
  %v3221 = vmul.f32 %v501, %v3047
  %v3222 = vmul.f32 %v505, %v3047
  %v3223 = vmul.f32 %v509, %v3047
  %v3224 = vadd.f32 %v3208, %v3216
  %v3225 = vadd.f32 %v3209, %v3217
  %v3226 = vadd.f32 %v3210, %v3218
  %v3227 = vadd.f32 %v3211, %v3219
  %v3228 = vadd.f32 %v3212, %v3220
  %v3229 = vadd.f32 %v3213, %v3221
  %v3230 = vadd.f32 %v3214, %v3222
  %v3231 = vadd.f32 %v3215, %v3223
  %v3232 = vadd.f32 %v2987, %v2726
  %v3233 = vadd.f32 %v2992, %v2730
  %v3234 = vadd.f32 %v2997, %v2734
  %v3235 = vadd.f32 %v3002, %v2738
  %v3236 = vadd.f32 %v3007, %v2742
  %v3237 = vadd.f32 %v3012, %v2746
  %v3238 = vadd.f32 %v3017, %v2750
  %v3239 = vadd.f32 %v3022, %v2754
  %v3240 = vmul.f32 %v3113, %v3232
  %v3241 = vmul.f32 %v3115, %v3233
  %v3242 = vmul.f32 %v3117, %v3234
  %v3243 = vmul.f32 %v3119, %v3235
  %v3244 = vmul.f32 %v3121, %v3236
  %v3245 = vmul.f32 %v3123, %v3237
  %v3246 = vmul.f32 %v3125, %v3238
  %v3247 = vmul.f32 %v3127, %v3239
  %v3248 = vadd.f32 %v3224, %v3240
  %v3249 = vadd.f32 %v3225, %v3241
  %v3250 = vadd.f32 %v3226, %v3242
  %v3251 = vadd.f32 %v3227, %v3243
  %v3252 = vadd.f32 %v3228, %v3244
  %v3253 = vadd.f32 %v3229, %v3245
  %v3254 = vadd.f32 %v3230, %v3246
  %v3255 = vadd.f32 %v3231, %v3247
  %v3256 = vtanh.pop %v3248
  %v3257 = vtanh.pop %v3249
  %v3258 = vtanh.pop %v3250
  %v3259 = vtanh.pop %v3251
  %v3260 = vtanh.pop %v3252
  %v3261 = vtanh.pop %v3253
  %v3262 = vtanh.pop %v3254
  %v3263 = vtanh.pop %v3255
  %v3264 = vsub.f32 1.0, %v3193
  %v3265 = vsub.f32 1.0, %v3195
  %v3266 = vsub.f32 1.0, %v3197
  %v3267 = vsub.f32 1.0, %v3199
  %v3268 = vsub.f32 1.0, %v3201
  %v3269 = vsub.f32 1.0, %v3203
  %v3270 = vsub.f32 1.0, %v3205
  %v3271 = vsub.f32 1.0, %v3207
  %v3272 = vmul.f32 %v3264, %v3256
  %v3273 = vmul.f32 %v3265, %v3257
  %v3274 = vmul.f32 %v3266, %v3258
  %v3275 = vmul.f32 %v3267, %v3259
  %v3276 = vmul.f32 %v3268, %v3260
  %v3277 = vmul.f32 %v3269, %v3261
  %v3278 = vmul.f32 %v3270, %v3262
  %v3279 = vmul.f32 %v3271, %v3263
  %v3280 = vmul.f32 %v3193, %v2832
  %v3281 = vmul.f32 %v3195, %v2833
  %v3282 = vmul.f32 %v3197, %v2834
  %v3283 = vmul.f32 %v3199, %v2835
  %v3284 = vmul.f32 %v3201, %v2836
  %v3285 = vmul.f32 %v3203, %v2837
  %v3286 = vmul.f32 %v3205, %v2838
  %v3287 = vmul.f32 %v3207, %v2839
  %v3288 = vadd.f32 %v3272, %v3280
  %v3289 = vadd.f32 %v3273, %v3281
  %v3290 = vadd.f32 %v3274, %v3282
  %v3291 = vadd.f32 %v3275, %v3283
  %v3292 = vadd.f32 %v3276, %v3284
  %v3293 = vadd.f32 %v3277, %v3285
  %v3294 = vadd.f32 %v3278, %v3286
  %v3295 = vadd.f32 %v3279, %v3287
  %3296 = vst.msk [vmem:[%s6 + $0x1] sm:$0x1] %vm2820, %v3030
  %3297 = vst.msk [vmem:[%s7] sm:$0x2] %vm2822, %v3030
  %v3298 = vld [vmem:[%s939] sm:$0xff]
  %v3299 = vld [vmem:[%s939 + $0x8] sm:$0xff]
  %v3300 = vld [vmem:[%s939 + $0x10] sm:$0xff]
  %v3301 = vld [vmem:[%s939 + $0x18] sm:$0xff]
  %v3302 = vld [vmem:[%s939 + $0x20] sm:$0xff]
  %v3303 = vld [vmem:[%s939 + $0x28] sm:$0xff]
  %v3304 = vld [vmem:[%s939 + $0x30] sm:$0xff]
  %v3305 = vld [vmem:[%s939 + $0x38] sm:$0xff]
  %v3306 = vmul.f32 %v3288, %v3298
  %v3307 = vmul.f32 %v3289, %v3299
  %v3308 = vmul.f32 %v3290, %v3300
  %v3309 = vmul.f32 %v3291, %v3301
  %v3310 = vmul.f32 %v3292, %v3302
  %v3311 = vmul.f32 %v3293, %v3303
  %v3312 = vmul.f32 %v3294, %v3304
  %v3313 = vmul.f32 %v3295, %v3305
  %3314 = vmatprep.subr.mxu0 0.0
  %3315 = vmatpush1.msra.mxu0 0.0
  %3316 = vmatprep.subr.mxu0 0.0
  %3317 = vmatpush1.msra.mxu0 0.0
  %3318 = vmatprep.subr.mxu0 0.0
  %3319 = vmatpush1.msra.mxu0 0.0
  %3320 = vmatprep.subr.mxu0 0.0
  %3321 = vmatpush1.msra.mxu0 0.0
  %3322 = vmatprep.subr.mxu0 0.0
  %3323 = vmatpush1.msra.mxu0 0.0
  %3324 = vmatprep.subr.mxu0 0.0
  %3325 = vmatpush1.msra.mxu0 0.0
  %3326 = vmatprep.subr.mxu0 0.0
  %3327 = vmatpush1.msra.mxu0 0.0
  %3328 = vmatprep.subr.mxu0 0.0
  %3329 = vmatpush1.msra.mxu0 0.0
  %3330 = vmatprep.subr.mxu0 0.0
  %3331 = vmatpush1.msra.mxu0 %v3313
  %3332 = vmatprep.subr.mxu0 0.0
  %3333 = vmatpush1.msra.mxu0 %v3312
  %3334 = vmatprep.subr.mxu0 0.0
  %3335 = vmatpush1.msra.mxu0 %v3311
  %3336 = vmatprep.subr.mxu0 0.0
  %3337 = vmatpush1.msra.mxu0 %v3310
  %3338 = vmatprep.subr.mxu0 0.0
  %3339 = vmatpush1.msra.mxu0 %v3309
  %3340 = vmatprep.subr.mxu0 0.0
  %3341 = vmatpush1.msra.mxu0 %v3308
  %3342 = vmatprep.subr.mxu0 0.0
  %3343 = vmatpush1.msra.mxu0 %v3307
  %3344 = vmatprep.subr.mxu0 0.0
  %3345 = vmatpush1.msra.mxu0 %v3306
  %3346 = vmatprep.subr.mxu0 0.0
  %3347 = vmatpush2.msra.mxu0 0.0
  %3348 = vmatprep.subr.mxu0 0.0
  %3349 = vmatpush2.msra.mxu0 0.0
  %3350 = vmatprep.subr.mxu0 0.0
  %3351 = vmatpush2.msra.mxu0 0.0
  %3352 = vmatprep.subr.mxu0 0.0
  %3353 = vmatpush2.msra.mxu0 0.0
  %3354 = vmatprep.subr.mxu0 0.0
  %3355 = vmatpush2.msra.mxu0 0.0
  %3356 = vmatprep.subr.mxu0 0.0
  %3357 = vmatpush2.msra.mxu0 0.0
  %3358 = vmatprep.subr.mxu0 0.0
  %3359 = vmatpush2.msra.mxu0 0.0
  %3360 = vmatprep.subr.mxu0 0.0
  %3361 = vmatpush2.msra.mxu0 0.0
  %3362 = vmatprep.subr.mxu0 0.0
  %3363 = vmatpush2.msra.mxu0 0.0
  %3364 = vmatprep.subr.mxu0 0.0
  %3365 = vmatpush2.msra.mxu0 0.0
  %3366 = vmatprep.subr.mxu0 0.0
  %3367 = vmatpush2.msra.mxu0 0.0
  %3368 = vmatprep.subr.mxu0 0.0
  %3369 = vmatpush2.msra.mxu0 0.0
  %3370 = vmatprep.subr.mxu0 0.0
  %3371 = vmatpush2.msra.mxu0 0.0
  %3372 = vmatprep.subr.mxu0 0.0
  %3373 = vmatpush2.msra.mxu0 0.0
  %3374 = vmatprep.subr.mxu0 0.0
  %3375 = vmatpush2.msra.mxu0 0.0
  %3376 = vmatprep.subr.mxu0 0.0
  %3377 = vmatpush2.msra.mxu0 0.0
  %3378 = vmatprep.mubr.f32.mxu0 0.0
  %3379 = vmatmul.mubr.f32.gmra.mxu0 %v2254
  %v3380 = vpop.f32.mrf.mxu0
  %v3381 = vadd.f32 0.0, %v3380
  %v3382 = vpop.f32.mrf.mxu0
  %3383 = vmatprep.mubr.f32.mxu0 0.0
  %3384 = vmatmul.mubr.f32.gmra.mxu0 %v2257
  %v3385 = vpop.f32.mrf.mxu0
  %v3386 = vadd.f32 0.0, %v3385
  %v3387 = vpop.f32.mrf.mxu0
  %3388 = vmatprep.mubr.f32.mxu0 0.0
  %3389 = vmatmul.mubr.f32.gmra.mxu0 %v2260
  %v3390 = vpop.f32.mrf.mxu0
  %v3391 = vadd.f32 0.0, %v3390
  %v3392 = vpop.f32.mrf.mxu0
  %3393 = vmatprep.mubr.f32.mxu0 0.0
  %3394 = vmatmul.mubr.f32.gmra.mxu0 %v2263
  %v3395 = vpop.f32.mrf.mxu0
  %v3396 = vadd.f32 0.0, %v3395
  %v3397 = vpop.f32.mrf.mxu0
  %3398 = vmatprep.mubr.f32.mxu0 0.0
  %3399 = vmatmul.mubr.f32.gmra.mxu0 %v2266
  %v3400 = vpop.f32.mrf.mxu0
  %v3401 = vadd.f32 0.0, %v3400
  %v3402 = vpop.f32.mrf.mxu0
  %3403 = vmatprep.mubr.f32.mxu0 0.0
  %3404 = vmatmul.mubr.f32.gmra.mxu0 %v2269
  %v3405 = vpop.f32.mrf.mxu0
  %v3406 = vadd.f32 0.0, %v3405
  %v3407 = vpop.f32.mrf.mxu0
  %3408 = vmatprep.mubr.f32.mxu0 0.0
  %3409 = vmatmul.mubr.f32.gmra.mxu0 %v2272
  %v3410 = vpop.f32.mrf.mxu0
  %v3411 = vadd.f32 0.0, %v3410
  %v3412 = vpop.f32.mrf.mxu0
  %3413 = vmatprep.mubr.f32.mxu0 0.0
  %3414 = vmatmul.mubr.f32.gmra.mxu0 %v2275
  %v3415 = vpop.f32.mrf.mxu0
  %v3416 = vadd.f32 0.0, %v3415
  %v3417 = vpop.f32.mrf.mxu0
  %3418 = vmatprep.mubr.f32.mxu0 0.0
  %3419 = vmatmul.mubr.f32.gmra.mxu0 %v2278
  %v3420 = vpop.f32.mrf.mxu0
  %v3421 = vadd.f32 0.0, %v3420
  %v3422 = vpop.f32.mrf.mxu0
  %3423 = vmatprep.mubr.f32.mxu0 0.0
  %3424 = vmatmul.mubr.f32.gmra.mxu0 %v2281
  %v3425 = vpop.f32.mrf.mxu0
  %v3426 = vadd.f32 0.0, %v3425
  %v3427 = vpop.f32.mrf.mxu0
  %3428 = vmatprep.mubr.f32.mxu0 0.0
  %3429 = vmatmul.mubr.f32.gmra.mxu0 %v2284
  %v3430 = vpop.f32.mrf.mxu0
  %v3431 = vadd.f32 0.0, %v3430
  %v3432 = vpop.f32.mrf.mxu0
  %3433 = vmatprep.mubr.f32.mxu0 0.0
  %3434 = vmatmul.mubr.f32.gmra.mxu0 %v2287
  %v3435 = vpop.f32.mrf.mxu0
  %v3436 = vadd.f32 0.0, %v3435
  %v3437 = vpop.f32.mrf.mxu0
  %3438 = vmatprep.mubr.f32.mxu0 0.0
  %3439 = vmatmul.mubr.f32.gmra.mxu0 %v2290
  %v3440 = vpop.f32.mrf.mxu0
  %v3441 = vadd.f32 0.0, %v3440
  %v3442 = vpop.f32.mrf.mxu0
  %3443 = vmatprep.mubr.f32.mxu0 0.0
  %3444 = vmatmul.mubr.f32.gmra.mxu0 %v2293
  %v3445 = vpop.f32.mrf.mxu0
  %v3446 = vadd.f32 0.0, %v3445
  %v3447 = vpop.f32.mrf.mxu0
  %3448 = vmatprep.mubr.f32.mxu0 0.0
  %3449 = vmatmul.mubr.f32.gmra.mxu0 %v2296
  %v3450 = vpop.f32.mrf.mxu0
  %v3451 = vadd.f32 0.0, %v3450
  %v3452 = vpop.f32.mrf.mxu0
  %3453 = vmatprep.mubr.f32.mxu0 0.0
  %3454 = vmatmul.mubr.f32.gmra.mxu0 %v2299
  %v3455 = vpop.f32.mrf.mxu0
  %v3456 = vadd.f32 0.0, %v3455
  %v3457 = vpop.f32.mrf.mxu0
  %3458 = vmatprep.mubr.f32.mxu0 0.0
  %3459 = vmatmul.mubr.f32.gmra.mxu0 %v2302
  %v3460 = vpop.f32.mrf.mxu0
  %v3461 = vadd.f32 0.0, %v3460
  %v3462 = vpop.f32.mrf.mxu0
  %3463 = vmatprep.mubr.f32.mxu0 0.0
  %3464 = vmatmul.mubr.f32.gmra.mxu0 %v2305
  %v3465 = vpop.f32.mrf.mxu0
  %v3466 = vadd.f32 0.0, %v3465
  %v3467 = vpop.f32.mrf.mxu0
  %3468 = vmatprep.mubr.f32.mxu0 0.0
  %3469 = vmatmul.mubr.f32.gmra.mxu0 %v2308
  %v3470 = vpop.f32.mrf.mxu0
  %v3471 = vadd.f32 0.0, %v3470
  %v3472 = vpop.f32.mrf.mxu0
  %3473 = vmatprep.mubr.f32.mxu0 0.0
  %3474 = vmatmul.mubr.f32.gmra.mxu0 %v2311
  %v3475 = vpop.f32.mrf.mxu0
  %v3476 = vadd.f32 0.0, %v3475
  %v3477 = vpop.f32.mrf.mxu0
  %3478 = vmatprep.mubr.f32.mxu0 0.0
  %3479 = vmatmul.mubr.f32.gmra.mxu0 %v2314
  %v3480 = vpop.f32.mrf.mxu0
  %v3481 = vadd.f32 0.0, %v3480
  %v3482 = vpop.f32.mrf.mxu0
  %3483 = vmatprep.mubr.f32.mxu0 0.0
  %3484 = vmatmul.mubr.f32.gmra.mxu0 %v2317
  %v3485 = vpop.f32.mrf.mxu0
  %v3486 = vadd.f32 0.0, %v3485
  %v3487 = vpop.f32.mrf.mxu0
  %3488 = vmatprep.mubr.f32.mxu0 0.0
  %3489 = vmatmul.mubr.f32.gmra.mxu0 %v2320
  %v3490 = vpop.f32.mrf.mxu0
  %v3491 = vadd.f32 0.0, %v3490
  %v3492 = vpop.f32.mrf.mxu0
  %3493 = vmatprep.mubr.f32.mxu0 0.0
  %3494 = vmatmul.mubr.f32.gmra.mxu0 %v2323
  %v3495 = vpop.f32.mrf.mxu0
  %v3496 = vadd.f32 0.0, %v3495
  %v3497 = vpop.f32.mrf.mxu0
  %3498 = vmatprep.mubr.f32.mxu0 0.0
  %3499 = vmatmul.mubr.f32.gmra.mxu0 %v2326
  %v3500 = vpop.f32.mrf.mxu0
  %v3501 = vadd.f32 0.0, %v3500
  %v3502 = vpop.f32.mrf.mxu0
  %3503 = vdwg.mxu0
  %v3504 = vadd.f32 %v3501, %v2520
  %v3505 = vld [vmem:[%s843] sm:$0x3f]
  %v3506 = vsub.f32 1.0, %v3505
  %v3508 = vrot.slane %v3504, 7
  %v3510 = vmul.f32 %v3506, %v3508
  %v3511 = vrot.slane %v3504, 5
  %v3513 = vmul.f32 %v3506, %v3511
  %v3514 = vlaneseq
  %v3515 = vshrl.u32 %v3514, 7
  %v3516 = vsub.s32 1, %v3515
  %v3517 = vrot.slane %v3510, %v3516
  %v3518 = vlaneseq
  %v3519 = vshrl.u32 %v3518, 7
  %v3520 = vsub.s32 4, %v3519
  %v3521 = vrot.slane %v3513, %v3520
  %v3522 = vld [vmem:[%s980] sm:$0xff]
  %v3523 = vld [vmem:[%s980 + $0x8] sm:$0xff]
  %v3524 = vld [vmem:[%s980 + $0x10] sm:$0xff]
  %v3525 = vld [vmem:[%s980 + $0x18] sm:$0xff]
  %v3526 = vld [vmem:[%s980 + $0x20] sm:$0xff]
  %v3527 = vld [vmem:[%s980 + $0x28] sm:$0xff]
  %v3528 = vld [vmem:[%s980 + $0x30] sm:$0xff]
  %v3529 = vld [vmem:[%s980 + $0x38] sm:$0xff]
  %v3530 = vmul.f32 %v209, %v3517
  %v3531 = vmul.f32 %v213, %v3517
  %v3532 = vmul.f32 %v217, %v3517
  %v3533 = vmul.f32 %v221, %v3517
  %v3534 = vmul.f32 %v225, %v3521
  %v3535 = vmul.f32 %v229, %v3521
  %v3536 = vmul.f32 %v233, %v3521
  %v3537 = vmul.f32 %v237, %v3521
  %v3538 = vadd.f32 %v3522, %v3530
  %v3539 = vadd.f32 %v3523, %v3531
  %v3540 = vadd.f32 %v3524, %v3532
  %v3541 = vadd.f32 %v3525, %v3533
  %v3542 = vadd.f32 %v3526, %v3534
  %v3543 = vadd.f32 %v3527, %v3535
  %v3544 = vadd.f32 %v3528, %v3536
  %v3545 = vadd.f32 %v3529, %v3537
  %v3546 = vadd.f32 %v3538, %v3381
  %v3547 = vadd.f32 %v3539, %v3386
  %v3548 = vadd.f32 %v3540, %v3391
  %v3549 = vadd.f32 %v3541, %v3396
  %v3550 = vadd.f32 %v3542, %v3401
  %v3551 = vadd.f32 %v3543, %v3406
  %v3552 = vadd.f32 %v3544, %v3411
  %v3553 = vadd.f32 %v3545, %v3416
  %v3554 = vxor.u32 %v3546, 2147483648
  %v3555 = vxor.u32 %v3547, 2147483648
  %v3556 = vxor.u32 %v3548, 2147483648
  %v3557 = vxor.u32 %v3549, 2147483648
  %v3558 = vxor.u32 %v3550, 2147483648
  %v3559 = vxor.u32 %v3551, 2147483648
  %v3560 = vxor.u32 %v3552, 2147483648
  %v3561 = vxor.u32 %v3553, 2147483648
  %v3562 = vmul.f32 %v3554, 1.442695
  %v3563 = vpow.pop %v3562
  %v3564 = vmul.f32 %v3555, 1.442695
  %v3565 = vpow.pop %v3564
  %v3566 = vmul.f32 %v3556, 1.442695
  %v3567 = vpow.pop %v3566
  %v3568 = vmul.f32 %v3557, 1.442695
  %v3569 = vpow.pop %v3568
  %v3570 = vmul.f32 %v3558, 1.442695
  %v3571 = vpow.pop %v3570
  %v3572 = vmul.f32 %v3559, 1.442695
  %v3573 = vpow.pop %v3572
  %v3574 = vmul.f32 %v3560, 1.442695
  %v3575 = vpow.pop %v3574
  %v3576 = vmul.f32 %v3561, 1.442695
  %v3577 = vpow.pop %v3576
  %v3578 = vadd.f32 %v3563, 1.0
  %v3579 = vadd.f32 %v3565, 1.0
  %v3580 = vadd.f32 %v3567, 1.0
  %v3581 = vadd.f32 %v3569, 1.0
  %v3582 = vadd.f32 %v3571, 1.0
  %v3583 = vadd.f32 %v3573, 1.0
  %v3584 = vadd.f32 %v3575, 1.0
  %v3585 = vadd.f32 %v3577, 1.0
  %v3586 = vrcp.pop %v3578
  %v3587 = vmul.f32 1.0, %v3586
  %v3588 = vrcp.pop %v3579
  %v3589 = vmul.f32 1.0, %v3588
  %v3590 = vrcp.pop %v3580
  %v3591 = vmul.f32 1.0, %v3590
  %v3592 = vrcp.pop %v3581
  %v3593 = vmul.f32 1.0, %v3592
  %v3594 = vrcp.pop %v3582
  %v3595 = vmul.f32 1.0, %v3594
  %v3596 = vrcp.pop %v3583
  %v3597 = vmul.f32 1.0, %v3596
  %v3598 = vrcp.pop %v3584
  %v3599 = vmul.f32 1.0, %v3598
  %v3600 = vrcp.pop %v3585
  %v3601 = vmul.f32 1.0, %v3600
  %v3602 = vld [vmem:[%s1021] sm:$0xff]
  %v3603 = vld [vmem:[%s1021 + $0x8] sm:$0xff]
  %v3604 = vld [vmem:[%s1021 + $0x10] sm:$0xff]
  %v3605 = vld [vmem:[%s1021 + $0x18] sm:$0xff]
  %v3606 = vld [vmem:[%s1021 + $0x20] sm:$0xff]
  %v3607 = vld [vmem:[%s1021 + $0x28] sm:$0xff]
  %v3608 = vld [vmem:[%s1021 + $0x30] sm:$0xff]
  %v3609 = vld [vmem:[%s1021 + $0x38] sm:$0xff]
  %v3610 = vmul.f32 %v345, %v3517
  %v3611 = vmul.f32 %v349, %v3517
  %v3612 = vmul.f32 %v353, %v3517
  %v3613 = vmul.f32 %v357, %v3517
  %v3614 = vmul.f32 %v361, %v3521
  %v3615 = vmul.f32 %v365, %v3521
  %v3616 = vmul.f32 %v369, %v3521
  %v3617 = vmul.f32 %v373, %v3521
  %v3618 = vadd.f32 %v3602, %v3610
  %v3619 = vadd.f32 %v3603, %v3611
  %v3620 = vadd.f32 %v3604, %v3612
  %v3621 = vadd.f32 %v3605, %v3613
  %v3622 = vadd.f32 %v3606, %v3614
  %v3623 = vadd.f32 %v3607, %v3615
  %v3624 = vadd.f32 %v3608, %v3616
  %v3625 = vadd.f32 %v3609, %v3617
  %v3626 = vadd.f32 %v3618, %v3421
  %v3627 = vadd.f32 %v3619, %v3426
  %v3628 = vadd.f32 %v3620, %v3431
  %v3629 = vadd.f32 %v3621, %v3436
  %v3630 = vadd.f32 %v3622, %v3441
  %v3631 = vadd.f32 %v3623, %v3446
  %v3632 = vadd.f32 %v3624, %v3451
  %v3633 = vadd.f32 %v3625, %v3456
  %v3634 = vxor.u32 %v3626, 2147483648
  %v3635 = vxor.u32 %v3627, 2147483648
  %v3636 = vxor.u32 %v3628, 2147483648
  %v3637 = vxor.u32 %v3629, 2147483648
  %v3638 = vxor.u32 %v3630, 2147483648
  %v3639 = vxor.u32 %v3631, 2147483648
  %v3640 = vxor.u32 %v3632, 2147483648
  %v3641 = vxor.u32 %v3633, 2147483648
  %v3642 = vmul.f32 %v3634, 1.442695
  %v3643 = vpow.pop %v3642
  %v3644 = vmul.f32 %v3635, 1.442695
  %v3645 = vpow.pop %v3644
  %v3646 = vmul.f32 %v3636, 1.442695
  %v3647 = vpow.pop %v3646
  %v3648 = vmul.f32 %v3637, 1.442695
  %v3649 = vpow.pop %v3648
  %v3650 = vmul.f32 %v3638, 1.442695
  %v3651 = vpow.pop %v3650
  %v3652 = vmul.f32 %v3639, 1.442695
  %v3653 = vpow.pop %v3652
  %v3654 = vmul.f32 %v3640, 1.442695
  %v3655 = vpow.pop %v3654
  %v3656 = vmul.f32 %v3641, 1.442695
  %v3657 = vpow.pop %v3656
  %v3658 = vadd.f32 %v3643, 1.0
  %v3659 = vadd.f32 %v3645, 1.0
  %v3660 = vadd.f32 %v3647, 1.0
  %v3661 = vadd.f32 %v3649, 1.0
  %v3662 = vadd.f32 %v3651, 1.0
  %v3663 = vadd.f32 %v3653, 1.0
  %v3664 = vadd.f32 %v3655, 1.0
  %v3665 = vadd.f32 %v3657, 1.0
  %v3666 = vrcp.pop %v3658
  %v3667 = vmul.f32 1.0, %v3666
  %v3668 = vrcp.pop %v3659
  %v3669 = vmul.f32 1.0, %v3668
  %v3670 = vrcp.pop %v3660
  %v3671 = vmul.f32 1.0, %v3670
  %v3672 = vrcp.pop %v3661
  %v3673 = vmul.f32 1.0, %v3672
  %v3674 = vrcp.pop %v3662
  %v3675 = vmul.f32 1.0, %v3674
  %v3676 = vrcp.pop %v3663
  %v3677 = vmul.f32 1.0, %v3676
  %v3678 = vrcp.pop %v3664
  %v3679 = vmul.f32 1.0, %v3678
  %v3680 = vrcp.pop %v3665
  %v3681 = vmul.f32 1.0, %v3680
  %v3682 = vld [vmem:[%s1062] sm:$0xff]
  %v3683 = vld [vmem:[%s1062 + $0x8] sm:$0xff]
  %v3684 = vld [vmem:[%s1062 + $0x10] sm:$0xff]
  %v3685 = vld [vmem:[%s1062 + $0x18] sm:$0xff]
  %v3686 = vld [vmem:[%s1062 + $0x20] sm:$0xff]
  %v3687 = vld [vmem:[%s1062 + $0x28] sm:$0xff]
  %v3688 = vld [vmem:[%s1062 + $0x30] sm:$0xff]
  %v3689 = vld [vmem:[%s1062 + $0x38] sm:$0xff]
  %v3690 = vmul.f32 %v481, %v3517
  %v3691 = vmul.f32 %v485, %v3517
  %v3692 = vmul.f32 %v489, %v3517
  %v3693 = vmul.f32 %v493, %v3517
  %v3694 = vmul.f32 %v497, %v3521
  %v3695 = vmul.f32 %v501, %v3521
  %v3696 = vmul.f32 %v505, %v3521
  %v3697 = vmul.f32 %v509, %v3521
  %v3698 = vadd.f32 %v3682, %v3690
  %v3699 = vadd.f32 %v3683, %v3691
  %v3700 = vadd.f32 %v3684, %v3692
  %v3701 = vadd.f32 %v3685, %v3693
  %v3702 = vadd.f32 %v3686, %v3694
  %v3703 = vadd.f32 %v3687, %v3695
  %v3704 = vadd.f32 %v3688, %v3696
  %v3705 = vadd.f32 %v3689, %v3697
  %v3706 = vadd.f32 %v3461, %v2726
  %v3707 = vadd.f32 %v3466, %v2730
  %v3708 = vadd.f32 %v3471, %v2734
  %v3709 = vadd.f32 %v3476, %v2738
  %v3710 = vadd.f32 %v3481, %v2742
  %v3711 = vadd.f32 %v3486, %v2746
  %v3712 = vadd.f32 %v3491, %v2750
  %v3713 = vadd.f32 %v3496, %v2754
  %v3714 = vmul.f32 %v3587, %v3706
  %v3715 = vmul.f32 %v3589, %v3707
  %v3716 = vmul.f32 %v3591, %v3708
  %v3717 = vmul.f32 %v3593, %v3709
  %v3718 = vmul.f32 %v3595, %v3710
  %v3719 = vmul.f32 %v3597, %v3711
  %v3720 = vmul.f32 %v3599, %v3712
  %v3721 = vmul.f32 %v3601, %v3713
  %v3722 = vadd.f32 %v3698, %v3714
  %v3723 = vadd.f32 %v3699, %v3715
  %v3724 = vadd.f32 %v3700, %v3716
  %v3725 = vadd.f32 %v3701, %v3717
  %v3726 = vadd.f32 %v3702, %v3718
  %v3727 = vadd.f32 %v3703, %v3719
  %v3728 = vadd.f32 %v3704, %v3720
  %v3729 = vadd.f32 %v3705, %v3721
  %v3730 = vtanh.pop %v3722
  %v3731 = vtanh.pop %v3723
  %v3732 = vtanh.pop %v3724
  %v3733 = vtanh.pop %v3725
  %v3734 = vtanh.pop %v3726
  %v3735 = vtanh.pop %v3727
  %v3736 = vtanh.pop %v3728
  %v3737 = vtanh.pop %v3729
  %v3738 = vsub.f32 1.0, %v3667
  %v3739 = vsub.f32 1.0, %v3669
  %v3740 = vsub.f32 1.0, %v3671
  %v3741 = vsub.f32 1.0, %v3673
  %v3742 = vsub.f32 1.0, %v3675
  %v3743 = vsub.f32 1.0, %v3677
  %v3744 = vsub.f32 1.0, %v3679
  %v3745 = vsub.f32 1.0, %v3681
  %v3746 = vmul.f32 %v3738, %v3730
  %v3747 = vmul.f32 %v3739, %v3731
  %v3748 = vmul.f32 %v3740, %v3732
  %v3749 = vmul.f32 %v3741, %v3733
  %v3750 = vmul.f32 %v3742, %v3734
  %v3751 = vmul.f32 %v3743, %v3735
  %v3752 = vmul.f32 %v3744, %v3736
  %v3753 = vmul.f32 %v3745, %v3737
  %v3754 = vmul.f32 %v3667, %v3306
  %v3755 = vmul.f32 %v3669, %v3307
  %v3756 = vmul.f32 %v3671, %v3308
  %v3757 = vmul.f32 %v3673, %v3309
  %v3758 = vmul.f32 %v3675, %v3310
  %v3759 = vmul.f32 %v3677, %v3311
  %v3760 = vmul.f32 %v3679, %v3312
  %v3761 = vmul.f32 %v3681, %v3313
  %v3762 = vadd.f32 %v3746, %v3754
  %v3763 = vadd.f32 %v3747, %v3755
  %v3764 = vadd.f32 %v3748, %v3756
  %v3765 = vadd.f32 %v3749, %v3757
  %v3766 = vadd.f32 %v3750, %v3758
  %v3767 = vadd.f32 %v3751, %v3759
  %v3768 = vadd.f32 %v3752, %v3760
  %v3769 = vadd.f32 %v3753, %v3761
  %3770 = vst.msk [vmem:[%s6 + $0x2] sm:$0x1] %vm2820, %v3504
  %3771 = vst.msk [vmem:[%s7 + $0x1] sm:$0x2] %vm2822, %v3504
  %v3772 = vld [vmem:[%s1167] sm:$0xff]
  %v3773 = vld [vmem:[%s1167 + $0x8] sm:$0xff]
  %v3774 = vld [vmem:[%s1167 + $0x10] sm:$0xff]
  %v3775 = vld [vmem:[%s1167 + $0x18] sm:$0xff]
  %v3776 = vld [vmem:[%s1167 + $0x20] sm:$0xff]
  %v3777 = vld [vmem:[%s1167 + $0x28] sm:$0xff]
  %v3778 = vld [vmem:[%s1167 + $0x30] sm:$0xff]
  %v3779 = vld [vmem:[%s1167 + $0x38] sm:$0xff]
  %v3780 = vmul.f32 %v3762, %v3772
  %v3781 = vmul.f32 %v3763, %v3773
  %v3782 = vmul.f32 %v3764, %v3774
  %v3783 = vmul.f32 %v3765, %v3775
  %v3784 = vmul.f32 %v3766, %v3776
  %v3785 = vmul.f32 %v3767, %v3777
  %v3786 = vmul.f32 %v3768, %v3778
  %v3787 = vmul.f32 %v3769, %v3779
  %3788 = vmatprep.subr.mxu0 0.0
  %3789 = vmatpush1.msra.mxu0 0.0
  %3790 = vmatprep.subr.mxu0 0.0
  %3791 = vmatpush1.msra.mxu0 0.0
  %3792 = vmatprep.subr.mxu0 0.0
  %3793 = vmatpush1.msra.mxu0 0.0
  %3794 = vmatprep.subr.mxu0 0.0
  %3795 = vmatpush1.msra.mxu0 0.0
  %3796 = vmatprep.subr.mxu0 0.0
  %3797 = vmatpush1.msra.mxu0 0.0
  %3798 = vmatprep.subr.mxu0 0.0
  %3799 = vmatpush1.msra.mxu0 0.0
  %3800 = vmatprep.subr.mxu0 0.0
  %3801 = vmatpush1.msra.mxu0 0.0
  %3802 = vmatprep.subr.mxu0 0.0
  %3803 = vmatpush1.msra.mxu0 0.0
  %3804 = vmatprep.subr.mxu0 0.0
  %3805 = vmatpush1.msra.mxu0 %v3787
  %3806 = vmatprep.subr.mxu0 0.0
  %3807 = vmatpush1.msra.mxu0 %v3786
  %3808 = vmatprep.subr.mxu0 0.0
  %3809 = vmatpush1.msra.mxu0 %v3785
  %3810 = vmatprep.subr.mxu0 0.0
  %3811 = vmatpush1.msra.mxu0 %v3784
  %3812 = vmatprep.subr.mxu0 0.0
  %3813 = vmatpush1.msra.mxu0 %v3783
  %3814 = vmatprep.subr.mxu0 0.0
  %3815 = vmatpush1.msra.mxu0 %v3782
  %3816 = vmatprep.subr.mxu0 0.0
  %3817 = vmatpush1.msra.mxu0 %v3781
  %3818 = vmatprep.subr.mxu0 0.0
  %3819 = vmatpush1.msra.mxu0 %v3780
  %3820 = vmatprep.subr.mxu0 0.0
  %3821 = vmatpush2.msra.mxu0 0.0
  %3822 = vmatprep.subr.mxu0 0.0
  %3823 = vmatpush2.msra.mxu0 0.0
  %3824 = vmatprep.subr.mxu0 0.0
  %3825 = vmatpush2.msra.mxu0 0.0
  %3826 = vmatprep.subr.mxu0 0.0
  %3827 = vmatpush2.msra.mxu0 0.0
  %3828 = vmatprep.subr.mxu0 0.0
  %3829 = vmatpush2.msra.mxu0 0.0
  %3830 = vmatprep.subr.mxu0 0.0
  %3831 = vmatpush2.msra.mxu0 0.0
  %3832 = vmatprep.subr.mxu0 0.0
  %3833 = vmatpush2.msra.mxu0 0.0
  %3834 = vmatprep.subr.mxu0 0.0
  %3835 = vmatpush2.msra.mxu0 0.0
  %3836 = vmatprep.subr.mxu0 0.0
  %3837 = vmatpush2.msra.mxu0 0.0
  %3838 = vmatprep.subr.mxu0 0.0
  %3839 = vmatpush2.msra.mxu0 0.0
  %3840 = vmatprep.subr.mxu0 0.0
  %3841 = vmatpush2.msra.mxu0 0.0
  %3842 = vmatprep.subr.mxu0 0.0
  %3843 = vmatpush2.msra.mxu0 0.0
  %3844 = vmatprep.subr.mxu0 0.0
  %3845 = vmatpush2.msra.mxu0 0.0
  %3846 = vmatprep.subr.mxu0 0.0
  %3847 = vmatpush2.msra.mxu0 0.0
  %3848 = vmatprep.subr.mxu0 0.0
  %3849 = vmatpush2.msra.mxu0 0.0
  %3850 = vmatprep.subr.mxu0 0.0
  %3851 = vmatpush2.msra.mxu0 0.0
  %3852 = vmatprep.mubr.f32.mxu0 0.0
  %3853 = vmatmul.mubr.f32.gmra.mxu0 %v2254
  %v3854 = vpop.f32.mrf.mxu0
  %v3855 = vadd.f32 0.0, %v3854
  %v3856 = vpop.f32.mrf.mxu0
  %3857 = vmatprep.mubr.f32.mxu0 0.0
  %3858 = vmatmul.mubr.f32.gmra.mxu0 %v2257
  %v3859 = vpop.f32.mrf.mxu0
  %v3860 = vadd.f32 0.0, %v3859
  %v3861 = vpop.f32.mrf.mxu0
  %3862 = vmatprep.mubr.f32.mxu0 0.0
  %3863 = vmatmul.mubr.f32.gmra.mxu0 %v2260
  %v3864 = vpop.f32.mrf.mxu0
  %v3865 = vadd.f32 0.0, %v3864
  %v3866 = vpop.f32.mrf.mxu0
  %3867 = vmatprep.mubr.f32.mxu0 0.0
  %3868 = vmatmul.mubr.f32.gmra.mxu0 %v2263
  %v3869 = vpop.f32.mrf.mxu0
  %v3870 = vadd.f32 0.0, %v3869
  %v3871 = vpop.f32.mrf.mxu0
  %3872 = vmatprep.mubr.f32.mxu0 0.0
  %3873 = vmatmul.mubr.f32.gmra.mxu0 %v2266
  %v3874 = vpop.f32.mrf.mxu0
  %v3875 = vadd.f32 0.0, %v3874
  %v3876 = vpop.f32.mrf.mxu0
  %3877 = vmatprep.mubr.f32.mxu0 0.0
  %3878 = vmatmul.mubr.f32.gmra.mxu0 %v2269
  %v3879 = vpop.f32.mrf.mxu0
  %v3880 = vadd.f32 0.0, %v3879
  %v3881 = vpop.f32.mrf.mxu0
  %3882 = vmatprep.mubr.f32.mxu0 0.0
  %3883 = vmatmul.mubr.f32.gmra.mxu0 %v2272
  %v3884 = vpop.f32.mrf.mxu0
  %v3885 = vadd.f32 0.0, %v3884
  %v3886 = vpop.f32.mrf.mxu0
  %3887 = vmatprep.mubr.f32.mxu0 0.0
  %3888 = vmatmul.mubr.f32.gmra.mxu0 %v2275
  %v3889 = vpop.f32.mrf.mxu0
  %v3890 = vadd.f32 0.0, %v3889
  %v3891 = vpop.f32.mrf.mxu0
  %3892 = vmatprep.mubr.f32.mxu0 0.0
  %3893 = vmatmul.mubr.f32.gmra.mxu0 %v2278
  %v3894 = vpop.f32.mrf.mxu0
  %v3895 = vadd.f32 0.0, %v3894
  %v3896 = vpop.f32.mrf.mxu0
  %3897 = vmatprep.mubr.f32.mxu0 0.0
  %3898 = vmatmul.mubr.f32.gmra.mxu0 %v2281
  %v3899 = vpop.f32.mrf.mxu0
  %v3900 = vadd.f32 0.0, %v3899
  %v3901 = vpop.f32.mrf.mxu0
  %3902 = vmatprep.mubr.f32.mxu0 0.0
  %3903 = vmatmul.mubr.f32.gmra.mxu0 %v2284
  %v3904 = vpop.f32.mrf.mxu0
  %v3905 = vadd.f32 0.0, %v3904
  %v3906 = vpop.f32.mrf.mxu0
  %3907 = vmatprep.mubr.f32.mxu0 0.0
  %3908 = vmatmul.mubr.f32.gmra.mxu0 %v2287
  %v3909 = vpop.f32.mrf.mxu0
  %v3910 = vadd.f32 0.0, %v3909
  %v3911 = vpop.f32.mrf.mxu0
  %3912 = vmatprep.mubr.f32.mxu0 0.0
  %3913 = vmatmul.mubr.f32.gmra.mxu0 %v2290
  %v3914 = vpop.f32.mrf.mxu0
  %v3915 = vadd.f32 0.0, %v3914
  %v3916 = vpop.f32.mrf.mxu0
  %3917 = vmatprep.mubr.f32.mxu0 0.0
  %3918 = vmatmul.mubr.f32.gmra.mxu0 %v2293
  %v3919 = vpop.f32.mrf.mxu0
  %v3920 = vadd.f32 0.0, %v3919
  %v3921 = vpop.f32.mrf.mxu0
  %3922 = vmatprep.mubr.f32.mxu0 0.0
  %3923 = vmatmul.mubr.f32.gmra.mxu0 %v2296
  %v3924 = vpop.f32.mrf.mxu0
  %v3925 = vadd.f32 0.0, %v3924
  %v3926 = vpop.f32.mrf.mxu0
  %3927 = vmatprep.mubr.f32.mxu0 0.0
  %3928 = vmatmul.mubr.f32.gmra.mxu0 %v2299
  %v3929 = vpop.f32.mrf.mxu0
  %v3930 = vadd.f32 0.0, %v3929
  %v3931 = vpop.f32.mrf.mxu0
  %3932 = vmatprep.mubr.f32.mxu0 0.0
  %3933 = vmatmul.mubr.f32.gmra.mxu0 %v2302
  %v3934 = vpop.f32.mrf.mxu0
  %v3935 = vadd.f32 0.0, %v3934
  %v3936 = vpop.f32.mrf.mxu0
  %3937 = vmatprep.mubr.f32.mxu0 0.0
  %3938 = vmatmul.mubr.f32.gmra.mxu0 %v2305
  %v3939 = vpop.f32.mrf.mxu0
  %v3940 = vadd.f32 0.0, %v3939
  %v3941 = vpop.f32.mrf.mxu0
  %3942 = vmatprep.mubr.f32.mxu0 0.0
  %3943 = vmatmul.mubr.f32.gmra.mxu0 %v2308
  %v3944 = vpop.f32.mrf.mxu0
  %v3945 = vadd.f32 0.0, %v3944
  %v3946 = vpop.f32.mrf.mxu0
  %3947 = vmatprep.mubr.f32.mxu0 0.0
  %3948 = vmatmul.mubr.f32.gmra.mxu0 %v2311
  %v3949 = vpop.f32.mrf.mxu0
  %v3950 = vadd.f32 0.0, %v3949
  %v3951 = vpop.f32.mrf.mxu0
  %3952 = vmatprep.mubr.f32.mxu0 0.0
  %3953 = vmatmul.mubr.f32.gmra.mxu0 %v2314
  %v3954 = vpop.f32.mrf.mxu0
  %v3955 = vadd.f32 0.0, %v3954
  %v3956 = vpop.f32.mrf.mxu0
  %3957 = vmatprep.mubr.f32.mxu0 0.0
  %3958 = vmatmul.mubr.f32.gmra.mxu0 %v2317
  %v3959 = vpop.f32.mrf.mxu0
  %v3960 = vadd.f32 0.0, %v3959
  %v3961 = vpop.f32.mrf.mxu0
  %3962 = vmatprep.mubr.f32.mxu0 0.0
  %3963 = vmatmul.mubr.f32.gmra.mxu0 %v2320
  %v3964 = vpop.f32.mrf.mxu0
  %v3965 = vadd.f32 0.0, %v3964
  %v3966 = vpop.f32.mrf.mxu0
  %3967 = vmatprep.mubr.f32.mxu0 0.0
  %3968 = vmatmul.mubr.f32.gmra.mxu0 %v2323
  %v3969 = vpop.f32.mrf.mxu0
  %v3970 = vadd.f32 0.0, %v3969
  %v3971 = vpop.f32.mrf.mxu0
  %3972 = vmatprep.mubr.f32.mxu0 0.0
  %3973 = vmatmul.mubr.f32.gmra.mxu0 %v2326
  %v3974 = vpop.f32.mrf.mxu0
  %v3975 = vadd.f32 0.0, %v3974
  %v3976 = vpop.f32.mrf.mxu0
  %3977 = vdwg.mxu0
  %v3978 = vadd.f32 %v3975, %v2520
  %v3979 = vld [vmem:[%s1071] sm:$0x3f]
  %v3980 = vsub.f32 1.0, %v3979
  %v3982 = vrot.slane %v3978, 7
  %v3984 = vmul.f32 %v3980, %v3982
  %v3985 = vrot.slane %v3978, 5
  %v3987 = vmul.f32 %v3980, %v3985
  %v3988 = vlaneseq
  %v3989 = vshrl.u32 %v3988, 7
  %v3990 = vsub.s32 1, %v3989
  %v3991 = vrot.slane %v3984, %v3990
  %v3992 = vlaneseq
  %v3993 = vshrl.u32 %v3992, 7
  %v3994 = vsub.s32 4, %v3993
  %v3995 = vrot.slane %v3987, %v3994
  %v3996 = vld [vmem:[%s1208] sm:$0xff]
  %v3997 = vld [vmem:[%s1208 + $0x8] sm:$0xff]
  %v3998 = vld [vmem:[%s1208 + $0x10] sm:$0xff]
  %v3999 = vld [vmem:[%s1208 + $0x18] sm:$0xff]
  %v4000 = vld [vmem:[%s1208 + $0x20] sm:$0xff]
  %v4001 = vld [vmem:[%s1208 + $0x28] sm:$0xff]
  %v4002 = vld [vmem:[%s1208 + $0x30] sm:$0xff]
  %v4003 = vld [vmem:[%s1208 + $0x38] sm:$0xff]
  %v4004 = vmul.f32 %v209, %v3991
  %v4005 = vmul.f32 %v213, %v3991
  %v4006 = vmul.f32 %v217, %v3991
  %v4007 = vmul.f32 %v221, %v3991
  %v4008 = vmul.f32 %v225, %v3995
  %v4009 = vmul.f32 %v229, %v3995
  %v4010 = vmul.f32 %v233, %v3995
  %v4011 = vmul.f32 %v237, %v3995
  %v4012 = vadd.f32 %v3996, %v4004
  %v4013 = vadd.f32 %v3997, %v4005
  %v4014 = vadd.f32 %v3998, %v4006
  %v4015 = vadd.f32 %v3999, %v4007
  %v4016 = vadd.f32 %v4000, %v4008
  %v4017 = vadd.f32 %v4001, %v4009
  %v4018 = vadd.f32 %v4002, %v4010
  %v4019 = vadd.f32 %v4003, %v4011
  %v4020 = vadd.f32 %v4012, %v3855
  %v4021 = vadd.f32 %v4013, %v3860
  %v4022 = vadd.f32 %v4014, %v3865
  %v4023 = vadd.f32 %v4015, %v3870
  %v4024 = vadd.f32 %v4016, %v3875
  %v4025 = vadd.f32 %v4017, %v3880
  %v4026 = vadd.f32 %v4018, %v3885
  %v4027 = vadd.f32 %v4019, %v3890
  %v4028 = vxor.u32 %v4020, 2147483648
  %v4029 = vxor.u32 %v4021, 2147483648
  %v4030 = vxor.u32 %v4022, 2147483648
  %v4031 = vxor.u32 %v4023, 2147483648
  %v4032 = vxor.u32 %v4024, 2147483648
  %v4033 = vxor.u32 %v4025, 2147483648
  %v4034 = vxor.u32 %v4026, 2147483648
  %v4035 = vxor.u32 %v4027, 2147483648
  %v4036 = vmul.f32 %v4028, 1.442695
  %v4037 = vpow.pop %v4036
  %v4038 = vmul.f32 %v4029, 1.442695
  %v4039 = vpow.pop %v4038
  %v4040 = vmul.f32 %v4030, 1.442695
  %v4041 = vpow.pop %v4040
  %v4042 = vmul.f32 %v4031, 1.442695
  %v4043 = vpow.pop %v4042
  %v4044 = vmul.f32 %v4032, 1.442695
  %v4045 = vpow.pop %v4044
  %v4046 = vmul.f32 %v4033, 1.442695
  %v4047 = vpow.pop %v4046
  %v4048 = vmul.f32 %v4034, 1.442695
  %v4049 = vpow.pop %v4048
  %v4050 = vmul.f32 %v4035, 1.442695
  %v4051 = vpow.pop %v4050
  %v4052 = vadd.f32 %v4037, 1.0
  %v4053 = vadd.f32 %v4039, 1.0
  %v4054 = vadd.f32 %v4041, 1.0
  %v4055 = vadd.f32 %v4043, 1.0
  %v4056 = vadd.f32 %v4045, 1.0
  %v4057 = vadd.f32 %v4047, 1.0
  %v4058 = vadd.f32 %v4049, 1.0
  %v4059 = vadd.f32 %v4051, 1.0
  %v4060 = vrcp.pop %v4052
  %v4061 = vmul.f32 1.0, %v4060
  %v4062 = vrcp.pop %v4053
  %v4063 = vmul.f32 1.0, %v4062
  %v4064 = vrcp.pop %v4054
  %v4065 = vmul.f32 1.0, %v4064
  %v4066 = vrcp.pop %v4055
  %v4067 = vmul.f32 1.0, %v4066
  %v4068 = vrcp.pop %v4056
  %v4069 = vmul.f32 1.0, %v4068
  %v4070 = vrcp.pop %v4057
  %v4071 = vmul.f32 1.0, %v4070
  %v4072 = vrcp.pop %v4058
  %v4073 = vmul.f32 1.0, %v4072
  %v4074 = vrcp.pop %v4059
  %v4075 = vmul.f32 1.0, %v4074
  %v4076 = vld [vmem:[%s1249] sm:$0xff]
  %v4077 = vld [vmem:[%s1249 + $0x8] sm:$0xff]
  %v4078 = vld [vmem:[%s1249 + $0x10] sm:$0xff]
  %v4079 = vld [vmem:[%s1249 + $0x18] sm:$0xff]
  %v4080 = vld [vmem:[%s1249 + $0x20] sm:$0xff]
  %v4081 = vld [vmem:[%s1249 + $0x28] sm:$0xff]
  %v4082 = vld [vmem:[%s1249 + $0x30] sm:$0xff]
  %v4083 = vld [vmem:[%s1249 + $0x38] sm:$0xff]
  %v4084 = vmul.f32 %v345, %v3991
  %v4085 = vmul.f32 %v349, %v3991
  %v4086 = vmul.f32 %v353, %v3991
  %v4087 = vmul.f32 %v357, %v3991
  %v4088 = vmul.f32 %v361, %v3995
  %v4089 = vmul.f32 %v365, %v3995
  %v4090 = vmul.f32 %v369, %v3995
  %v4091 = vmul.f32 %v373, %v3995
  %v4092 = vadd.f32 %v4076, %v4084
  %v4093 = vadd.f32 %v4077, %v4085
  %v4094 = vadd.f32 %v4078, %v4086
  %v4095 = vadd.f32 %v4079, %v4087
  %v4096 = vadd.f32 %v4080, %v4088
  %v4097 = vadd.f32 %v4081, %v4089
  %v4098 = vadd.f32 %v4082, %v4090
  %v4099 = vadd.f32 %v4083, %v4091
  %v4100 = vadd.f32 %v4092, %v3895
  %v4101 = vadd.f32 %v4093, %v3900
  %v4102 = vadd.f32 %v4094, %v3905
  %v4103 = vadd.f32 %v4095, %v3910
  %v4104 = vadd.f32 %v4096, %v3915
  %v4105 = vadd.f32 %v4097, %v3920
  %v4106 = vadd.f32 %v4098, %v3925
  %v4107 = vadd.f32 %v4099, %v3930
  %v4108 = vxor.u32 %v4100, 2147483648
  %v4109 = vxor.u32 %v4101, 2147483648
  %v4110 = vxor.u32 %v4102, 2147483648
  %v4111 = vxor.u32 %v4103, 2147483648
  %v4112 = vxor.u32 %v4104, 2147483648
  %v4113 = vxor.u32 %v4105, 2147483648
  %v4114 = vxor.u32 %v4106, 2147483648
  %v4115 = vxor.u32 %v4107, 2147483648
  %v4116 = vmul.f32 %v4108, 1.442695
  %v4117 = vpow.pop %v4116
  %v4118 = vmul.f32 %v4109, 1.442695
  %v4119 = vpow.pop %v4118
  %v4120 = vmul.f32 %v4110, 1.442695
  %v4121 = vpow.pop %v4120
  %v4122 = vmul.f32 %v4111, 1.442695
  %v4123 = vpow.pop %v4122
  %v4124 = vmul.f32 %v4112, 1.442695
  %v4125 = vpow.pop %v4124
  %v4126 = vmul.f32 %v4113, 1.442695
  %v4127 = vpow.pop %v4126
  %v4128 = vmul.f32 %v4114, 1.442695
  %v4129 = vpow.pop %v4128
  %v4130 = vmul.f32 %v4115, 1.442695
  %v4131 = vpow.pop %v4130
  %v4132 = vadd.f32 %v4117, 1.0
  %v4133 = vadd.f32 %v4119, 1.0
  %v4134 = vadd.f32 %v4121, 1.0
  %v4135 = vadd.f32 %v4123, 1.0
  %v4136 = vadd.f32 %v4125, 1.0
  %v4137 = vadd.f32 %v4127, 1.0
  %v4138 = vadd.f32 %v4129, 1.0
  %v4139 = vadd.f32 %v4131, 1.0
  %v4140 = vrcp.pop %v4132
  %v4141 = vmul.f32 1.0, %v4140
  %v4142 = vrcp.pop %v4133
  %v4143 = vmul.f32 1.0, %v4142
  %v4144 = vrcp.pop %v4134
  %v4145 = vmul.f32 1.0, %v4144
  %v4146 = vrcp.pop %v4135
  %v4147 = vmul.f32 1.0, %v4146
  %v4148 = vrcp.pop %v4136
  %v4149 = vmul.f32 1.0, %v4148
  %v4150 = vrcp.pop %v4137
  %v4151 = vmul.f32 1.0, %v4150
  %v4152 = vrcp.pop %v4138
  %v4153 = vmul.f32 1.0, %v4152
  %v4154 = vrcp.pop %v4139
  %v4155 = vmul.f32 1.0, %v4154
  %v4156 = vld [vmem:[%s1290] sm:$0xff]
  %v4157 = vld [vmem:[%s1290 + $0x8] sm:$0xff]
  %v4158 = vld [vmem:[%s1290 + $0x10] sm:$0xff]
  %v4159 = vld [vmem:[%s1290 + $0x18] sm:$0xff]
  %v4160 = vld [vmem:[%s1290 + $0x20] sm:$0xff]
  %v4161 = vld [vmem:[%s1290 + $0x28] sm:$0xff]
  %v4162 = vld [vmem:[%s1290 + $0x30] sm:$0xff]
  %v4163 = vld [vmem:[%s1290 + $0x38] sm:$0xff]
  %v4164 = vmul.f32 %v481, %v3991
  %v4165 = vmul.f32 %v485, %v3991
  %v4166 = vmul.f32 %v489, %v3991
  %v4167 = vmul.f32 %v493, %v3991
  %v4168 = vmul.f32 %v497, %v3995
  %v4169 = vmul.f32 %v501, %v3995
  %v4170 = vmul.f32 %v505, %v3995
  %v4171 = vmul.f32 %v509, %v3995
  %v4172 = vadd.f32 %v4156, %v4164
  %v4173 = vadd.f32 %v4157, %v4165
  %v4174 = vadd.f32 %v4158, %v4166
  %v4175 = vadd.f32 %v4159, %v4167
  %v4176 = vadd.f32 %v4160, %v4168
  %v4177 = vadd.f32 %v4161, %v4169
  %v4178 = vadd.f32 %v4162, %v4170
  %v4179 = vadd.f32 %v4163, %v4171
  %v4180 = vadd.f32 %v3935, %v2726
  %v4181 = vadd.f32 %v3940, %v2730
  %v4182 = vadd.f32 %v3945, %v2734
  %v4183 = vadd.f32 %v3950, %v2738
  %v4184 = vadd.f32 %v3955, %v2742
  %v4185 = vadd.f32 %v3960, %v2746
  %v4186 = vadd.f32 %v3965, %v2750
  %v4187 = vadd.f32 %v3970, %v2754
  %v4188 = vmul.f32 %v4061, %v4180
  %v4189 = vmul.f32 %v4063, %v4181
  %v4190 = vmul.f32 %v4065, %v4182
  %v4191 = vmul.f32 %v4067, %v4183
  %v4192 = vmul.f32 %v4069, %v4184
  %v4193 = vmul.f32 %v4071, %v4185
  %v4194 = vmul.f32 %v4073, %v4186
  %v4195 = vmul.f32 %v4075, %v4187
  %v4196 = vadd.f32 %v4172, %v4188
  %v4197 = vadd.f32 %v4173, %v4189
  %v4198 = vadd.f32 %v4174, %v4190
  %v4199 = vadd.f32 %v4175, %v4191
  %v4200 = vadd.f32 %v4176, %v4192
  %v4201 = vadd.f32 %v4177, %v4193
  %v4202 = vadd.f32 %v4178, %v4194
  %v4203 = vadd.f32 %v4179, %v4195
  %v4204 = vtanh.pop %v4196
  %v4205 = vtanh.pop %v4197
  %v4206 = vtanh.pop %v4198
  %v4207 = vtanh.pop %v4199
  %v4208 = vtanh.pop %v4200
  %v4209 = vtanh.pop %v4201
  %v4210 = vtanh.pop %v4202
  %v4211 = vtanh.pop %v4203
  %v4212 = vsub.f32 1.0, %v4141
  %v4213 = vsub.f32 1.0, %v4143
  %v4214 = vsub.f32 1.0, %v4145
  %v4215 = vsub.f32 1.0, %v4147
  %v4216 = vsub.f32 1.0, %v4149
  %v4217 = vsub.f32 1.0, %v4151
  %v4218 = vsub.f32 1.0, %v4153
  %v4219 = vsub.f32 1.0, %v4155
  %v4220 = vmul.f32 %v4212, %v4204
  %v4221 = vmul.f32 %v4213, %v4205
  %v4222 = vmul.f32 %v4214, %v4206
  %v4223 = vmul.f32 %v4215, %v4207
  %v4224 = vmul.f32 %v4216, %v4208
  %v4225 = vmul.f32 %v4217, %v4209
  %v4226 = vmul.f32 %v4218, %v4210
  %v4227 = vmul.f32 %v4219, %v4211
  %v4228 = vmul.f32 %v4141, %v3780
  %v4229 = vmul.f32 %v4143, %v3781
  %v4230 = vmul.f32 %v4145, %v3782
  %v4231 = vmul.f32 %v4147, %v3783
  %v4232 = vmul.f32 %v4149, %v3784
  %v4233 = vmul.f32 %v4151, %v3785
  %v4234 = vmul.f32 %v4153, %v3786
  %v4235 = vmul.f32 %v4155, %v3787
  %v4236 = vadd.f32 %v4220, %v4228
  %v4237 = vadd.f32 %v4221, %v4229
  %v4238 = vadd.f32 %v4222, %v4230
  %v4239 = vadd.f32 %v4223, %v4231
  %v4240 = vadd.f32 %v4224, %v4232
  %v4241 = vadd.f32 %v4225, %v4233
  %v4242 = vadd.f32 %v4226, %v4234
  %v4243 = vadd.f32 %v4227, %v4235
  %4244 = vst.msk [vmem:[%s6 + $0x3] sm:$0x1] %vm2820, %v3978
  %4245 = vst.msk [vmem:[%s7 + $0x2] sm:$0x2] %vm2822, %v3978
  %v4246 = vld [vmem:[%s1395] sm:$0xff]
  %v4247 = vld [vmem:[%s1395 + $0x8] sm:$0xff]
  %v4248 = vld [vmem:[%s1395 + $0x10] sm:$0xff]
  %v4249 = vld [vmem:[%s1395 + $0x18] sm:$0xff]
  %v4250 = vld [vmem:[%s1395 + $0x20] sm:$0xff]
  %v4251 = vld [vmem:[%s1395 + $0x28] sm:$0xff]
  %v4252 = vld [vmem:[%s1395 + $0x30] sm:$0xff]
  %v4253 = vld [vmem:[%s1395 + $0x38] sm:$0xff]
  %v4254 = vmul.f32 %v4236, %v4246
  %v4255 = vmul.f32 %v4237, %v4247
  %v4256 = vmul.f32 %v4238, %v4248
  %v4257 = vmul.f32 %v4239, %v4249
  %v4258 = vmul.f32 %v4240, %v4250
  %v4259 = vmul.f32 %v4241, %v4251
  %v4260 = vmul.f32 %v4242, %v4252
  %v4261 = vmul.f32 %v4243, %v4253
  %4262 = vmatprep.subr.mxu0 0.0
  %4263 = vmatpush1.msra.mxu0 0.0
  %4264 = vmatprep.subr.mxu0 0.0
  %4265 = vmatpush1.msra.mxu0 0.0
  %4266 = vmatprep.subr.mxu0 0.0
  %4267 = vmatpush1.msra.mxu0 0.0
  %4268 = vmatprep.subr.mxu0 0.0
  %4269 = vmatpush1.msra.mxu0 0.0
  %4270 = vmatprep.subr.mxu0 0.0
  %4271 = vmatpush1.msra.mxu0 0.0
  %4272 = vmatprep.subr.mxu0 0.0
  %4273 = vmatpush1.msra.mxu0 0.0
  %4274 = vmatprep.subr.mxu0 0.0
  %4275 = vmatpush1.msra.mxu0 0.0
  %4276 = vmatprep.subr.mxu0 0.0
  %4277 = vmatpush1.msra.mxu0 0.0
  %4278 = vmatprep.subr.mxu0 0.0
  %4279 = vmatpush1.msra.mxu0 %v4261
  %4280 = vmatprep.subr.mxu0 0.0
  %4281 = vmatpush1.msra.mxu0 %v4260
  %4282 = vmatprep.subr.mxu0 0.0
  %4283 = vmatpush1.msra.mxu0 %v4259
  %4284 = vmatprep.subr.mxu0 0.0
  %4285 = vmatpush1.msra.mxu0 %v4258
  %4286 = vmatprep.subr.mxu0 0.0
  %4287 = vmatpush1.msra.mxu0 %v4257
  %4288 = vmatprep.subr.mxu0 0.0
  %4289 = vmatpush1.msra.mxu0 %v4256
  %4290 = vmatprep.subr.mxu0 0.0
  %4291 = vmatpush1.msra.mxu0 %v4255
  %4292 = vmatprep.subr.mxu0 0.0
  %4293 = vmatpush1.msra.mxu0 %v4254
  %4294 = vmatprep.subr.mxu0 0.0
  %4295 = vmatpush2.msra.mxu0 0.0
  %4296 = vmatprep.subr.mxu0 0.0
  %4297 = vmatpush2.msra.mxu0 0.0
  %4298 = vmatprep.subr.mxu0 0.0
  %4299 = vmatpush2.msra.mxu0 0.0
  %4300 = vmatprep.subr.mxu0 0.0
  %4301 = vmatpush2.msra.mxu0 0.0
  %4302 = vmatprep.subr.mxu0 0.0
  %4303 = vmatpush2.msra.mxu0 0.0
  %4304 = vmatprep.subr.mxu0 0.0
  %4305 = vmatpush2.msra.mxu0 0.0
  %4306 = vmatprep.subr.mxu0 0.0
  %4307 = vmatpush2.msra.mxu0 0.0
  %4308 = vmatprep.subr.mxu0 0.0
  %4309 = vmatpush2.msra.mxu0 0.0
  %4310 = vmatprep.subr.mxu0 0.0
  %4311 = vmatpush2.msra.mxu0 0.0
  %4312 = vmatprep.subr.mxu0 0.0
  %4313 = vmatpush2.msra.mxu0 0.0
  %4314 = vmatprep.subr.mxu0 0.0
  %4315 = vmatpush2.msra.mxu0 0.0
  %4316 = vmatprep.subr.mxu0 0.0
  %4317 = vmatpush2.msra.mxu0 0.0
  %4318 = vmatprep.subr.mxu0 0.0
  %4319 = vmatpush2.msra.mxu0 0.0
  %4320 = vmatprep.subr.mxu0 0.0
  %4321 = vmatpush2.msra.mxu0 0.0
  %4322 = vmatprep.subr.mxu0 0.0
  %4323 = vmatpush2.msra.mxu0 0.0
  %4324 = vmatprep.subr.mxu0 0.0
  %4325 = vmatpush2.msra.mxu0 0.0
  %4326 = vmatprep.mubr.f32.mxu0 0.0
  %4327 = vmatmul.mubr.f32.gmra.mxu0 %v2254
  %v4328 = vpop.f32.mrf.mxu0
  %v4329 = vadd.f32 0.0, %v4328
  %v4330 = vpop.f32.mrf.mxu0
  %4331 = vmatprep.mubr.f32.mxu0 0.0
  %4332 = vmatmul.mubr.f32.gmra.mxu0 %v2257
  %v4333 = vpop.f32.mrf.mxu0
  %v4334 = vadd.f32 0.0, %v4333
  %v4335 = vpop.f32.mrf.mxu0
  %4336 = vmatprep.mubr.f32.mxu0 0.0
  %4337 = vmatmul.mubr.f32.gmra.mxu0 %v2260
  %v4338 = vpop.f32.mrf.mxu0
  %v4339 = vadd.f32 0.0, %v4338
  %v4340 = vpop.f32.mrf.mxu0
  %4341 = vmatprep.mubr.f32.mxu0 0.0
  %4342 = vmatmul.mubr.f32.gmra.mxu0 %v2263
  %v4343 = vpop.f32.mrf.mxu0
  %v4344 = vadd.f32 0.0, %v4343
  %v4345 = vpop.f32.mrf.mxu0
  %4346 = vmatprep.mubr.f32.mxu0 0.0
  %4347 = vmatmul.mubr.f32.gmra.mxu0 %v2266
  %v4348 = vpop.f32.mrf.mxu0
  %v4349 = vadd.f32 0.0, %v4348
  %v4350 = vpop.f32.mrf.mxu0
  %4351 = vmatprep.mubr.f32.mxu0 0.0
  %4352 = vmatmul.mubr.f32.gmra.mxu0 %v2269
  %v4353 = vpop.f32.mrf.mxu0
  %v4354 = vadd.f32 0.0, %v4353
  %v4355 = vpop.f32.mrf.mxu0
  %4356 = vmatprep.mubr.f32.mxu0 0.0
  %4357 = vmatmul.mubr.f32.gmra.mxu0 %v2272
  %v4358 = vpop.f32.mrf.mxu0
  %v4359 = vadd.f32 0.0, %v4358
  %v4360 = vpop.f32.mrf.mxu0
  %4361 = vmatprep.mubr.f32.mxu0 0.0
  %4362 = vmatmul.mubr.f32.gmra.mxu0 %v2275
  %v4363 = vpop.f32.mrf.mxu0
  %v4364 = vadd.f32 0.0, %v4363
  %v4365 = vpop.f32.mrf.mxu0
  %4366 = vmatprep.mubr.f32.mxu0 0.0
  %4367 = vmatmul.mubr.f32.gmra.mxu0 %v2278
  %v4368 = vpop.f32.mrf.mxu0
  %v4369 = vadd.f32 0.0, %v4368
  %v4370 = vpop.f32.mrf.mxu0
  %4371 = vmatprep.mubr.f32.mxu0 0.0
  %4372 = vmatmul.mubr.f32.gmra.mxu0 %v2281
  %v4373 = vpop.f32.mrf.mxu0
  %v4374 = vadd.f32 0.0, %v4373
  %v4375 = vpop.f32.mrf.mxu0
  %4376 = vmatprep.mubr.f32.mxu0 0.0
  %4377 = vmatmul.mubr.f32.gmra.mxu0 %v2284
  %v4378 = vpop.f32.mrf.mxu0
  %v4379 = vadd.f32 0.0, %v4378
  %v4380 = vpop.f32.mrf.mxu0
  %4381 = vmatprep.mubr.f32.mxu0 0.0
  %4382 = vmatmul.mubr.f32.gmra.mxu0 %v2287
  %v4383 = vpop.f32.mrf.mxu0
  %v4384 = vadd.f32 0.0, %v4383
  %v4385 = vpop.f32.mrf.mxu0
  %4386 = vmatprep.mubr.f32.mxu0 0.0
  %4387 = vmatmul.mubr.f32.gmra.mxu0 %v2290
  %v4388 = vpop.f32.mrf.mxu0
  %v4389 = vadd.f32 0.0, %v4388
  %v4390 = vpop.f32.mrf.mxu0
  %4391 = vmatprep.mubr.f32.mxu0 0.0
  %4392 = vmatmul.mubr.f32.gmra.mxu0 %v2293
  %v4393 = vpop.f32.mrf.mxu0
  %v4394 = vadd.f32 0.0, %v4393
  %v4395 = vpop.f32.mrf.mxu0
  %4396 = vmatprep.mubr.f32.mxu0 0.0
  %4397 = vmatmul.mubr.f32.gmra.mxu0 %v2296
  %v4398 = vpop.f32.mrf.mxu0
  %v4399 = vadd.f32 0.0, %v4398
  %v4400 = vpop.f32.mrf.mxu0
  %4401 = vmatprep.mubr.f32.mxu0 0.0
  %4402 = vmatmul.mubr.f32.gmra.mxu0 %v2299
  %v4403 = vpop.f32.mrf.mxu0
  %v4404 = vadd.f32 0.0, %v4403
  %v4405 = vpop.f32.mrf.mxu0
  %4406 = vmatprep.mubr.f32.mxu0 0.0
  %4407 = vmatmul.mubr.f32.gmra.mxu0 %v2302
  %v4408 = vpop.f32.mrf.mxu0
  %v4409 = vadd.f32 0.0, %v4408
  %v4410 = vpop.f32.mrf.mxu0
  %4411 = vmatprep.mubr.f32.mxu0 0.0
  %4412 = vmatmul.mubr.f32.gmra.mxu0 %v2305
  %v4413 = vpop.f32.mrf.mxu0
  %v4414 = vadd.f32 0.0, %v4413
  %v4415 = vpop.f32.mrf.mxu0
  %4416 = vmatprep.mubr.f32.mxu0 0.0
  %4417 = vmatmul.mubr.f32.gmra.mxu0 %v2308
  %v4418 = vpop.f32.mrf.mxu0
  %v4419 = vadd.f32 0.0, %v4418
  %v4420 = vpop.f32.mrf.mxu0
  %4421 = vmatprep.mubr.f32.mxu0 0.0
  %4422 = vmatmul.mubr.f32.gmra.mxu0 %v2311
  %v4423 = vpop.f32.mrf.mxu0
  %v4424 = vadd.f32 0.0, %v4423
  %v4425 = vpop.f32.mrf.mxu0
  %4426 = vmatprep.mubr.f32.mxu0 0.0
  %4427 = vmatmul.mubr.f32.gmra.mxu0 %v2314
  %v4428 = vpop.f32.mrf.mxu0
  %v4429 = vadd.f32 0.0, %v4428
  %v4430 = vpop.f32.mrf.mxu0
  %4431 = vmatprep.mubr.f32.mxu0 0.0
  %4432 = vmatmul.mubr.f32.gmra.mxu0 %v2317
  %v4433 = vpop.f32.mrf.mxu0
  %v4434 = vadd.f32 0.0, %v4433
  %v4435 = vpop.f32.mrf.mxu0
  %4436 = vmatprep.mubr.f32.mxu0 0.0
  %4437 = vmatmul.mubr.f32.gmra.mxu0 %v2320
  %v4438 = vpop.f32.mrf.mxu0
  %v4439 = vadd.f32 0.0, %v4438
  %v4440 = vpop.f32.mrf.mxu0
  %4441 = vmatprep.mubr.f32.mxu0 0.0
  %4442 = vmatmul.mubr.f32.gmra.mxu0 %v2323
  %v4443 = vpop.f32.mrf.mxu0
  %v4444 = vadd.f32 0.0, %v4443
  %v4445 = vpop.f32.mrf.mxu0
  %4446 = vmatprep.mubr.f32.mxu0 0.0
  %4447 = vmatmul.mubr.f32.gmra.mxu0 %v2326
  %v4448 = vpop.f32.mrf.mxu0
  %v4449 = vadd.f32 0.0, %v4448
  %v4450 = vpop.f32.mrf.mxu0
  %4451 = vdwg.mxu0
  %v4452 = vadd.f32 %v4449, %v2520
  %v4453 = vld [vmem:[%s1299] sm:$0x3f]
  %v4454 = vsub.f32 1.0, %v4453
  %v4456 = vrot.slane %v4452, 7
  %v4458 = vmul.f32 %v4454, %v4456
  %v4459 = vrot.slane %v4452, 5
  %v4461 = vmul.f32 %v4454, %v4459
  %v4462 = vlaneseq
  %v4463 = vshrl.u32 %v4462, 7
  %v4464 = vsub.s32 1, %v4463
  %v4465 = vrot.slane %v4458, %v4464
  %v4466 = vlaneseq
  %v4467 = vshrl.u32 %v4466, 7
  %v4468 = vsub.s32 4, %v4467
  %v4469 = vrot.slane %v4461, %v4468
  %v4470 = vld [vmem:[%s1436] sm:$0xff]
  %v4471 = vld [vmem:[%s1436 + $0x8] sm:$0xff]
  %v4472 = vld [vmem:[%s1436 + $0x10] sm:$0xff]
  %v4473 = vld [vmem:[%s1436 + $0x18] sm:$0xff]
  %v4474 = vld [vmem:[%s1436 + $0x20] sm:$0xff]
  %v4475 = vld [vmem:[%s1436 + $0x28] sm:$0xff]
  %v4476 = vld [vmem:[%s1436 + $0x30] sm:$0xff]
  %v4477 = vld [vmem:[%s1436 + $0x38] sm:$0xff]
  %v4478 = vmul.f32 %v209, %v4465
  %v4479 = vmul.f32 %v213, %v4465
  %v4480 = vmul.f32 %v217, %v4465
  %v4481 = vmul.f32 %v221, %v4465
  %v4482 = vmul.f32 %v225, %v4469
  %v4483 = vmul.f32 %v229, %v4469
  %v4484 = vmul.f32 %v233, %v4469
  %v4485 = vmul.f32 %v237, %v4469
  %v4486 = vadd.f32 %v4470, %v4478
  %v4487 = vadd.f32 %v4471, %v4479
  %v4488 = vadd.f32 %v4472, %v4480
  %v4489 = vadd.f32 %v4473, %v4481
  %v4490 = vadd.f32 %v4474, %v4482
  %v4491 = vadd.f32 %v4475, %v4483
  %v4492 = vadd.f32 %v4476, %v4484
  %v4493 = vadd.f32 %v4477, %v4485
  %v4494 = vadd.f32 %v4486, %v4329
  %v4495 = vadd.f32 %v4487, %v4334
  %v4496 = vadd.f32 %v4488, %v4339
  %v4497 = vadd.f32 %v4489, %v4344
  %v4498 = vadd.f32 %v4490, %v4349
  %v4499 = vadd.f32 %v4491, %v4354
  %v4500 = vadd.f32 %v4492, %v4359
  %v4501 = vadd.f32 %v4493, %v4364
  %v4502 = vxor.u32 %v4494, 2147483648
  %v4503 = vxor.u32 %v4495, 2147483648
  %v4504 = vxor.u32 %v4496, 2147483648
  %v4505 = vxor.u32 %v4497, 2147483648
  %v4506 = vxor.u32 %v4498, 2147483648
  %v4507 = vxor.u32 %v4499, 2147483648
  %v4508 = vxor.u32 %v4500, 2147483648
  %v4509 = vxor.u32 %v4501, 2147483648
  %v4510 = vmul.f32 %v4502, 1.442695
  %v4511 = vpow.pop %v4510
  %v4512 = vmul.f32 %v4503, 1.442695
  %v4513 = vpow.pop %v4512
  %v4514 = vmul.f32 %v4504, 1.442695
  %v4515 = vpow.pop %v4514
  %v4516 = vmul.f32 %v4505, 1.442695
  %v4517 = vpow.pop %v4516
  %v4518 = vmul.f32 %v4506, 1.442695
  %v4519 = vpow.pop %v4518
  %v4520 = vmul.f32 %v4507, 1.442695
  %v4521 = vpow.pop %v4520
  %v4522 = vmul.f32 %v4508, 1.442695
  %v4523 = vpow.pop %v4522
  %v4524 = vmul.f32 %v4509, 1.442695
  %v4525 = vpow.pop %v4524
  %v4526 = vadd.f32 %v4511, 1.0
  %v4527 = vadd.f32 %v4513, 1.0
  %v4528 = vadd.f32 %v4515, 1.0
  %v4529 = vadd.f32 %v4517, 1.0
  %v4530 = vadd.f32 %v4519, 1.0
  %v4531 = vadd.f32 %v4521, 1.0
  %v4532 = vadd.f32 %v4523, 1.0
  %v4533 = vadd.f32 %v4525, 1.0
  %v4534 = vrcp.pop %v4526
  %v4535 = vmul.f32 1.0, %v4534
  %v4536 = vrcp.pop %v4527
  %v4537 = vmul.f32 1.0, %v4536
  %v4538 = vrcp.pop %v4528
  %v4539 = vmul.f32 1.0, %v4538
  %v4540 = vrcp.pop %v4529
  %v4541 = vmul.f32 1.0, %v4540
  %v4542 = vrcp.pop %v4530
  %v4543 = vmul.f32 1.0, %v4542
  %v4544 = vrcp.pop %v4531
  %v4545 = vmul.f32 1.0, %v4544
  %v4546 = vrcp.pop %v4532
  %v4547 = vmul.f32 1.0, %v4546
  %v4548 = vrcp.pop %v4533
  %v4549 = vmul.f32 1.0, %v4548
  %v4550 = vld [vmem:[%s1477] sm:$0xff]
  %v4551 = vld [vmem:[%s1477 + $0x8] sm:$0xff]
  %v4552 = vld [vmem:[%s1477 + $0x10] sm:$0xff]
  %v4553 = vld [vmem:[%s1477 + $0x18] sm:$0xff]
  %v4554 = vld [vmem:[%s1477 + $0x20] sm:$0xff]
  %v4555 = vld [vmem:[%s1477 + $0x28] sm:$0xff]
  %v4556 = vld [vmem:[%s1477 + $0x30] sm:$0xff]
  %v4557 = vld [vmem:[%s1477 + $0x38] sm:$0xff]
  %v4558 = vmul.f32 %v345, %v4465
  %v4559 = vmul.f32 %v349, %v4465
  %v4560 = vmul.f32 %v353, %v4465
  %v4561 = vmul.f32 %v357, %v4465
  %v4562 = vmul.f32 %v361, %v4469
  %v4563 = vmul.f32 %v365, %v4469
  %v4564 = vmul.f32 %v369, %v4469
  %v4565 = vmul.f32 %v373, %v4469
  %v4566 = vadd.f32 %v4550, %v4558
  %v4567 = vadd.f32 %v4551, %v4559
  %v4568 = vadd.f32 %v4552, %v4560
  %v4569 = vadd.f32 %v4553, %v4561
  %v4570 = vadd.f32 %v4554, %v4562
  %v4571 = vadd.f32 %v4555, %v4563
  %v4572 = vadd.f32 %v4556, %v4564
  %v4573 = vadd.f32 %v4557, %v4565
  %v4574 = vadd.f32 %v4566, %v4369
  %v4575 = vadd.f32 %v4567, %v4374
  %v4576 = vadd.f32 %v4568, %v4379
  %v4577 = vadd.f32 %v4569, %v4384
  %v4578 = vadd.f32 %v4570, %v4389
  %v4579 = vadd.f32 %v4571, %v4394
  %v4580 = vadd.f32 %v4572, %v4399
  %v4581 = vadd.f32 %v4573, %v4404
  %v4582 = vxor.u32 %v4574, 2147483648
  %v4583 = vxor.u32 %v4575, 2147483648
  %v4584 = vxor.u32 %v4576, 2147483648
  %v4585 = vxor.u32 %v4577, 2147483648
  %v4586 = vxor.u32 %v4578, 2147483648
  %v4587 = vxor.u32 %v4579, 2147483648
  %v4588 = vxor.u32 %v4580, 2147483648
  %v4589 = vxor.u32 %v4581, 2147483648
  %v4590 = vmul.f32 %v4582, 1.442695
  %v4591 = vpow.pop %v4590
  %v4592 = vmul.f32 %v4583, 1.442695
  %v4593 = vpow.pop %v4592
  %v4594 = vmul.f32 %v4584, 1.442695
  %v4595 = vpow.pop %v4594
  %v4596 = vmul.f32 %v4585, 1.442695
  %v4597 = vpow.pop %v4596
  %v4598 = vmul.f32 %v4586, 1.442695
  %v4599 = vpow.pop %v4598
  %v4600 = vmul.f32 %v4587, 1.442695
  %v4601 = vpow.pop %v4600
  %v4602 = vmul.f32 %v4588, 1.442695
  %v4603 = vpow.pop %v4602
  %v4604 = vmul.f32 %v4589, 1.442695
  %v4605 = vpow.pop %v4604
  %v4606 = vadd.f32 %v4591, 1.0
  %v4607 = vadd.f32 %v4593, 1.0
  %v4608 = vadd.f32 %v4595, 1.0
  %v4609 = vadd.f32 %v4597, 1.0
  %v4610 = vadd.f32 %v4599, 1.0
  %v4611 = vadd.f32 %v4601, 1.0
  %v4612 = vadd.f32 %v4603, 1.0
  %v4613 = vadd.f32 %v4605, 1.0
  %v4614 = vrcp.pop %v4606
  %v4615 = vmul.f32 1.0, %v4614
  %v4616 = vrcp.pop %v4607
  %v4617 = vmul.f32 1.0, %v4616
  %v4618 = vrcp.pop %v4608
  %v4619 = vmul.f32 1.0, %v4618
  %v4620 = vrcp.pop %v4609
  %v4621 = vmul.f32 1.0, %v4620
  %v4622 = vrcp.pop %v4610
  %v4623 = vmul.f32 1.0, %v4622
  %v4624 = vrcp.pop %v4611
  %v4625 = vmul.f32 1.0, %v4624
  %v4626 = vrcp.pop %v4612
  %v4627 = vmul.f32 1.0, %v4626
  %v4628 = vrcp.pop %v4613
  %v4629 = vmul.f32 1.0, %v4628
  %v4630 = vld [vmem:[%s1518] sm:$0xff]
  %v4631 = vld [vmem:[%s1518 + $0x8] sm:$0xff]
  %v4632 = vld [vmem:[%s1518 + $0x10] sm:$0xff]
  %v4633 = vld [vmem:[%s1518 + $0x18] sm:$0xff]
  %v4634 = vld [vmem:[%s1518 + $0x20] sm:$0xff]
  %v4635 = vld [vmem:[%s1518 + $0x28] sm:$0xff]
  %v4636 = vld [vmem:[%s1518 + $0x30] sm:$0xff]
  %v4637 = vld [vmem:[%s1518 + $0x38] sm:$0xff]
  %v4638 = vmul.f32 %v481, %v4465
  %v4639 = vmul.f32 %v485, %v4465
  %v4640 = vmul.f32 %v489, %v4465
  %v4641 = vmul.f32 %v493, %v4465
  %v4642 = vmul.f32 %v497, %v4469
  %v4643 = vmul.f32 %v501, %v4469
  %v4644 = vmul.f32 %v505, %v4469
  %v4645 = vmul.f32 %v509, %v4469
  %v4646 = vadd.f32 %v4630, %v4638
  %v4647 = vadd.f32 %v4631, %v4639
  %v4648 = vadd.f32 %v4632, %v4640
  %v4649 = vadd.f32 %v4633, %v4641
  %v4650 = vadd.f32 %v4634, %v4642
  %v4651 = vadd.f32 %v4635, %v4643
  %v4652 = vadd.f32 %v4636, %v4644
  %v4653 = vadd.f32 %v4637, %v4645
  %v4654 = vadd.f32 %v4409, %v2726
  %v4655 = vadd.f32 %v4414, %v2730
  %v4656 = vadd.f32 %v4419, %v2734
  %v4657 = vadd.f32 %v4424, %v2738
  %v4658 = vadd.f32 %v4429, %v2742
  %v4659 = vadd.f32 %v4434, %v2746
  %v4660 = vadd.f32 %v4439, %v2750
  %v4661 = vadd.f32 %v4444, %v2754
  %v4662 = vmul.f32 %v4535, %v4654
  %v4663 = vmul.f32 %v4537, %v4655
  %v4664 = vmul.f32 %v4539, %v4656
  %v4665 = vmul.f32 %v4541, %v4657
  %v4666 = vmul.f32 %v4543, %v4658
  %v4667 = vmul.f32 %v4545, %v4659
  %v4668 = vmul.f32 %v4547, %v4660
  %v4669 = vmul.f32 %v4549, %v4661
  %v4670 = vadd.f32 %v4646, %v4662
  %v4671 = vadd.f32 %v4647, %v4663
  %v4672 = vadd.f32 %v4648, %v4664
  %v4673 = vadd.f32 %v4649, %v4665
  %v4674 = vadd.f32 %v4650, %v4666
  %v4675 = vadd.f32 %v4651, %v4667
  %v4676 = vadd.f32 %v4652, %v4668
  %v4677 = vadd.f32 %v4653, %v4669
  %v4678 = vtanh.pop %v4670
  %v4679 = vtanh.pop %v4671
  %v4680 = vtanh.pop %v4672
  %v4681 = vtanh.pop %v4673
  %v4682 = vtanh.pop %v4674
  %v4683 = vtanh.pop %v4675
  %v4684 = vtanh.pop %v4676
  %v4685 = vtanh.pop %v4677
  %v4686 = vsub.f32 1.0, %v4615
  %v4687 = vsub.f32 1.0, %v4617
  %v4688 = vsub.f32 1.0, %v4619
  %v4689 = vsub.f32 1.0, %v4621
  %v4690 = vsub.f32 1.0, %v4623
  %v4691 = vsub.f32 1.0, %v4625
  %v4692 = vsub.f32 1.0, %v4627
  %v4693 = vsub.f32 1.0, %v4629
  %v4694 = vmul.f32 %v4686, %v4678
  %v4695 = vmul.f32 %v4687, %v4679
  %v4696 = vmul.f32 %v4688, %v4680
  %v4697 = vmul.f32 %v4689, %v4681
  %v4698 = vmul.f32 %v4690, %v4682
  %v4699 = vmul.f32 %v4691, %v4683
  %v4700 = vmul.f32 %v4692, %v4684
  %v4701 = vmul.f32 %v4693, %v4685
  %v4702 = vmul.f32 %v4615, %v4254
  %v4703 = vmul.f32 %v4617, %v4255
  %v4704 = vmul.f32 %v4619, %v4256
  %v4705 = vmul.f32 %v4621, %v4257
  %v4706 = vmul.f32 %v4623, %v4258
  %v4707 = vmul.f32 %v4625, %v4259
  %v4708 = vmul.f32 %v4627, %v4260
  %v4709 = vmul.f32 %v4629, %v4261
  %v4710 = vadd.f32 %v4694, %v4702
  %v4711 = vadd.f32 %v4695, %v4703
  %v4712 = vadd.f32 %v4696, %v4704
  %v4713 = vadd.f32 %v4697, %v4705
  %v4714 = vadd.f32 %v4698, %v4706
  %v4715 = vadd.f32 %v4699, %v4707
  %v4716 = vadd.f32 %v4700, %v4708
  %v4717 = vadd.f32 %v4701, %v4709
  %4718 = vst.msk [vmem:[%s6 + $0x4] sm:$0x1] %vm2820, %v4452
  %4719 = vst.msk [vmem:[%s7 + $0x3] sm:$0x2] %vm2822, %v4452
  %v4720 = vld [vmem:[%s1623] sm:$0xff]
  %v4721 = vld [vmem:[%s1623 + $0x8] sm:$0xff]
  %v4722 = vld [vmem:[%s1623 + $0x10] sm:$0xff]
  %v4723 = vld [vmem:[%s1623 + $0x18] sm:$0xff]
  %v4724 = vld [vmem:[%s1623 + $0x20] sm:$0xff]
  %v4725 = vld [vmem:[%s1623 + $0x28] sm:$0xff]
  %v4726 = vld [vmem:[%s1623 + $0x30] sm:$0xff]
  %v4727 = vld [vmem:[%s1623 + $0x38] sm:$0xff]
  %v4728 = vmul.f32 %v4710, %v4720
  %v4729 = vmul.f32 %v4711, %v4721
  %v4730 = vmul.f32 %v4712, %v4722
  %v4731 = vmul.f32 %v4713, %v4723
  %v4732 = vmul.f32 %v4714, %v4724
  %v4733 = vmul.f32 %v4715, %v4725
  %v4734 = vmul.f32 %v4716, %v4726
  %v4735 = vmul.f32 %v4717, %v4727
  %4736 = vmatprep.subr.mxu0 0.0
  %4737 = vmatpush1.msra.mxu0 0.0
  %4738 = vmatprep.subr.mxu0 0.0
  %4739 = vmatpush1.msra.mxu0 0.0
  %4740 = vmatprep.subr.mxu0 0.0
  %4741 = vmatpush1.msra.mxu0 0.0
  %4742 = vmatprep.subr.mxu0 0.0
  %4743 = vmatpush1.msra.mxu0 0.0
  %4744 = vmatprep.subr.mxu0 0.0
  %4745 = vmatpush1.msra.mxu0 0.0
  %4746 = vmatprep.subr.mxu0 0.0
  %4747 = vmatpush1.msra.mxu0 0.0
  %4748 = vmatprep.subr.mxu0 0.0
  %4749 = vmatpush1.msra.mxu0 0.0
  %4750 = vmatprep.subr.mxu0 0.0
  %4751 = vmatpush1.msra.mxu0 0.0
  %4752 = vmatprep.subr.mxu0 0.0
  %4753 = vmatpush1.msra.mxu0 %v4735
  %4754 = vmatprep.subr.mxu0 0.0
  %4755 = vmatpush1.msra.mxu0 %v4734
  %4756 = vmatprep.subr.mxu0 0.0
  %4757 = vmatpush1.msra.mxu0 %v4733
  %4758 = vmatprep.subr.mxu0 0.0
  %4759 = vmatpush1.msra.mxu0 %v4732
  %4760 = vmatprep.subr.mxu0 0.0
  %4761 = vmatpush1.msra.mxu0 %v4731
  %4762 = vmatprep.subr.mxu0 0.0
  %4763 = vmatpush1.msra.mxu0 %v4730
  %4764 = vmatprep.subr.mxu0 0.0
  %4765 = vmatpush1.msra.mxu0 %v4729
  %4766 = vmatprep.subr.mxu0 0.0
  %4767 = vmatpush1.msra.mxu0 %v4728
  %4768 = vmatprep.subr.mxu0 0.0
  %4769 = vmatpush2.msra.mxu0 0.0
  %4770 = vmatprep.subr.mxu0 0.0
  %4771 = vmatpush2.msra.mxu0 0.0
  %4772 = vmatprep.subr.mxu0 0.0
  %4773 = vmatpush2.msra.mxu0 0.0
  %4774 = vmatprep.subr.mxu0 0.0
  %4775 = vmatpush2.msra.mxu0 0.0
  %4776 = vmatprep.subr.mxu0 0.0
  %4777 = vmatpush2.msra.mxu0 0.0
  %4778 = vmatprep.subr.mxu0 0.0
  %4779 = vmatpush2.msra.mxu0 0.0
  %4780 = vmatprep.subr.mxu0 0.0
  %4781 = vmatpush2.msra.mxu0 0.0
  %4782 = vmatprep.subr.mxu0 0.0
  %4783 = vmatpush2.msra.mxu0 0.0
  %4784 = vmatprep.subr.mxu0 0.0
  %4785 = vmatpush2.msra.mxu0 0.0
  %4786 = vmatprep.subr.mxu0 0.0
  %4787 = vmatpush2.msra.mxu0 0.0
  %4788 = vmatprep.subr.mxu0 0.0
  %4789 = vmatpush2.msra.mxu0 0.0
  %4790 = vmatprep.subr.mxu0 0.0
  %4791 = vmatpush2.msra.mxu0 0.0
  %4792 = vmatprep.subr.mxu0 0.0
  %4793 = vmatpush2.msra.mxu0 0.0
  %4794 = vmatprep.subr.mxu0 0.0
  %4795 = vmatpush2.msra.mxu0 0.0
  %4796 = vmatprep.subr.mxu0 0.0
  %4797 = vmatpush2.msra.mxu0 0.0
  %4798 = vmatprep.subr.mxu0 0.0
  %4799 = vmatpush2.msra.mxu0 0.0
  %4800 = vmatprep.mubr.f32.mxu0 0.0
  %4801 = vmatmul.mubr.f32.gmra.mxu0 %v2254
  %v4802 = vpop.f32.mrf.mxu0
  %v4803 = vadd.f32 0.0, %v4802
  %v4804 = vpop.f32.mrf.mxu0
  %4805 = vmatprep.mubr.f32.mxu0 0.0
  %4806 = vmatmul.mubr.f32.gmra.mxu0 %v2257
  %v4807 = vpop.f32.mrf.mxu0
  %v4808 = vadd.f32 0.0, %v4807
  %v4809 = vpop.f32.mrf.mxu0
  %4810 = vmatprep.mubr.f32.mxu0 0.0
  %4811 = vmatmul.mubr.f32.gmra.mxu0 %v2260
  %v4812 = vpop.f32.mrf.mxu0
  %v4813 = vadd.f32 0.0, %v4812
  %v4814 = vpop.f32.mrf.mxu0
  %4815 = vmatprep.mubr.f32.mxu0 0.0
  %4816 = vmatmul.mubr.f32.gmra.mxu0 %v2263
  %v4817 = vpop.f32.mrf.mxu0
  %v4818 = vadd.f32 0.0, %v4817
  %v4819 = vpop.f32.mrf.mxu0
  %4820 = vmatprep.mubr.f32.mxu0 0.0
  %4821 = vmatmul.mubr.f32.gmra.mxu0 %v2266
  %v4822 = vpop.f32.mrf.mxu0
  %v4823 = vadd.f32 0.0, %v4822
  %v4824 = vpop.f32.mrf.mxu0
  %4825 = vmatprep.mubr.f32.mxu0 0.0
  %4826 = vmatmul.mubr.f32.gmra.mxu0 %v2269
  %v4827 = vpop.f32.mrf.mxu0
  %v4828 = vadd.f32 0.0, %v4827
  %v4829 = vpop.f32.mrf.mxu0
  %4830 = vmatprep.mubr.f32.mxu0 0.0
  %4831 = vmatmul.mubr.f32.gmra.mxu0 %v2272
  %v4832 = vpop.f32.mrf.mxu0
  %v4833 = vadd.f32 0.0, %v4832
  %v4834 = vpop.f32.mrf.mxu0
  %4835 = vmatprep.mubr.f32.mxu0 0.0
  %4836 = vmatmul.mubr.f32.gmra.mxu0 %v2275
  %v4837 = vpop.f32.mrf.mxu0
  %v4838 = vadd.f32 0.0, %v4837
  %v4839 = vpop.f32.mrf.mxu0
  %4840 = vmatprep.mubr.f32.mxu0 0.0
  %4841 = vmatmul.mubr.f32.gmra.mxu0 %v2278
  %v4842 = vpop.f32.mrf.mxu0
  %v4843 = vadd.f32 0.0, %v4842
  %v4844 = vpop.f32.mrf.mxu0
  %4845 = vmatprep.mubr.f32.mxu0 0.0
  %4846 = vmatmul.mubr.f32.gmra.mxu0 %v2281
  %v4847 = vpop.f32.mrf.mxu0
  %v4848 = vadd.f32 0.0, %v4847
  %v4849 = vpop.f32.mrf.mxu0
  %4850 = vmatprep.mubr.f32.mxu0 0.0
  %4851 = vmatmul.mubr.f32.gmra.mxu0 %v2284
  %v4852 = vpop.f32.mrf.mxu0
  %v4853 = vadd.f32 0.0, %v4852
  %v4854 = vpop.f32.mrf.mxu0
  %4855 = vmatprep.mubr.f32.mxu0 0.0
  %4856 = vmatmul.mubr.f32.gmra.mxu0 %v2287
  %v4857 = vpop.f32.mrf.mxu0
  %v4858 = vadd.f32 0.0, %v4857
  %v4859 = vpop.f32.mrf.mxu0
  %4860 = vmatprep.mubr.f32.mxu0 0.0
  %4861 = vmatmul.mubr.f32.gmra.mxu0 %v2290
  %v4862 = vpop.f32.mrf.mxu0
  %v4863 = vadd.f32 0.0, %v4862
  %v4864 = vpop.f32.mrf.mxu0
  %4865 = vmatprep.mubr.f32.mxu0 0.0
  %4866 = vmatmul.mubr.f32.gmra.mxu0 %v2293
  %v4867 = vpop.f32.mrf.mxu0
  %v4868 = vadd.f32 0.0, %v4867
  %v4869 = vpop.f32.mrf.mxu0
  %4870 = vmatprep.mubr.f32.mxu0 0.0
  %4871 = vmatmul.mubr.f32.gmra.mxu0 %v2296
  %v4872 = vpop.f32.mrf.mxu0
  %v4873 = vadd.f32 0.0, %v4872
  %v4874 = vpop.f32.mrf.mxu0
  %4875 = vmatprep.mubr.f32.mxu0 0.0
  %4876 = vmatmul.mubr.f32.gmra.mxu0 %v2299
  %v4877 = vpop.f32.mrf.mxu0
  %v4878 = vadd.f32 0.0, %v4877
  %v4879 = vpop.f32.mrf.mxu0
  %4880 = vmatprep.mubr.f32.mxu0 0.0
  %4881 = vmatmul.mubr.f32.gmra.mxu0 %v2302
  %v4882 = vpop.f32.mrf.mxu0
  %v4883 = vadd.f32 0.0, %v4882
  %v4884 = vpop.f32.mrf.mxu0
  %4885 = vmatprep.mubr.f32.mxu0 0.0
  %4886 = vmatmul.mubr.f32.gmra.mxu0 %v2305
  %v4887 = vpop.f32.mrf.mxu0
  %v4888 = vadd.f32 0.0, %v4887
  %v4889 = vpop.f32.mrf.mxu0
  %4890 = vmatprep.mubr.f32.mxu0 0.0
  %4891 = vmatmul.mubr.f32.gmra.mxu0 %v2308
  %v4892 = vpop.f32.mrf.mxu0
  %v4893 = vadd.f32 0.0, %v4892
  %v4894 = vpop.f32.mrf.mxu0
  %4895 = vmatprep.mubr.f32.mxu0 0.0
  %4896 = vmatmul.mubr.f32.gmra.mxu0 %v2311
  %v4897 = vpop.f32.mrf.mxu0
  %v4898 = vadd.f32 0.0, %v4897
  %v4899 = vpop.f32.mrf.mxu0
  %4900 = vmatprep.mubr.f32.mxu0 0.0
  %4901 = vmatmul.mubr.f32.gmra.mxu0 %v2314
  %v4902 = vpop.f32.mrf.mxu0
  %v4903 = vadd.f32 0.0, %v4902
  %v4904 = vpop.f32.mrf.mxu0
  %4905 = vmatprep.mubr.f32.mxu0 0.0
  %4906 = vmatmul.mubr.f32.gmra.mxu0 %v2317
  %v4907 = vpop.f32.mrf.mxu0
  %v4908 = vadd.f32 0.0, %v4907
  %v4909 = vpop.f32.mrf.mxu0
  %4910 = vmatprep.mubr.f32.mxu0 0.0
  %4911 = vmatmul.mubr.f32.gmra.mxu0 %v2320
  %v4912 = vpop.f32.mrf.mxu0
  %v4913 = vadd.f32 0.0, %v4912
  %v4914 = vpop.f32.mrf.mxu0
  %4915 = vmatprep.mubr.f32.mxu0 0.0
  %4916 = vmatmul.mubr.f32.gmra.mxu0 %v2323
  %v4917 = vpop.f32.mrf.mxu0
  %v4918 = vadd.f32 0.0, %v4917
  %v4919 = vpop.f32.mrf.mxu0
  %4920 = vmatprep.mubr.f32.mxu0 0.0
  %4921 = vmatmul.mubr.f32.gmra.mxu0 %v2326
  %v4922 = vpop.f32.mrf.mxu0
  %v4923 = vadd.f32 0.0, %v4922
  %v4924 = vpop.f32.mrf.mxu0
  %4925 = vdwg.mxu0
  %v4926 = vadd.f32 %v4923, %v2520
  %v4927 = vld [vmem:[%s1527] sm:$0x3f]
  %v4928 = vsub.f32 1.0, %v4927
  %v4930 = vrot.slane %v4926, 7
  %v4932 = vmul.f32 %v4928, %v4930
  %v4933 = vrot.slane %v4926, 5
  %v4935 = vmul.f32 %v4928, %v4933
  %v4936 = vlaneseq
  %v4937 = vshrl.u32 %v4936, 7
  %v4938 = vsub.s32 1, %v4937
  %v4939 = vrot.slane %v4932, %v4938
  %v4940 = vlaneseq
  %v4941 = vshrl.u32 %v4940, 7
  %v4942 = vsub.s32 4, %v4941
  %v4943 = vrot.slane %v4935, %v4942
  %v4944 = vld [vmem:[%s1664] sm:$0xff]
  %v4945 = vld [vmem:[%s1664 + $0x8] sm:$0xff]
  %v4946 = vld [vmem:[%s1664 + $0x10] sm:$0xff]
  %v4947 = vld [vmem:[%s1664 + $0x18] sm:$0xff]
  %v4948 = vld [vmem:[%s1664 + $0x20] sm:$0xff]
  %v4949 = vld [vmem:[%s1664 + $0x28] sm:$0xff]
  %v4950 = vld [vmem:[%s1664 + $0x30] sm:$0xff]
  %v4951 = vld [vmem:[%s1664 + $0x38] sm:$0xff]
  %v4952 = vmul.f32 %v209, %v4939
  %v4953 = vmul.f32 %v213, %v4939
  %v4954 = vmul.f32 %v217, %v4939
  %v4955 = vmul.f32 %v221, %v4939
  %v4956 = vmul.f32 %v225, %v4943
  %v4957 = vmul.f32 %v229, %v4943
  %v4958 = vmul.f32 %v233, %v4943
  %v4959 = vmul.f32 %v237, %v4943
  %v4960 = vadd.f32 %v4944, %v4952
  %v4961 = vadd.f32 %v4945, %v4953
  %v4962 = vadd.f32 %v4946, %v4954
  %v4963 = vadd.f32 %v4947, %v4955
  %v4964 = vadd.f32 %v4948, %v4956
  %v4965 = vadd.f32 %v4949, %v4957
  %v4966 = vadd.f32 %v4950, %v4958
  %v4967 = vadd.f32 %v4951, %v4959
  %v4968 = vadd.f32 %v4960, %v4803
  %v4969 = vadd.f32 %v4961, %v4808
  %v4970 = vadd.f32 %v4962, %v4813
  %v4971 = vadd.f32 %v4963, %v4818
  %v4972 = vadd.f32 %v4964, %v4823
  %v4973 = vadd.f32 %v4965, %v4828
  %v4974 = vadd.f32 %v4966, %v4833
  %v4975 = vadd.f32 %v4967, %v4838
  %v4976 = vxor.u32 %v4968, 2147483648
  %v4977 = vxor.u32 %v4969, 2147483648
  %v4978 = vxor.u32 %v4970, 2147483648
  %v4979 = vxor.u32 %v4971, 2147483648
  %v4980 = vxor.u32 %v4972, 2147483648
  %v4981 = vxor.u32 %v4973, 2147483648
  %v4982 = vxor.u32 %v4974, 2147483648
  %v4983 = vxor.u32 %v4975, 2147483648
  %v4984 = vmul.f32 %v4976, 1.442695
  %v4985 = vpow.pop %v4984
  %v4986 = vmul.f32 %v4977, 1.442695
  %v4987 = vpow.pop %v4986
  %v4988 = vmul.f32 %v4978, 1.442695
  %v4989 = vpow.pop %v4988
  %v4990 = vmul.f32 %v4979, 1.442695
  %v4991 = vpow.pop %v4990
  %v4992 = vmul.f32 %v4980, 1.442695
  %v4993 = vpow.pop %v4992
  %v4994 = vmul.f32 %v4981, 1.442695
  %v4995 = vpow.pop %v4994
  %v4996 = vmul.f32 %v4982, 1.442695
  %v4997 = vpow.pop %v4996
  %v4998 = vmul.f32 %v4983, 1.442695
  %v4999 = vpow.pop %v4998
  %v5000 = vadd.f32 %v4985, 1.0
  %v5001 = vadd.f32 %v4987, 1.0
  %v5002 = vadd.f32 %v4989, 1.0
  %v5003 = vadd.f32 %v4991, 1.0
  %v5004 = vadd.f32 %v4993, 1.0
  %v5005 = vadd.f32 %v4995, 1.0
  %v5006 = vadd.f32 %v4997, 1.0
  %v5007 = vadd.f32 %v4999, 1.0
  %v5008 = vrcp.pop %v5000
  %v5009 = vmul.f32 1.0, %v5008
  %v5010 = vrcp.pop %v5001
  %v5011 = vmul.f32 1.0, %v5010
  %v5012 = vrcp.pop %v5002
  %v5013 = vmul.f32 1.0, %v5012
  %v5014 = vrcp.pop %v5003
  %v5015 = vmul.f32 1.0, %v5014
  %v5016 = vrcp.pop %v5004
  %v5017 = vmul.f32 1.0, %v5016
  %v5018 = vrcp.pop %v5005
  %v5019 = vmul.f32 1.0, %v5018
  %v5020 = vrcp.pop %v5006
  %v5021 = vmul.f32 1.0, %v5020
  %v5022 = vrcp.pop %v5007
  %v5023 = vmul.f32 1.0, %v5022
  %v5024 = vld [vmem:[%s1705] sm:$0xff]
  %v5025 = vld [vmem:[%s1705 + $0x8] sm:$0xff]
  %v5026 = vld [vmem:[%s1705 + $0x10] sm:$0xff]
  %v5027 = vld [vmem:[%s1705 + $0x18] sm:$0xff]
  %v5028 = vld [vmem:[%s1705 + $0x20] sm:$0xff]
  %v5029 = vld [vmem:[%s1705 + $0x28] sm:$0xff]
  %v5030 = vld [vmem:[%s1705 + $0x30] sm:$0xff]
  %v5031 = vld [vmem:[%s1705 + $0x38] sm:$0xff]
  %v5032 = vmul.f32 %v345, %v4939
  %v5033 = vmul.f32 %v349, %v4939
  %v5034 = vmul.f32 %v353, %v4939
  %v5035 = vmul.f32 %v357, %v4939
  %v5036 = vmul.f32 %v361, %v4943
  %v5037 = vmul.f32 %v365, %v4943
  %v5038 = vmul.f32 %v369, %v4943
  %v5039 = vmul.f32 %v373, %v4943
  %v5040 = vadd.f32 %v5024, %v5032
  %v5041 = vadd.f32 %v5025, %v5033
  %v5042 = vadd.f32 %v5026, %v5034
  %v5043 = vadd.f32 %v5027, %v5035
  %v5044 = vadd.f32 %v5028, %v5036
  %v5045 = vadd.f32 %v5029, %v5037
  %v5046 = vadd.f32 %v5030, %v5038
  %v5047 = vadd.f32 %v5031, %v5039
  %v5048 = vadd.f32 %v5040, %v4843
  %v5049 = vadd.f32 %v5041, %v4848
  %v5050 = vadd.f32 %v5042, %v4853
  %v5051 = vadd.f32 %v5043, %v4858
  %v5052 = vadd.f32 %v5044, %v4863
  %v5053 = vadd.f32 %v5045, %v4868
  %v5054 = vadd.f32 %v5046, %v4873
  %v5055 = vadd.f32 %v5047, %v4878
  %v5056 = vxor.u32 %v5048, 2147483648
  %v5057 = vxor.u32 %v5049, 2147483648
  %v5058 = vxor.u32 %v5050, 2147483648
  %v5059 = vxor.u32 %v5051, 2147483648
  %v5060 = vxor.u32 %v5052, 2147483648
  %v5061 = vxor.u32 %v5053, 2147483648
  %v5062 = vxor.u32 %v5054, 2147483648
  %v5063 = vxor.u32 %v5055, 2147483648
  %v5064 = vmul.f32 %v5056, 1.442695
  %v5065 = vpow.pop %v5064
  %v5066 = vmul.f32 %v5057, 1.442695
  %v5067 = vpow.pop %v5066
  %v5068 = vmul.f32 %v5058, 1.442695
  %v5069 = vpow.pop %v5068
  %v5070 = vmul.f32 %v5059, 1.442695
  %v5071 = vpow.pop %v5070
  %v5072 = vmul.f32 %v5060, 1.442695
  %v5073 = vpow.pop %v5072
  %v5074 = vmul.f32 %v5061, 1.442695
  %v5075 = vpow.pop %v5074
  %v5076 = vmul.f32 %v5062, 1.442695
  %v5077 = vpow.pop %v5076
  %v5078 = vmul.f32 %v5063, 1.442695
  %v5079 = vpow.pop %v5078
  %v5080 = vadd.f32 %v5065, 1.0
  %v5081 = vadd.f32 %v5067, 1.0
  %v5082 = vadd.f32 %v5069, 1.0
  %v5083 = vadd.f32 %v5071, 1.0
  %v5084 = vadd.f32 %v5073, 1.0
  %v5085 = vadd.f32 %v5075, 1.0
  %v5086 = vadd.f32 %v5077, 1.0
  %v5087 = vadd.f32 %v5079, 1.0
  %v5088 = vrcp.pop %v5080
  %v5089 = vmul.f32 1.0, %v5088
  %v5090 = vrcp.pop %v5081
  %v5091 = vmul.f32 1.0, %v5090
  %v5092 = vrcp.pop %v5082
  %v5093 = vmul.f32 1.0, %v5092
  %v5094 = vrcp.pop %v5083
  %v5095 = vmul.f32 1.0, %v5094
  %v5096 = vrcp.pop %v5084
  %v5097 = vmul.f32 1.0, %v5096
  %v5098 = vrcp.pop %v5085
  %v5099 = vmul.f32 1.0, %v5098
  %v5100 = vrcp.pop %v5086
  %v5101 = vmul.f32 1.0, %v5100
  %v5102 = vrcp.pop %v5087
  %v5103 = vmul.f32 1.0, %v5102
  %v5104 = vld [vmem:[%s1746] sm:$0xff]
  %v5105 = vld [vmem:[%s1746 + $0x8] sm:$0xff]
  %v5106 = vld [vmem:[%s1746 + $0x10] sm:$0xff]
  %v5107 = vld [vmem:[%s1746 + $0x18] sm:$0xff]
  %v5108 = vld [vmem:[%s1746 + $0x20] sm:$0xff]
  %v5109 = vld [vmem:[%s1746 + $0x28] sm:$0xff]
  %v5110 = vld [vmem:[%s1746 + $0x30] sm:$0xff]
  %v5111 = vld [vmem:[%s1746 + $0x38] sm:$0xff]
  %v5112 = vmul.f32 %v481, %v4939
  %v5113 = vmul.f32 %v485, %v4939
  %v5114 = vmul.f32 %v489, %v4939
  %v5115 = vmul.f32 %v493, %v4939
  %v5116 = vmul.f32 %v497, %v4943
  %v5117 = vmul.f32 %v501, %v4943
  %v5118 = vmul.f32 %v505, %v4943
  %v5119 = vmul.f32 %v509, %v4943
  %v5120 = vadd.f32 %v5104, %v5112
  %v5121 = vadd.f32 %v5105, %v5113
  %v5122 = vadd.f32 %v5106, %v5114
  %v5123 = vadd.f32 %v5107, %v5115
  %v5124 = vadd.f32 %v5108, %v5116
  %v5125 = vadd.f32 %v5109, %v5117
  %v5126 = vadd.f32 %v5110, %v5118
  %v5127 = vadd.f32 %v5111, %v5119
  %v5128 = vadd.f32 %v4883, %v2726
  %v5129 = vadd.f32 %v4888, %v2730
  %v5130 = vadd.f32 %v4893, %v2734
  %v5131 = vadd.f32 %v4898, %v2738
  %v5132 = vadd.f32 %v4903, %v2742
  %v5133 = vadd.f32 %v4908, %v2746
  %v5134 = vadd.f32 %v4913, %v2750
  %v5135 = vadd.f32 %v4918, %v2754
  %v5136 = vmul.f32 %v5009, %v5128
  %v5137 = vmul.f32 %v5011, %v5129
  %v5138 = vmul.f32 %v5013, %v5130
  %v5139 = vmul.f32 %v5015, %v5131
  %v5140 = vmul.f32 %v5017, %v5132
  %v5141 = vmul.f32 %v5019, %v5133
  %v5142 = vmul.f32 %v5021, %v5134
  %v5143 = vmul.f32 %v5023, %v5135
  %v5144 = vadd.f32 %v5120, %v5136
  %v5145 = vadd.f32 %v5121, %v5137
  %v5146 = vadd.f32 %v5122, %v5138
  %v5147 = vadd.f32 %v5123, %v5139
  %v5148 = vadd.f32 %v5124, %v5140
  %v5149 = vadd.f32 %v5125, %v5141
  %v5150 = vadd.f32 %v5126, %v5142
  %v5151 = vadd.f32 %v5127, %v5143
  %v5152 = vtanh.pop %v5144
  %v5153 = vtanh.pop %v5145
  %v5154 = vtanh.pop %v5146
  %v5155 = vtanh.pop %v5147
  %v5156 = vtanh.pop %v5148
  %v5157 = vtanh.pop %v5149
  %v5158 = vtanh.pop %v5150
  %v5159 = vtanh.pop %v5151
  %v5160 = vsub.f32 1.0, %v5089
  %v5161 = vsub.f32 1.0, %v5091
  %v5162 = vsub.f32 1.0, %v5093
  %v5163 = vsub.f32 1.0, %v5095
  %v5164 = vsub.f32 1.0, %v5097
  %v5165 = vsub.f32 1.0, %v5099
  %v5166 = vsub.f32 1.0, %v5101
  %v5167 = vsub.f32 1.0, %v5103
  %v5168 = vmul.f32 %v5160, %v5152
  %v5169 = vmul.f32 %v5161, %v5153
  %v5170 = vmul.f32 %v5162, %v5154
  %v5171 = vmul.f32 %v5163, %v5155
  %v5172 = vmul.f32 %v5164, %v5156
  %v5173 = vmul.f32 %v5165, %v5157
  %v5174 = vmul.f32 %v5166, %v5158
  %v5175 = vmul.f32 %v5167, %v5159
  %v5176 = vmul.f32 %v5089, %v4728
  %v5177 = vmul.f32 %v5091, %v4729
  %v5178 = vmul.f32 %v5093, %v4730
  %v5179 = vmul.f32 %v5095, %v4731
  %v5180 = vmul.f32 %v5097, %v4732
  %v5181 = vmul.f32 %v5099, %v4733
  %v5182 = vmul.f32 %v5101, %v4734
  %v5183 = vmul.f32 %v5103, %v4735
  %v5184 = vadd.f32 %v5168, %v5176
  %v5185 = vadd.f32 %v5169, %v5177
  %v5186 = vadd.f32 %v5170, %v5178
  %v5187 = vadd.f32 %v5171, %v5179
  %v5188 = vadd.f32 %v5172, %v5180
  %v5189 = vadd.f32 %v5173, %v5181
  %v5190 = vadd.f32 %v5174, %v5182
  %v5191 = vadd.f32 %v5175, %v5183
  %5192 = vst.msk [vmem:[%s6 + $0x5] sm:$0x1] %vm2820, %v4926
  %5193 = vst.msk [vmem:[%s7 + $0x4] sm:$0x2] %vm2822, %v4926
  %v5194 = vld [vmem:[%s1851] sm:$0xff]
  %v5195 = vld [vmem:[%s1851 + $0x8] sm:$0xff]
  %v5196 = vld [vmem:[%s1851 + $0x10] sm:$0xff]
  %v5197 = vld [vmem:[%s1851 + $0x18] sm:$0xff]
  %v5198 = vld [vmem:[%s1851 + $0x20] sm:$0xff]
  %v5199 = vld [vmem:[%s1851 + $0x28] sm:$0xff]
  %v5200 = vld [vmem:[%s1851 + $0x30] sm:$0xff]
  %v5201 = vld [vmem:[%s1851 + $0x38] sm:$0xff]
  %v5202 = vmul.f32 %v5184, %v5194
  %v5203 = vmul.f32 %v5185, %v5195
  %v5204 = vmul.f32 %v5186, %v5196
  %v5205 = vmul.f32 %v5187, %v5197
  %v5206 = vmul.f32 %v5188, %v5198
  %v5207 = vmul.f32 %v5189, %v5199
  %v5208 = vmul.f32 %v5190, %v5200
  %v5209 = vmul.f32 %v5191, %v5201
  %5210 = vmatprep.subr.mxu0 0.0
  %5211 = vmatpush1.msra.mxu0 0.0
  %5212 = vmatprep.subr.mxu0 0.0
  %5213 = vmatpush1.msra.mxu0 0.0
  %5214 = vmatprep.subr.mxu0 0.0
  %5215 = vmatpush1.msra.mxu0 0.0
  %5216 = vmatprep.subr.mxu0 0.0
  %5217 = vmatpush1.msra.mxu0 0.0
  %5218 = vmatprep.subr.mxu0 0.0
  %5219 = vmatpush1.msra.mxu0 0.0
  %5220 = vmatprep.subr.mxu0 0.0
  %5221 = vmatpush1.msra.mxu0 0.0
  %5222 = vmatprep.subr.mxu0 0.0
  %5223 = vmatpush1.msra.mxu0 0.0
  %5224 = vmatprep.subr.mxu0 0.0
  %5225 = vmatpush1.msra.mxu0 0.0
  %5226 = vmatprep.subr.mxu0 0.0
  %5227 = vmatpush1.msra.mxu0 %v5209
  %5228 = vmatprep.subr.mxu0 0.0
  %5229 = vmatpush1.msra.mxu0 %v5208
  %5230 = vmatprep.subr.mxu0 0.0
  %5231 = vmatpush1.msra.mxu0 %v5207
  %5232 = vmatprep.subr.mxu0 0.0
  %5233 = vmatpush1.msra.mxu0 %v5206
  %5234 = vmatprep.subr.mxu0 0.0
  %5235 = vmatpush1.msra.mxu0 %v5205
  %5236 = vmatprep.subr.mxu0 0.0
  %5237 = vmatpush1.msra.mxu0 %v5204
  %5238 = vmatprep.subr.mxu0 0.0
  %5239 = vmatpush1.msra.mxu0 %v5203
  %5240 = vmatprep.subr.mxu0 0.0
  %5241 = vmatpush1.msra.mxu0 %v5202
  %5242 = vmatprep.subr.mxu0 0.0
  %5243 = vmatpush2.msra.mxu0 0.0
  %5244 = vmatprep.subr.mxu0 0.0
  %5245 = vmatpush2.msra.mxu0 0.0
  %5246 = vmatprep.subr.mxu0 0.0
  %5247 = vmatpush2.msra.mxu0 0.0
  %5248 = vmatprep.subr.mxu0 0.0
  %5249 = vmatpush2.msra.mxu0 0.0
  %5250 = vmatprep.subr.mxu0 0.0
  %5251 = vmatpush2.msra.mxu0 0.0
  %5252 = vmatprep.subr.mxu0 0.0
  %5253 = vmatpush2.msra.mxu0 0.0
  %5254 = vmatprep.subr.mxu0 0.0
  %5255 = vmatpush2.msra.mxu0 0.0
  %5256 = vmatprep.subr.mxu0 0.0
  %5257 = vmatpush2.msra.mxu0 0.0
  %5258 = vmatprep.subr.mxu0 0.0
  %5259 = vmatpush2.msra.mxu0 0.0
  %5260 = vmatprep.subr.mxu0 0.0
  %5261 = vmatpush2.msra.mxu0 0.0
  %5262 = vmatprep.subr.mxu0 0.0
  %5263 = vmatpush2.msra.mxu0 0.0
  %5264 = vmatprep.subr.mxu0 0.0
  %5265 = vmatpush2.msra.mxu0 0.0
  %5266 = vmatprep.subr.mxu0 0.0
  %5267 = vmatpush2.msra.mxu0 0.0
  %5268 = vmatprep.subr.mxu0 0.0
  %5269 = vmatpush2.msra.mxu0 0.0
  %5270 = vmatprep.subr.mxu0 0.0
  %5271 = vmatpush2.msra.mxu0 0.0
  %5272 = vmatprep.subr.mxu0 0.0
  %5273 = vmatpush2.msra.mxu0 0.0
  %5274 = vmatprep.mubr.f32.mxu0 0.0
  %5275 = vmatmul.mubr.f32.gmra.mxu0 %v2254
  %v5276 = vpop.f32.mrf.mxu0
  %v5277 = vadd.f32 0.0, %v5276
  %v5278 = vpop.f32.mrf.mxu0
  %5279 = vmatprep.mubr.f32.mxu0 0.0
  %5280 = vmatmul.mubr.f32.gmra.mxu0 %v2257
  %v5281 = vpop.f32.mrf.mxu0
  %v5282 = vadd.f32 0.0, %v5281
  %v5283 = vpop.f32.mrf.mxu0
  %5284 = vmatprep.mubr.f32.mxu0 0.0
  %5285 = vmatmul.mubr.f32.gmra.mxu0 %v2260
  %v5286 = vpop.f32.mrf.mxu0
  %v5287 = vadd.f32 0.0, %v5286
  %v5288 = vpop.f32.mrf.mxu0
  %5289 = vmatprep.mubr.f32.mxu0 0.0
  %5290 = vmatmul.mubr.f32.gmra.mxu0 %v2263
  %v5291 = vpop.f32.mrf.mxu0
  %v5292 = vadd.f32 0.0, %v5291
  %v5293 = vpop.f32.mrf.mxu0
  %5294 = vmatprep.mubr.f32.mxu0 0.0
  %5295 = vmatmul.mubr.f32.gmra.mxu0 %v2266
  %v5296 = vpop.f32.mrf.mxu0
  %v5297 = vadd.f32 0.0, %v5296
  %v5298 = vpop.f32.mrf.mxu0
  %5299 = vmatprep.mubr.f32.mxu0 0.0
  %5300 = vmatmul.mubr.f32.gmra.mxu0 %v2269
  %v5301 = vpop.f32.mrf.mxu0
  %v5302 = vadd.f32 0.0, %v5301
  %v5303 = vpop.f32.mrf.mxu0
  %5304 = vmatprep.mubr.f32.mxu0 0.0
  %5305 = vmatmul.mubr.f32.gmra.mxu0 %v2272
  %v5306 = vpop.f32.mrf.mxu0
  %v5307 = vadd.f32 0.0, %v5306
  %v5308 = vpop.f32.mrf.mxu0
  %5309 = vmatprep.mubr.f32.mxu0 0.0
  %5310 = vmatmul.mubr.f32.gmra.mxu0 %v2275
  %v5311 = vpop.f32.mrf.mxu0
  %v5312 = vadd.f32 0.0, %v5311
  %v5313 = vpop.f32.mrf.mxu0
  %5314 = vmatprep.mubr.f32.mxu0 0.0
  %5315 = vmatmul.mubr.f32.gmra.mxu0 %v2278
  %v5316 = vpop.f32.mrf.mxu0
  %v5317 = vadd.f32 0.0, %v5316
  %v5318 = vpop.f32.mrf.mxu0
  %5319 = vmatprep.mubr.f32.mxu0 0.0
  %5320 = vmatmul.mubr.f32.gmra.mxu0 %v2281
  %v5321 = vpop.f32.mrf.mxu0
  %v5322 = vadd.f32 0.0, %v5321
  %v5323 = vpop.f32.mrf.mxu0
  %5324 = vmatprep.mubr.f32.mxu0 0.0
  %5325 = vmatmul.mubr.f32.gmra.mxu0 %v2284
  %v5326 = vpop.f32.mrf.mxu0
  %v5327 = vadd.f32 0.0, %v5326
  %v5328 = vpop.f32.mrf.mxu0
  %5329 = vmatprep.mubr.f32.mxu0 0.0
  %5330 = vmatmul.mubr.f32.gmra.mxu0 %v2287
  %v5331 = vpop.f32.mrf.mxu0
  %v5332 = vadd.f32 0.0, %v5331
  %v5333 = vpop.f32.mrf.mxu0
  %5334 = vmatprep.mubr.f32.mxu0 0.0
  %5335 = vmatmul.mubr.f32.gmra.mxu0 %v2290
  %v5336 = vpop.f32.mrf.mxu0
  %v5337 = vadd.f32 0.0, %v5336
  %v5338 = vpop.f32.mrf.mxu0
  %5339 = vmatprep.mubr.f32.mxu0 0.0
  %5340 = vmatmul.mubr.f32.gmra.mxu0 %v2293
  %v5341 = vpop.f32.mrf.mxu0
  %v5342 = vadd.f32 0.0, %v5341
  %v5343 = vpop.f32.mrf.mxu0
  %5344 = vmatprep.mubr.f32.mxu0 0.0
  %5345 = vmatmul.mubr.f32.gmra.mxu0 %v2296
  %v5346 = vpop.f32.mrf.mxu0
  %v5347 = vadd.f32 0.0, %v5346
  %v5348 = vpop.f32.mrf.mxu0
  %5349 = vmatprep.mubr.f32.mxu0 0.0
  %5350 = vmatmul.mubr.f32.gmra.mxu0 %v2299
  %v5351 = vpop.f32.mrf.mxu0
  %v5352 = vadd.f32 0.0, %v5351
  %v5353 = vpop.f32.mrf.mxu0
  %5354 = vmatprep.mubr.f32.mxu0 0.0
  %5355 = vmatmul.mubr.f32.gmra.mxu0 %v2302
  %v5356 = vpop.f32.mrf.mxu0
  %v5357 = vadd.f32 0.0, %v5356
  %v5358 = vpop.f32.mrf.mxu0
  %5359 = vmatprep.mubr.f32.mxu0 0.0
  %5360 = vmatmul.mubr.f32.gmra.mxu0 %v2305
  %v5361 = vpop.f32.mrf.mxu0
  %v5362 = vadd.f32 0.0, %v5361
  %v5363 = vpop.f32.mrf.mxu0
  %5364 = vmatprep.mubr.f32.mxu0 0.0
  %5365 = vmatmul.mubr.f32.gmra.mxu0 %v2308
  %v5366 = vpop.f32.mrf.mxu0
  %v5367 = vadd.f32 0.0, %v5366
  %v5368 = vpop.f32.mrf.mxu0
  %5369 = vmatprep.mubr.f32.mxu0 0.0
  %5370 = vmatmul.mubr.f32.gmra.mxu0 %v2311
  %v5371 = vpop.f32.mrf.mxu0
  %v5372 = vadd.f32 0.0, %v5371
  %v5373 = vpop.f32.mrf.mxu0
  %5374 = vmatprep.mubr.f32.mxu0 0.0
  %5375 = vmatmul.mubr.f32.gmra.mxu0 %v2314
  %v5376 = vpop.f32.mrf.mxu0
  %v5377 = vadd.f32 0.0, %v5376
  %v5378 = vpop.f32.mrf.mxu0
  %5379 = vmatprep.mubr.f32.mxu0 0.0
  %5380 = vmatmul.mubr.f32.gmra.mxu0 %v2317
  %v5381 = vpop.f32.mrf.mxu0
  %v5382 = vadd.f32 0.0, %v5381
  %v5383 = vpop.f32.mrf.mxu0
  %5384 = vmatprep.mubr.f32.mxu0 0.0
  %5385 = vmatmul.mubr.f32.gmra.mxu0 %v2320
  %v5386 = vpop.f32.mrf.mxu0
  %v5387 = vadd.f32 0.0, %v5386
  %v5388 = vpop.f32.mrf.mxu0
  %5389 = vmatprep.mubr.f32.mxu0 0.0
  %5390 = vmatmul.mubr.f32.gmra.mxu0 %v2323
  %v5391 = vpop.f32.mrf.mxu0
  %v5392 = vadd.f32 0.0, %v5391
  %v5393 = vpop.f32.mrf.mxu0
  %5394 = vmatprep.mubr.f32.mxu0 0.0
  %5395 = vmatmul.mubr.f32.gmra.mxu0 %v2326
  %v5396 = vpop.f32.mrf.mxu0
  %v5397 = vadd.f32 0.0, %v5396
  %v5398 = vpop.f32.mrf.mxu0
  %5399 = vdwg.mxu0
  %v5400 = vadd.f32 %v5397, %v2520
  %v5401 = vld [vmem:[%s1755] sm:$0x3f]
  %v5402 = vsub.f32 1.0, %v5401
  %v5404 = vrot.slane %v5400, 7
  %v5406 = vmul.f32 %v5402, %v5404
  %v5407 = vrot.slane %v5400, 5
  %v5409 = vmul.f32 %v5402, %v5407
  %v5410 = vlaneseq
  %v5411 = vshrl.u32 %v5410, 7
  %v5412 = vsub.s32 1, %v5411
  %v5413 = vrot.slane %v5406, %v5412
  %v5414 = vlaneseq
  %v5415 = vshrl.u32 %v5414, 7
  %v5416 = vsub.s32 4, %v5415
  %v5417 = vrot.slane %v5409, %v5416
  %v5418 = vld [vmem:[%s1892] sm:$0xff]
  %v5419 = vld [vmem:[%s1892 + $0x8] sm:$0xff]
  %v5420 = vld [vmem:[%s1892 + $0x10] sm:$0xff]
  %v5421 = vld [vmem:[%s1892 + $0x18] sm:$0xff]
  %v5422 = vld [vmem:[%s1892 + $0x20] sm:$0xff]
  %v5423 = vld [vmem:[%s1892 + $0x28] sm:$0xff]
  %v5424 = vld [vmem:[%s1892 + $0x30] sm:$0xff]
  %v5425 = vld [vmem:[%s1892 + $0x38] sm:$0xff]
  %v5426 = vmul.f32 %v209, %v5413
  %v5427 = vmul.f32 %v213, %v5413
  %v5428 = vmul.f32 %v217, %v5413
  %v5429 = vmul.f32 %v221, %v5413
  %v5430 = vmul.f32 %v225, %v5417
  %v5431 = vmul.f32 %v229, %v5417
  %v5432 = vmul.f32 %v233, %v5417
  %v5433 = vmul.f32 %v237, %v5417
  %v5434 = vadd.f32 %v5418, %v5426
  %v5435 = vadd.f32 %v5419, %v5427
  %v5436 = vadd.f32 %v5420, %v5428
  %v5437 = vadd.f32 %v5421, %v5429
  %v5438 = vadd.f32 %v5422, %v5430
  %v5439 = vadd.f32 %v5423, %v5431
  %v5440 = vadd.f32 %v5424, %v5432
  %v5441 = vadd.f32 %v5425, %v5433
  %v5442 = vadd.f32 %v5434, %v5277
  %v5443 = vadd.f32 %v5435, %v5282
  %v5444 = vadd.f32 %v5436, %v5287
  %v5445 = vadd.f32 %v5437, %v5292
  %v5446 = vadd.f32 %v5438, %v5297
  %v5447 = vadd.f32 %v5439, %v5302
  %v5448 = vadd.f32 %v5440, %v5307
  %v5449 = vadd.f32 %v5441, %v5312
  %v5450 = vxor.u32 %v5442, 2147483648
  %v5451 = vxor.u32 %v5443, 2147483648
  %v5452 = vxor.u32 %v5444, 2147483648
  %v5453 = vxor.u32 %v5445, 2147483648
  %v5454 = vxor.u32 %v5446, 2147483648
  %v5455 = vxor.u32 %v5447, 2147483648
  %v5456 = vxor.u32 %v5448, 2147483648
  %v5457 = vxor.u32 %v5449, 2147483648
  %v5458 = vmul.f32 %v5450, 1.442695
  %v5459 = vpow.pop %v5458
  %v5460 = vmul.f32 %v5451, 1.442695
  %v5461 = vpow.pop %v5460
  %v5462 = vmul.f32 %v5452, 1.442695
  %v5463 = vpow.pop %v5462
  %v5464 = vmul.f32 %v5453, 1.442695
  %v5465 = vpow.pop %v5464
  %v5466 = vmul.f32 %v5454, 1.442695
  %v5467 = vpow.pop %v5466
  %v5468 = vmul.f32 %v5455, 1.442695
  %v5469 = vpow.pop %v5468
  %v5470 = vmul.f32 %v5456, 1.442695
  %v5471 = vpow.pop %v5470
  %v5472 = vmul.f32 %v5457, 1.442695
  %v5473 = vpow.pop %v5472
  %v5474 = vadd.f32 %v5459, 1.0
  %v5475 = vadd.f32 %v5461, 1.0
  %v5476 = vadd.f32 %v5463, 1.0
  %v5477 = vadd.f32 %v5465, 1.0
  %v5478 = vadd.f32 %v5467, 1.0
  %v5479 = vadd.f32 %v5469, 1.0
  %v5480 = vadd.f32 %v5471, 1.0
  %v5481 = vadd.f32 %v5473, 1.0
  %v5482 = vrcp.pop %v5474
  %v5483 = vmul.f32 1.0, %v5482
  %v5484 = vrcp.pop %v5475
  %v5485 = vmul.f32 1.0, %v5484
  %v5486 = vrcp.pop %v5476
  %v5487 = vmul.f32 1.0, %v5486
  %v5488 = vrcp.pop %v5477
  %v5489 = vmul.f32 1.0, %v5488
  %v5490 = vrcp.pop %v5478
  %v5491 = vmul.f32 1.0, %v5490
  %v5492 = vrcp.pop %v5479
  %v5493 = vmul.f32 1.0, %v5492
  %v5494 = vrcp.pop %v5480
  %v5495 = vmul.f32 1.0, %v5494
  %v5496 = vrcp.pop %v5481
  %v5497 = vmul.f32 1.0, %v5496
  %v5498 = vld [vmem:[%s1933] sm:$0xff]
  %v5499 = vld [vmem:[%s1933 + $0x8] sm:$0xff]
  %v5500 = vld [vmem:[%s1933 + $0x10] sm:$0xff]
  %v5501 = vld [vmem:[%s1933 + $0x18] sm:$0xff]
  %v5502 = vld [vmem:[%s1933 + $0x20] sm:$0xff]
  %v5503 = vld [vmem:[%s1933 + $0x28] sm:$0xff]
  %v5504 = vld [vmem:[%s1933 + $0x30] sm:$0xff]
  %v5505 = vld [vmem:[%s1933 + $0x38] sm:$0xff]
  %v5506 = vmul.f32 %v345, %v5413
  %v5507 = vmul.f32 %v349, %v5413
  %v5508 = vmul.f32 %v353, %v5413
  %v5509 = vmul.f32 %v357, %v5413
  %v5510 = vmul.f32 %v361, %v5417
  %v5511 = vmul.f32 %v365, %v5417
  %v5512 = vmul.f32 %v369, %v5417
  %v5513 = vmul.f32 %v373, %v5417
  %v5514 = vadd.f32 %v5498, %v5506
  %v5515 = vadd.f32 %v5499, %v5507
  %v5516 = vadd.f32 %v5500, %v5508
  %v5517 = vadd.f32 %v5501, %v5509
  %v5518 = vadd.f32 %v5502, %v5510
  %v5519 = vadd.f32 %v5503, %v5511
  %v5520 = vadd.f32 %v5504, %v5512
  %v5521 = vadd.f32 %v5505, %v5513
  %v5522 = vadd.f32 %v5514, %v5317
  %v5523 = vadd.f32 %v5515, %v5322
  %v5524 = vadd.f32 %v5516, %v5327
  %v5525 = vadd.f32 %v5517, %v5332
  %v5526 = vadd.f32 %v5518, %v5337
  %v5527 = vadd.f32 %v5519, %v5342
  %v5528 = vadd.f32 %v5520, %v5347
  %v5529 = vadd.f32 %v5521, %v5352
  %v5530 = vxor.u32 %v5522, 2147483648
  %v5531 = vxor.u32 %v5523, 2147483648
  %v5532 = vxor.u32 %v5524, 2147483648
  %v5533 = vxor.u32 %v5525, 2147483648
  %v5534 = vxor.u32 %v5526, 2147483648
  %v5535 = vxor.u32 %v5527, 2147483648
  %v5536 = vxor.u32 %v5528, 2147483648
  %v5537 = vxor.u32 %v5529, 2147483648
  %v5538 = vmul.f32 %v5530, 1.442695
  %v5539 = vpow.pop %v5538
  %v5540 = vmul.f32 %v5531, 1.442695
  %v5541 = vpow.pop %v5540
  %v5542 = vmul.f32 %v5532, 1.442695
  %v5543 = vpow.pop %v5542
  %v5544 = vmul.f32 %v5533, 1.442695
  %v5545 = vpow.pop %v5544
  %v5546 = vmul.f32 %v5534, 1.442695
  %v5547 = vpow.pop %v5546
  %v5548 = vmul.f32 %v5535, 1.442695
  %v5549 = vpow.pop %v5548
  %v5550 = vmul.f32 %v5536, 1.442695
  %v5551 = vpow.pop %v5550
  %v5552 = vmul.f32 %v5537, 1.442695
  %v5553 = vpow.pop %v5552
  %v5554 = vadd.f32 %v5539, 1.0
  %v5555 = vadd.f32 %v5541, 1.0
  %v5556 = vadd.f32 %v5543, 1.0
  %v5557 = vadd.f32 %v5545, 1.0
  %v5558 = vadd.f32 %v5547, 1.0
  %v5559 = vadd.f32 %v5549, 1.0
  %v5560 = vadd.f32 %v5551, 1.0
  %v5561 = vadd.f32 %v5553, 1.0
  %v5562 = vrcp.pop %v5554
  %v5563 = vmul.f32 1.0, %v5562
  %v5564 = vrcp.pop %v5555
  %v5565 = vmul.f32 1.0, %v5564
  %v5566 = vrcp.pop %v5556
  %v5567 = vmul.f32 1.0, %v5566
  %v5568 = vrcp.pop %v5557
  %v5569 = vmul.f32 1.0, %v5568
  %v5570 = vrcp.pop %v5558
  %v5571 = vmul.f32 1.0, %v5570
  %v5572 = vrcp.pop %v5559
  %v5573 = vmul.f32 1.0, %v5572
  %v5574 = vrcp.pop %v5560
  %v5575 = vmul.f32 1.0, %v5574
  %v5576 = vrcp.pop %v5561
  %v5577 = vmul.f32 1.0, %v5576
  %v5578 = vld [vmem:[%s1974] sm:$0xff]
  %v5579 = vld [vmem:[%s1974 + $0x8] sm:$0xff]
  %v5580 = vld [vmem:[%s1974 + $0x10] sm:$0xff]
  %v5581 = vld [vmem:[%s1974 + $0x18] sm:$0xff]
  %v5582 = vld [vmem:[%s1974 + $0x20] sm:$0xff]
  %v5583 = vld [vmem:[%s1974 + $0x28] sm:$0xff]
  %v5584 = vld [vmem:[%s1974 + $0x30] sm:$0xff]
  %v5585 = vld [vmem:[%s1974 + $0x38] sm:$0xff]
  %v5586 = vmul.f32 %v481, %v5413
  %v5587 = vmul.f32 %v485, %v5413
  %v5588 = vmul.f32 %v489, %v5413
  %v5589 = vmul.f32 %v493, %v5413
  %v5590 = vmul.f32 %v497, %v5417
  %v5591 = vmul.f32 %v501, %v5417
  %v5592 = vmul.f32 %v505, %v5417
  %v5593 = vmul.f32 %v509, %v5417
  %v5594 = vadd.f32 %v5578, %v5586
  %v5595 = vadd.f32 %v5579, %v5587
  %v5596 = vadd.f32 %v5580, %v5588
  %v5597 = vadd.f32 %v5581, %v5589
  %v5598 = vadd.f32 %v5582, %v5590
  %v5599 = vadd.f32 %v5583, %v5591
  %v5600 = vadd.f32 %v5584, %v5592
  %v5601 = vadd.f32 %v5585, %v5593
  %v5602 = vadd.f32 %v5357, %v2726
  %v5603 = vadd.f32 %v5362, %v2730
  %v5604 = vadd.f32 %v5367, %v2734
  %v5605 = vadd.f32 %v5372, %v2738
  %v5606 = vadd.f32 %v5377, %v2742
  %v5607 = vadd.f32 %v5382, %v2746
  %v5608 = vadd.f32 %v5387, %v2750
  %v5609 = vadd.f32 %v5392, %v2754
  %v5610 = vmul.f32 %v5483, %v5602
  %v5611 = vmul.f32 %v5485, %v5603
  %v5612 = vmul.f32 %v5487, %v5604
  %v5613 = vmul.f32 %v5489, %v5605
  %v5614 = vmul.f32 %v5491, %v5606
  %v5615 = vmul.f32 %v5493, %v5607
  %v5616 = vmul.f32 %v5495, %v5608
  %v5617 = vmul.f32 %v5497, %v5609
  %v5618 = vadd.f32 %v5594, %v5610
  %v5619 = vadd.f32 %v5595, %v5611
  %v5620 = vadd.f32 %v5596, %v5612
  %v5621 = vadd.f32 %v5597, %v5613
  %v5622 = vadd.f32 %v5598, %v5614
  %v5623 = vadd.f32 %v5599, %v5615
  %v5624 = vadd.f32 %v5600, %v5616
  %v5625 = vadd.f32 %v5601, %v5617
  %v5626 = vtanh.pop %v5618
  %v5627 = vtanh.pop %v5619
  %v5628 = vtanh.pop %v5620
  %v5629 = vtanh.pop %v5621
  %v5630 = vtanh.pop %v5622
  %v5631 = vtanh.pop %v5623
  %v5632 = vtanh.pop %v5624
  %v5633 = vtanh.pop %v5625
  %v5634 = vsub.f32 1.0, %v5563
  %v5635 = vsub.f32 1.0, %v5565
  %v5636 = vsub.f32 1.0, %v5567
  %v5637 = vsub.f32 1.0, %v5569
  %v5638 = vsub.f32 1.0, %v5571
  %v5639 = vsub.f32 1.0, %v5573
  %v5640 = vsub.f32 1.0, %v5575
  %v5641 = vsub.f32 1.0, %v5577
  %v5642 = vmul.f32 %v5634, %v5626
  %v5643 = vmul.f32 %v5635, %v5627
  %v5644 = vmul.f32 %v5636, %v5628
  %v5645 = vmul.f32 %v5637, %v5629
  %v5646 = vmul.f32 %v5638, %v5630
  %v5647 = vmul.f32 %v5639, %v5631
  %v5648 = vmul.f32 %v5640, %v5632
  %v5649 = vmul.f32 %v5641, %v5633
  %v5650 = vmul.f32 %v5563, %v5202
  %v5651 = vmul.f32 %v5565, %v5203
  %v5652 = vmul.f32 %v5567, %v5204
  %v5653 = vmul.f32 %v5569, %v5205
  %v5654 = vmul.f32 %v5571, %v5206
  %v5655 = vmul.f32 %v5573, %v5207
  %v5656 = vmul.f32 %v5575, %v5208
  %v5657 = vmul.f32 %v5577, %v5209
  %v5658 = vadd.f32 %v5642, %v5650
  %v5659 = vadd.f32 %v5643, %v5651
  %v5660 = vadd.f32 %v5644, %v5652
  %v5661 = vadd.f32 %v5645, %v5653
  %v5662 = vadd.f32 %v5646, %v5654
  %v5663 = vadd.f32 %v5647, %v5655
  %v5664 = vadd.f32 %v5648, %v5656
  %v5665 = vadd.f32 %v5649, %v5657
  %5666 = vst.msk [vmem:[%s6 + $0x6] sm:$0x1] %vm2820, %v5400
  %5667 = vst.msk [vmem:[%s7 + $0x5] sm:$0x2] %vm2822, %v5400
  %v5668 = vld [vmem:[%s2079] sm:$0xff]
  %v5669 = vld [vmem:[%s2079 + $0x8] sm:$0xff]
  %v5670 = vld [vmem:[%s2079 + $0x10] sm:$0xff]
  %v5671 = vld [vmem:[%s2079 + $0x18] sm:$0xff]
  %v5672 = vld [vmem:[%s2079 + $0x20] sm:$0xff]
  %v5673 = vld [vmem:[%s2079 + $0x28] sm:$0xff]
  %v5674 = vld [vmem:[%s2079 + $0x30] sm:$0xff]
  %v5675 = vld [vmem:[%s2079 + $0x38] sm:$0xff]
  %v5676 = vmul.f32 %v5658, %v5668
  %v5677 = vmul.f32 %v5659, %v5669
  %v5678 = vmul.f32 %v5660, %v5670
  %v5679 = vmul.f32 %v5661, %v5671
  %v5680 = vmul.f32 %v5662, %v5672
  %v5681 = vmul.f32 %v5663, %v5673
  %v5682 = vmul.f32 %v5664, %v5674
  %v5683 = vmul.f32 %v5665, %v5675
  %5684 = vmatprep.subr.mxu0 0.0
  %5685 = vmatpush1.msra.mxu0 0.0
  %5686 = vmatprep.subr.mxu0 0.0
  %5687 = vmatpush1.msra.mxu0 0.0
  %5688 = vmatprep.subr.mxu0 0.0
  %5689 = vmatpush1.msra.mxu0 0.0
  %5690 = vmatprep.subr.mxu0 0.0
  %5691 = vmatpush1.msra.mxu0 0.0
  %5692 = vmatprep.subr.mxu0 0.0
  %5693 = vmatpush1.msra.mxu0 0.0
  %5694 = vmatprep.subr.mxu0 0.0
  %5695 = vmatpush1.msra.mxu0 0.0
  %5696 = vmatprep.subr.mxu0 0.0
  %5697 = vmatpush1.msra.mxu0 0.0
  %5698 = vmatprep.subr.mxu0 0.0
  %5699 = vmatpush1.msra.mxu0 0.0
  %5700 = vmatprep.subr.mxu0 0.0
  %5701 = vmatpush1.msra.mxu0 %v5683
  %5702 = vmatprep.subr.mxu0 0.0
  %5703 = vmatpush1.msra.mxu0 %v5682
  %5704 = vmatprep.subr.mxu0 0.0
  %5705 = vmatpush1.msra.mxu0 %v5681
  %5706 = vmatprep.subr.mxu0 0.0
  %5707 = vmatpush1.msra.mxu0 %v5680
  %5708 = vmatprep.subr.mxu0 0.0
  %5709 = vmatpush1.msra.mxu0 %v5679
  %5710 = vmatprep.subr.mxu0 0.0
  %5711 = vmatpush1.msra.mxu0 %v5678
  %5712 = vmatprep.subr.mxu0 0.0
  %5713 = vmatpush1.msra.mxu0 %v5677
  %5714 = vmatprep.subr.mxu0 0.0
  %5715 = vmatpush1.msra.mxu0 %v5676
  %5716 = vmatprep.subr.mxu0 0.0
  %5717 = vmatpush2.msra.mxu0 0.0
  %5718 = vmatprep.subr.mxu0 0.0
  %5719 = vmatpush2.msra.mxu0 0.0
  %5720 = vmatprep.subr.mxu0 0.0
  %5721 = vmatpush2.msra.mxu0 0.0
  %5722 = vmatprep.subr.mxu0 0.0
  %5723 = vmatpush2.msra.mxu0 0.0
  %5724 = vmatprep.subr.mxu0 0.0
  %5725 = vmatpush2.msra.mxu0 0.0
  %5726 = vmatprep.subr.mxu0 0.0
  %5727 = vmatpush2.msra.mxu0 0.0
  %5728 = vmatprep.subr.mxu0 0.0
  %5729 = vmatpush2.msra.mxu0 0.0
  %5730 = vmatprep.subr.mxu0 0.0
  %5731 = vmatpush2.msra.mxu0 0.0
  %5732 = vmatprep.subr.mxu0 0.0
  %5733 = vmatpush2.msra.mxu0 0.0
  %5734 = vmatprep.subr.mxu0 0.0
  %5735 = vmatpush2.msra.mxu0 0.0
  %5736 = vmatprep.subr.mxu0 0.0
  %5737 = vmatpush2.msra.mxu0 0.0
  %5738 = vmatprep.subr.mxu0 0.0
  %5739 = vmatpush2.msra.mxu0 0.0
  %5740 = vmatprep.subr.mxu0 0.0
  %5741 = vmatpush2.msra.mxu0 0.0
  %5742 = vmatprep.subr.mxu0 0.0
  %5743 = vmatpush2.msra.mxu0 0.0
  %5744 = vmatprep.subr.mxu0 0.0
  %5745 = vmatpush2.msra.mxu0 0.0
  %5746 = vmatprep.subr.mxu0 0.0
  %5747 = vmatpush2.msra.mxu0 0.0
  %5748 = vmatprep.mubr.f32.mxu0 0.0
  %5749 = vmatmul.mubr.f32.gmra.mxu0 %v2254
  %v5750 = vpop.f32.mrf.mxu0
  %v5751 = vadd.f32 0.0, %v5750
  %v5752 = vpop.f32.mrf.mxu0
  %5753 = vmatprep.mubr.f32.mxu0 0.0
  %5754 = vmatmul.mubr.f32.gmra.mxu0 %v2257
  %v5755 = vpop.f32.mrf.mxu0
  %v5756 = vadd.f32 0.0, %v5755
  %v5757 = vpop.f32.mrf.mxu0
  %5758 = vmatprep.mubr.f32.mxu0 0.0
  %5759 = vmatmul.mubr.f32.gmra.mxu0 %v2260
  %v5760 = vpop.f32.mrf.mxu0
  %v5761 = vadd.f32 0.0, %v5760
  %v5762 = vpop.f32.mrf.mxu0
  %5763 = vmatprep.mubr.f32.mxu0 0.0
  %5764 = vmatmul.mubr.f32.gmra.mxu0 %v2263
  %v5765 = vpop.f32.mrf.mxu0
  %v5766 = vadd.f32 0.0, %v5765
  %v5767 = vpop.f32.mrf.mxu0
  %5768 = vmatprep.mubr.f32.mxu0 0.0
  %5769 = vmatmul.mubr.f32.gmra.mxu0 %v2266
  %v5770 = vpop.f32.mrf.mxu0
  %v5771 = vadd.f32 0.0, %v5770
  %v5772 = vpop.f32.mrf.mxu0
  %5773 = vmatprep.mubr.f32.mxu0 0.0
  %5774 = vmatmul.mubr.f32.gmra.mxu0 %v2269
  %v5775 = vpop.f32.mrf.mxu0
  %v5776 = vadd.f32 0.0, %v5775
  %v5777 = vpop.f32.mrf.mxu0
  %5778 = vmatprep.mubr.f32.mxu0 0.0
  %5779 = vmatmul.mubr.f32.gmra.mxu0 %v2272
  %v5780 = vpop.f32.mrf.mxu0
  %v5781 = vadd.f32 0.0, %v5780
  %v5782 = vpop.f32.mrf.mxu0
  %5783 = vmatprep.mubr.f32.mxu0 0.0
  %5784 = vmatmul.mubr.f32.gmra.mxu0 %v2275
  %v5785 = vpop.f32.mrf.mxu0
  %v5786 = vadd.f32 0.0, %v5785
  %v5787 = vpop.f32.mrf.mxu0
  %5788 = vmatprep.mubr.f32.mxu0 0.0
  %5789 = vmatmul.mubr.f32.gmra.mxu0 %v2278
  %v5790 = vpop.f32.mrf.mxu0
  %v5791 = vadd.f32 0.0, %v5790
  %v5792 = vpop.f32.mrf.mxu0
  %5793 = vmatprep.mubr.f32.mxu0 0.0
  %5794 = vmatmul.mubr.f32.gmra.mxu0 %v2281
  %v5795 = vpop.f32.mrf.mxu0
  %v5796 = vadd.f32 0.0, %v5795
  %v5797 = vpop.f32.mrf.mxu0
  %5798 = vmatprep.mubr.f32.mxu0 0.0
  %5799 = vmatmul.mubr.f32.gmra.mxu0 %v2284
  %v5800 = vpop.f32.mrf.mxu0
  %v5801 = vadd.f32 0.0, %v5800
  %v5802 = vpop.f32.mrf.mxu0
  %5803 = vmatprep.mubr.f32.mxu0 0.0
  %5804 = vmatmul.mubr.f32.gmra.mxu0 %v2287
  %v5805 = vpop.f32.mrf.mxu0
  %v5806 = vadd.f32 0.0, %v5805
  %v5807 = vpop.f32.mrf.mxu0
  %5808 = vmatprep.mubr.f32.mxu0 0.0
  %5809 = vmatmul.mubr.f32.gmra.mxu0 %v2290
  %v5810 = vpop.f32.mrf.mxu0
  %v5811 = vadd.f32 0.0, %v5810
  %v5812 = vpop.f32.mrf.mxu0
  %5813 = vmatprep.mubr.f32.mxu0 0.0
  %5814 = vmatmul.mubr.f32.gmra.mxu0 %v2293
  %v5815 = vpop.f32.mrf.mxu0
  %v5816 = vadd.f32 0.0, %v5815
  %v5817 = vpop.f32.mrf.mxu0
  %5818 = vmatprep.mubr.f32.mxu0 0.0
  %5819 = vmatmul.mubr.f32.gmra.mxu0 %v2296
  %v5820 = vpop.f32.mrf.mxu0
  %v5821 = vadd.f32 0.0, %v5820
  %v5822 = vpop.f32.mrf.mxu0
  %5823 = vmatprep.mubr.f32.mxu0 0.0
  %5824 = vmatmul.mubr.f32.gmra.mxu0 %v2299
  %v5825 = vpop.f32.mrf.mxu0
  %v5826 = vadd.f32 0.0, %v5825
  %v5827 = vpop.f32.mrf.mxu0
  %5828 = vmatprep.mubr.f32.mxu0 0.0
  %5829 = vmatmul.mubr.f32.gmra.mxu0 %v2302
  %v5830 = vpop.f32.mrf.mxu0
  %v5831 = vadd.f32 0.0, %v5830
  %v5832 = vpop.f32.mrf.mxu0
  %5833 = vmatprep.mubr.f32.mxu0 0.0
  %5834 = vmatmul.mubr.f32.gmra.mxu0 %v2305
  %v5835 = vpop.f32.mrf.mxu0
  %v5836 = vadd.f32 0.0, %v5835
  %v5837 = vpop.f32.mrf.mxu0
  %5838 = vmatprep.mubr.f32.mxu0 0.0
  %5839 = vmatmul.mubr.f32.gmra.mxu0 %v2308
  %v5840 = vpop.f32.mrf.mxu0
  %v5841 = vadd.f32 0.0, %v5840
  %v5842 = vpop.f32.mrf.mxu0
  %5843 = vmatprep.mubr.f32.mxu0 0.0
  %5844 = vmatmul.mubr.f32.gmra.mxu0 %v2311
  %v5845 = vpop.f32.mrf.mxu0
  %v5846 = vadd.f32 0.0, %v5845
  %v5847 = vpop.f32.mrf.mxu0
  %5848 = vmatprep.mubr.f32.mxu0 0.0
  %5849 = vmatmul.mubr.f32.gmra.mxu0 %v2314
  %v5850 = vpop.f32.mrf.mxu0
  %v5851 = vadd.f32 0.0, %v5850
  %v5852 = vpop.f32.mrf.mxu0
  %5853 = vmatprep.mubr.f32.mxu0 0.0
  %5854 = vmatmul.mubr.f32.gmra.mxu0 %v2317
  %v5855 = vpop.f32.mrf.mxu0
  %v5856 = vadd.f32 0.0, %v5855
  %v5857 = vpop.f32.mrf.mxu0
  %5858 = vmatprep.mubr.f32.mxu0 0.0
  %5859 = vmatmul.mubr.f32.gmra.mxu0 %v2320
  %v5860 = vpop.f32.mrf.mxu0
  %v5861 = vadd.f32 0.0, %v5860
  %v5862 = vpop.f32.mrf.mxu0
  %5863 = vmatprep.mubr.f32.mxu0 0.0
  %5864 = vmatmul.mubr.f32.gmra.mxu0 %v2323
  %v5865 = vpop.f32.mrf.mxu0
  %v5866 = vadd.f32 0.0, %v5865
  %v5867 = vpop.f32.mrf.mxu0
  %5868 = vmatprep.mubr.f32.mxu0 0.0
  %5869 = vmatmul.mubr.f32.gmra.mxu0 %v2326
  %v5870 = vpop.f32.mrf.mxu0
  %v5871 = vadd.f32 0.0, %v5870
  %v5872 = vpop.f32.mrf.mxu0
  %5873 = vdwg.mxu0
  %v5874 = vadd.f32 %v5871, %v2520
  %v5875 = vld [vmem:[%s1983] sm:$0x3f]
  %v5876 = vsub.f32 1.0, %v5875
  %v5878 = vrot.slane %v5874, 7
  %v5880 = vmul.f32 %v5876, %v5878
  %v5881 = vrot.slane %v5874, 5
  %v5883 = vmul.f32 %v5876, %v5881
  %v5884 = vlaneseq
  %v5885 = vshrl.u32 %v5884, 7
  %v5886 = vsub.s32 1, %v5885
  %v5887 = vrot.slane %v5880, %v5886
  %v5888 = vlaneseq
  %v5889 = vshrl.u32 %v5888, 7
  %v5890 = vsub.s32 4, %v5889
  %v5891 = vrot.slane %v5883, %v5890
  %v5892 = vld [vmem:[%s2120] sm:$0xff]
  %v5893 = vld [vmem:[%s2120 + $0x8] sm:$0xff]
  %v5894 = vld [vmem:[%s2120 + $0x10] sm:$0xff]
  %v5895 = vld [vmem:[%s2120 + $0x18] sm:$0xff]
  %v5896 = vld [vmem:[%s2120 + $0x20] sm:$0xff]
  %v5897 = vld [vmem:[%s2120 + $0x28] sm:$0xff]
  %v5898 = vld [vmem:[%s2120 + $0x30] sm:$0xff]
  %v5899 = vld [vmem:[%s2120 + $0x38] sm:$0xff]
  %v5900 = vmul.f32 %v209, %v5887
  %v5901 = vmul.f32 %v213, %v5887
  %v5902 = vmul.f32 %v217, %v5887
  %v5903 = vmul.f32 %v221, %v5887
  %v5904 = vmul.f32 %v225, %v5891
  %v5905 = vmul.f32 %v229, %v5891
  %v5906 = vmul.f32 %v233, %v5891
  %v5907 = vmul.f32 %v237, %v5891
  %v5908 = vadd.f32 %v5892, %v5900
  %v5909 = vadd.f32 %v5893, %v5901
  %v5910 = vadd.f32 %v5894, %v5902
  %v5911 = vadd.f32 %v5895, %v5903
  %v5912 = vadd.f32 %v5896, %v5904
  %v5913 = vadd.f32 %v5897, %v5905
  %v5914 = vadd.f32 %v5898, %v5906
  %v5915 = vadd.f32 %v5899, %v5907
  %v5916 = vadd.f32 %v5908, %v5751
  %v5917 = vadd.f32 %v5909, %v5756
  %v5918 = vadd.f32 %v5910, %v5761
  %v5919 = vadd.f32 %v5911, %v5766
  %v5920 = vadd.f32 %v5912, %v5771
  %v5921 = vadd.f32 %v5913, %v5776
  %v5922 = vadd.f32 %v5914, %v5781
  %v5923 = vadd.f32 %v5915, %v5786
  %v5924 = vxor.u32 %v5916, 2147483648
  %v5925 = vxor.u32 %v5917, 2147483648
  %v5926 = vxor.u32 %v5918, 2147483648
  %v5927 = vxor.u32 %v5919, 2147483648
  %v5928 = vxor.u32 %v5920, 2147483648
  %v5929 = vxor.u32 %v5921, 2147483648
  %v5930 = vxor.u32 %v5922, 2147483648
  %v5931 = vxor.u32 %v5923, 2147483648
  %v5932 = vmul.f32 %v5924, 1.442695
  %v5933 = vpow.pop %v5932
  %v5934 = vmul.f32 %v5925, 1.442695
  %v5935 = vpow.pop %v5934
  %v5936 = vmul.f32 %v5926, 1.442695
  %v5937 = vpow.pop %v5936
  %v5938 = vmul.f32 %v5927, 1.442695
  %v5939 = vpow.pop %v5938
  %v5940 = vmul.f32 %v5928, 1.442695
  %v5941 = vpow.pop %v5940
  %v5942 = vmul.f32 %v5929, 1.442695
  %v5943 = vpow.pop %v5942
  %v5944 = vmul.f32 %v5930, 1.442695
  %v5945 = vpow.pop %v5944
  %v5946 = vmul.f32 %v5931, 1.442695
  %v5947 = vpow.pop %v5946
  %v5948 = vadd.f32 %v5933, 1.0
  %v5949 = vadd.f32 %v5935, 1.0
  %v5950 = vadd.f32 %v5937, 1.0
  %v5951 = vadd.f32 %v5939, 1.0
  %v5952 = vadd.f32 %v5941, 1.0
  %v5953 = vadd.f32 %v5943, 1.0
  %v5954 = vadd.f32 %v5945, 1.0
  %v5955 = vadd.f32 %v5947, 1.0
  %v5956 = vrcp.pop %v5948
  %v5957 = vmul.f32 1.0, %v5956
  %v5958 = vrcp.pop %v5949
  %v5959 = vmul.f32 1.0, %v5958
  %v5960 = vrcp.pop %v5950
  %v5961 = vmul.f32 1.0, %v5960
  %v5962 = vrcp.pop %v5951
  %v5963 = vmul.f32 1.0, %v5962
  %v5964 = vrcp.pop %v5952
  %v5965 = vmul.f32 1.0, %v5964
  %v5966 = vrcp.pop %v5953
  %v5967 = vmul.f32 1.0, %v5966
  %v5968 = vrcp.pop %v5954
  %v5969 = vmul.f32 1.0, %v5968
  %v5970 = vrcp.pop %v5955
  %v5971 = vmul.f32 1.0, %v5970
  %v5972 = vld [vmem:[%s2161] sm:$0xff]
  %v5973 = vld [vmem:[%s2161 + $0x8] sm:$0xff]
  %v5974 = vld [vmem:[%s2161 + $0x10] sm:$0xff]
  %v5975 = vld [vmem:[%s2161 + $0x18] sm:$0xff]
  %v5976 = vld [vmem:[%s2161 + $0x20] sm:$0xff]
  %v5977 = vld [vmem:[%s2161 + $0x28] sm:$0xff]
  %v5978 = vld [vmem:[%s2161 + $0x30] sm:$0xff]
  %v5979 = vld [vmem:[%s2161 + $0x38] sm:$0xff]
  %v5980 = vmul.f32 %v345, %v5887
  %v5981 = vmul.f32 %v349, %v5887
  %v5982 = vmul.f32 %v353, %v5887
  %v5983 = vmul.f32 %v357, %v5887
  %v5984 = vmul.f32 %v361, %v5891
  %v5985 = vmul.f32 %v365, %v5891
  %v5986 = vmul.f32 %v369, %v5891
  %v5987 = vmul.f32 %v373, %v5891
  %v5988 = vadd.f32 %v5972, %v5980
  %v5989 = vadd.f32 %v5973, %v5981
  %v5990 = vadd.f32 %v5974, %v5982
  %v5991 = vadd.f32 %v5975, %v5983
  %v5992 = vadd.f32 %v5976, %v5984
  %v5993 = vadd.f32 %v5977, %v5985
  %v5994 = vadd.f32 %v5978, %v5986
  %v5995 = vadd.f32 %v5979, %v5987
  %v5996 = vadd.f32 %v5988, %v5791
  %v5997 = vadd.f32 %v5989, %v5796
  %v5998 = vadd.f32 %v5990, %v5801
  %v5999 = vadd.f32 %v5991, %v5806
  %v6000 = vadd.f32 %v5992, %v5811
  %v6001 = vadd.f32 %v5993, %v5816
  %v6002 = vadd.f32 %v5994, %v5821
  %v6003 = vadd.f32 %v5995, %v5826
  %v6004 = vxor.u32 %v5996, 2147483648
  %v6005 = vxor.u32 %v5997, 2147483648
  %v6006 = vxor.u32 %v5998, 2147483648
  %v6007 = vxor.u32 %v5999, 2147483648
  %v6008 = vxor.u32 %v6000, 2147483648
  %v6009 = vxor.u32 %v6001, 2147483648
  %v6010 = vxor.u32 %v6002, 2147483648
  %v6011 = vxor.u32 %v6003, 2147483648
  %v6012 = vmul.f32 %v6004, 1.442695
  %v6013 = vpow.pop %v6012
  %v6014 = vmul.f32 %v6005, 1.442695
  %v6015 = vpow.pop %v6014
  %v6016 = vmul.f32 %v6006, 1.442695
  %v6017 = vpow.pop %v6016
  %v6018 = vmul.f32 %v6007, 1.442695
  %v6019 = vpow.pop %v6018
  %v6020 = vmul.f32 %v6008, 1.442695
  %v6021 = vpow.pop %v6020
  %v6022 = vmul.f32 %v6009, 1.442695
  %v6023 = vpow.pop %v6022
  %v6024 = vmul.f32 %v6010, 1.442695
  %v6025 = vpow.pop %v6024
  %v6026 = vmul.f32 %v6011, 1.442695
  %v6027 = vpow.pop %v6026
  %v6028 = vadd.f32 %v6013, 1.0
  %v6029 = vadd.f32 %v6015, 1.0
  %v6030 = vadd.f32 %v6017, 1.0
  %v6031 = vadd.f32 %v6019, 1.0
  %v6032 = vadd.f32 %v6021, 1.0
  %v6033 = vadd.f32 %v6023, 1.0
  %v6034 = vadd.f32 %v6025, 1.0
  %v6035 = vadd.f32 %v6027, 1.0
  %v6036 = vrcp.pop %v6028
  %v6037 = vmul.f32 1.0, %v6036
  %v6038 = vrcp.pop %v6029
  %v6039 = vmul.f32 1.0, %v6038
  %v6040 = vrcp.pop %v6030
  %v6041 = vmul.f32 1.0, %v6040
  %v6042 = vrcp.pop %v6031
  %v6043 = vmul.f32 1.0, %v6042
  %v6044 = vrcp.pop %v6032
  %v6045 = vmul.f32 1.0, %v6044
  %v6046 = vrcp.pop %v6033
  %v6047 = vmul.f32 1.0, %v6046
  %v6048 = vrcp.pop %v6034
  %v6049 = vmul.f32 1.0, %v6048
  %v6050 = vrcp.pop %v6035
  %v6051 = vmul.f32 1.0, %v6050
  %v6052 = vld [vmem:[%s2202] sm:$0xff]
  %v6053 = vld [vmem:[%s2202 + $0x8] sm:$0xff]
  %v6054 = vld [vmem:[%s2202 + $0x10] sm:$0xff]
  %v6055 = vld [vmem:[%s2202 + $0x18] sm:$0xff]
  %v6056 = vld [vmem:[%s2202 + $0x20] sm:$0xff]
  %v6057 = vld [vmem:[%s2202 + $0x28] sm:$0xff]
  %v6058 = vld [vmem:[%s2202 + $0x30] sm:$0xff]
  %v6059 = vld [vmem:[%s2202 + $0x38] sm:$0xff]
  %v6060 = vmul.f32 %v481, %v5887
  %v6061 = vmul.f32 %v485, %v5887
  %v6062 = vmul.f32 %v489, %v5887
  %v6063 = vmul.f32 %v493, %v5887
  %v6064 = vmul.f32 %v497, %v5891
  %v6065 = vmul.f32 %v501, %v5891
  %v6066 = vmul.f32 %v505, %v5891
  %v6067 = vmul.f32 %v509, %v5891
  %v6068 = vadd.f32 %v6052, %v6060
  %v6069 = vadd.f32 %v6053, %v6061
  %v6070 = vadd.f32 %v6054, %v6062
  %v6071 = vadd.f32 %v6055, %v6063
  %v6072 = vadd.f32 %v6056, %v6064
  %v6073 = vadd.f32 %v6057, %v6065
  %v6074 = vadd.f32 %v6058, %v6066
  %v6075 = vadd.f32 %v6059, %v6067
  %v6076 = vadd.f32 %v5831, %v2726
  %v6077 = vadd.f32 %v5836, %v2730
  %v6078 = vadd.f32 %v5841, %v2734
  %v6079 = vadd.f32 %v5846, %v2738
  %v6080 = vadd.f32 %v5851, %v2742
  %v6081 = vadd.f32 %v5856, %v2746
  %v6082 = vadd.f32 %v5861, %v2750
  %v6083 = vadd.f32 %v5866, %v2754
  %v6084 = vmul.f32 %v5957, %v6076
  %v6085 = vmul.f32 %v5959, %v6077
  %v6086 = vmul.f32 %v5961, %v6078
  %v6087 = vmul.f32 %v5963, %v6079
  %v6088 = vmul.f32 %v5965, %v6080
  %v6089 = vmul.f32 %v5967, %v6081
  %v6090 = vmul.f32 %v5969, %v6082
  %v6091 = vmul.f32 %v5971, %v6083
  %v6092 = vadd.f32 %v6068, %v6084
  %v6093 = vadd.f32 %v6069, %v6085
  %v6094 = vadd.f32 %v6070, %v6086
  %v6095 = vadd.f32 %v6071, %v6087
  %v6096 = vadd.f32 %v6072, %v6088
  %v6097 = vadd.f32 %v6073, %v6089
  %v6098 = vadd.f32 %v6074, %v6090
  %v6099 = vadd.f32 %v6075, %v6091
  %v6100 = vtanh.pop %v6092
  %v6101 = vtanh.pop %v6093
  %v6102 = vtanh.pop %v6094
  %v6103 = vtanh.pop %v6095
  %v6104 = vtanh.pop %v6096
  %v6105 = vtanh.pop %v6097
  %v6106 = vtanh.pop %v6098
  %v6107 = vtanh.pop %v6099
  %v6108 = vsub.f32 1.0, %v6037
  %v6109 = vsub.f32 1.0, %v6039
  %v6110 = vsub.f32 1.0, %v6041
  %v6111 = vsub.f32 1.0, %v6043
  %v6112 = vsub.f32 1.0, %v6045
  %v6113 = vsub.f32 1.0, %v6047
  %v6114 = vsub.f32 1.0, %v6049
  %v6115 = vsub.f32 1.0, %v6051
  %v6116 = vmul.f32 %v6108, %v6100
  %v6117 = vmul.f32 %v6109, %v6101
  %v6118 = vmul.f32 %v6110, %v6102
  %v6119 = vmul.f32 %v6111, %v6103
  %v6120 = vmul.f32 %v6112, %v6104
  %v6121 = vmul.f32 %v6113, %v6105
  %v6122 = vmul.f32 %v6114, %v6106
  %v6123 = vmul.f32 %v6115, %v6107
  %v6124 = vmul.f32 %v6037, %v5676
  %v6125 = vmul.f32 %v6039, %v5677
  %v6126 = vmul.f32 %v6041, %v5678
  %v6127 = vmul.f32 %v6043, %v5679
  %v6128 = vmul.f32 %v6045, %v5680
  %v6129 = vmul.f32 %v6047, %v5681
  %v6130 = vmul.f32 %v6049, %v5682
  %v6131 = vmul.f32 %v6051, %v5683
  %v6132 = vadd.f32 %v6116, %v6124
  %v6133 = vadd.f32 %v6117, %v6125
  %v6134 = vadd.f32 %v6118, %v6126
  %v6135 = vadd.f32 %v6119, %v6127
  %v6136 = vadd.f32 %v6120, %v6128
  %v6137 = vadd.f32 %v6121, %v6129
  %v6138 = vadd.f32 %v6122, %v6130
  %v6139 = vadd.f32 %v6123, %v6131
  %6140 = vst.msk [vmem:[%s6 + $0x7] sm:$0x1] %vm2820, %v5874
  %6141 = vst.msk [vmem:[%s7 + $0x6] sm:$0x2] %vm2822, %v5874
  %v6142 = vld [vmem:[%s3] sm:$0xf]
  %v6143 = vld [vmem:[%s4] sm:$0xf]
  %6145 = vset.pattern.permute.xlu0 0
  %6146 = vperm.xlu0 %6145, %v6143
  %v6147 = vpop.permute.xlu0 %6146
  %v6150 = vsel %vm2252, %v6142, 0
  %6152 = vmatprep.subr.mxu0 0.0
  %6153 = vmatpush1.msra.mxu0 0.0
  %6154 = vmatprep.subr.mxu0 0.0
  %6155 = vmatpush1.msra.mxu0 0.0
  %6156 = vmatprep.subr.mxu0 0.0
  %6157 = vmatpush1.msra.mxu0 0.0
  %6158 = vmatprep.subr.mxu0 0.0
  %6159 = vmatpush1.msra.mxu0 0.0
  %6160 = vmatprep.subr.mxu0 0.0
  %6161 = vmatpush1.msra.mxu0 0.0
  %6162 = vmatprep.subr.mxu0 0.0
  %6163 = vmatpush1.msra.mxu0 0.0
  %6164 = vmatprep.subr.mxu0 0.0
  %6165 = vmatpush1.msra.mxu0 0.0
  %6166 = vmatprep.subr.mxu0 0.0
  %6167 = vmatpush1.msra.mxu0 0.0
  %6168 = vmatprep.subr.mxu0 0.0
  %6169 = vmatpush1.msra.mxu0 %v6139
  %6170 = vmatprep.subr.mxu0 0.0
  %6171 = vmatpush1.msra.mxu0 %v6138
  %6172 = vmatprep.subr.mxu0 0.0
  %6173 = vmatpush1.msra.mxu0 %v6137
  %6174 = vmatprep.subr.mxu0 0.0
  %6175 = vmatpush1.msra.mxu0 %v6136
  %6176 = vmatprep.subr.mxu0 0.0
  %6177 = vmatpush1.msra.mxu0 %v6135
  %6178 = vmatprep.subr.mxu0 0.0
  %6179 = vmatpush1.msra.mxu0 %v6134
  %6180 = vmatprep.subr.mxu0 0.0
  %6181 = vmatpush1.msra.mxu0 %v6133
  %6182 = vmatprep.subr.mxu0 0.0
  %6183 = vmatpush1.msra.mxu0 %v6132
  %6184 = vmatprep.subr.mxu0 0.0
  %6185 = vmatpush2.msra.mxu0 0.0
  %6186 = vmatprep.subr.mxu0 0.0
  %6187 = vmatpush2.msra.mxu0 0.0
  %6188 = vmatprep.subr.mxu0 0.0
  %6189 = vmatpush2.msra.mxu0 0.0
  %6190 = vmatprep.subr.mxu0 0.0
  %6191 = vmatpush2.msra.mxu0 0.0
  %6192 = vmatprep.subr.mxu0 0.0
  %6193 = vmatpush2.msra.mxu0 0.0
  %6194 = vmatprep.subr.mxu0 0.0
  %6195 = vmatpush2.msra.mxu0 0.0
  %6196 = vmatprep.subr.mxu0 0.0
  %6197 = vmatpush2.msra.mxu0 0.0
  %6198 = vmatprep.subr.mxu0 0.0
  %6199 = vmatpush2.msra.mxu0 0.0
  %6200 = vmatprep.subr.mxu0 0.0
  %6201 = vmatpush2.msra.mxu0 0.0
  %6202 = vmatprep.subr.mxu0 0.0
  %6203 = vmatpush2.msra.mxu0 0.0
  %6204 = vmatprep.subr.mxu0 0.0
  %6205 = vmatpush2.msra.mxu0 0.0
  %6206 = vmatprep.subr.mxu0 0.0
  %6207 = vmatpush2.msra.mxu0 0.0
  %6208 = vmatprep.subr.mxu0 0.0
  %6209 = vmatpush2.msra.mxu0 0.0
  %6210 = vmatprep.subr.mxu0 0.0
  %6211 = vmatpush2.msra.mxu0 0.0
  %6212 = vmatprep.subr.mxu0 0.0
  %6213 = vmatpush2.msra.mxu0 0.0
  %6214 = vmatprep.subr.mxu0 0.0
  %6215 = vmatpush2.msra.mxu0 0.0
  %6216 = vmatprep.mubr.f32.mxu0 0.0
  %6217 = vmatmul.mubr.f32.gmra.mxu0 %v6150
  %v6218 = vpop.f32.mrf.mxu0
  %v6219 = vadd.f32 %v6147, %v6218
  %v6220 = vpop.f32.mrf.mxu0
  %6221 = vdwg.mxu0
  %vm6222 = vcmask 11264
  %6223 = vst.msk [vmem:[%s5] sm:$0xf] %vm6222, %v6219
  // Predicated region
  $region22: #{tpu_custom_call.1} parent=0 // pred_check
    _
  $region23: #{tpu_custom_call.1} parent=0 // pred_check_branch
    %6225 = sbr.rel (0) target = $region25
  $region24: #{tpu_custom_call.1} parent=0 // pred_region
    _
  $region25: #{tpu_custom_call.1} parent=0 // pred_fallthru
    _
  // Predicated region
  $region26: #{tpu_custom_call.1} parent=0 // pred_check
    _
  $region27: #{tpu_custom_call.1} parent=0 // pred_check_branch
    %6227 = sbr.rel (0) target = $region29
  $region28: #{tpu_custom_call.1} parent=0 // pred_region
    _
  $region29: #{tpu_custom_call.1} parent=0 // pred_fallthru
    _
  // Predicated region
  $region30: #{tpu_custom_call.1} parent=0 // pred_check
    _
  $region31: #{tpu_custom_call.1} parent=0 // pred_check_branch
    %6229 = sbr.rel (0) target = $region33
  $region32: #{tpu_custom_call.1} parent=0 // pred_region
    _
  $region33: #{tpu_custom_call.1} parent=0 // pred_fallthru
    _
  // Predicated region
  $region34: #{tpu_custom_call.1} parent=0 // pred_check
    _
  $region35: #{tpu_custom_call.1} parent=0 // pred_check_branch
    %6231 = sbr.rel (0) target = $region37
  $region36: #{tpu_custom_call.1} parent=0 // pred_region
    _
  $region37: #{tpu_custom_call.1} parent=0 // pred_fallthru
    _
  // Predicated region
  $region38: #{tpu_custom_call.1} parent=0 // pred_check
    _
  $region39: #{tpu_custom_call.1} parent=0 // pred_check_branch
    %6233 = sbr.rel (0) target = $region41
  $region40: #{tpu_custom_call.1} parent=0 // pred_region
    _
  $region41: #{tpu_custom_call.1} parent=0 // pred_fallthru
    _
  // Predicated region
  $region42: #{tpu_custom_call.1} parent=0 // pred_check
    _
  $region43: #{tpu_custom_call.1} parent=0 // pred_check_branch
    %6235 = sbr.rel (0) target = $region45
  $region44: #{tpu_custom_call.1} parent=0 // pred_region
    _
  $region45: #{tpu_custom_call.1} parent=0 // pred_fallthru
    _

</llo_original>
